<compile_context>
chip_gen: v7x
topology: tpu7x:2x2x1
jax: 0.10.0
libtpu: 0.0.40
codegen_flags: <defaults>
</compile_context>

<pallas_src>
import functools

import numpy as np

import jax
import jax.numpy as jnp
from jax.experimental import pallas as pl
from jax.experimental.pallas import tpu as pltpu  # noqa: F401  (TPU backend assumed)

BN_EPS = 1e-5
_HI = jax.lax.Precision.HIGHEST


# ----------------------------------------------------------------------------
# Host-side constants: 3x3 edge masks + batched (block-diagonal) DFT operators
# ----------------------------------------------------------------------------
@functools.lru_cache(maxsize=None)
def build_consts(h, w, n):
    m = h * w
    r = n * m

    # 0/1 validity mask for each of the 9 taps of a 3x3 / pad=1 conv, per flat row.
    # Rolling the flat (n*m, C) tile by the tap offset can wrap across rows / batch
    # elements, but every such position is exactly an out-of-bounds tap -> masked.
    masks = np.zeros((r, 9), np.float32)
    for b in range(n):
        for i in range(h):
            for j in range(w):
                p = b * m + i * w + j
                for ky in range(3):
                    for kx in range(3):
                        if 0 <= i + ky - 1 < h and 0 <= j + kx - 1 < w:
                            masks[p, ky * 3 + kx] = 1.0

    # 2-D DFT over (H, W) as one (m, m) matrix T = kron(D_H, D_W), block-diag over batch.
    dh = np.exp(-2j * np.pi * np.outer(np.arange(h), np.arange(h)) / h)
    dw = np.exp(-2j * np.pi * np.outer(np.arange(w), np.arange(w)) / w)
    t2 = np.kron(dh, dw)
    tr = np.real(t2).astype(np.float32)
    ti = np.imag(t2).astype(np.float32)
    eye = np.eye(n, dtype=np.float32)
    btr = np.kron(eye, tr)                               # (r, r) block-diag
    bti = np.kron(eye, ti)
    dft_fwd = np.concatenate([btr, bti], axis=0)         # (2r, r):  [Re;Im] = fwd @ x
    dft_inv = np.block([[btr, bti], [-bti, btr]])        # (2r, 2r): m*[Re;Im](ifft) = inv @ [pr;pi]
    return masks, dft_fwd, dft_inv


# ----------------------------------------------------------------------------
# The single fused Pallas kernel (whole batch in one invocation, no grid)
# ----------------------------------------------------------------------------
def _module3_kernel(
    hin_ref, lin_ref, mask_ref, dftf_ref, dfti_ref,
    w1_ref, b1_ref, w2_ref, b2_ref, w3_ref, b3_ref,
    w4_ref, b4_ref, w5_ref, b5_ref, w6_ref, b6_ref,
    wa_ref, ba_ref, wb_ref, bb_ref,
    nsc_ref, nsh_ref,
    wo_ref, bo_ref,
    o_ref,
    *, w, cdt, prec,
):
    f32 = jnp.float32
    r = hin_ref.shape[0]                # n * h * w (batch stacked along rows)
    masks = mask_ref[...]               # (r, 9) 0/1 edge masks

    def mxu(a, b):
        # MXU dot: operands in the compute dtype (bf16 fast path / f32 exact path),
        # f32 accumulation.
        return jnp.dot(a.astype(cdt), b.astype(cdt),
                       preferred_element_type=f32, precision=prec)

    def conv3x3(x, w_full, b_row):
        """3x3 / pad=1 / stride=1 conv: 8 static row-rolls + masks -> one im2col dot."""
        cols = []
        for ky in range(3):
            for kx in range(3):
                t = ky * 3 + kx
                off = (ky - 1) * w + (kx - 1)
                # static roll -> sublane slice + concat (VPU/XLU); no MXU data movement
                xt = x if off == 0 else jnp.roll(x, -off, axis=0)
                cols.append((xt * masks[:, t:t + 1]).astype(cdt))
        patch = jnp.concatenate(cols, axis=-1)           # (r, 9*cin)
        return jnp.dot(patch, w_full.astype(cdt),
                       preferred_element_type=f32, precision=prec) + b_row

    hin = hin_ref[...]                                   # (r, C)
    lin = lin_ref[...]                                   # (r, C)

    # ---- self.conv on cat([Hin, Lin]); Los_feature == Hos_feature -> compute once
    x = mxu(jnp.concatenate([hin, lin], axis=-1), w1_ref[...]) + b1_ref[...]
    x = conv3x3(x, w2_ref[...], b2_ref[...])
    x = conv3x3(x, w3_ref[...], b3_ref[...])
    os_feat = jnp.maximum(x, 0.0)

    # ---- L branch: self.conv3
    y = mxu(os_feat, w4_ref[...]) + b4_ref[...]
    y = conv3x3(y, w5_ref[...], b5_ref[...])
    y = conv3x3(y, w6_ref[...], b6_ref[...])
    l_feat = jnp.maximum(y, 0.0)

    # ---- H branch: fft2 -> SE gate on real part -> complex mult -> ifft2 -> |.| -> BN -> ReLU
    ff = mxu(dftf_ref[...], os_feat)                     # (2r, C) = [Re(fft2); Im(fft2)]
    fr = ff[:r, :]
    se = jnp.maximum(mxu(fr, wa_ref[...]) + ba_ref[...], 0.0)
    wt = jax.nn.sigmoid(mxu(se, wb_ref[...]) + bb_ref[...])          # (r, C) gate
    prpi = ff * jnp.concatenate([wt, wt], axis=0)        # [Re*wt ; Im*wt]
    uu = mxu(dfti_ref[...], prpi)                        # (2r, C) = m*[Re(ifft2); Im(ifft2)]
    ur = uu[:r, :]
    ui = uu[r:, :]
    mag = jnp.sqrt(ur * ur + ui * ui)                    # = m * |ifft2(...)|
    # 1/m of the ifft is folded into nsc (nsh left unscaled).
    h_feat = jnp.maximum(mag * nsc_ref[...] + nsh_ref[...], 0.0)

    # ---- sigmoid gating / feature mixing (exact reference arithmetic)
    g_l = jax.nn.sigmoid(l_feat)
    g_h = jax.nn.sigmoid(h_feat)
    l_new = lin + lin * g_l + (1.0 - g_l) * g_h * h_feat
    h_new = hin + hin * g_h + (1.0 - g_h) * g_l * l_new

    # ---- self.out: ONE 3x3 conv on the lane-concat [H | L] (+BN folded) + ReLU
    z = conv3x3(jnp.concatenate([h_new, l_new], axis=-1), wo_ref[...], bo_ref[...])
    o_ref[...] = jnp.maximum(z, 0.0)


def module3_forward(hin_nhwc, lin_nhwc, params, *, exact=False):
    n, h, w, c = hin_nhwc.shape
    m = h * w
    masks, dft_fwd, dft_inv = build_consts(h, w, n)

    cdt = jnp.float32 if exact else jnp.bfloat16
    prec = _HI if exact else None
    p = params

    def wc(a):  # MXU-side constants / weights in the compute dtype
        return jnp.asarray(a, dtype=cdt)

    operands = (
        hin_nhwc.reshape(n * m, c), lin_nhwc.reshape(n * m, c),
        jnp.asarray(masks), wc(dft_fwd), wc(dft_inv),
        wc(p["w1"]), p["b1"], wc(p["w2"]), p["b2"], wc(p["w3"]), p["b3"],
        wc(p["w4"]), p["b4"], wc(p["w5"]), p["b5"], wc(p["w6"]), p["b6"],
        wc(p["wa"]), p["ba"], wc(p["wb"]), p["bb"],
        p["nsc"] / m, p["nsh"],                          # fold ifft 1/(H*W) into BN scale
        wc(p["wo"]), p["bo"],
    )

    # No grid: both batch elements are processed in a single invocation (batch
    # stacked along rows -> M = n*h*w for every weight dot, no per-step overhead).
    # Every operand is a whole-array VMEM ref; total footprint < 1 MiB.
    out = pl.pallas_call(
        functools.partial(_module3_kernel, w=w, cdt=cdt, prec=prec),
        out_shape=jax.ShapeDtypeStruct((n * m, c), jnp.float32),
    )(*operands)
    return out.reshape(n, h, w, c)


# ----------------------------------------------------------------------------
# Deterministic synthetic parameters (BN folded into weights at build time)
# ----------------------------------------------------------------------------
def make_params(key, c):
    c2, cs = 2 * c, c // 16
    keys = iter(jax.random.split(key, 64))

    def nrm(shape, scale):
        return scale * jax.random.normal(next(keys), shape, jnp.float32)

    def bn(ch):
        gamma = 1.0 + 0.1 * jax.random.normal(next(keys), (ch,), jnp.float32)
        beta = 0.1 * jax.random.normal(next(keys), (ch,), jnp.float32)
        mean = 0.1 * jax.random.normal(next(keys), (ch,), jnp.float32)
        var = jnp.abs(1.0 + 0.1 * jax.random.normal(next(keys), (ch,), jnp.float32))
        s = gamma / jnp.sqrt(var + BN_EPS)
        t = beta - mean * s
        return s, t

    def conv1x1_bn(cin, cout, with_bn=True):
        wmat = nrm((cin, cout), 1.0 / np.sqrt(cin))
        b = nrm((cout,), 0.05)
        if with_bn:
            s, t = bn(cout)
            wmat, b = wmat * s, b * s + t
        return wmat, b.reshape(1, cout)

    def conv3x3_bn(cin, cout):
        # taps stacked along rows: rows [t*cin:(t+1)*cin] = tap t = (ky, kx)
        wmat = nrm((9 * cin, cout), 1.0 / np.sqrt(9 * cin))
        b = nrm((cout,), 0.05)
        s, t = bn(cout)
        return wmat * s, (b * s + t).reshape(1, cout)

    p = {}
    # self.conv : Conv1x1(2C->C)+BN, Conv3x3+BN, Conv3x3+BN, ReLU
    p["w1"], p["b1"] = conv1x1_bn(c2, c)
    p["w2"], p["b2"] = conv3x3_bn(c, c)
    p["w3"], p["b3"] = conv3x3_bn(c, c)
    # self.conv3 : Conv1x1(C->C)+BN, Conv3x3+BN, Conv3x3+BN, ReLU
    p["w4"], p["b4"] = conv1x1_bn(c, c)
    p["w5"], p["b5"] = conv3x3_bn(c, c)
    p["w6"], p["b6"] = conv3x3_bn(c, c)
    # self.weight : Conv1x1(C->C/16)+BN+ReLU, Conv1x1(C/16->C)+Sigmoid
    p["wa"], p["ba"] = conv1x1_bn(c, cs)
    p["wb"], p["bb"] = conv1x1_bn(cs, c, with_bn=False)
    # self.norm : BatchNorm2d(C)
    nsc, nsh = bn(c)
    p["nsc"], p["nsh"] = nsc.reshape(1, c), nsh.reshape(1, c)
    # self.out : Conv3x3(2C->C)+BN+ReLU on cat([H, L]) (weight kept unsplit)
    p["wo"], p["bo"] = conv3x3_bn(c2, c)
    return p


# ----------------------------------------------------------------------------
# Pure-JAX reference (jnp.fft based) for validation
# ----------------------------------------------------------------------------
def _ref_conv1x1(x, wmat, b):
    return jnp.einsum("nhwi,io->nhwo", x, wmat, precision=_HI) + b.reshape(1, 1, 1, -1)


def _ref_conv3x3(x, wstack, b):
    n, h, w, cin = x.shape
    cout = wstack.shape[1]
    xp = jnp.pad(x, ((0, 0), (1, 1), (1, 1), (0, 0)))
    y = jnp.zeros((n, h, w, cout), jnp.float32)
    for ky in range(3):
        for kx in range(3):
            t = ky * 3 + kx
            y = y + jnp.einsum("nhwi,io->nhwo", xp[:, ky:ky + h, kx:kx + w, :],
                               wstack[t * cin:(t + 1) * cin], precision=_HI)
    return y + b.reshape(1, 1, 1, -1)


def module3_reference(hin, lin, p):
    cat = jnp.concatenate([hin, lin], axis=-1)
    x = _ref_conv1x1(cat, p["w1"], p["b1"])
    x = _ref_conv3x3(x, p["w2"], p["b2"])
    x = _ref_conv3x3(x, p["w3"], p["b3"])
    os_feat = jax.nn.relu(x)

    y = _ref_conv1x1(os_feat, p["w4"], p["b4"])
    y = _ref_conv3x3(y, p["w5"], p["b5"])
    y = _ref_conv3x3(y, p["w6"], p["b6"])
    l_feat = jax.nn.relu(y)

    f = jnp.fft.fft2(os_feat, axes=(1, 2))
    se = jax.nn.relu(_ref_conv1x1(jnp.real(f), p["wa"], p["ba"]))
    wt = jax.nn.sigmoid(_ref_conv1x1(se, p["wb"], p["bb"]))
    inv = jnp.fft.ifft2(f * wt, axes=(1, 2))
    h_feat = jax.nn.relu(jnp.abs(inv) * p["nsc"].reshape(1, 1, 1, -1)
                         + p["nsh"].reshape(1, 1, 1, -1))

    g_l = jax.nn.sigmoid(l_feat)
    g_h = jax.nn.sigmoid(h_feat)
    l_new = lin + lin * g_l + (1.0 - g_l) * g_h * h_feat
    h_new = hin + hin * g_h + (1.0 - g_h) * g_l * l_new

    z = _ref_conv3x3(jnp.concatenate([h_new, l_new], axis=-1), p["wo"], p["bo"])
    return jax.nn.relu(z)


# ----------------------------------------------------------------------------
if __name__ == "__main__":
    key = jax.random.PRNGKey(0)
    k_h, k_l, k_p = jax.random.split(key, 3)

    # torch reference shapes [2, 32, 8, 8] (NCHW)  ->  here NHWC [2, 8, 8, 32]
    N, H, W, C = 2, 8, 8, 32
    hin_feature = jax.random.normal(k_h, (N, H, W, C), jnp.float32)
    lin_feature = jax.random.normal(k_l, (N, H, W, C), jnp.float32)
    params = make_params(k_p, C)

    # Production path: bf16 MXU operands, f32 accumulation, single fused invocation.
    fwd = jax.jit(functools.partial(module3_forward, exact=False))
    out = jax.block_until_ready(fwd(hin_feature, lin_feature, params))
    assert out.shape == (N, H, W, C), out.shape
    assert bool(jnp.all(jnp.isfinite(out)))

    ref = module3_reference(hin_feature, lin_feature, params)

    # Structural check: same kernel with f32 operands / HIGHEST dots must match the
    # jnp.fft-based reference tightly (validates rolls/masks/im2col/DFT/BN folding).
    fwd_exact = jax.jit(functools.partial(module3_forward, exact=True))
    out_exact = jax.block_until_ready(fwd_exact(hin_feature, lin_feature, params))
    err_exact = float(jnp.max(jnp.abs(out_exact - ref)))
    assert err_exact < 2e-2, f"f32-path max abs error vs reference: {err_exact}"

    # Numerical sanity of the fast bf16 path (operands rounded to bf16, f32 accumulate).
    err_max = float(jnp.max(jnp.abs(out - ref)))
    err_mean = float(jnp.mean(jnp.abs(out - ref)))
    assert err_max < 0.30 and err_mean < 0.03, (err_max, err_mean)

    print("KERNEL_OK")
</pallas_src>

<mosaic_0001>
module attributes {stable_mosaic.version = 11 : i64} {
  func.func @_module3_kernel(%arg0: memref<128x32xf32, #tpu.memory_space<vmem>>, %arg1: memref<128x32xf32, #tpu.memory_space<vmem>>, %arg2: memref<128x9xf32, #tpu.memory_space<vmem>>, %arg3: memref<256x128xbf16, #tpu.memory_space<vmem>>, %arg4: memref<256x256xbf16, #tpu.memory_space<vmem>>, %arg5: memref<64x32xbf16, #tpu.memory_space<vmem>>, %arg6: memref<1x32xf32, #tpu.memory_space<vmem>>, %arg7: memref<288x32xbf16, #tpu.memory_space<vmem>>, %arg8: memref<1x32xf32, #tpu.memory_space<vmem>>, %arg9: memref<288x32xbf16, #tpu.memory_space<vmem>>, %arg10: memref<1x32xf32, #tpu.memory_space<vmem>>, %arg11: memref<32x32xbf16, #tpu.memory_space<vmem>>, %arg12: memref<1x32xf32, #tpu.memory_space<vmem>>, %arg13: memref<288x32xbf16, #tpu.memory_space<vmem>>, %arg14: memref<1x32xf32, #tpu.memory_space<vmem>>, %arg15: memref<288x32xbf16, #tpu.memory_space<vmem>>, %arg16: memref<1x32xf32, #tpu.memory_space<vmem>>, %arg17: memref<32x2xbf16, #tpu.memory_space<vmem>>, %arg18: memref<1x2xf32, #tpu.memory_space<vmem>>, %arg19: memref<2x32xbf16, #tpu.memory_space<vmem>>, %arg20: memref<1x32xf32, #tpu.memory_space<vmem>>, %arg21: memref<1x32xf32, #tpu.memory_space<vmem>>, %arg22: memref<1x32xf32, #tpu.memory_space<vmem>>, %arg23: memref<576x32xbf16, #tpu.memory_space<vmem>>, %arg24: memref<1x32xf32, #tpu.memory_space<vmem>>, %arg25: memref<128x32xf32, #tpu.memory_space<vmem>>) attributes {dimension_semantics = [], scalar_prefetch = 0 : i64, scratch_operands = 0 : i64, tpu.core_type = #tpu.core_type<tc>} {
    %c0 = arith.constant 0 : index
    %c0_0 = arith.constant 0 : index
    %0 = vector.load %arg2[%c0, %c0_0] : memref<128x9xf32, #tpu.memory_space<vmem>>, vector<128x9xf32>
    %c0_1 = arith.constant 0 : index
    %c0_2 = arith.constant 0 : index
    %1 = vector.load %arg0[%c0_1, %c0_2] : memref<128x32xf32, #tpu.memory_space<vmem>>, vector<128x32xf32>
    %c0_3 = arith.constant 0 : index
    %c0_4 = arith.constant 0 : index
    %2 = vector.load %arg1[%c0_3, %c0_4] : memref<128x32xf32, #tpu.memory_space<vmem>>, vector<128x32xf32>
    %3 = tpu.concatenate %1, %2 in 1 : vector<128x32xf32>, vector<128x32xf32> -> vector<128x64xf32>
    %c0_5 = arith.constant 0 : index
    %c0_6 = arith.constant 0 : index
    %4 = vector.load %arg5[%c0_5, %c0_6] : memref<64x32xbf16, #tpu.memory_space<vmem>>, vector<64x32xbf16>
    %5 = arith.truncf %3 : vector<128x64xf32> to vector<128x64xbf16>
    %cst = arith.constant dense<0.000000e+00> : vector<128x32xf32>
    %6 = tpu.matmul %5, %4, %cst {dimension_numbers = #tpu.dot_dimension_numbers<[1], [0], [0], [1], [0, 0, 1, 1], [], []>} : vector<128x64xbf16>, vector<64x32xbf16>, vector<128x32xf32> -> vector<128x32xf32>
    %c0_7 = arith.constant 0 : index
    %c0_8 = arith.constant 0 : index
    %7 = vector.load %arg6[%c0_7, %c0_8] : memref<1x32xf32, #tpu.memory_space<vmem>>, vector<1x32xf32>
    %8 = vector.broadcast %7 : vector<1x32xf32> to vector<128x32xf32>
    %9 = arith.addf %6, %8 : vector<128x32xf32>
    %c0_9 = arith.constant 0 : index
    %c0_10 = arith.constant 0 : index
    %10 = vector.load %arg7[%c0_9, %c0_10] : memref<288x32xbf16, #tpu.memory_space<vmem>>, vector<288x32xbf16>
    %c0_11 = arith.constant 0 : index
    %c0_12 = arith.constant 0 : index
    %11 = vector.load %arg8[%c0_11, %c0_12] : memref<1x32xf32, #tpu.memory_space<vmem>>, vector<1x32xf32>
    %12 = vector.extract_strided_slice %9 {offsets = [119, 0], sizes = [9, 32], strides = [1, 1]} : vector<128x32xf32> to vector<9x32xf32>
    %13 = vector.extract_strided_slice %9 {offsets = [0, 0], sizes = [119, 32], strides = [1, 1]} : vector<128x32xf32> to vector<119x32xf32>
    %14 = tpu.concatenate %12, %13 in 0 : vector<9x32xf32>, vector<119x32xf32> -> vector<128x32xf32>
    %15 = vector.extract_strided_slice %0 {offsets = [0, 0], sizes = [128, 1], strides = [1, 1]} : vector<128x9xf32> to vector<128x1xf32>
    %16 = vector.broadcast %15 : vector<128x1xf32> to vector<128x32xf32>
    %17 = arith.mulf %14, %16 : vector<128x32xf32>
    %18 = arith.truncf %17 : vector<128x32xf32> to vector<128x32xbf16>
    %19 = vector.extract_strided_slice %9 {offsets = [120, 0], sizes = [8, 32], strides = [1, 1]} : vector<128x32xf32> to vector<8x32xf32>
    %20 = vector.extract_strided_slice %9 {offsets = [0, 0], sizes = [120, 32], strides = [1, 1]} : vector<128x32xf32> to vector<120x32xf32>
    %21 = tpu.concatenate %19, %20 in 0 : vector<8x32xf32>, vector<120x32xf32> -> vector<128x32xf32>
    %22 = vector.extract_strided_slice %0 {offsets = [0, 1], sizes = [128, 1], strides = [1, 1]} : vector<128x9xf32> to vector<128x1xf32>
    %23 = vector.broadcast %22 : vector<128x1xf32> to vector<128x32xf32>
    %24 = arith.mulf %21, %23 : vector<128x32xf32>
    %25 = arith.truncf %24 : vector<128x32xf32> to vector<128x32xbf16>
    %26 = vector.extract_strided_slice %9 {offsets = [121, 0], sizes = [7, 32], strides = [1, 1]} : vector<128x32xf32> to vector<7x32xf32>
    %27 = vector.extract_strided_slice %9 {offsets = [0, 0], sizes = [121, 32], strides = [1, 1]} : vector<128x32xf32> to vector<121x32xf32>
    %28 = tpu.concatenate %26, %27 in 0 : vector<7x32xf32>, vector<121x32xf32> -> vector<128x32xf32>
    %29 = vector.extract_strided_slice %0 {offsets = [0, 2], sizes = [128, 1], strides = [1, 1]} : vector<128x9xf32> to vector<128x1xf32>
    %30 = vector.broadcast %29 : vector<128x1xf32> to vector<128x32xf32>
    %31 = arith.mulf %28, %30 : vector<128x32xf32>
    %32 = arith.truncf %31 : vector<128x32xf32> to vector<128x32xbf16>
    %33 = vector.extract_strided_slice %9 {offsets = [127, 0], sizes = [1, 32], strides = [1, 1]} : vector<128x32xf32> to vector<1x32xf32>
    %34 = vector.extract_strided_slice %9 {offsets = [0, 0], sizes = [127, 32], strides = [1, 1]} : vector<128x32xf32> to vector<127x32xf32>
    %35 = tpu.concatenate %33, %34 in 0 : vector<1x32xf32>, vector<127x32xf32> -> vector<128x32xf32>
    %36 = vector.extract_strided_slice %0 {offsets = [0, 3], sizes = [128, 1], strides = [1, 1]} : vector<128x9xf32> to vector<128x1xf32>
    %37 = vector.broadcast %36 : vector<128x1xf32> to vector<128x32xf32>
    %38 = arith.mulf %35, %37 : vector<128x32xf32>
    %39 = arith.truncf %38 : vector<128x32xf32> to vector<128x32xbf16>
    %40 = vector.extract_strided_slice %0 {offsets = [0, 4], sizes = [128, 1], strides = [1, 1]} : vector<128x9xf32> to vector<128x1xf32>
    %41 = vector.broadcast %40 : vector<128x1xf32> to vector<128x32xf32>
    %42 = arith.mulf %9, %41 : vector<128x32xf32>
    %43 = arith.truncf %42 : vector<128x32xf32> to vector<128x32xbf16>
    %44 = vector.extract_strided_slice %9 {offsets = [1, 0], sizes = [127, 32], strides = [1, 1]} : vector<128x32xf32> to vector<127x32xf32>
    %45 = vector.extract_strided_slice %9 {offsets = [0, 0], sizes = [1, 32], strides = [1, 1]} : vector<128x32xf32> to vector<1x32xf32>
    %46 = tpu.concatenate %44, %45 in 0 : vector<127x32xf32>, vector<1x32xf32> -> vector<128x32xf32>
    %47 = vector.extract_strided_slice %0 {offsets = [0, 5], sizes = [128, 1], strides = [1, 1]} : vector<128x9xf32> to vector<128x1xf32>
    %48 = vector.broadcast %47 : vector<128x1xf32> to vector<128x32xf32>
    %49 = arith.mulf %46, %48 : vector<128x32xf32>
    %50 = arith.truncf %49 : vector<128x32xf32> to vector<128x32xbf16>
    %51 = vector.extract_strided_slice %9 {offsets = [7, 0], sizes = [121, 32], strides = [1, 1]} : vector<128x32xf32> to vector<121x32xf32>
    %52 = vector.extract_strided_slice %9 {offsets = [0, 0], sizes = [7, 32], strides = [1, 1]} : vector<128x32xf32> to vector<7x32xf32>
    %53 = tpu.concatenate %51, %52 in 0 : vector<121x32xf32>, vector<7x32xf32> -> vector<128x32xf32>
    %54 = vector.extract_strided_slice %0 {offsets = [0, 6], sizes = [128, 1], strides = [1, 1]} : vector<128x9xf32> to vector<128x1xf32>
    %55 = vector.broadcast %54 : vector<128x1xf32> to vector<128x32xf32>
    %56 = arith.mulf %53, %55 : vector<128x32xf32>
    %57 = arith.truncf %56 : vector<128x32xf32> to vector<128x32xbf16>
    %58 = vector.extract_strided_slice %9 {offsets = [8, 0], sizes = [120, 32], strides = [1, 1]} : vector<128x32xf32> to vector<120x32xf32>
    %59 = vector.extract_strided_slice %9 {offsets = [0, 0], sizes = [8, 32], strides = [1, 1]} : vector<128x32xf32> to vector<8x32xf32>
    %60 = tpu.concatenate %58, %59 in 0 : vector<120x32xf32>, vector<8x32xf32> -> vector<128x32xf32>
    %61 = vector.extract_strided_slice %0 {offsets = [0, 7], sizes = [128, 1], strides = [1, 1]} : vector<128x9xf32> to vector<128x1xf32>
    %62 = vector.broadcast %61 : vector<128x1xf32> to vector<128x32xf32>
    %63 = arith.mulf %60, %62 : vector<128x32xf32>
    %64 = arith.truncf %63 : vector<128x32xf32> to vector<128x32xbf16>
    %65 = vector.extract_strided_slice %9 {offsets = [9, 0], sizes = [119, 32], strides = [1, 1]} : vector<128x32xf32> to vector<119x32xf32>
    %66 = vector.extract_strided_slice %9 {offsets = [0, 0], sizes = [9, 32], strides = [1, 1]} : vector<128x32xf32> to vector<9x32xf32>
    %67 = tpu.concatenate %65, %66 in 0 : vector<119x32xf32>, vector<9x32xf32> -> vector<128x32xf32>
    %68 = vector.extract_strided_slice %0 {offsets = [0, 8], sizes = [128, 1], strides = [1, 1]} : vector<128x9xf32> to vector<128x1xf32>
    %69 = vector.broadcast %68 : vector<128x1xf32> to vector<128x32xf32>
    %70 = arith.mulf %67, %69 : vector<128x32xf32>
    %71 = arith.truncf %70 : vector<128x32xf32> to vector<128x32xbf16>
    %72 = tpu.concatenate %18, %25, %32, %39, %43, %50, %57, %64, %71 in 1 : vector<128x32xbf16>, vector<128x32xbf16>, vector<128x32xbf16>, vector<128x32xbf16>, vector<128x32xbf16>, vector<128x32xbf16>, vector<128x32xbf16>, vector<128x32xbf16>, vector<128x32xbf16> -> vector<128x288xbf16>
    %cst_13 = arith.constant dense<0.000000e+00> : vector<128x32xf32>
    %73 = tpu.matmul %72, %10, %cst_13 {dimension_numbers = #tpu.dot_dimension_numbers<[1], [0], [0], [1], [0, 0, 1, 1], [], []>} : vector<128x288xbf16>, vector<288x32xbf16>, vector<128x32xf32> -> vector<128x32xf32>
    %74 = vector.broadcast %11 : vector<1x32xf32> to vector<128x32xf32>
    %75 = arith.addf %73, %74 : vector<128x32xf32>
    %c0_14 = arith.constant 0 : index
    %c0_15 = arith.constant 0 : index
    %76 = vector.load %arg9[%c0_14, %c0_15] : memref<288x32xbf16, #tpu.memory_space<vmem>>, vector<288x32xbf16>
    %c0_16 = arith.constant 0 : index
    %c0_17 = arith.constant 0 : index
    %77 = vector.load %arg10[%c0_16, %c0_17] : memref<1x32xf32, #tpu.memory_space<vmem>>, vector<1x32xf32>
    %78 = vector.extract_strided_slice %75 {offsets = [119, 0], sizes = [9, 32], strides = [1, 1]} : vector<128x32xf32> to vector<9x32xf32>
    %79 = vector.extract_strided_slice %75 {offsets = [0, 0], sizes = [119, 32], strides = [1, 1]} : vector<128x32xf32> to vector<119x32xf32>
    %80 = tpu.concatenate %78, %79 in 0 : vector<9x32xf32>, vector<119x32xf32> -> vector<128x32xf32>
    %81 = vector.extract_strided_slice %0 {offsets = [0, 0], sizes = [128, 1], strides = [1, 1]} : vector<128x9xf32> to vector<128x1xf32>
    %82 = vector.broadcast %81 : vector<128x1xf32> to vector<128x32xf32>
    %83 = arith.mulf %80, %82 : vector<128x32xf32>
    %84 = arith.truncf %83 : vector<128x32xf32> to vector<128x32xbf16>
    %85 = vector.extract_strided_slice %75 {offsets = [120, 0], sizes = [8, 32], strides = [1, 1]} : vector<128x32xf32> to vector<8x32xf32>
    %86 = vector.extract_strided_slice %75 {offsets = [0, 0], sizes = [120, 32], strides = [1, 1]} : vector<128x32xf32> to vector<120x32xf32>
    %87 = tpu.concatenate %85, %86 in 0 : vector<8x32xf32>, vector<120x32xf32> -> vector<128x32xf32>
    %88 = vector.extract_strided_slice %0 {offsets = [0, 1], sizes = [128, 1], strides = [1, 1]} : vector<128x9xf32> to vector<128x1xf32>
    %89 = vector.broadcast %88 : vector<128x1xf32> to vector<128x32xf32>
    %90 = arith.mulf %87, %89 : vector<128x32xf32>
    %91 = arith.truncf %90 : vector<128x32xf32> to vector<128x32xbf16>
    %92 = vector.extract_strided_slice %75 {offsets = [121, 0], sizes = [7, 32], strides = [1, 1]} : vector<128x32xf32> to vector<7x32xf32>
    %93 = vector.extract_strided_slice %75 {offsets = [0, 0], sizes = [121, 32], strides = [1, 1]} : vector<128x32xf32> to vector<121x32xf32>
    %94 = tpu.concatenate %92, %93 in 0 : vector<7x32xf32>, vector<121x32xf32> -> vector<128x32xf32>
    %95 = vector.extract_strided_slice %0 {offsets = [0, 2], sizes = [128, 1], strides = [1, 1]} : vector<128x9xf32> to vector<128x1xf32>
    %96 = vector.broadcast %95 : vector<128x1xf32> to vector<128x32xf32>
    %97 = arith.mulf %94, %96 : vector<128x32xf32>
    %98 = arith.truncf %97 : vector<128x32xf32> to vector<128x32xbf16>
    %99 = vector.extract_strided_slice %75 {offsets = [127, 0], sizes = [1, 32], strides = [1, 1]} : vector<128x32xf32> to vector<1x32xf32>
    %100 = vector.extract_strided_slice %75 {offsets = [0, 0], sizes = [127, 32], strides = [1, 1]} : vector<128x32xf32> to vector<127x32xf32>
    %101 = tpu.concatenate %99, %100 in 0 : vector<1x32xf32>, vector<127x32xf32> -> vector<128x32xf32>
    %102 = vector.extract_strided_slice %0 {offsets = [0, 3], sizes = [128, 1], strides = [1, 1]} : vector<128x9xf32> to vector<128x1xf32>
    %103 = vector.broadcast %102 : vector<128x1xf32> to vector<128x32xf32>
    %104 = arith.mulf %101, %103 : vector<128x32xf32>
    %105 = arith.truncf %104 : vector<128x32xf32> to vector<128x32xbf16>
    %106 = vector.extract_strided_slice %0 {offsets = [0, 4], sizes = [128, 1], strides = [1, 1]} : vector<128x9xf32> to vector<128x1xf32>
    %107 = vector.broadcast %106 : vector<128x1xf32> to vector<128x32xf32>
    %108 = arith.mulf %75, %107 : vector<128x32xf32>
    %109 = arith.truncf %108 : vector<128x32xf32> to vector<128x32xbf16>
    %110 = vector.extract_strided_slice %75 {offsets = [1, 0], sizes = [127, 32], strides = [1, 1]} : vector<128x32xf32> to vector<127x32xf32>
    %111 = vector.extract_strided_slice %75 {offsets = [0, 0], sizes = [1, 32], strides = [1, 1]} : vector<128x32xf32> to vector<1x32xf32>
    %112 = tpu.concatenate %110, %111 in 0 : vector<127x32xf32>, vector<1x32xf32> -> vector<128x32xf32>
    %113 = vector.extract_strided_slice %0 {offsets = [0, 5], sizes = [128, 1], strides = [1, 1]} : vector<128x9xf32> to vector<128x1xf32>
    %114 = vector.broadcast %113 : vector<128x1xf32> to vector<128x32xf32>
    %115 = arith.mulf %112, %114 : vector<128x32xf32>
    %116 = arith.truncf %115 : vector<128x32xf32> to vector<128x32xbf16>
    %117 = vector.extract_strided_slice %75 {offsets = [7, 0], sizes = [121, 32], strides = [1, 1]} : vector<128x32xf32> to vector<121x32xf32>
    %118 = vector.extract_strided_slice %75 {offsets = [0, 0], sizes = [7, 32], strides = [1, 1]} : vector<128x32xf32> to vector<7x32xf32>
    %119 = tpu.concatenate %117, %118 in 0 : vector<121x32xf32>, vector<7x32xf32> -> vector<128x32xf32>
    %120 = vector.extract_strided_slice %0 {offsets = [0, 6], sizes = [128, 1], strides = [1, 1]} : vector<128x9xf32> to vector<128x1xf32>
    %121 = vector.broadcast %120 : vector<128x1xf32> to vector<128x32xf32>
    %122 = arith.mulf %119, %121 : vector<128x32xf32>
    %123 = arith.truncf %122 : vector<128x32xf32> to vector<128x32xbf16>
    %124 = vector.extract_strided_slice %75 {offsets = [8, 0], sizes = [120, 32], strides = [1, 1]} : vector<128x32xf32> to vector<120x32xf32>
    %125 = vector.extract_strided_slice %75 {offsets = [0, 0], sizes = [8, 32], strides = [1, 1]} : vector<128x32xf32> to vector<8x32xf32>
    %126 = tpu.concatenate %124, %125 in 0 : vector<120x32xf32>, vector<8x32xf32> -> vector<128x32xf32>
    %127 = vector.extract_strided_slice %0 {offsets = [0, 7], sizes = [128, 1], strides = [1, 1]} : vector<128x9xf32> to vector<128x1xf32>
    %128 = vector.broadcast %127 : vector<128x1xf32> to vector<128x32xf32>
    %129 = arith.mulf %126, %128 : vector<128x32xf32>
    %130 = arith.truncf %129 : vector<128x32xf32> to vector<128x32xbf16>
    %131 = vector.extract_strided_slice %75 {offsets = [9, 0], sizes = [119, 32], strides = [1, 1]} : vector<128x32xf32> to vector<119x32xf32>
    %132 = vector.extract_strided_slice %75 {offsets = [0, 0], sizes = [9, 32], strides = [1, 1]} : vector<128x32xf32> to vector<9x32xf32>
    %133 = tpu.concatenate %131, %132 in 0 : vector<119x32xf32>, vector<9x32xf32> -> vector<128x32xf32>
    %134 = vector.extract_strided_slice %0 {offsets = [0, 8], sizes = [128, 1], strides = [1, 1]} : vector<128x9xf32> to vector<128x1xf32>
    %135 = vector.broadcast %134 : vector<128x1xf32> to vector<128x32xf32>
    %136 = arith.mulf %133, %135 : vector<128x32xf32>
    %137 = arith.truncf %136 : vector<128x32xf32> to vector<128x32xbf16>
    %138 = tpu.concatenate %84, %91, %98, %105, %109, %116, %123, %130, %137 in 1 : vector<128x32xbf16>, vector<128x32xbf16>, vector<128x32xbf16>, vector<128x32xbf16>, vector<128x32xbf16>, vector<128x32xbf16>, vector<128x32xbf16>, vector<128x32xbf16>, vector<128x32xbf16> -> vector<128x288xbf16>
    %cst_18 = arith.constant dense<0.000000e+00> : vector<128x32xf32>
    %139 = tpu.matmul %138, %76, %cst_18 {dimension_numbers = #tpu.dot_dimension_numbers<[1], [0], [0], [1], [0, 0, 1, 1], [], []>} : vector<128x288xbf16>, vector<288x32xbf16>, vector<128x32xf32> -> vector<128x32xf32>
    %140 = vector.broadcast %77 : vector<1x32xf32> to vector<128x32xf32>
    %141 = arith.addf %139, %140 : vector<128x32xf32>
    %cst_19 = arith.constant 0.000000e+00 : f32
    %142 = vector.broadcast %cst_19 : f32 to vector<128x32xf32>
    %143 = arith.maximumf %141, %142 : vector<128x32xf32>
    %c0_20 = arith.constant 0 : index
    %c0_21 = arith.constant 0 : index
    %144 = vector.load %arg11[%c0_20, %c0_21] : memref<32x32xbf16, #tpu.memory_space<vmem>>, vector<32x32xbf16>
    %145 = arith.truncf %143 : vector<128x32xf32> to vector<128x32xbf16>
    %cst_22 = arith.constant dense<0.000000e+00> : vector<128x32xf32>
    %146 = tpu.matmul %145, %144, %cst_22 {dimension_numbers = #tpu.dot_dimension_numbers<[1], [0], [0], [1], [0, 0, 1, 1], [], []>} : vector<128x32xbf16>, vector<32x32xbf16>, vector<128x32xf32> -> vector<128x32xf32>
    %c0_23 = arith.constant 0 : index
    %c0_24 = arith.constant 0 : index
    %147 = vector.load %arg12[%c0_23, %c0_24] : memref<1x32xf32, #tpu.memory_space<vmem>>, vector<1x32xf32>
    %148 = vector.broadcast %147 : vector<1x32xf32> to vector<128x32xf32>
    %149 = arith.addf %146, %148 : vector<128x32xf32>
    %c0_25 = arith.constant 0 : index
    %c0_26 = arith.constant 0 : index
    %150 = vector.load %arg13[%c0_25, %c0_26] : memref<288x32xbf16, #tpu.memory_space<vmem>>, vector<288x32xbf16>
    %c0_27 = arith.constant 0 : index
    %c0_28 = arith.constant 0 : index
    %151 = vector.load %arg14[%c0_27, %c0_28] : memref<1x32xf32, #tpu.memory_space<vmem>>, vector<1x32xf32>
    %152 = vector.extract_strided_slice %149 {offsets = [119, 0], sizes = [9, 32], strides = [1, 1]} : vector<128x32xf32> to vector<9x32xf32>
    %153 = vector.extract_strided_slice %149 {offsets = [0, 0], sizes = [119, 32], strides = [1, 1]} : vector<128x32xf32> to vector<119x32xf32>
    %154 = tpu.concatenate %152, %153 in 0 : vector<9x32xf32>, vector<119x32xf32> -> vector<128x32xf32>
    %155 = vector.extract_strided_slice %0 {offsets = [0, 0], sizes = [128, 1], strides = [1, 1]} : vector<128x9xf32> to vector<128x1xf32>
    %156 = vector.broadcast %155 : vector<128x1xf32> to vector<128x32xf32>
    %157 = arith.mulf %154, %156 : vector<128x32xf32>
    %158 = arith.truncf %157 : vector<128x32xf32> to vector<128x32xbf16>
    %159 = vector.extract_strided_slice %149 {offsets = [120, 0], sizes = [8, 32], strides = [1, 1]} : vector<128x32xf32> to vector<8x32xf32>
    %160 = vector.extract_strided_slice %149 {offsets = [0, 0], sizes = [120, 32], strides = [1, 1]} : vector<128x32xf32> to vector<120x32xf32>
    %161 = tpu.concatenate %159, %160 in 0 : vector<8x32xf32>, vector<120x32xf32> -> vector<128x32xf32>
    %162 = vector.extract_strided_slice %0 {offsets = [0, 1], sizes = [128, 1], strides = [1, 1]} : vector<128x9xf32> to vector<128x1xf32>
    %163 = vector.broadcast %162 : vector<128x1xf32> to vector<128x32xf32>
    %164 = arith.mulf %161, %163 : vector<128x32xf32>
    %165 = arith.truncf %164 : vector<128x32xf32> to vector<128x32xbf16>
    %166 = vector.extract_strided_slice %149 {offsets = [121, 0], sizes = [7, 32], strides = [1, 1]} : vector<128x32xf32> to vector<7x32xf32>
    %167 = vector.extract_strided_slice %149 {offsets = [0, 0], sizes = [121, 32], strides = [1, 1]} : vector<128x32xf32> to vector<121x32xf32>
    %168 = tpu.concatenate %166, %167 in 0 : vector<7x32xf32>, vector<121x32xf32> -> vector<128x32xf32>
    %169 = vector.extract_strided_slice %0 {offsets = [0, 2], sizes = [128, 1], strides = [1, 1]} : vector<128x9xf32> to vector<128x1xf32>
    %170 = vector.broadcast %169 : vector<128x1xf32> to vector<128x32xf32>
    %171 = arith.mulf %168, %170 : vector<128x32xf32>
    %172 = arith.truncf %171 : vector<128x32xf32> to vector<128x32xbf16>
    %173 = vector.extract_strided_slice %149 {offsets = [127, 0], sizes = [1, 32], strides = [1, 1]} : vector<128x32xf32> to vector<1x32xf32>
    %174 = vector.extract_strided_slice %149 {offsets = [0, 0], sizes = [127, 32], strides = [1, 1]} : vector<128x32xf32> to vector<127x32xf32>
    %175 = tpu.concatenate %173, %174 in 0 : vector<1x32xf32>, vector<127x32xf32> -> vector<128x32xf32>
    %176 = vector.extract_strided_slice %0 {offsets = [0, 3], sizes = [128, 1], strides = [1, 1]} : vector<128x9xf32> to vector<128x1xf32>
    %177 = vector.broadcast %176 : vector<128x1xf32> to vector<128x32xf32>
    %178 = arith.mulf %175, %177 : vector<128x32xf32>
    %179 = arith.truncf %178 : vector<128x32xf32> to vector<128x32xbf16>
    %180 = vector.extract_strided_slice %0 {offsets = [0, 4], sizes = [128, 1], strides = [1, 1]} : vector<128x9xf32> to vector<128x1xf32>
    %181 = vector.broadcast %180 : vector<128x1xf32> to vector<128x32xf32>
    %182 = arith.mulf %149, %181 : vector<128x32xf32>
    %183 = arith.truncf %182 : vector<128x32xf32> to vector<128x32xbf16>
    %184 = vector.extract_strided_slice %149 {offsets = [1, 0], sizes = [127, 32], strides = [1, 1]} : vector<128x32xf32> to vector<127x32xf32>
    %185 = vector.extract_strided_slice %149 {offsets = [0, 0], sizes = [1, 32], strides = [1, 1]} : vector<128x32xf32> to vector<1x32xf32>
    %186 = tpu.concatenate %184, %185 in 0 : vector<127x32xf32>, vector<1x32xf32> -> vector<128x32xf32>
    %187 = vector.extract_strided_slice %0 {offsets = [0, 5], sizes = [128, 1], strides = [1, 1]} : vector<128x9xf32> to vector<128x1xf32>
    %188 = vector.broadcast %187 : vector<128x1xf32> to vector<128x32xf32>
    %189 = arith.mulf %186, %188 : vector<128x32xf32>
    %190 = arith.truncf %189 : vector<128x32xf32> to vector<128x32xbf16>
    %191 = vector.extract_strided_slice %149 {offsets = [7, 0], sizes = [121, 32], strides = [1, 1]} : vector<128x32xf32> to vector<121x32xf32>
    %192 = vector.extract_strided_slice %149 {offsets = [0, 0], sizes = [7, 32], strides = [1, 1]} : vector<128x32xf32> to vector<7x32xf32>
    %193 = tpu.concatenate %191, %192 in 0 : vector<121x32xf32>, vector<7x32xf32> -> vector<128x32xf32>
    %194 = vector.extract_strided_slice %0 {offsets = [0, 6], sizes = [128, 1], strides = [1, 1]} : vector<128x9xf32> to vector<128x1xf32>
    %195 = vector.broadcast %194 : vector<128x1xf32> to vector<128x32xf32>
    %196 = arith.mulf %193, %195 : vector<128x32xf32>
    %197 = arith.truncf %196 : vector<128x32xf32> to vector<128x32xbf16>
    %198 = vector.extract_strided_slice %149 {offsets = [8, 0], sizes = [120, 32], strides = [1, 1]} : vector<128x32xf32> to vector<120x32xf32>
    %199 = vector.extract_strided_slice %149 {offsets = [0, 0], sizes = [8, 32], strides = [1, 1]} : vector<128x32xf32> to vector<8x32xf32>
    %200 = tpu.concatenate %198, %199 in 0 : vector<120x32xf32>, vector<8x32xf32> -> vector<128x32xf32>
    %201 = vector.extract_strided_slice %0 {offsets = [0, 7], sizes = [128, 1], strides = [1, 1]} : vector<128x9xf32> to vector<128x1xf32>
    %202 = vector.broadcast %201 : vector<128x1xf32> to vector<128x32xf32>
    %203 = arith.mulf %200, %202 : vector<128x32xf32>
    %204 = arith.truncf %203 : vector<128x32xf32> to vector<128x32xbf16>
    %205 = vector.extract_strided_slice %149 {offsets = [9, 0], sizes = [119, 32], strides = [1, 1]} : vector<128x32xf32> to vector<119x32xf32>
    %206 = vector.extract_strided_slice %149 {offsets = [0, 0], sizes = [9, 32], strides = [1, 1]} : vector<128x32xf32> to vector<9x32xf32>
    %207 = tpu.concatenate %205, %206 in 0 : vector<119x32xf32>, vector<9x32xf32> -> vector<128x32xf32>
    %208 = vector.extract_strided_slice %0 {offsets = [0, 8], sizes = [128, 1], strides = [1, 1]} : vector<128x9xf32> to vector<128x1xf32>
    %209 = vector.broadcast %208 : vector<128x1xf32> to vector<128x32xf32>
    %210 = arith.mulf %207, %209 : vector<128x32xf32>
    %211 = arith.truncf %210 : vector<128x32xf32> to vector<128x32xbf16>
    %212 = tpu.concatenate %158, %165, %172, %179, %183, %190, %197, %204, %211 in 1 : vector<128x32xbf16>, vector<128x32xbf16>, vector<128x32xbf16>, vector<128x32xbf16>, vector<128x32xbf16>, vector<128x32xbf16>, vector<128x32xbf16>, vector<128x32xbf16>, vector<128x32xbf16> -> vector<128x288xbf16>
    %cst_29 = arith.constant dense<0.000000e+00> : vector<128x32xf32>
    %213 = tpu.matmul %212, %150, %cst_29 {dimension_numbers = #tpu.dot_dimension_numbers<[1], [0], [0], [1], [0, 0, 1, 1], [], []>} : vector<128x288xbf16>, vector<288x32xbf16>, vector<128x32xf32> -> vector<128x32xf32>
    %214 = vector.broadcast %151 : vector<1x32xf32> to vector<128x32xf32>
    %215 = arith.addf %213, %214 : vector<128x32xf32>
    %c0_30 = arith.constant 0 : index
    %c0_31 = arith.constant 0 : index
    %216 = vector.load %arg15[%c0_30, %c0_31] : memref<288x32xbf16, #tpu.memory_space<vmem>>, vector<288x32xbf16>
    %c0_32 = arith.constant 0 : index
    %c0_33 = arith.constant 0 : index
    %217 = vector.load %arg16[%c0_32, %c0_33] : memref<1x32xf32, #tpu.memory_space<vmem>>, vector<1x32xf32>
    %218 = vector.extract_strided_slice %215 {offsets = [119, 0], sizes = [9, 32], strides = [1, 1]} : vector<128x32xf32> to vector<9x32xf32>
    %219 = vector.extract_strided_slice %215 {offsets = [0, 0], sizes = [119, 32], strides = [1, 1]} : vector<128x32xf32> to vector<119x32xf32>
    %220 = tpu.concatenate %218, %219 in 0 : vector<9x32xf32>, vector<119x32xf32> -> vector<128x32xf32>
    %221 = vector.extract_strided_slice %0 {offsets = [0, 0], sizes = [128, 1], strides = [1, 1]} : vector<128x9xf32> to vector<128x1xf32>
    %222 = vector.broadcast %221 : vector<128x1xf32> to vector<128x32xf32>
    %223 = arith.mulf %220, %222 : vector<128x32xf32>
    %224 = arith.truncf %223 : vector<128x32xf32> to vector<128x32xbf16>
    %225 = vector.extract_strided_slice %215 {offsets = [120, 0], sizes = [8, 32], strides = [1, 1]} : vector<128x32xf32> to vector<8x32xf32>
    %226 = vector.extract_strided_slice %215 {offsets = [0, 0], sizes = [120, 32], strides = [1, 1]} : vector<128x32xf32> to vector<120x32xf32>
    %227 = tpu.concatenate %225, %226 in 0 : vector<8x32xf32>, vector<120x32xf32> -> vector<128x32xf32>
    %228 = vector.extract_strided_slice %0 {offsets = [0, 1], sizes = [128, 1], strides = [1, 1]} : vector<128x9xf32> to vector<128x1xf32>
    %229 = vector.broadcast %228 : vector<128x1xf32> to vector<128x32xf32>
    %230 = arith.mulf %227, %229 : vector<128x32xf32>
    %231 = arith.truncf %230 : vector<128x32xf32> to vector<128x32xbf16>
    %232 = vector.extract_strided_slice %215 {offsets = [121, 0], sizes = [7, 32], strides = [1, 1]} : vector<128x32xf32> to vector<7x32xf32>
    %233 = vector.extract_strided_slice %215 {offsets = [0, 0], sizes = [121, 32], strides = [1, 1]} : vector<128x32xf32> to vector<121x32xf32>
    %234 = tpu.concatenate %232, %233 in 0 : vector<7x32xf32>, vector<121x32xf32> -> vector<128x32xf32>
    %235 = vector.extract_strided_slice %0 {offsets = [0, 2], sizes = [128, 1], strides = [1, 1]} : vector<128x9xf32> to vector<128x1xf32>
    %236 = vector.broadcast %235 : vector<128x1xf32> to vector<128x32xf32>
    %237 = arith.mulf %234, %236 : vector<128x32xf32>
    %238 = arith.truncf %237 : vector<128x32xf32> to vector<128x32xbf16>
    %239 = vector.extract_strided_slice %215 {offsets = [127, 0], sizes = [1, 32], strides = [1, 1]} : vector<128x32xf32> to vector<1x32xf32>
    %240 = vector.extract_strided_slice %215 {offsets = [0, 0], sizes = [127, 32], strides = [1, 1]} : vector<128x32xf32> to vector<127x32xf32>
    %241 = tpu.concatenate %239, %240 in 0 : vector<1x32xf32>, vector<127x32xf32> -> vector<128x32xf32>
    %242 = vector.extract_strided_slice %0 {offsets = [0, 3], sizes = [128, 1], strides = [1, 1]} : vector<128x9xf32> to vector<128x1xf32>
    %243 = vector.broadcast %242 : vector<128x1xf32> to vector<128x32xf32>
    %244 = arith.mulf %241, %243 : vector<128x32xf32>
    %245 = arith.truncf %244 : vector<128x32xf32> to vector<128x32xbf16>
    %246 = vector.extract_strided_slice %0 {offsets = [0, 4], sizes = [128, 1], strides = [1, 1]} : vector<128x9xf32> to vector<128x1xf32>
    %247 = vector.broadcast %246 : vector<128x1xf32> to vector<128x32xf32>
    %248 = arith.mulf %215, %247 : vector<128x32xf32>
    %249 = arith.truncf %248 : vector<128x32xf32> to vector<128x32xbf16>
    %250 = vector.extract_strided_slice %215 {offsets = [1, 0], sizes = [127, 32], strides = [1, 1]} : vector<128x32xf32> to vector<127x32xf32>
    %251 = vector.extract_strided_slice %215 {offsets = [0, 0], sizes = [1, 32], strides = [1, 1]} : vector<128x32xf32> to vector<1x32xf32>
    %252 = tpu.concatenate %250, %251 in 0 : vector<127x32xf32>, vector<1x32xf32> -> vector<128x32xf32>
    %253 = vector.extract_strided_slice %0 {offsets = [0, 5], sizes = [128, 1], strides = [1, 1]} : vector<128x9xf32> to vector<128x1xf32>
    %254 = vector.broadcast %253 : vector<128x1xf32> to vector<128x32xf32>
    %255 = arith.mulf %252, %254 : vector<128x32xf32>
    %256 = arith.truncf %255 : vector<128x32xf32> to vector<128x32xbf16>
    %257 = vector.extract_strided_slice %215 {offsets = [7, 0], sizes = [121, 32], strides = [1, 1]} : vector<128x32xf32> to vector<121x32xf32>
    %258 = vector.extract_strided_slice %215 {offsets = [0, 0], sizes = [7, 32], strides = [1, 1]} : vector<128x32xf32> to vector<7x32xf32>
    %259 = tpu.concatenate %257, %258 in 0 : vector<121x32xf32>, vector<7x32xf32> -> vector<128x32xf32>
    %260 = vector.extract_strided_slice %0 {offsets = [0, 6], sizes = [128, 1], strides = [1, 1]} : vector<128x9xf32> to vector<128x1xf32>
    %261 = vector.broadcast %260 : vector<128x1xf32> to vector<128x32xf32>
    %262 = arith.mulf %259, %261 : vector<128x32xf32>
    %263 = arith.truncf %262 : vector<128x32xf32> to vector<128x32xbf16>
    %264 = vector.extract_strided_slice %215 {offsets = [8, 0], sizes = [120, 32], strides = [1, 1]} : vector<128x32xf32> to vector<120x32xf32>
    %265 = vector.extract_strided_slice %215 {offsets = [0, 0], sizes = [8, 32], strides = [1, 1]} : vector<128x32xf32> to vector<8x32xf32>
    %266 = tpu.concatenate %264, %265 in 0 : vector<120x32xf32>, vector<8x32xf32> -> vector<128x32xf32>
    %267 = vector.extract_strided_slice %0 {offsets = [0, 7], sizes = [128, 1], strides = [1, 1]} : vector<128x9xf32> to vector<128x1xf32>
    %268 = vector.broadcast %267 : vector<128x1xf32> to vector<128x32xf32>
    %269 = arith.mulf %266, %268 : vector<128x32xf32>
    %270 = arith.truncf %269 : vector<128x32xf32> to vector<128x32xbf16>
    %271 = vector.extract_strided_slice %215 {offsets = [9, 0], sizes = [119, 32], strides = [1, 1]} : vector<128x32xf32> to vector<119x32xf32>
    %272 = vector.extract_strided_slice %215 {offsets = [0, 0], sizes = [9, 32], strides = [1, 1]} : vector<128x32xf32> to vector<9x32xf32>
    %273 = tpu.concatenate %271, %272 in 0 : vector<119x32xf32>, vector<9x32xf32> -> vector<128x32xf32>
    %274 = vector.extract_strided_slice %0 {offsets = [0, 8], sizes = [128, 1], strides = [1, 1]} : vector<128x9xf32> to vector<128x1xf32>
    %275 = vector.broadcast %274 : vector<128x1xf32> to vector<128x32xf32>
    %276 = arith.mulf %273, %275 : vector<128x32xf32>
    %277 = arith.truncf %276 : vector<128x32xf32> to vector<128x32xbf16>
    %278 = tpu.concatenate %224, %231, %238, %245, %249, %256, %263, %270, %277 in 1 : vector<128x32xbf16>, vector<128x32xbf16>, vector<128x32xbf16>, vector<128x32xbf16>, vector<128x32xbf16>, vector<128x32xbf16>, vector<128x32xbf16>, vector<128x32xbf16>, vector<128x32xbf16> -> vector<128x288xbf16>
    %cst_34 = arith.constant dense<0.000000e+00> : vector<128x32xf32>
    %279 = tpu.matmul %278, %216, %cst_34 {dimension_numbers = #tpu.dot_dimension_numbers<[1], [0], [0], [1], [0, 0, 1, 1], [], []>} : vector<128x288xbf16>, vector<288x32xbf16>, vector<128x32xf32> -> vector<128x32xf32>
    %280 = vector.broadcast %217 : vector<1x32xf32> to vector<128x32xf32>
    %281 = arith.addf %279, %280 : vector<128x32xf32>
    %cst_35 = arith.constant 0.000000e+00 : f32
    %282 = vector.broadcast %cst_35 : f32 to vector<128x32xf32>
    %283 = arith.maximumf %281, %282 : vector<128x32xf32>
    %c0_36 = arith.constant 0 : index
    %c0_37 = arith.constant 0 : index
    %284 = vector.load %arg3[%c0_36, %c0_37] : memref<256x128xbf16, #tpu.memory_space<vmem>>, vector<256x128xbf16>
    %285 = arith.truncf %143 : vector<128x32xf32> to vector<128x32xbf16>
    %cst_38 = arith.constant dense<0.000000e+00> : vector<256x32xf32>
    %286 = tpu.matmul %284, %285, %cst_38 {dimension_numbers = #tpu.dot_dimension_numbers<[1], [0], [0], [1], [0, 0, 1, 1], [], []>} : vector<256x128xbf16>, vector<128x32xbf16>, vector<256x32xf32> -> vector<256x32xf32>
    %287 = vector.extract_strided_slice %286 {offsets = [0, 0], sizes = [128, 32], strides = [1, 1]} : vector<256x32xf32> to vector<128x32xf32>
    %c0_39 = arith.constant 0 : index
    %c0_40 = arith.constant 0 : index
    %288 = vector.load %arg17[%c0_39, %c0_40] : memref<32x2xbf16, #tpu.memory_space<vmem>>, vector<32x2xbf16>
    %289 = arith.truncf %287 : vector<128x32xf32> to vector<128x32xbf16>
    %cst_41 = arith.constant dense<0.000000e+00> : vector<128x2xf32>
    %290 = tpu.matmul %289, %288, %cst_41 {dimension_numbers = #tpu.dot_dimension_numbers<[1], [0], [0], [1], [0, 0, 1, 1], [], []>} : vector<128x32xbf16>, vector<32x2xbf16>, vector<128x2xf32> -> vector<128x2xf32>
    %c0_42 = arith.constant 0 : index
    %c0_43 = arith.constant 0 : index
    %291 = vector.load %arg18[%c0_42, %c0_43] : memref<1x2xf32, #tpu.memory_space<vmem>>, vector<1x2xf32>
    %292 = vector.broadcast %291 : vector<1x2xf32> to vector<128x2xf32>
    %293 = arith.addf %290, %292 : vector<128x2xf32>
    %cst_44 = arith.constant 0.000000e+00 : f32
    %294 = vector.broadcast %cst_44 : f32 to vector<128x2xf32>
    %295 = arith.maximumf %293, %294 : vector<128x2xf32>
    %c0_45 = arith.constant 0 : index
    %c0_46 = arith.constant 0 : index
    %296 = vector.load %arg19[%c0_45, %c0_46] : memref<2x32xbf16, #tpu.memory_space<vmem>>, vector<2x32xbf16>
    %297 = arith.truncf %295 : vector<128x2xf32> to vector<128x2xbf16>
    %cst_47 = arith.constant dense<0.000000e+00> : vector<128x32xf32>
    %298 = tpu.matmul %297, %296, %cst_47 {dimension_numbers = #tpu.dot_dimension_numbers<[1], [0], [0], [1], [0, 0, 1, 1], [], []>} : vector<128x2xbf16>, vector<2x32xbf16>, vector<128x32xf32> -> vector<128x32xf32>
    %c0_48 = arith.constant 0 : index
    %c0_49 = arith.constant 0 : index
    %299 = vector.load %arg20[%c0_48, %c0_49] : memref<1x32xf32, #tpu.memory_space<vmem>>, vector<1x32xf32>
    %300 = vector.broadcast %299 : vector<1x32xf32> to vector<128x32xf32>
    %301 = arith.addf %298, %300 : vector<128x32xf32>
    %302 = arith.negf %301 : vector<128x32xf32>
    %303 = math.exp %302 : vector<128x32xf32>
    %cst_50 = arith.constant 1.000000e+00 : f32
    %304 = vector.broadcast %cst_50 : f32 to vector<128x32xf32>
    %305 = arith.addf %304, %303 : vector<128x32xf32>
    %306 = arith.divf %304, %305 : vector<128x32xf32>
    %307 = tpu.concatenate %306, %306 in 0 : vector<128x32xf32>, vector<128x32xf32> -> vector<256x32xf32>
    %308 = arith.mulf %286, %307 : vector<256x32xf32>
    %c0_51 = arith.constant 0 : index
    %c0_52 = arith.constant 0 : index
    %309 = vector.load %arg4[%c0_51, %c0_52] : memref<256x256xbf16, #tpu.memory_space<vmem>>, vector<256x256xbf16>
    %310 = arith.truncf %308 : vector<256x32xf32> to vector<256x32xbf16>
    %cst_53 = arith.constant dense<0.000000e+00> : vector<256x32xf32>
    %311 = tpu.matmul %309, %310, %cst_53 {dimension_numbers = #tpu.dot_dimension_numbers<[1], [0], [0], [1], [0, 0, 1, 1], [], []>} : vector<256x256xbf16>, vector<256x32xbf16>, vector<256x32xf32> -> vector<256x32xf32>
    %312 = vector.extract_strided_slice %311 {offsets = [0, 0], sizes = [128, 32], strides = [1, 1]} : vector<256x32xf32> to vector<128x32xf32>
    %313 = vector.extract_strided_slice %311 {offsets = [128, 0], sizes = [128, 32], strides = [1, 1]} : vector<256x32xf32> to vector<128x32xf32>
    %314 = arith.mulf %312, %312 : vector<128x32xf32>
    %315 = arith.mulf %313, %313 : vector<128x32xf32>
    %316 = arith.addf %314, %315 : vector<128x32xf32>
    %317 = math.sqrt %316 : vector<128x32xf32>
    %c0_54 = arith.constant 0 : index
    %c0_55 = arith.constant 0 : index
    %318 = vector.load %arg21[%c0_54, %c0_55] : memref<1x32xf32, #tpu.memory_space<vmem>>, vector<1x32xf32>
    %319 = vector.broadcast %318 : vector<1x32xf32> to vector<128x32xf32>
    %320 = arith.mulf %317, %319 : vector<128x32xf32>
    %c0_56 = arith.constant 0 : index
    %c0_57 = arith.constant 0 : index
    %321 = vector.load %arg22[%c0_56, %c0_57] : memref<1x32xf32, #tpu.memory_space<vmem>>, vector<1x32xf32>
    %322 = vector.broadcast %321 : vector<1x32xf32> to vector<128x32xf32>
    %323 = arith.addf %320, %322 : vector<128x32xf32>
    %cst_58 = arith.constant 0.000000e+00 : f32
    %324 = vector.broadcast %cst_58 : f32 to vector<128x32xf32>
    %325 = arith.maximumf %323, %324 : vector<128x32xf32>
    %326 = arith.negf %283 : vector<128x32xf32>
    %327 = math.exp %326 : vector<128x32xf32>
    %cst_59 = arith.constant 1.000000e+00 : f32
    %328 = vector.broadcast %cst_59 : f32 to vector<128x32xf32>
    %329 = arith.addf %328, %327 : vector<128x32xf32>
    %330 = arith.divf %328, %329 : vector<128x32xf32>
    %331 = arith.negf %325 : vector<128x32xf32>
    %332 = math.exp %331 : vector<128x32xf32>
    %cst_60 = arith.constant 1.000000e+00 : f32
    %333 = vector.broadcast %cst_60 : f32 to vector<128x32xf32>
    %334 = arith.addf %333, %332 : vector<128x32xf32>
    %335 = arith.divf %333, %334 : vector<128x32xf32>
    %336 = arith.mulf %2, %330 : vector<128x32xf32>
    %337 = arith.addf %2, %336 : vector<128x32xf32>
    %cst_61 = arith.constant 1.000000e+00 : f32
    %338 = vector.broadcast %cst_61 : f32 to vector<128x32xf32>
    %339 = arith.subf %338, %330 : vector<128x32xf32>
    %340 = arith.mulf %339, %335 : vector<128x32xf32>
    %341 = arith.mulf %340, %325 : vector<128x32xf32>
    %342 = arith.addf %337, %341 : vector<128x32xf32>
    %343 = arith.mulf %1, %335 : vector<128x32xf32>
    %344 = arith.addf %1, %343 : vector<128x32xf32>
    %cst_62 = arith.constant 1.000000e+00 : f32
    %345 = vector.broadcast %cst_62 : f32 to vector<128x32xf32>
    %346 = arith.subf %345, %335 : vector<128x32xf32>
    %347 = arith.mulf %346, %330 : vector<128x32xf32>
    %348 = arith.mulf %347, %342 : vector<128x32xf32>
    %349 = arith.addf %344, %348 : vector<128x32xf32>
    %350 = tpu.concatenate %349, %342 in 1 : vector<128x32xf32>, vector<128x32xf32> -> vector<128x64xf32>
    %c0_63 = arith.constant 0 : index
    %c0_64 = arith.constant 0 : index
    %351 = vector.load %arg23[%c0_63, %c0_64] : memref<576x32xbf16, #tpu.memory_space<vmem>>, vector<576x32xbf16>
    %c0_65 = arith.constant 0 : index
    %c0_66 = arith.constant 0 : index
    %352 = vector.load %arg24[%c0_65, %c0_66] : memref<1x32xf32, #tpu.memory_space<vmem>>, vector<1x32xf32>
    %353 = vector.extract_strided_slice %350 {offsets = [119, 0], sizes = [9, 64], strides = [1, 1]} : vector<128x64xf32> to vector<9x64xf32>
    %354 = vector.extract_strided_slice %350 {offsets = [0, 0], sizes = [119, 64], strides = [1, 1]} : vector<128x64xf32> to vector<119x64xf32>
    %355 = tpu.concatenate %353, %354 in 0 : vector<9x64xf32>, vector<119x64xf32> -> vector<128x64xf32>
    %356 = vector.extract_strided_slice %0 {offsets = [0, 0], sizes = [128, 1], strides = [1, 1]} : vector<128x9xf32> to vector<128x1xf32>
    %357 = vector.broadcast %356 : vector<128x1xf32> to vector<128x64xf32>
    %358 = arith.mulf %355, %357 : vector<128x64xf32>
    %359 = arith.truncf %358 : vector<128x64xf32> to vector<128x64xbf16>
    %360 = vector.extract_strided_slice %350 {offsets = [120, 0], sizes = [8, 64], strides = [1, 1]} : vector<128x64xf32> to vector<8x64xf32>
    %361 = vector.extract_strided_slice %350 {offsets = [0, 0], sizes = [120, 64], strides = [1, 1]} : vector<128x64xf32> to vector<120x64xf32>
    %362 = tpu.concatenate %360, %361 in 0 : vector<8x64xf32>, vector<120x64xf32> -> vector<128x64xf32>
    %363 = vector.extract_strided_slice %0 {offsets = [0, 1], sizes = [128, 1], strides = [1, 1]} : vector<128x9xf32> to vector<128x1xf32>
    %364 = vector.broadcast %363 : vector<128x1xf32> to vector<128x64xf32>
    %365 = arith.mulf %362, %364 : vector<128x64xf32>
    %366 = arith.truncf %365 : vector<128x64xf32> to vector<128x64xbf16>
    %367 = vector.extract_strided_slice %350 {offsets = [121, 0], sizes = [7, 64], strides = [1, 1]} : vector<128x64xf32> to vector<7x64xf32>
    %368 = vector.extract_strided_slice %350 {offsets = [0, 0], sizes = [121, 64], strides = [1, 1]} : vector<128x64xf32> to vector<121x64xf32>
    %369 = tpu.concatenate %367, %368 in 0 : vector<7x64xf32>, vector<121x64xf32> -> vector<128x64xf32>
    %370 = vector.extract_strided_slice %0 {offsets = [0, 2], sizes = [128, 1], strides = [1, 1]} : vector<128x9xf32> to vector<128x1xf32>
    %371 = vector.broadcast %370 : vector<128x1xf32> to vector<128x64xf32>
    %372 = arith.mulf %369, %371 : vector<128x64xf32>
    %373 = arith.truncf %372 : vector<128x64xf32> to vector<128x64xbf16>
    %374 = vector.extract_strided_slice %350 {offsets = [127, 0], sizes = [1, 64], strides = [1, 1]} : vector<128x64xf32> to vector<1x64xf32>
    %375 = vector.extract_strided_slice %350 {offsets = [0, 0], sizes = [127, 64], strides = [1, 1]} : vector<128x64xf32> to vector<127x64xf32>
    %376 = tpu.concatenate %374, %375 in 0 : vector<1x64xf32>, vector<127x64xf32> -> vector<128x64xf32>
    %377 = vector.extract_strided_slice %0 {offsets = [0, 3], sizes = [128, 1], strides = [1, 1]} : vector<128x9xf32> to vector<128x1xf32>
    %378 = vector.broadcast %377 : vector<128x1xf32> to vector<128x64xf32>
    %379 = arith.mulf %376, %378 : vector<128x64xf32>
    %380 = arith.truncf %379 : vector<128x64xf32> to vector<128x64xbf16>
    %381 = vector.extract_strided_slice %0 {offsets = [0, 4], sizes = [128, 1], strides = [1, 1]} : vector<128x9xf32> to vector<128x1xf32>
    %382 = vector.broadcast %381 : vector<128x1xf32> to vector<128x64xf32>
    %383 = arith.mulf %350, %382 : vector<128x64xf32>
    %384 = arith.truncf %383 : vector<128x64xf32> to vector<128x64xbf16>
    %385 = vector.extract_strided_slice %350 {offsets = [1, 0], sizes = [127, 64], strides = [1, 1]} : vector<128x64xf32> to vector<127x64xf32>
    %386 = vector.extract_strided_slice %350 {offsets = [0, 0], sizes = [1, 64], strides = [1, 1]} : vector<128x64xf32> to vector<1x64xf32>
    %387 = tpu.concatenate %385, %386 in 0 : vector<127x64xf32>, vector<1x64xf32> -> vector<128x64xf32>
    %388 = vector.extract_strided_slice %0 {offsets = [0, 5], sizes = [128, 1], strides = [1, 1]} : vector<128x9xf32> to vector<128x1xf32>
    %389 = vector.broadcast %388 : vector<128x1xf32> to vector<128x64xf32>
    %390 = arith.mulf %387, %389 : vector<128x64xf32>
    %391 = arith.truncf %390 : vector<128x64xf32> to vector<128x64xbf16>
    %392 = vector.extract_strided_slice %350 {offsets = [7, 0], sizes = [121, 64], strides = [1, 1]} : vector<128x64xf32> to vector<121x64xf32>
    %393 = vector.extract_strided_slice %350 {offsets = [0, 0], sizes = [7, 64], strides = [1, 1]} : vector<128x64xf32> to vector<7x64xf32>
    %394 = tpu.concatenate %392, %393 in 0 : vector<121x64xf32>, vector<7x64xf32> -> vector<128x64xf32>
    %395 = vector.extract_strided_slice %0 {offsets = [0, 6], sizes = [128, 1], strides = [1, 1]} : vector<128x9xf32> to vector<128x1xf32>
    %396 = vector.broadcast %395 : vector<128x1xf32> to vector<128x64xf32>
    %397 = arith.mulf %394, %396 : vector<128x64xf32>
    %398 = arith.truncf %397 : vector<128x64xf32> to vector<128x64xbf16>
    %399 = vector.extract_strided_slice %350 {offsets = [8, 0], sizes = [120, 64], strides = [1, 1]} : vector<128x64xf32> to vector<120x64xf32>
    %400 = vector.extract_strided_slice %350 {offsets = [0, 0], sizes = [8, 64], strides = [1, 1]} : vector<128x64xf32> to vector<8x64xf32>
    %401 = tpu.concatenate %399, %400 in 0 : vector<120x64xf32>, vector<8x64xf32> -> vector<128x64xf32>
    %402 = vector.extract_strided_slice %0 {offsets = [0, 7], sizes = [128, 1], strides = [1, 1]} : vector<128x9xf32> to vector<128x1xf32>
    %403 = vector.broadcast %402 : vector<128x1xf32> to vector<128x64xf32>
    %404 = arith.mulf %401, %403 : vector<128x64xf32>
    %405 = arith.truncf %404 : vector<128x64xf32> to vector<128x64xbf16>
    %406 = vector.extract_strided_slice %350 {offsets = [9, 0], sizes = [119, 64], strides = [1, 1]} : vector<128x64xf32> to vector<119x64xf32>
    %407 = vector.extract_strided_slice %350 {offsets = [0, 0], sizes = [9, 64], strides = [1, 1]} : vector<128x64xf32> to vector<9x64xf32>
    %408 = tpu.concatenate %406, %407 in 0 : vector<119x64xf32>, vector<9x64xf32> -> vector<128x64xf32>
    %409 = vector.extract_strided_slice %0 {offsets = [0, 8], sizes = [128, 1], strides = [1, 1]} : vector<128x9xf32> to vector<128x1xf32>
    %410 = vector.broadcast %409 : vector<128x1xf32> to vector<128x64xf32>
    %411 = arith.mulf %408, %410 : vector<128x64xf32>
    %412 = arith.truncf %411 : vector<128x64xf32> to vector<128x64xbf16>
    %413 = tpu.concatenate %359, %366, %373, %380, %384, %391, %398, %405, %412 in 1 : vector<128x64xbf16>, vector<128x64xbf16>, vector<128x64xbf16>, vector<128x64xbf16>, vector<128x64xbf16>, vector<128x64xbf16>, vector<128x64xbf16>, vector<128x64xbf16>, vector<128x64xbf16> -> vector<128x576xbf16>
    %cst_67 = arith.constant dense<0.000000e+00> : vector<128x32xf32>
    %414 = tpu.matmul %413, %351, %cst_67 {dimension_numbers = #tpu.dot_dimension_numbers<[1], [0], [0], [1], [0, 0, 1, 1], [], []>} : vector<128x576xbf16>, vector<576x32xbf16>, vector<128x32xf32> -> vector<128x32xf32>
    %415 = vector.broadcast %352 : vector<1x32xf32> to vector<128x32xf32>
    %416 = arith.addf %414, %415 : vector<128x32xf32>
    %cst_68 = arith.constant 0.000000e+00 : f32
    %417 = vector.broadcast %cst_68 : f32 to vector<128x32xf32>
    %418 = arith.maximumf %416, %417 : vector<128x32xf32>
    %c0_69 = arith.constant 0 : index
    %c0_70 = arith.constant 0 : index
    %419 = vector.load %arg25[%c0_69, %c0_70] : memref<128x32xf32, #tpu.memory_space<vmem>>, vector<128x32xf32>
    tpu.vector_store %arg25[%c0_69, %c0_70], %418 {strides = array<i32>} : memref<128x32xf32, #tpu.memory_space<vmem>>, vector<128x32xf32>,
    return
  }
}

</mosaic_0001>

<llo_original>
// kernel: module3_forward.1
$region0: #{module3_forward.1}
  #allocation0 [shape = 'u32[]', space=smem, size = 0x4, offset = 0x4, fixed_abs, tag = 'smem constant byte address 0x4 - core index']
  #allocation1 [shape = 'u32[144,128]{1,0:T(1,128)}', space=vmem, size = 0x12000, scoped, tag = 'internal scratch']
  %s0 = inlined_call_operand.vmem [shape: f32[128,32], index: 0, kind: input, shape index: {}]
  %s1 = inlined_call_operand.vmem [shape: f32[128,32], index: 1, kind: input, shape index: {}]
  %s2 = inlined_call_operand.vmem [shape: f32[128,9], index: 2, kind: input, shape index: {}]
  %s3 = inlined_call_operand.vmem [shape: bf16[256,128], index: 3, kind: input, shape index: {}]
  %s4 = inlined_call_operand.vmem [shape: bf16[256,256], index: 4, kind: input, shape index: {}]
  %s5 = inlined_call_operand.vmem [shape: bf16[64,32], index: 5, kind: input, shape index: {}]
  %s6 = inlined_call_operand.vmem [shape: f32[1,32], index: 6, kind: input, shape index: {}]
  %s7 = inlined_call_operand.vmem [shape: bf16[288,32], index: 7, kind: input, shape index: {}]
  %s8 = inlined_call_operand.vmem [shape: f32[1,32], index: 8, kind: input, shape index: {}]
  %s9 = inlined_call_operand.vmem [shape: bf16[288,32], index: 9, kind: input, shape index: {}]
  %s10 = inlined_call_operand.vmem [shape: f32[1,32], index: 10, kind: input, shape index: {}]
  %s11 = inlined_call_operand.vmem [shape: bf16[32,32], index: 11, kind: input, shape index: {}]
  %s12 = inlined_call_operand.vmem [shape: f32[1,32], index: 12, kind: input, shape index: {}]
  %s13 = inlined_call_operand.vmem [shape: bf16[288,32], index: 13, kind: input, shape index: {}]
  %s14 = inlined_call_operand.vmem [shape: f32[1,32], index: 14, kind: input, shape index: {}]
  %s15 = inlined_call_operand.vmem [shape: bf16[288,32], index: 15, kind: input, shape index: {}]
  %s16 = inlined_call_operand.vmem [shape: f32[1,32], index: 16, kind: input, shape index: {}]
  %s17 = inlined_call_operand.vmem [shape: bf16[32,2], index: 17, kind: input, shape index: {}]
  %s18 = inlined_call_operand.vmem [shape: f32[1,2], index: 18, kind: input, shape index: {}]
  %s19 = inlined_call_operand.vmem [shape: bf16[2,32], index: 19, kind: input, shape index: {}]
  %s20 = inlined_call_operand.vmem [shape: f32[1,32], index: 20, kind: input, shape index: {}]
  %s21 = inlined_call_operand.vmem [shape: f32[1,32], index: 21, kind: input, shape index: {}]
  %s22 = inlined_call_operand.vmem [shape: f32[1,32], index: 22, kind: input, shape index: {}]
  %s23 = inlined_call_operand.vmem [shape: bf16[576,32], index: 23, kind: input, shape index: {}]
  %s24 = inlined_call_operand.vmem [shape: f32[1,32], index: 24, kind: input, shape index: {}]
  %s25 = inlined_call_operand.hbm [shape: f32[128,32], index: 25, kind: output, shape index: {}]
  %s26 = sld [smem:[#allocation0]]
  $region110: #{module3_forward.1} parent=0
    _
  %s28 = ssub.s32 1, %s26
  %s29 = scalar_select 0, %s28, %s26
  $region1: #{module3_forward.1} parent=0
    #allocation2 [shape = 'u8[65536]{0}', space=vmem, size = 0x10000, scoped, tag = 'output window, operand 0, single buffered']
    #allocation3 [shape = 's32[1]{0}', space=sflag, size = 0x4, scoped, tag = 'scoped memory for module3_forward.1']
    %30 = vsyncpa [#allocation3], 0
    // Predicated region
    $region2: #{module3_forward.1} parent=1 // pred_check
      _
    $region3: #{module3_forward.1} parent=1 // pred_check_branch
      %32 = sbr.rel (0) target = $region5
    $region4: #{module3_forward.1} parent=1 // pred_region
      _
    $region5: #{module3_forward.1} parent=1 // pred_fallthru
      _
    // Predicated region
    $region6: #{module3_forward.1} parent=1 // pred_check
      _
    $region7: #{module3_forward.1} parent=1 // pred_check_branch
      %34 = sbr.rel (0) target = $region9
    $region8: #{module3_forward.1} parent=1 // pred_region
      _
    $region9: #{module3_forward.1} parent=1 // pred_fallthru
      _
    // Predicated region
    $region10: #{module3_forward.1} parent=1 // pred_check
      _
    $region11: #{module3_forward.1} parent=1 // pred_check_branch
      %36 = sbr.rel (0) target = $region13
    $region12: #{module3_forward.1} parent=1 // pred_region
      _
    $region13: #{module3_forward.1} parent=1 // pred_fallthru
      _
    // Predicated region
    $region14: #{module3_forward.1} parent=1 // pred_check
      _
    $region15: #{module3_forward.1} parent=1 // pred_check_branch
      %38 = sbr.rel (0) target = $region17
    $region16: #{module3_forward.1} parent=1 // pred_region
      _
    $region17: #{module3_forward.1} parent=1 // pred_fallthru
      _
    // Predicated region
    $region18: #{module3_forward.1} parent=1 // pred_check
      _
    $region19: #{module3_forward.1} parent=1 // pred_check_branch
      %40 = sbr.rel (0) target = $region21
    $region20: #{module3_forward.1} parent=1 // pred_region
      _
    $region21: #{module3_forward.1} parent=1 // pred_fallthru
      _
    // Predicated region
    $region22: #{module3_forward.1} parent=1 // pred_check
      _
    $region23: #{module3_forward.1} parent=1 // pred_check_branch
      %42 = sbr.rel (0) target = $region25
    $region24: #{module3_forward.1} parent=1 // pred_region
      _
    $region25: #{module3_forward.1} parent=1 // pred_fallthru
      _
    // Predicated region
    $region26: #{module3_forward.1} parent=1 // pred_check
      _
    $region27: #{module3_forward.1} parent=1 // pred_check_branch
      %44 = sbr.rel (0) target = $region29
    $region28: #{module3_forward.1} parent=1 // pred_region
      _
    $region29: #{module3_forward.1} parent=1 // pred_fallthru
      _
    // Predicated region
    $region30: #{module3_forward.1} parent=1 // pred_check
      _
    $region31: #{module3_forward.1} parent=1 // pred_check_branch
      %46 = sbr.rel (0) target = $region33
    $region32: #{module3_forward.1} parent=1 // pred_region
      _
    $region33: #{module3_forward.1} parent=1 // pred_fallthru
      _
    // Predicated region
    $region34: #{module3_forward.1} parent=1 // pred_check
      _
    $region35: #{module3_forward.1} parent=1 // pred_check_branch
      %48 = sbr.rel (0) target = $region37
    $region36: #{module3_forward.1} parent=1 // pred_region
      _
    $region37: #{module3_forward.1} parent=1 // pred_fallthru
      _
    // Predicated region
    $region38: #{module3_forward.1} parent=1 // pred_check
      _
    $region39: #{module3_forward.1} parent=1 // pred_check_branch
      %50 = sbr.rel (0) target = $region41
    $region40: #{module3_forward.1} parent=1 // pred_region
      _
    $region41: #{module3_forward.1} parent=1 // pred_fallthru
      _
    // Predicated region
    $region42: #{module3_forward.1} parent=1 // pred_check
      _
    $region43: #{module3_forward.1} parent=1 // pred_check_branch
      %52 = sbr.rel (0) target = $region45
    $region44: #{module3_forward.1} parent=1 // pred_region
      _
    $region45: #{module3_forward.1} parent=1 // pred_fallthru
      _
    // Predicated region
    $region46: #{module3_forward.1} parent=1 // pred_check
      _
    $region47: #{module3_forward.1} parent=1 // pred_check_branch
      %54 = sbr.rel (0) target = $region49
    $region48: #{module3_forward.1} parent=1 // pred_region
      _
    $region49: #{module3_forward.1} parent=1 // pred_fallthru
      _
    // Predicated region
    $region50: #{module3_forward.1} parent=1 // pred_check
      _
    $region51: #{module3_forward.1} parent=1 // pred_check_branch
      %56 = sbr.rel (0) target = $region53
    $region52: #{module3_forward.1} parent=1 // pred_region
      _
    $region53: #{module3_forward.1} parent=1 // pred_fallthru
      _
    // Predicated region
    $region54: #{module3_forward.1} parent=1 // pred_check
      _
    $region55: #{module3_forward.1} parent=1 // pred_check_branch
      %58 = sbr.rel (0) target = $region57
    $region56: #{module3_forward.1} parent=1 // pred_region
      _
    $region57: #{module3_forward.1} parent=1 // pred_fallthru
      _
    // Predicated region
    $region58: #{module3_forward.1} parent=1 // pred_check
      _
    $region59: #{module3_forward.1} parent=1 // pred_check_branch
      %60 = sbr.rel (0) target = $region61
    $region60: #{module3_forward.1} parent=1 // pred_region
      _
    $region61: #{module3_forward.1} parent=1 // pred_fallthru
      _
    // Predicated region
    $region62: #{module3_forward.1} parent=1 // pred_check
      _
    $region63: #{module3_forward.1} parent=1 // pred_check_branch
      %62 = sbr.rel (0) target = $region65
    $region64: #{module3_forward.1} parent=1 // pred_region
      _
    $region65: #{module3_forward.1} parent=1 // pred_fallthru
      _
    // Predicated region
    $region66: #{module3_forward.1} parent=1 // pred_check
      _
    $region67: #{module3_forward.1} parent=1 // pred_check_branch
      %64 = sbr.rel (0) target = $region69
    $region68: #{module3_forward.1} parent=1 // pred_region
      _
    $region69: #{module3_forward.1} parent=1 // pred_fallthru
      _
    // Predicated region
    $region70: #{module3_forward.1} parent=1 // pred_check
      _
    $region71: #{module3_forward.1} parent=1 // pred_check_branch
      %66 = sbr.rel (0) target = $region73
    $region72: #{module3_forward.1} parent=1 // pred_region
      _
    $region73: #{module3_forward.1} parent=1 // pred_fallthru
      _
    // Predicated region
    $region74: #{module3_forward.1} parent=1 // pred_check
      _
    $region75: #{module3_forward.1} parent=1 // pred_check_branch
      %68 = sbr.rel (0) target = $region77
    $region76: #{module3_forward.1} parent=1 // pred_region
      _
    $region77: #{module3_forward.1} parent=1 // pred_fallthru
      _
    // Predicated region
    $region78: #{module3_forward.1} parent=1 // pred_check
      _
    $region79: #{module3_forward.1} parent=1 // pred_check_branch
      %70 = sbr.rel (0) target = $region81
    $region80: #{module3_forward.1} parent=1 // pred_region
      _
    $region81: #{module3_forward.1} parent=1 // pred_fallthru
      _
    // Predicated region
    $region82: #{module3_forward.1} parent=1 // pred_check
      _
    $region83: #{module3_forward.1} parent=1 // pred_check_branch
      %72 = sbr.rel (0) target = $region85
    $region84: #{module3_forward.1} parent=1 // pred_region
      _
    $region85: #{module3_forward.1} parent=1 // pred_fallthru
      _
    // Predicated region
    $region86: #{module3_forward.1} parent=1 // pred_check
      _
    $region87: #{module3_forward.1} parent=1 // pred_check_branch
      %74 = sbr.rel (0) target = $region89
    $region88: #{module3_forward.1} parent=1 // pred_region
      _
    $region89: #{module3_forward.1} parent=1 // pred_fallthru
      _
    // Predicated region
    $region90: #{module3_forward.1} parent=1 // pred_check
      _
    $region91: #{module3_forward.1} parent=1 // pred_check_branch
      %76 = sbr.rel (0) target = $region93
    $region92: #{module3_forward.1} parent=1 // pred_region
      _
    $region93: #{module3_forward.1} parent=1 // pred_fallthru
      _
    // Predicated region
    $region94: #{module3_forward.1} parent=1 // pred_check
      _
    $region95: #{module3_forward.1} parent=1 // pred_check_branch
      %78 = sbr.rel (0) target = $region97
    $region96: #{module3_forward.1} parent=1 // pred_region
      _
    $region97: #{module3_forward.1} parent=1 // pred_fallthru
      _
    // Predicated region
    $region98: #{module3_forward.1} parent=1 // pred_check
      _
    $region99: #{module3_forward.1} parent=1 // pred_check_branch
      %80 = sbr.rel (0) target = $region101
    $region100: #{module3_forward.1} parent=1 // pred_region
      _
    $region101: #{module3_forward.1} parent=1 // pred_fallthru
      _
    %v82 = vld [vmem:[%s2] sm:$0xff]
    %v83 = vld [vmem:[%s2 + $0x8] sm:$0xff]
    %v84 = vld [vmem:[%s2 + $0x10] sm:$0xff]
    %v85 = vld [vmem:[%s2 + $0x18] sm:$0xff]
    %v86 = vld [vmem:[%s2 + $0x20] sm:$0xff]
    %v87 = vld [vmem:[%s2 + $0x28] sm:$0xff]
    %v88 = vld [vmem:[%s2 + $0x30] sm:$0xff]
    %v89 = vld [vmem:[%s2 + $0x38] sm:$0xff]
    %v90 = vld [vmem:[%s2 + $0x40] sm:$0xff]
    %v91 = vld [vmem:[%s2 + $0x48] sm:$0xff]
    %v92 = vld [vmem:[%s2 + $0x50] sm:$0xff]
    %v93 = vld [vmem:[%s2 + $0x58] sm:$0xff]
    %v94 = vld [vmem:[%s2 + $0x60] sm:$0xff]
    %v95 = vld [vmem:[%s2 + $0x68] sm:$0xff]
    %v96 = vld [vmem:[%s2 + $0x70] sm:$0xff]
    %v97 = vld [vmem:[%s2 + $0x78] sm:$0xff]
    %v98 = vld [vmem:[%s0] sm:$0xff]
    %v99 = vld [vmem:[%s0 + $0x8] sm:$0xff]
    %v100 = vld [vmem:[%s0 + $0x10] sm:$0xff]
    %v101 = vld [vmem:[%s0 + $0x18] sm:$0xff]
    %v102 = vld [vmem:[%s0 + $0x20] sm:$0xff]
    %v103 = vld [vmem:[%s0 + $0x28] sm:$0xff]
    %v104 = vld [vmem:[%s0 + $0x30] sm:$0xff]
    %v105 = vld [vmem:[%s0 + $0x38] sm:$0xff]
    %v106 = vld [vmem:[%s0 + $0x40] sm:$0xff]
    %v107 = vld [vmem:[%s0 + $0x48] sm:$0xff]
    %v108 = vld [vmem:[%s0 + $0x50] sm:$0xff]
    %v109 = vld [vmem:[%s0 + $0x58] sm:$0xff]
    %v110 = vld [vmem:[%s0 + $0x60] sm:$0xff]
    %v111 = vld [vmem:[%s0 + $0x68] sm:$0xff]
    %v112 = vld [vmem:[%s0 + $0x70] sm:$0xff]
    %v113 = vld [vmem:[%s0 + $0x78] sm:$0xff]
    %v114 = vld [vmem:[%s1] sm:$0xff]
    %v115 = vld [vmem:[%s1 + $0x8] sm:$0xff]
    %v116 = vld [vmem:[%s1 + $0x10] sm:$0xff]
    %v117 = vld [vmem:[%s1 + $0x18] sm:$0xff]
    %v118 = vld [vmem:[%s1 + $0x20] sm:$0xff]
    %v119 = vld [vmem:[%s1 + $0x28] sm:$0xff]
    %v120 = vld [vmem:[%s1 + $0x30] sm:$0xff]
    %v121 = vld [vmem:[%s1 + $0x38] sm:$0xff]
    %v122 = vld [vmem:[%s1 + $0x40] sm:$0xff]
    %v123 = vld [vmem:[%s1 + $0x48] sm:$0xff]
    %v124 = vld [vmem:[%s1 + $0x50] sm:$0xff]
    %v125 = vld [vmem:[%s1 + $0x58] sm:$0xff]
    %v126 = vld [vmem:[%s1 + $0x60] sm:$0xff]
    %v127 = vld [vmem:[%s1 + $0x68] sm:$0xff]
    %v128 = vld [vmem:[%s1 + $0x70] sm:$0xff]
    %v129 = vld [vmem:[%s1 + $0x78] sm:$0xff]
    %146 = vrot.lane.b32.xlu0 %v114, 32
    %v147 = vpop.permute.xlu0 %146
    %148 = vrot.lane.b32.xlu0 %v115, 32
    %v149 = vpop.permute.xlu0 %148
    %150 = vrot.lane.b32.xlu0 %v116, 32
    %v151 = vpop.permute.xlu0 %150
    %152 = vrot.lane.b32.xlu0 %v117, 32
    %v153 = vpop.permute.xlu0 %152
    %154 = vrot.lane.b32.xlu0 %v118, 32
    %v155 = vpop.permute.xlu0 %154
    %156 = vrot.lane.b32.xlu0 %v119, 32
    %v157 = vpop.permute.xlu0 %156
    %158 = vrot.lane.b32.xlu0 %v120, 32
    %v159 = vpop.permute.xlu0 %158
    %160 = vrot.lane.b32.xlu0 %v121, 32
    %v161 = vpop.permute.xlu0 %160
    %162 = vrot.lane.b32.xlu0 %v122, 32
    %v163 = vpop.permute.xlu0 %162
    %164 = vrot.lane.b32.xlu0 %v123, 32
    %v165 = vpop.permute.xlu0 %164
    %166 = vrot.lane.b32.xlu0 %v124, 32
    %v167 = vpop.permute.xlu0 %166
    %168 = vrot.lane.b32.xlu0 %v125, 32
    %v169 = vpop.permute.xlu0 %168
    %170 = vrot.lane.b32.xlu0 %v126, 32
    %v171 = vpop.permute.xlu0 %170
    %172 = vrot.lane.b32.xlu0 %v127, 32
    %v173 = vpop.permute.xlu0 %172
    %174 = vrot.lane.b32.xlu0 %v128, 32
    %v175 = vpop.permute.xlu0 %174
    %176 = vrot.lane.b32.xlu0 %v129, 32
    %v177 = vpop.permute.xlu0 %176
    %vm194 = vcmask 261120
    %v195 = vsel %vm194, %v98, %v147
    %v196 = vsel %vm194, %v99, %v149
    %v197 = vsel %vm194, %v100, %v151
    %v198 = vsel %vm194, %v101, %v153
    %v199 = vsel %vm194, %v102, %v155
    %v200 = vsel %vm194, %v103, %v157
    %v201 = vsel %vm194, %v104, %v159
    %v202 = vsel %vm194, %v105, %v161
    %v203 = vsel %vm194, %v106, %v163
    %v204 = vsel %vm194, %v107, %v165
    %v205 = vsel %vm194, %v108, %v167
    %v206 = vsel %vm194, %v109, %v169
    %v207 = vsel %vm194, %v110, %v171
    %v208 = vsel %vm194, %v111, %v173
    %v209 = vsel %vm194, %v112, %v175
    %v210 = vsel %vm194, %v113, %v177
    %v211 = vld [vmem:[%s5] sm:$0xf]
    %v212 = vld [vmem:[%s5 + $0x4] sm:$0xf]
    %v213 = vld [vmem:[%s5 + $0x8] sm:$0xf]
    %v214 = vld [vmem:[%s5 + $0xc] sm:$0xf]
    %v215 = vld [vmem:[%s5 + $0x10] sm:$0xf]
    %v216 = vld [vmem:[%s5 + $0x14] sm:$0xf]
    %v217 = vld [vmem:[%s5 + $0x18] sm:$0xf]
    %v218 = vld [vmem:[%s5 + $0x1c] sm:$0xf]
    %v219 = vpack.c.bf16 %v196, %v195
    %v220 = vpack.c.bf16 %v198, %v197
    %v221 = vpack.c.bf16 %v200, %v199
    %v222 = vpack.c.bf16 %v202, %v201
    %v223 = vpack.c.bf16 %v204, %v203
    %v224 = vpack.c.bf16 %v206, %v205
    %v225 = vpack.c.bf16 %v208, %v207
    %v226 = vpack.c.bf16 %v210, %v209
    %v227 = vld [vmem:[%s6] sm:$0x1]
    %v229 = vlaneseq
    %v230 = vshrl.u32 %v229, 7
    %v231 = vsub.s32 0, %v230
    %v232 = vrot.slane %v227, %v231
    %v242 = vunpack.c.l.b16 %v211
    %v243 = vunpack.c.l.b16 %v212
    %v244 = vunpack.c.l.b16 %v213
    %v245 = vunpack.c.l.b16 %v214
    %v246 = vunpack.c.l.b16 %v215
    %v247 = vunpack.c.l.b16 %v216
    %v248 = vunpack.c.l.b16 %v217
    %v249 = vunpack.c.l.b16 %v218
    %v250 = vpack.c.b16 %v243, %v242
    %v251 = vpack.c.b16 %v245, %v244
    %v252 = vpack.c.b16 %v247, %v246
    %v253 = vpack.c.b16 %v249, %v248
    %vm258 = vcmask 523264
    %v260 = vsel %vm258, %v219, 0
    %v263 = vsel %vm258, %v220, 0
    %v266 = vsel %vm258, %v221, 0
    %v269 = vsel %vm258, %v222, 0
    %v272 = vsel %vm258, %v223, 0
    %v275 = vsel %vm258, %v224, 0
    %v278 = vsel %vm258, %v225, 0
    %v281 = vsel %vm258, %v226, 0
    %283 = vmatprep.subr.bf16.mxu0 0
    %284 = vmatpush1.bf16.msra.mxu0 %v250
    %285 = vmatprep.subr.bf16.mxu0 0
    %286 = vmatpush1.bf16.msra.mxu0 %v251
    %287 = vmatprep.subr.bf16.mxu0 0
    %288 = vmatpush1.bf16.msra.mxu0 %v252
    %289 = vmatprep.subr.bf16.mxu0 0
    %290 = vmatpush1.bf16.msra.mxu0 %v253
    %291 = vmatprep.subr.bf16.mxu0 0
    %292 = vmatpush1.bf16.msra.mxu0 0
    %293 = vmatprep.subr.bf16.mxu0 0
    %294 = vmatpush1.bf16.msra.mxu0 0
    %295 = vmatprep.subr.bf16.mxu0 0
    %296 = vmatpush1.bf16.msra.mxu0 0
    %297 = vmatprep.subr.bf16.mxu0 0
    %298 = vmatpush1.bf16.msra.mxu0 0
    %299 = vmatprep.subr.bf16.mxu0 0
    %300 = vmatpush1.bf16.msra.mxu0 0
    %301 = vmatprep.subr.bf16.mxu0 0
    %302 = vmatpush1.bf16.msra.mxu0 0
    %303 = vmatprep.subr.bf16.mxu0 0
    %304 = vmatpush1.bf16.msra.mxu0 0
    %305 = vmatprep.subr.bf16.mxu0 0
    %306 = vmatpush1.bf16.msra.mxu0 0
    %307 = vmatprep.subr.bf16.mxu0 0
    %308 = vmatpush1.bf16.msra.mxu0 0
    %309 = vmatprep.subr.bf16.mxu0 0
    %310 = vmatpush1.bf16.msra.mxu0 0
    %311 = vmatprep.subr.bf16.mxu0 0
    %312 = vmatpush1.bf16.msra.mxu0 0
    %313 = vmatprep.subr.bf16.mxu0 0
    %314 = vmatpush1.bf16.msra.mxu0 0
    %315 = vmatprep.mubr.bf16.mxu0 0
    %316 = vmatmul.mubr.bf16.gmra.mrb[0].mxu0 %v260
    %v317 = vpop.f32.mrb[0].mxu0
    %v318 = vadd.f32 %v232, %v317
    %v319 = vpop.f32.mrb[0].mxu0
    %v320 = vpop.f32.mrb[0].mxu0
    %v321 = vadd.f32 %v232, %v320
    %v322 = vpop.f32.mrb[0].mxu0
    %323 = vmatprep.mubr.bf16.mxu0 0
    %324 = vmatmul.mubr.bf16.gmra.mrb[0].mxu0 %v263
    %v325 = vpop.f32.mrb[0].mxu0
    %v326 = vadd.f32 %v232, %v325
    %v327 = vpop.f32.mrb[0].mxu0
    %v328 = vpop.f32.mrb[0].mxu0
    %v329 = vadd.f32 %v232, %v328
    %v330 = vpop.f32.mrb[0].mxu0
    %331 = vmatprep.mubr.bf16.mxu0 0
    %332 = vmatmul.mubr.bf16.gmra.mrb[0].mxu0 %v266
    %v333 = vpop.f32.mrb[0].mxu0
    %v334 = vadd.f32 %v232, %v333
    %v335 = vpop.f32.mrb[0].mxu0
    %v336 = vpop.f32.mrb[0].mxu0
    %v337 = vadd.f32 %v232, %v336
    %v338 = vpop.f32.mrb[0].mxu0
    %339 = vmatprep.mubr.bf16.mxu0 0
    %340 = vmatmul.mubr.bf16.gmra.mrb[0].mxu0 %v269
    %v341 = vpop.f32.mrb[0].mxu0
    %v342 = vadd.f32 %v232, %v341
    %v343 = vpop.f32.mrb[0].mxu0
    %v344 = vpop.f32.mrb[0].mxu0
    %v345 = vadd.f32 %v232, %v344
    %v346 = vpop.f32.mrb[0].mxu0
    %347 = vmatprep.mubr.bf16.mxu0 0
    %348 = vmatmul.mubr.bf16.gmra.mrb[0].mxu0 %v272
    %v349 = vpop.f32.mrb[0].mxu0
    %v350 = vadd.f32 %v232, %v349
    %v351 = vpop.f32.mrb[0].mxu0
    %v352 = vpop.f32.mrb[0].mxu0
    %v353 = vadd.f32 %v232, %v352
    %v354 = vpop.f32.mrb[0].mxu0
    %355 = vmatprep.mubr.bf16.mxu0 0
    %356 = vmatmul.mubr.bf16.gmra.mrb[0].mxu0 %v275
    %v357 = vpop.f32.mrb[0].mxu0
    %v358 = vadd.f32 %v232, %v357
    %v359 = vpop.f32.mrb[0].mxu0
    %v360 = vpop.f32.mrb[0].mxu0
    %v361 = vadd.f32 %v232, %v360
    %v362 = vpop.f32.mrb[0].mxu0
    %363 = vmatprep.mubr.bf16.mxu0 0
    %364 = vmatmul.mubr.bf16.gmra.mrb[0].mxu0 %v278
    %v365 = vpop.f32.mrb[0].mxu0
    %v366 = vadd.f32 %v232, %v365
    %v367 = vpop.f32.mrb[0].mxu0
    %v368 = vpop.f32.mrb[0].mxu0
    %v369 = vadd.f32 %v232, %v368
    %v370 = vpop.f32.mrb[0].mxu0
    %371 = vmatprep.mubr.bf16.mxu0 0
    %372 = vmatmul.mubr.bf16.gmra.mrb[0].mxu0 %v281
    %v373 = vpop.f32.mrb[0].mxu0
    %v374 = vadd.f32 %v232, %v373
    %v375 = vpop.f32.mrb[0].mxu0
    %v376 = vpop.f32.mrb[0].mxu0
    %v377 = vadd.f32 %v232, %v376
    %v378 = vpop.f32.mrb[0].mxu0
    %379 = vdwg.mxu0
    %v380 = vld [vmem:[%s7] sm:$0xf]
    %v381 = vld [vmem:[%s7 + $0x4] sm:$0xf]
    %v382 = vld [vmem:[%s7 + $0x8] sm:$0xf]
    %v383 = vld [vmem:[%s7 + $0xc] sm:$0xf]
    %v384 = vld [vmem:[%s7 + $0x10] sm:$0xf]
    %v385 = vld [vmem:[%s7 + $0x14] sm:$0xf]
    %v386 = vld [vmem:[%s7 + $0x18] sm:$0xf]
    %v387 = vld [vmem:[%s7 + $0x1c] sm:$0xf]
    %v388 = vld [vmem:[%s7 + $0x20] sm:$0xf]
    %v389 = vld [vmem:[%s7 + $0x24] sm:$0xf]
    %v390 = vld [vmem:[%s7 + $0x28] sm:$0xf]
    %v391 = vld [vmem:[%s7 + $0x2c] sm:$0xf]
    %v392 = vld [vmem:[%s7 + $0x30] sm:$0xf]
    %v393 = vld [vmem:[%s7 + $0x34] sm:$0xf]
    %v394 = vld [vmem:[%s7 + $0x38] sm:$0xf]
    %v395 = vld [vmem:[%s7 + $0x3c] sm:$0xf]
    %v396 = vld [vmem:[%s7 + $0x40] sm:$0xf]
    %v397 = vld [vmem:[%s7 + $0x44] sm:$0xf]
    %v398 = vld [vmem:[%s7 + $0x48] sm:$0xf]
    %v399 = vld [vmem:[%s7 + $0x4c] sm:$0xf]
    %v400 = vld [vmem:[%s7 + $0x50] sm:$0xf]
    %v401 = vld [vmem:[%s7 + $0x54] sm:$0xf]
    %v402 = vld [vmem:[%s7 + $0x58] sm:$0xf]
    %v403 = vld [vmem:[%s7 + $0x5c] sm:$0xf]
    %v404 = vld [vmem:[%s7 + $0x60] sm:$0xf]
    %v405 = vld [vmem:[%s7 + $0x64] sm:$0xf]
    %v406 = vld [vmem:[%s7 + $0x68] sm:$0xf]
    %v407 = vld [vmem:[%s7 + $0x6c] sm:$0xf]
    %v408 = vld [vmem:[%s7 + $0x70] sm:$0xf]
    %v409 = vld [vmem:[%s7 + $0x74] sm:$0xf]
    %v410 = vld [vmem:[%s7 + $0x78] sm:$0xf]
    %v411 = vld [vmem:[%s7 + $0x7c] sm:$0xf]
    %v412 = vld [vmem:[%s7 + $0x80] sm:$0xf]
    %v413 = vld [vmem:[%s7 + $0x84] sm:$0xf]
    %v414 = vld [vmem:[%s7 + $0x88] sm:$0xf]
    %v415 = vld [vmem:[%s7 + $0x8c] sm:$0xf]
    %v416 = vld [vmem:[%s8] sm:$0x1]
    %vm419 = vcmask 1040384
    %v420 = vrot.slane %v374, 7
    %v421 = vrot.slane %v377, 7
    %v422 = vsel %vm419, %v420, %v421
    %v439 = vrot.slane %v318, 7
    %v440 = vrot.slane %v321, 7
    %v441 = vsel %vm419, %v439, %v440
    %v442 = vrot.slane %v326, 7
    %v443 = vsel %vm419, %v440, %v442
    %v444 = vrot.slane %v329, 7
    %v445 = vsel %vm419, %v442, %v444
    %v446 = vrot.slane %v334, 7
    %v447 = vsel %vm419, %v444, %v446
    %v448 = vrot.slane %v337, 7
    %v449 = vsel %vm419, %v446, %v448
    %v450 = vrot.slane %v342, 7
    %v451 = vsel %vm419, %v448, %v450
    %v452 = vrot.slane %v345, 7
    %v453 = vsel %vm419, %v450, %v452
    %v454 = vrot.slane %v350, 7
    %v455 = vsel %vm419, %v452, %v454
    %v456 = vrot.slane %v353, 7
    %v457 = vsel %vm419, %v454, %v456
    %v458 = vrot.slane %v358, 7
    %v459 = vsel %vm419, %v456, %v458
    %v460 = vrot.slane %v361, 7
    %v461 = vsel %vm419, %v458, %v460
    %v462 = vrot.slane %v366, 7
    %v463 = vsel %vm419, %v460, %v462
    %v464 = vrot.slane %v369, 7
    %v465 = vsel %vm419, %v462, %v464
    %v466 = vsel %vm419, %v464, %v420
    %v482 = vsel %vm419, %v421, %v439
    %484 = vset.pattern.permute.xlu0 0
    %485 = vperm.xlu0 %484, %v82
    %v486 = vpop.permute.xlu0 %485
    %489 = vset.pattern.permute.xlu0 0
    %490 = vperm.xlu0 %489, %v83
    %v491 = vpop.permute.xlu0 %490
    %494 = vset.pattern.permute.xlu0 0
    %495 = vperm.xlu0 %494, %v84
    %v496 = vpop.permute.xlu0 %495
    %499 = vset.pattern.permute.xlu0 0
    %500 = vperm.xlu0 %499, %v85
    %v501 = vpop.permute.xlu0 %500
    %504 = vset.pattern.permute.xlu0 0
    %505 = vperm.xlu0 %504, %v86
    %v506 = vpop.permute.xlu0 %505
    %509 = vset.pattern.permute.xlu0 0
    %510 = vperm.xlu0 %509, %v87
    %v511 = vpop.permute.xlu0 %510
    %514 = vset.pattern.permute.xlu0 0
    %515 = vperm.xlu0 %514, %v88
    %v516 = vpop.permute.xlu0 %515
    %519 = vset.pattern.permute.xlu0 0
    %520 = vperm.xlu0 %519, %v89
    %v521 = vpop.permute.xlu0 %520
    %524 = vset.pattern.permute.xlu0 0
    %525 = vperm.xlu0 %524, %v90
    %v526 = vpop.permute.xlu0 %525
    %529 = vset.pattern.permute.xlu0 0
    %530 = vperm.xlu0 %529, %v91
    %v531 = vpop.permute.xlu0 %530
    %534 = vset.pattern.permute.xlu0 0
    %535 = vperm.xlu0 %534, %v92
    %v536 = vpop.permute.xlu0 %535
    %539 = vset.pattern.permute.xlu0 0
    %540 = vperm.xlu0 %539, %v93
    %v541 = vpop.permute.xlu0 %540
    %544 = vset.pattern.permute.xlu0 0
    %545 = vperm.xlu0 %544, %v94
    %v546 = vpop.permute.xlu0 %545
    %549 = vset.pattern.permute.xlu0 0
    %550 = vperm.xlu0 %549, %v95
    %v551 = vpop.permute.xlu0 %550
    %554 = vset.pattern.permute.xlu0 0
    %555 = vperm.xlu0 %554, %v96
    %v556 = vpop.permute.xlu0 %555
    %559 = vset.pattern.permute.xlu0 0
    %560 = vperm.xlu0 %559, %v97
    %v561 = vpop.permute.xlu0 %560
    %v563 = vmul.f32 %v422, %v486
    %v564 = vmul.f32 %v482, %v491
    %v565 = vmul.f32 %v441, %v496
    %v566 = vmul.f32 %v443, %v501
    %v567 = vmul.f32 %v445, %v506
    %v568 = vmul.f32 %v447, %v511
    %v569 = vmul.f32 %v449, %v516
    %v570 = vmul.f32 %v451, %v521
    %v571 = vmul.f32 %v453, %v526
    %v572 = vmul.f32 %v455, %v531
    %v573 = vmul.f32 %v457, %v536
    %v574 = vmul.f32 %v459, %v541
    %v575 = vmul.f32 %v461, %v546
    %v576 = vmul.f32 %v463, %v551
    %v577 = vmul.f32 %v465, %v556
    %v578 = vmul.f32 %v466, %v561
    %v579 = vpack.c.bf16 %v564, %v563
    %v580 = vpack.c.bf16 %v566, %v565
    %v581 = vpack.c.bf16 %v568, %v567
    %v582 = vpack.c.bf16 %v570, %v569
    %v583 = vpack.c.bf16 %v572, %v571
    %v584 = vpack.c.bf16 %v574, %v573
    %v585 = vpack.c.bf16 %v576, %v575
    %v586 = vpack.c.bf16 %v578, %v577
    %587 = vset.pattern.permute.xlu0 1
    %588 = vperm.xlu0 %587, %v82
    %v589 = vpop.permute.xlu0 %588
    %591 = vset.pattern.permute.xlu0 1
    %592 = vperm.xlu0 %591, %v83
    %v593 = vpop.permute.xlu0 %592
    %595 = vset.pattern.permute.xlu0 1
    %596 = vperm.xlu0 %595, %v84
    %v597 = vpop.permute.xlu0 %596
    %599 = vset.pattern.permute.xlu0 1
    %600 = vperm.xlu0 %599, %v85
    %v601 = vpop.permute.xlu0 %600
    %603 = vset.pattern.permute.xlu0 1
    %604 = vperm.xlu0 %603, %v86
    %v605 = vpop.permute.xlu0 %604
    %607 = vset.pattern.permute.xlu0 1
    %608 = vperm.xlu0 %607, %v87
    %v609 = vpop.permute.xlu0 %608
    %611 = vset.pattern.permute.xlu0 1
    %612 = vperm.xlu0 %611, %v88
    %v613 = vpop.permute.xlu0 %612
    %615 = vset.pattern.permute.xlu0 1
    %616 = vperm.xlu0 %615, %v89
    %v617 = vpop.permute.xlu0 %616
    %619 = vset.pattern.permute.xlu0 1
    %620 = vperm.xlu0 %619, %v90
    %v621 = vpop.permute.xlu0 %620
    %623 = vset.pattern.permute.xlu0 1
    %624 = vperm.xlu0 %623, %v91
    %v625 = vpop.permute.xlu0 %624
    %627 = vset.pattern.permute.xlu0 1
    %628 = vperm.xlu0 %627, %v92
    %v629 = vpop.permute.xlu0 %628
    %631 = vset.pattern.permute.xlu0 1
    %632 = vperm.xlu0 %631, %v93
    %v633 = vpop.permute.xlu0 %632
    %635 = vset.pattern.permute.xlu0 1
    %636 = vperm.xlu0 %635, %v94
    %v637 = vpop.permute.xlu0 %636
    %639 = vset.pattern.permute.xlu0 1
    %640 = vperm.xlu0 %639, %v95
    %v641 = vpop.permute.xlu0 %640
    %643 = vset.pattern.permute.xlu0 1
    %644 = vperm.xlu0 %643, %v96
    %v645 = vpop.permute.xlu0 %644
    %647 = vset.pattern.permute.xlu0 1
    %648 = vperm.xlu0 %647, %v97
    %v649 = vpop.permute.xlu0 %648
    %v651 = vmul.f32 %v377, %v589
    %v652 = vmul.f32 %v318, %v593
    %v653 = vmul.f32 %v321, %v597
    %v654 = vmul.f32 %v326, %v601
    %v655 = vmul.f32 %v329, %v605
    %v656 = vmul.f32 %v334, %v609
    %v657 = vmul.f32 %v337, %v613
    %v658 = vmul.f32 %v342, %v617
    %v659 = vmul.f32 %v345, %v621
    %v660 = vmul.f32 %v350, %v625
    %v661 = vmul.f32 %v353, %v629
    %v662 = vmul.f32 %v358, %v633
    %v663 = vmul.f32 %v361, %v637
    %v664 = vmul.f32 %v366, %v641
    %v665 = vmul.f32 %v369, %v645
    %v666 = vmul.f32 %v374, %v649
    %v667 = vpack.c.bf16 %v652, %v651
    %v668 = vpack.c.bf16 %v654, %v653
    %v669 = vpack.c.bf16 %v656, %v655
    %v670 = vpack.c.bf16 %v658, %v657
    %v671 = vpack.c.bf16 %v660, %v659
    %v672 = vpack.c.bf16 %v662, %v661
    %v673 = vpack.c.bf16 %v664, %v663
    %v674 = vpack.c.bf16 %v666, %v665
    %v675 = vrot.slane %v377, 1
    %vm677 = vcmask 1046528
    %v678 = vrot.slane %v318, 1
    %v679 = vrot.slane %v321, 1
    %v680 = vsel %vm677, %v678, %v679
    %v681 = vrot.slane %v326, 1
    %v682 = vsel %vm677, %v679, %v681
    %v683 = vrot.slane %v329, 1
    %v684 = vsel %vm677, %v681, %v683
    %v685 = vrot.slane %v334, 1
    %v686 = vsel %vm677, %v683, %v685
    %v687 = vrot.slane %v337, 1
    %v688 = vsel %vm677, %v685, %v687
    %v689 = vrot.slane %v342, 1
    %v690 = vsel %vm677, %v687, %v689
    %v691 = vrot.slane %v345, 1
    %v692 = vsel %vm677, %v689, %v691
    %v693 = vrot.slane %v350, 1
    %v694 = vsel %vm677, %v691, %v693
    %v695 = vrot.slane %v353, 1
    %v696 = vsel %vm677, %v693, %v695
    %v697 = vrot.slane %v358, 1
    %v698 = vsel %vm677, %v695, %v697
    %v699 = vrot.slane %v361, 1
    %v700 = vsel %vm677, %v697, %v699
    %v701 = vrot.slane %v366, 1
    %v702 = vsel %vm677, %v699, %v701
    %v703 = vrot.slane %v369, 1
    %v704 = vsel %vm677, %v701, %v703
    %v705 = vrot.slane %v374, 1
    %v706 = vsel %vm677, %v703, %v705
    %v707 = vsel %vm677, %v705, %v675
    %v724 = vsel %vm677, %v675, %v678
    %725 = vset.pattern.permute.xlu0 2
    %726 = vperm.xlu0 %725, %v82
    %v727 = vpop.permute.xlu0 %726
    %729 = vset.pattern.permute.xlu0 2
    %730 = vperm.xlu0 %729, %v83
    %v731 = vpop.permute.xlu0 %730
    %733 = vset.pattern.permute.xlu0 2
    %734 = vperm.xlu0 %733, %v84
    %v735 = vpop.permute.xlu0 %734
    %737 = vset.pattern.permute.xlu0 2
    %738 = vperm.xlu0 %737, %v85
    %v739 = vpop.permute.xlu0 %738
    %741 = vset.pattern.permute.xlu0 2
    %742 = vperm.xlu0 %741, %v86
    %v743 = vpop.permute.xlu0 %742
    %745 = vset.pattern.permute.xlu0 2
    %746 = vperm.xlu0 %745, %v87
    %v747 = vpop.permute.xlu0 %746
    %749 = vset.pattern.permute.xlu0 2
    %750 = vperm.xlu0 %749, %v88
    %v751 = vpop.permute.xlu0 %750
    %753 = vset.pattern.permute.xlu0 2
    %754 = vperm.xlu0 %753, %v89
    %v755 = vpop.permute.xlu0 %754
    %757 = vset.pattern.permute.xlu0 2
    %758 = vperm.xlu0 %757, %v90
    %v759 = vpop.permute.xlu0 %758
    %761 = vset.pattern.permute.xlu0 2
    %762 = vperm.xlu0 %761, %v91
    %v763 = vpop.permute.xlu0 %762
    %765 = vset.pattern.permute.xlu0 2
    %766 = vperm.xlu0 %765, %v92
    %v767 = vpop.permute.xlu0 %766
    %769 = vset.pattern.permute.xlu0 2
    %770 = vperm.xlu0 %769, %v93
    %v771 = vpop.permute.xlu0 %770
    %773 = vset.pattern.permute.xlu0 2
    %774 = vperm.xlu0 %773, %v94
    %v775 = vpop.permute.xlu0 %774
    %777 = vset.pattern.permute.xlu0 2
    %778 = vperm.xlu0 %777, %v95
    %v779 = vpop.permute.xlu0 %778
    %781 = vset.pattern.permute.xlu0 2
    %782 = vperm.xlu0 %781, %v96
    %v783 = vpop.permute.xlu0 %782
    %785 = vset.pattern.permute.xlu0 2
    %786 = vperm.xlu0 %785, %v97
    %v787 = vpop.permute.xlu0 %786
    %v789 = vmul.f32 %v724, %v727
    %v790 = vmul.f32 %v680, %v731
    %v791 = vmul.f32 %v682, %v735
    %v792 = vmul.f32 %v684, %v739
    %v793 = vmul.f32 %v686, %v743
    %v794 = vmul.f32 %v688, %v747
    %v795 = vmul.f32 %v690, %v751
    %v796 = vmul.f32 %v692, %v755
    %v797 = vmul.f32 %v694, %v759
    %v798 = vmul.f32 %v696, %v763
    %v799 = vmul.f32 %v698, %v767
    %v800 = vmul.f32 %v700, %v771
    %v801 = vmul.f32 %v702, %v775
    %v802 = vmul.f32 %v704, %v779
    %v803 = vmul.f32 %v706, %v783
    %v804 = vmul.f32 %v707, %v787
    %v805 = vpack.c.bf16 %v790, %v789
    %v806 = vpack.c.bf16 %v792, %v791
    %v807 = vpack.c.bf16 %v794, %v793
    %v808 = vpack.c.bf16 %v796, %v795
    %v809 = vpack.c.bf16 %v798, %v797
    %v810 = vpack.c.bf16 %v800, %v799
    %v811 = vpack.c.bf16 %v802, %v801
    %v812 = vpack.c.bf16 %v804, %v803
    %813 = vset.pattern.permute.xlu0 3
    %814 = vperm.xlu0 %813, %v82
    %v815 = vpop.permute.xlu0 %814
    %817 = vset.pattern.permute.xlu0 3
    %818 = vperm.xlu0 %817, %v83
    %v819 = vpop.permute.xlu0 %818
    %821 = vset.pattern.permute.xlu0 3
    %822 = vperm.xlu0 %821, %v84
    %v823 = vpop.permute.xlu0 %822
    %825 = vset.pattern.permute.xlu0 3
    %826 = vperm.xlu0 %825, %v85
    %v827 = vpop.permute.xlu0 %826
    %829 = vset.pattern.permute.xlu0 3
    %830 = vperm.xlu0 %829, %v86
    %v831 = vpop.permute.xlu0 %830
    %833 = vset.pattern.permute.xlu0 3
    %834 = vperm.xlu0 %833, %v87
    %v835 = vpop.permute.xlu0 %834
    %837 = vset.pattern.permute.xlu0 3
    %838 = vperm.xlu0 %837, %v88
    %v839 = vpop.permute.xlu0 %838
    %841 = vset.pattern.permute.xlu0 3
    %842 = vperm.xlu0 %841, %v89
    %v843 = vpop.permute.xlu0 %842
    %845 = vset.pattern.permute.xlu0 3
    %846 = vperm.xlu0 %845, %v90
    %v847 = vpop.permute.xlu0 %846
    %849 = vset.pattern.permute.xlu0 3
    %850 = vperm.xlu0 %849, %v91
    %v851 = vpop.permute.xlu0 %850
    %853 = vset.pattern.permute.xlu0 3
    %854 = vperm.xlu0 %853, %v92
    %v855 = vpop.permute.xlu0 %854
    %857 = vset.pattern.permute.xlu0 3
    %858 = vperm.xlu0 %857, %v93
    %v859 = vpop.permute.xlu0 %858
    %861 = vset.pattern.permute.xlu0 3
    %862 = vperm.xlu0 %861, %v94
    %v863 = vpop.permute.xlu0 %862
    %865 = vset.pattern.permute.xlu0 3
    %866 = vperm.xlu0 %865, %v95
    %v867 = vpop.permute.xlu0 %866
    %869 = vset.pattern.permute.xlu0 3
    %870 = vperm.xlu0 %869, %v96
    %v871 = vpop.permute.xlu0 %870
    %873 = vset.pattern.permute.xlu0 3
    %874 = vperm.xlu0 %873, %v97
    %v875 = vpop.permute.xlu0 %874
    %v877 = vmul.f32 %v482, %v815
    %v878 = vmul.f32 %v441, %v819
    %v879 = vmul.f32 %v443, %v823
    %v880 = vmul.f32 %v445, %v827
    %v881 = vmul.f32 %v447, %v831
    %v882 = vmul.f32 %v449, %v835
    %v883 = vmul.f32 %v451, %v839
    %v884 = vmul.f32 %v453, %v843
    %v885 = vmul.f32 %v455, %v847
    %v886 = vmul.f32 %v457, %v851
    %v887 = vmul.f32 %v459, %v855
    %v888 = vmul.f32 %v461, %v859
    %v889 = vmul.f32 %v463, %v863
    %v890 = vmul.f32 %v465, %v867
    %v891 = vmul.f32 %v466, %v871
    %v892 = vmul.f32 %v422, %v875
    %v893 = vpack.c.bf16 %v878, %v877
    %v894 = vpack.c.bf16 %v880, %v879
    %v895 = vpack.c.bf16 %v882, %v881
    %v896 = vpack.c.bf16 %v884, %v883
    %v897 = vpack.c.bf16 %v886, %v885
    %v898 = vpack.c.bf16 %v888, %v887
    %v899 = vpack.c.bf16 %v890, %v889
    %v900 = vpack.c.bf16 %v892, %v891
    %901 = vset.pattern.permute.xlu0 4
    %902 = vperm.xlu0 %901, %v82
    %v903 = vpop.permute.xlu0 %902
    %905 = vset.pattern.permute.xlu0 4
    %906 = vperm.xlu0 %905, %v83
    %v907 = vpop.permute.xlu0 %906
    %909 = vset.pattern.permute.xlu0 4
    %910 = vperm.xlu0 %909, %v84
    %v911 = vpop.permute.xlu0 %910
    %913 = vset.pattern.permute.xlu0 4
    %914 = vperm.xlu0 %913, %v85
    %v915 = vpop.permute.xlu0 %914
    %917 = vset.pattern.permute.xlu0 4
    %918 = vperm.xlu0 %917, %v86
    %v919 = vpop.permute.xlu0 %918
    %921 = vset.pattern.permute.xlu0 4
    %922 = vperm.xlu0 %921, %v87
    %v923 = vpop.permute.xlu0 %922
    %925 = vset.pattern.permute.xlu0 4
    %926 = vperm.xlu0 %925, %v88
    %v927 = vpop.permute.xlu0 %926
    %929 = vset.pattern.permute.xlu0 4
    %930 = vperm.xlu0 %929, %v89
    %v931 = vpop.permute.xlu0 %930
    %933 = vset.pattern.permute.xlu0 4
    %934 = vperm.xlu0 %933, %v90
    %v935 = vpop.permute.xlu0 %934
    %937 = vset.pattern.permute.xlu0 4
    %938 = vperm.xlu0 %937, %v91
    %v939 = vpop.permute.xlu0 %938
    %941 = vset.pattern.permute.xlu0 4
    %942 = vperm.xlu0 %941, %v92
    %v943 = vpop.permute.xlu0 %942
    %945 = vset.pattern.permute.xlu0 4
    %946 = vperm.xlu0 %945, %v93
    %v947 = vpop.permute.xlu0 %946
    %949 = vset.pattern.permute.xlu0 4
    %950 = vperm.xlu0 %949, %v94
    %v951 = vpop.permute.xlu0 %950
    %953 = vset.pattern.permute.xlu0 4
    %954 = vperm.xlu0 %953, %v95
    %v955 = vpop.permute.xlu0 %954
    %957 = vset.pattern.permute.xlu0 4
    %958 = vperm.xlu0 %957, %v96
    %v959 = vpop.permute.xlu0 %958
    %961 = vset.pattern.permute.xlu0 4
    %962 = vperm.xlu0 %961, %v97
    %v963 = vpop.permute.xlu0 %962
    %v965 = vmul.f32 %v318, %v903
    %v966 = vmul.f32 %v321, %v907
    %v967 = vmul.f32 %v326, %v911
    %v968 = vmul.f32 %v329, %v915
    %v969 = vmul.f32 %v334, %v919
    %v970 = vmul.f32 %v337, %v923
    %v971 = vmul.f32 %v342, %v927
    %v972 = vmul.f32 %v345, %v931
    %v973 = vmul.f32 %v350, %v935
    %v974 = vmul.f32 %v353, %v939
    %v975 = vmul.f32 %v358, %v943
    %v976 = vmul.f32 %v361, %v947
    %v977 = vmul.f32 %v366, %v951
    %v978 = vmul.f32 %v369, %v955
    %v979 = vmul.f32 %v374, %v959
    %v980 = vmul.f32 %v377, %v963
    %v981 = vpack.c.bf16 %v966, %v965
    %v982 = vpack.c.bf16 %v968, %v967
    %v983 = vpack.c.bf16 %v970, %v969
    %v984 = vpack.c.bf16 %v972, %v971
    %v985 = vpack.c.bf16 %v974, %v973
    %v986 = vpack.c.bf16 %v976, %v975
    %v987 = vpack.c.bf16 %v978, %v977
    %v988 = vpack.c.bf16 %v980, %v979
    %989 = vset.pattern.permute.xlu0 5
    %990 = vperm.xlu0 %989, %v82
    %v991 = vpop.permute.xlu0 %990
    %993 = vset.pattern.permute.xlu0 5
    %994 = vperm.xlu0 %993, %v83
    %v995 = vpop.permute.xlu0 %994
    %997 = vset.pattern.permute.xlu0 5
    %998 = vperm.xlu0 %997, %v84
    %v999 = vpop.permute.xlu0 %998
    %1001 = vset.pattern.permute.xlu0 5
    %1002 = vperm.xlu0 %1001, %v85
    %v1003 = vpop.permute.xlu0 %1002
    %1005 = vset.pattern.permute.xlu0 5
    %1006 = vperm.xlu0 %1005, %v86
    %v1007 = vpop.permute.xlu0 %1006
    %1009 = vset.pattern.permute.xlu0 5
    %1010 = vperm.xlu0 %1009, %v87
    %v1011 = vpop.permute.xlu0 %1010
    %1013 = vset.pattern.permute.xlu0 5
    %1014 = vperm.xlu0 %1013, %v88
    %v1015 = vpop.permute.xlu0 %1014
    %1017 = vset.pattern.permute.xlu0 5
    %1018 = vperm.xlu0 %1017, %v89
    %v1019 = vpop.permute.xlu0 %1018
    %1021 = vset.pattern.permute.xlu0 5
    %1022 = vperm.xlu0 %1021, %v90
    %v1023 = vpop.permute.xlu0 %1022
    %1025 = vset.pattern.permute.xlu0 5
    %1026 = vperm.xlu0 %1025, %v91
    %v1027 = vpop.permute.xlu0 %1026
    %1029 = vset.pattern.permute.xlu0 5
    %1030 = vperm.xlu0 %1029, %v92
    %v1031 = vpop.permute.xlu0 %1030
    %1033 = vset.pattern.permute.xlu0 5
    %1034 = vperm.xlu0 %1033, %v93
    %v1035 = vpop.permute.xlu0 %1034
    %1037 = vset.pattern.permute.xlu0 5
    %1038 = vperm.xlu0 %1037, %v94
    %v1039 = vpop.permute.xlu0 %1038
    %1041 = vset.pattern.permute.xlu0 5
    %1042 = vperm.xlu0 %1041, %v95
    %v1043 = vpop.permute.xlu0 %1042
    %1045 = vset.pattern.permute.xlu0 5
    %1046 = vperm.xlu0 %1045, %v96
    %v1047 = vpop.permute.xlu0 %1046
    %1049 = vset.pattern.permute.xlu0 5
    %1050 = vperm.xlu0 %1049, %v97
    %v1051 = vpop.permute.xlu0 %1050
    %v1053 = vmul.f32 %v680, %v991
    %v1054 = vmul.f32 %v682, %v995
    %v1055 = vmul.f32 %v684, %v999
    %v1056 = vmul.f32 %v686, %v1003
    %v1057 = vmul.f32 %v688, %v1007
    %v1058 = vmul.f32 %v690, %v1011
    %v1059 = vmul.f32 %v692, %v1015
    %v1060 = vmul.f32 %v694, %v1019
    %v1061 = vmul.f32 %v696, %v1023
    %v1062 = vmul.f32 %v698, %v1027
    %v1063 = vmul.f32 %v700, %v1031
    %v1064 = vmul.f32 %v702, %v1035
    %v1065 = vmul.f32 %v704, %v1039
    %v1066 = vmul.f32 %v706, %v1043
    %v1067 = vmul.f32 %v707, %v1047
    %v1068 = vmul.f32 %v724, %v1051
    %v1069 = vpack.c.bf16 %v1054, %v1053
    %v1070 = vpack.c.bf16 %v1056, %v1055
    %v1071 = vpack.c.bf16 %v1058, %v1057
    %v1072 = vpack.c.bf16 %v1060, %v1059
    %v1073 = vpack.c.bf16 %v1062, %v1061
    %v1074 = vpack.c.bf16 %v1064, %v1063
    %v1075 = vpack.c.bf16 %v1066, %v1065
    %v1076 = vpack.c.bf16 %v1068, %v1067
    %1077 = vset.pattern.permute.xlu0 6
    %1078 = vperm.xlu0 %1077, %v82
    %v1079 = vpop.permute.xlu0 %1078
    %1081 = vset.pattern.permute.xlu0 6
    %1082 = vperm.xlu0 %1081, %v83
    %v1083 = vpop.permute.xlu0 %1082
    %1085 = vset.pattern.permute.xlu0 6
    %1086 = vperm.xlu0 %1085, %v84
    %v1087 = vpop.permute.xlu0 %1086
    %1089 = vset.pattern.permute.xlu0 6
    %1090 = vperm.xlu0 %1089, %v85
    %v1091 = vpop.permute.xlu0 %1090
    %1093 = vset.pattern.permute.xlu0 6
    %1094 = vperm.xlu0 %1093, %v86
    %v1095 = vpop.permute.xlu0 %1094
    %1097 = vset.pattern.permute.xlu0 6
    %1098 = vperm.xlu0 %1097, %v87
    %v1099 = vpop.permute.xlu0 %1098
    %1101 = vset.pattern.permute.xlu0 6
    %1102 = vperm.xlu0 %1101, %v88
    %v1103 = vpop.permute.xlu0 %1102
    %1105 = vset.pattern.permute.xlu0 6
    %1106 = vperm.xlu0 %1105, %v89
    %v1107 = vpop.permute.xlu0 %1106
    %1109 = vset.pattern.permute.xlu0 6
    %1110 = vperm.xlu0 %1109, %v90
    %v1111 = vpop.permute.xlu0 %1110
    %1113 = vset.pattern.permute.xlu0 6
    %1114 = vperm.xlu0 %1113, %v91
    %v1115 = vpop.permute.xlu0 %1114
    %1117 = vset.pattern.permute.xlu0 6
    %1118 = vperm.xlu0 %1117, %v92
    %v1119 = vpop.permute.xlu0 %1118
    %1121 = vset.pattern.permute.xlu0 6
    %1122 = vperm.xlu0 %1121, %v93
    %v1123 = vpop.permute.xlu0 %1122
    %1125 = vset.pattern.permute.xlu0 6
    %1126 = vperm.xlu0 %1125, %v94
    %v1127 = vpop.permute.xlu0 %1126
    %1129 = vset.pattern.permute.xlu0 6
    %1130 = vperm.xlu0 %1129, %v95
    %v1131 = vpop.permute.xlu0 %1130
    %1133 = vset.pattern.permute.xlu0 6
    %1134 = vperm.xlu0 %1133, %v96
    %v1135 = vpop.permute.xlu0 %1134
    %1137 = vset.pattern.permute.xlu0 6
    %1138 = vperm.xlu0 %1137, %v97
    %v1139 = vpop.permute.xlu0 %1138
    %v1141 = vmul.f32 %v441, %v1079
    %v1142 = vmul.f32 %v443, %v1083
    %v1143 = vmul.f32 %v445, %v1087
    %v1144 = vmul.f32 %v447, %v1091
    %v1145 = vmul.f32 %v449, %v1095
    %v1146 = vmul.f32 %v451, %v1099
    %v1147 = vmul.f32 %v453, %v1103
    %v1148 = vmul.f32 %v455, %v1107
    %v1149 = vmul.f32 %v457, %v1111
    %v1150 = vmul.f32 %v459, %v1115
    %v1151 = vmul.f32 %v461, %v1119
    %v1152 = vmul.f32 %v463, %v1123
    %v1153 = vmul.f32 %v465, %v1127
    %v1154 = vmul.f32 %v466, %v1131
    %v1155 = vmul.f32 %v422, %v1135
    %v1156 = vmul.f32 %v482, %v1139
    %v1157 = vpack.c.bf16 %v1142, %v1141
    %v1158 = vpack.c.bf16 %v1144, %v1143
    %v1159 = vpack.c.bf16 %v1146, %v1145
    %v1160 = vpack.c.bf16 %v1148, %v1147
    %v1161 = vpack.c.bf16 %v1150, %v1149
    %v1162 = vpack.c.bf16 %v1152, %v1151
    %v1163 = vpack.c.bf16 %v1154, %v1153
    %v1164 = vpack.c.bf16 %v1156, %v1155
    %1165 = vset.pattern.permute.xlu0 7
    %1166 = vperm.xlu0 %1165, %v82
    %v1167 = vpop.permute.xlu0 %1166
    %1169 = vset.pattern.permute.xlu0 7
    %1170 = vperm.xlu0 %1169, %v83
    %v1171 = vpop.permute.xlu0 %1170
    %1173 = vset.pattern.permute.xlu0 7
    %1174 = vperm.xlu0 %1173, %v84
    %v1175 = vpop.permute.xlu0 %1174
    %1177 = vset.pattern.permute.xlu0 7
    %1178 = vperm.xlu0 %1177, %v85
    %v1179 = vpop.permute.xlu0 %1178
    %1181 = vset.pattern.permute.xlu0 7
    %1182 = vperm.xlu0 %1181, %v86
    %v1183 = vpop.permute.xlu0 %1182
    %1185 = vset.pattern.permute.xlu0 7
    %1186 = vperm.xlu0 %1185, %v87
    %v1187 = vpop.permute.xlu0 %1186
    %1189 = vset.pattern.permute.xlu0 7
    %1190 = vperm.xlu0 %1189, %v88
    %v1191 = vpop.permute.xlu0 %1190
    %1193 = vset.pattern.permute.xlu0 7
    %1194 = vperm.xlu0 %1193, %v89
    %v1195 = vpop.permute.xlu0 %1194
    %1197 = vset.pattern.permute.xlu0 7
    %1198 = vperm.xlu0 %1197, %v90
    %v1199 = vpop.permute.xlu0 %1198
    %1201 = vset.pattern.permute.xlu0 7
    %1202 = vperm.xlu0 %1201, %v91
    %v1203 = vpop.permute.xlu0 %1202
    %1205 = vset.pattern.permute.xlu0 7
    %1206 = vperm.xlu0 %1205, %v92
    %v1207 = vpop.permute.xlu0 %1206
    %1209 = vset.pattern.permute.xlu0 7
    %1210 = vperm.xlu0 %1209, %v93
    %v1211 = vpop.permute.xlu0 %1210
    %1213 = vset.pattern.permute.xlu0 7
    %1214 = vperm.xlu0 %1213, %v94
    %v1215 = vpop.permute.xlu0 %1214
    %1217 = vset.pattern.permute.xlu0 7
    %1218 = vperm.xlu0 %1217, %v95
    %v1219 = vpop.permute.xlu0 %1218
    %1221 = vset.pattern.permute.xlu0 7
    %1222 = vperm.xlu0 %1221, %v96
    %v1223 = vpop.permute.xlu0 %1222
    %1225 = vset.pattern.permute.xlu0 7
    %1226 = vperm.xlu0 %1225, %v97
    %v1227 = vpop.permute.xlu0 %1226
    %v1229 = vmul.f32 %v321, %v1167
    %v1230 = vmul.f32 %v326, %v1171
    %v1231 = vmul.f32 %v329, %v1175
    %v1232 = vmul.f32 %v334, %v1179
    %v1233 = vmul.f32 %v337, %v1183
    %v1234 = vmul.f32 %v342, %v1187
    %v1235 = vmul.f32 %v345, %v1191
    %v1236 = vmul.f32 %v350, %v1195
    %v1237 = vmul.f32 %v353, %v1199
    %v1238 = vmul.f32 %v358, %v1203
    %v1239 = vmul.f32 %v361, %v1207
    %v1240 = vmul.f32 %v366, %v1211
    %v1241 = vmul.f32 %v369, %v1215
    %v1242 = vmul.f32 %v374, %v1219
    %v1243 = vmul.f32 %v377, %v1223
    %v1244 = vmul.f32 %v318, %v1227
    %v1245 = vpack.c.bf16 %v1230, %v1229
    %v1246 = vpack.c.bf16 %v1232, %v1231
    %v1247 = vpack.c.bf16 %v1234, %v1233
    %v1248 = vpack.c.bf16 %v1236, %v1235
    %v1249 = vpack.c.bf16 %v1238, %v1237
    %v1250 = vpack.c.bf16 %v1240, %v1239
    %v1251 = vpack.c.bf16 %v1242, %v1241
    %v1252 = vpack.c.bf16 %v1244, %v1243
    %1253 = vset.pattern.permute.xlu0 8
    %1254 = vperm.xlu0 %1253, %v82
    %v1255 = vpop.permute.xlu0 %1254
    %1257 = vset.pattern.permute.xlu0 8
    %1258 = vperm.xlu0 %1257, %v83
    %v1259 = vpop.permute.xlu0 %1258
    %1261 = vset.pattern.permute.xlu0 8
    %1262 = vperm.xlu0 %1261, %v84
    %v1263 = vpop.permute.xlu0 %1262
    %1265 = vset.pattern.permute.xlu0 8
    %1266 = vperm.xlu0 %1265, %v85
    %v1267 = vpop.permute.xlu0 %1266
    %1269 = vset.pattern.permute.xlu0 8
    %1270 = vperm.xlu0 %1269, %v86
    %v1271 = vpop.permute.xlu0 %1270
    %1273 = vset.pattern.permute.xlu0 8
    %1274 = vperm.xlu0 %1273, %v87
    %v1275 = vpop.permute.xlu0 %1274
    %1277 = vset.pattern.permute.xlu0 8
    %1278 = vperm.xlu0 %1277, %v88
    %v1279 = vpop.permute.xlu0 %1278
    %1281 = vset.pattern.permute.xlu0 8
    %1282 = vperm.xlu0 %1281, %v89
    %v1283 = vpop.permute.xlu0 %1282
    %1285 = vset.pattern.permute.xlu0 8
    %1286 = vperm.xlu0 %1285, %v90
    %v1287 = vpop.permute.xlu0 %1286
    %1289 = vset.pattern.permute.xlu0 8
    %1290 = vperm.xlu0 %1289, %v91
    %v1291 = vpop.permute.xlu0 %1290
    %1293 = vset.pattern.permute.xlu0 8
    %1294 = vperm.xlu0 %1293, %v92
    %v1295 = vpop.permute.xlu0 %1294
    %1297 = vset.pattern.permute.xlu0 8
    %1298 = vperm.xlu0 %1297, %v93
    %v1299 = vpop.permute.xlu0 %1298
    %1301 = vset.pattern.permute.xlu0 8
    %1302 = vperm.xlu0 %1301, %v94
    %v1303 = vpop.permute.xlu0 %1302
    %1305 = vset.pattern.permute.xlu0 8
    %1306 = vperm.xlu0 %1305, %v95
    %v1307 = vpop.permute.xlu0 %1306
    %1309 = vset.pattern.permute.xlu0 8
    %1310 = vperm.xlu0 %1309, %v96
    %v1311 = vpop.permute.xlu0 %1310
    %1313 = vset.pattern.permute.xlu0 8
    %1314 = vperm.xlu0 %1313, %v97
    %v1315 = vpop.permute.xlu0 %1314
    %v1317 = vmul.f32 %v682, %v1255
    %v1318 = vmul.f32 %v684, %v1259
    %v1319 = vmul.f32 %v686, %v1263
    %v1320 = vmul.f32 %v688, %v1267
    %v1321 = vmul.f32 %v690, %v1271
    %v1322 = vmul.f32 %v692, %v1275
    %v1323 = vmul.f32 %v694, %v1279
    %v1324 = vmul.f32 %v696, %v1283
    %v1325 = vmul.f32 %v698, %v1287
    %v1326 = vmul.f32 %v700, %v1291
    %v1327 = vmul.f32 %v702, %v1295
    %v1328 = vmul.f32 %v704, %v1299
    %v1329 = vmul.f32 %v706, %v1303
    %v1330 = vmul.f32 %v707, %v1307
    %v1331 = vmul.f32 %v724, %v1311
    %v1332 = vmul.f32 %v680, %v1315
    %v1333 = vpack.c.bf16 %v1318, %v1317
    %v1334 = vpack.c.bf16 %v1320, %v1319
    %v1335 = vpack.c.bf16 %v1322, %v1321
    %v1336 = vpack.c.bf16 %v1324, %v1323
    %v1337 = vpack.c.bf16 %v1326, %v1325
    %v1338 = vpack.c.bf16 %v1328, %v1327
    %v1339 = vpack.c.bf16 %v1330, %v1329
    %v1340 = vpack.c.bf16 %v1332, %v1331
    %1349 = vrot.lane.b32.xlu0 %v667, 32
    %v1350 = vpop.permute.xlu0 %1349
    %1351 = vrot.lane.b32.xlu0 %v668, 32
    %v1352 = vpop.permute.xlu0 %1351
    %1353 = vrot.lane.b32.xlu0 %v669, 32
    %v1354 = vpop.permute.xlu0 %1353
    %1355 = vrot.lane.b32.xlu0 %v670, 32
    %v1356 = vpop.permute.xlu0 %1355
    %1357 = vrot.lane.b32.xlu0 %v671, 32
    %v1358 = vpop.permute.xlu0 %1357
    %1359 = vrot.lane.b32.xlu0 %v672, 32
    %v1360 = vpop.permute.xlu0 %1359
    %1361 = vrot.lane.b32.xlu0 %v673, 32
    %v1362 = vpop.permute.xlu0 %1361
    %1363 = vrot.lane.b32.xlu0 %v674, 32
    %v1364 = vpop.permute.xlu0 %1363
    %1373 = vrot.lane.b32.xlu0 %v805, 64
    %v1374 = vpop.permute.xlu0 %1373
    %1375 = vrot.lane.b32.xlu0 %v806, 64
    %v1376 = vpop.permute.xlu0 %1375
    %1377 = vrot.lane.b32.xlu0 %v807, 64
    %v1378 = vpop.permute.xlu0 %1377
    %1379 = vrot.lane.b32.xlu0 %v808, 64
    %v1380 = vpop.permute.xlu0 %1379
    %1381 = vrot.lane.b32.xlu0 %v809, 64
    %v1382 = vpop.permute.xlu0 %1381
    %1383 = vrot.lane.b32.xlu0 %v810, 64
    %v1384 = vpop.permute.xlu0 %1383
    %1385 = vrot.lane.b32.xlu0 %v811, 64
    %v1386 = vpop.permute.xlu0 %1385
    %1387 = vrot.lane.b32.xlu0 %v812, 64
    %v1388 = vpop.permute.xlu0 %1387
    %1397 = vrot.lane.b32.xlu0 %v893, 96
    %v1398 = vpop.permute.xlu0 %1397
    %1399 = vrot.lane.b32.xlu0 %v894, 96
    %v1400 = vpop.permute.xlu0 %1399
    %1401 = vrot.lane.b32.xlu0 %v895, 96
    %v1402 = vpop.permute.xlu0 %1401
    %1403 = vrot.lane.b32.xlu0 %v896, 96
    %v1404 = vpop.permute.xlu0 %1403
    %1405 = vrot.lane.b32.xlu0 %v897, 96
    %v1406 = vpop.permute.xlu0 %1405
    %1407 = vrot.lane.b32.xlu0 %v898, 96
    %v1408 = vpop.permute.xlu0 %1407
    %1409 = vrot.lane.b32.xlu0 %v899, 96
    %v1410 = vpop.permute.xlu0 %1409
    %1411 = vrot.lane.b32.xlu0 %v900, 96
    %v1412 = vpop.permute.xlu0 %1411
    %1421 = vrot.lane.b32.xlu0 %v1069, 32
    %v1422 = vpop.permute.xlu0 %1421
    %1423 = vrot.lane.b32.xlu0 %v1070, 32
    %v1424 = vpop.permute.xlu0 %1423
    %1425 = vrot.lane.b32.xlu0 %v1071, 32
    %v1426 = vpop.permute.xlu0 %1425
    %1427 = vrot.lane.b32.xlu0 %v1072, 32
    %v1428 = vpop.permute.xlu0 %1427
    %1429 = vrot.lane.b32.xlu0 %v1073, 32
    %v1430 = vpop.permute.xlu0 %1429
    %1431 = vrot.lane.b32.xlu0 %v1074, 32
    %v1432 = vpop.permute.xlu0 %1431
    %1433 = vrot.lane.b32.xlu0 %v1075, 32
    %v1434 = vpop.permute.xlu0 %1433
    %1435 = vrot.lane.b32.xlu0 %v1076, 32
    %v1436 = vpop.permute.xlu0 %1435
    %1445 = vrot.lane.b32.xlu0 %v1157, 64
    %v1446 = vpop.permute.xlu0 %1445
    %1447 = vrot.lane.b32.xlu0 %v1158, 64
    %v1448 = vpop.permute.xlu0 %1447
    %1449 = vrot.lane.b32.xlu0 %v1159, 64
    %v1450 = vpop.permute.xlu0 %1449
    %1451 = vrot.lane.b32.xlu0 %v1160, 64
    %v1452 = vpop.permute.xlu0 %1451
    %1453 = vrot.lane.b32.xlu0 %v1161, 64
    %v1454 = vpop.permute.xlu0 %1453
    %1455 = vrot.lane.b32.xlu0 %v1162, 64
    %v1456 = vpop.permute.xlu0 %1455
    %1457 = vrot.lane.b32.xlu0 %v1163, 64
    %v1458 = vpop.permute.xlu0 %1457
    %1459 = vrot.lane.b32.xlu0 %v1164, 64
    %v1460 = vpop.permute.xlu0 %1459
    %1469 = vrot.lane.b32.xlu0 %v1245, 96
    %v1470 = vpop.permute.xlu0 %1469
    %1471 = vrot.lane.b32.xlu0 %v1246, 96
    %v1472 = vpop.permute.xlu0 %1471
    %1473 = vrot.lane.b32.xlu0 %v1247, 96
    %v1474 = vpop.permute.xlu0 %1473
    %1475 = vrot.lane.b32.xlu0 %v1248, 96
    %v1476 = vpop.permute.xlu0 %1475
    %1477 = vrot.lane.b32.xlu0 %v1249, 96
    %v1478 = vpop.permute.xlu0 %1477
    %1479 = vrot.lane.b32.xlu0 %v1250, 96
    %v1480 = vpop.permute.xlu0 %1479
    %1481 = vrot.lane.b32.xlu0 %v1251, 96
    %v1482 = vpop.permute.xlu0 %1481
    %1483 = vrot.lane.b32.xlu0 %v1252, 96
    %v1484 = vpop.permute.xlu0 %1483
    %v1487 = vsel %vm194, %v579, %v1350
    %v1490 = vsel %vm194, %v580, %v1352
    %v1493 = vsel %vm194, %v581, %v1354
    %v1496 = vsel %vm194, %v582, %v1356
    %v1499 = vsel %vm194, %v583, %v1358
    %v1502 = vsel %vm194, %v584, %v1360
    %v1505 = vsel %vm194, %v585, %v1362
    %v1508 = vsel %vm194, %v586, %v1364
    %v1510 = vsel %vm258, %v1487, %v1374
    %v1512 = vsel %vm258, %v1490, %v1376
    %v1514 = vsel %vm258, %v1493, %v1378
    %v1516 = vsel %vm258, %v1496, %v1380
    %v1518 = vsel %vm258, %v1499, %v1382
    %v1520 = vsel %vm258, %v1502, %v1384
    %v1522 = vsel %vm258, %v1505, %v1386
    %v1524 = vsel %vm258, %v1508, %v1388
    %vm1525 = vcmask 785408
    %v1527 = vsel %vm1525, %v1510, %v1398
    %v1530 = vsel %vm1525, %v1512, %v1400
    %v1533 = vsel %vm1525, %v1514, %v1402
    %v1536 = vsel %vm1525, %v1516, %v1404
    %v1539 = vsel %vm1525, %v1518, %v1406
    %v1542 = vsel %vm1525, %v1520, %v1408
    %v1545 = vsel %vm1525, %v1522, %v1410
    %v1548 = vsel %vm1525, %v1524, %v1412
    %v1552 = vsel %vm194, %v981, %v1422
    %v1555 = vsel %vm194, %v982, %v1424
    %v1558 = vsel %vm194, %v983, %v1426
    %v1561 = vsel %vm194, %v984, %v1428
    %v1564 = vsel %vm194, %v985, %v1430
    %v1567 = vsel %vm194, %v986, %v1432
    %v1570 = vsel %vm194, %v987, %v1434
    %v1573 = vsel %vm194, %v988, %v1436
    %v1575 = vsel %vm258, %v1552, %v1446
    %v1577 = vsel %vm258, %v1555, %v1448
    %v1579 = vsel %vm258, %v1558, %v1450
    %v1581 = vsel %vm258, %v1561, %v1452
    %v1583 = vsel %vm258, %v1564, %v1454
    %v1585 = vsel %vm258, %v1567, %v1456
    %v1587 = vsel %vm258, %v1570, %v1458
    %v1589 = vsel %vm258, %v1573, %v1460
    %v1591 = vsel %vm1525, %v1575, %v1470
    %v1594 = vsel %vm1525, %v1577, %v1472
    %v1597 = vsel %vm1525, %v1579, %v1474
    %v1600 = vsel %vm1525, %v1581, %v1476
    %v1603 = vsel %vm1525, %v1583, %v1478
    %v1606 = vsel %vm1525, %v1585, %v1480
    %v1609 = vsel %vm1525, %v1587, %v1482
    %v1612 = vsel %vm1525, %v1589, %v1484
    %v1615 = vlaneseq
    %v1616 = vshrl.u32 %v1615, 7
    %v1617 = vsub.s32 0, %v1616
    %v1618 = vrot.slane %v416, %v1617
    %v1656 = vunpack.c.l.b16 %v380
    %v1657 = vunpack.c.l.b16 %v381
    %v1658 = vunpack.c.l.b16 %v382
    %v1659 = vunpack.c.l.b16 %v383
    %v1660 = vunpack.c.l.b16 %v384
    %v1661 = vunpack.c.l.b16 %v385
    %v1662 = vunpack.c.l.b16 %v386
    %v1663 = vunpack.c.l.b16 %v387
    %v1664 = vunpack.c.l.b16 %v388
    %v1665 = vunpack.c.l.b16 %v389
    %v1666 = vunpack.c.l.b16 %v390
    %v1667 = vunpack.c.l.b16 %v391
    %v1668 = vunpack.c.l.b16 %v392
    %v1669 = vunpack.c.l.b16 %v393
    %v1670 = vunpack.c.l.b16 %v394
    %v1671 = vunpack.c.l.b16 %v395
    %v1672 = vunpack.c.l.b16 %v396
    %v1673 = vunpack.c.l.b16 %v397
    %v1674 = vunpack.c.l.b16 %v398
    %v1675 = vunpack.c.l.b16 %v399
    %v1676 = vunpack.c.l.b16 %v400
    %v1677 = vunpack.c.l.b16 %v401
    %v1678 = vunpack.c.l.b16 %v402
    %v1679 = vunpack.c.l.b16 %v403
    %v1680 = vunpack.c.l.b16 %v404
    %v1681 = vunpack.c.l.b16 %v405
    %v1682 = vunpack.c.l.b16 %v406
    %v1683 = vunpack.c.l.b16 %v407
    %v1684 = vunpack.c.l.b16 %v408
    %v1685 = vunpack.c.l.b16 %v409
    %v1686 = vunpack.c.l.b16 %v410
    %v1687 = vunpack.c.l.b16 %v411
    %v1688 = vunpack.c.l.b16 %v412
    %v1689 = vunpack.c.l.b16 %v413
    %v1690 = vunpack.c.l.b16 %v414
    %v1691 = vunpack.c.l.b16 %v415
    %v1692 = vpack.c.b16 %v1657, %v1656
    %v1693 = vpack.c.b16 %v1659, %v1658
    %v1694 = vpack.c.b16 %v1661, %v1660
    %v1695 = vpack.c.b16 %v1663, %v1662
    %v1696 = vpack.c.b16 %v1665, %v1664
    %v1697 = vpack.c.b16 %v1667, %v1666
    %v1698 = vpack.c.b16 %v1669, %v1668
    %v1699 = vpack.c.b16 %v1671, %v1670
    %v1700 = vpack.c.b16 %v1673, %v1672
    %v1701 = vpack.c.b16 %v1675, %v1674
    %v1702 = vpack.c.b16 %v1677, %v1676
    %v1703 = vpack.c.b16 %v1679, %v1678
    %v1704 = vpack.c.b16 %v1681, %v1680
    %v1705 = vpack.c.b16 %v1683, %v1682
    %v1706 = vpack.c.b16 %v1685, %v1684
    %v1707 = vpack.c.b16 %v1687, %v1686
    %v1708 = vpack.c.b16 %v1689, %v1688
    %v1709 = vpack.c.b16 %v1691, %v1690
    %v1729 = vsel %vm194, %v1333, 0
    %v1732 = vsel %vm194, %v1334, 0
    %v1735 = vsel %vm194, %v1335, 0
    %v1738 = vsel %vm194, %v1336, 0
    %v1741 = vsel %vm194, %v1337, 0
    %v1744 = vsel %vm194, %v1338, 0
    %v1747 = vsel %vm194, %v1339, 0
    %v1750 = vsel %vm194, %v1340, 0
    %1752 = vmatprep.subr.bf16.mxu0 0
    %1753 = vmatpush1.bf16.msra.mxu0 %v1692
    %1754 = vmatprep.subr.bf16.mxu0 0
    %1755 = vmatpush1.bf16.msra.mxu0 %v1693
    %1756 = vmatprep.subr.bf16.mxu0 0
    %1757 = vmatpush1.bf16.msra.mxu0 %v1694
    %1758 = vmatprep.subr.bf16.mxu0 0
    %1759 = vmatpush1.bf16.msra.mxu0 %v1695
    %1760 = vmatprep.subr.bf16.mxu0 0
    %1761 = vmatpush1.bf16.msra.mxu0 %v1696
    %1762 = vmatprep.subr.bf16.mxu0 0
    %1763 = vmatpush1.bf16.msra.mxu0 %v1697
    %1764 = vmatprep.subr.bf16.mxu0 0
    %1765 = vmatpush1.bf16.msra.mxu0 %v1698
    %1766 = vmatprep.subr.bf16.mxu0 0
    %1767 = vmatpush1.bf16.msra.mxu0 %v1699
    %1768 = vmatprep.subr.bf16.mxu0 0
    %1769 = vmatpush1.bf16.msra.mxu0 %v1700
    %1770 = vmatprep.subr.bf16.mxu0 0
    %1771 = vmatpush1.bf16.msra.mxu0 %v1701
    %1772 = vmatprep.subr.bf16.mxu0 0
    %1773 = vmatpush1.bf16.msra.mxu0 %v1702
    %1774 = vmatprep.subr.bf16.mxu0 0
    %1775 = vmatpush1.bf16.msra.mxu0 %v1703
    %1776 = vmatprep.subr.bf16.mxu0 0
    %1777 = vmatpush1.bf16.msra.mxu0 %v1704
    %1778 = vmatprep.subr.bf16.mxu0 0
    %1779 = vmatpush1.bf16.msra.mxu0 %v1705
    %1780 = vmatprep.subr.bf16.mxu0 0
    %1781 = vmatpush1.bf16.msra.mxu0 %v1706
    %1782 = vmatprep.subr.bf16.mxu0 0
    %1783 = vmatpush1.bf16.msra.mxu0 %v1707
    %1784 = vmatprep.mubr.bf16.mxu0 %v1591
    %1785 = vmatmul.mubr.bf16.gmra.mrb[0].mxu0 %v1527
    %v1786 = vpop.f32.mrb[0].mxu0
    %v1787 = vadd.f32 %v1618, %v1786
    %v1788 = vpop.f32.mrb[0].mxu0
    %v1789 = vpop.f32.mrb[0].mxu0
    %v1790 = vadd.f32 %v1618, %v1789
    %v1791 = vpop.f32.mrb[0].mxu0
    %1792 = vmatprep.mubr.bf16.mxu0 %v1594
    %1793 = vmatmul.mubr.bf16.gmra.mrb[0].mxu0 %v1530
    %v1794 = vpop.f32.mrb[0].mxu0
    %v1795 = vadd.f32 %v1618, %v1794
    %v1796 = vpop.f32.mrb[0].mxu0
    %v1797 = vpop.f32.mrb[0].mxu0
    %v1798 = vadd.f32 %v1618, %v1797
    %v1799 = vpop.f32.mrb[0].mxu0
    %1800 = vmatprep.mubr.bf16.mxu0 %v1597
    %1801 = vmatmul.mubr.bf16.gmra.mrb[0].mxu0 %v1533
    %v1802 = vpop.f32.mrb[0].mxu0
    %v1803 = vadd.f32 %v1618, %v1802
    %v1804 = vpop.f32.mrb[0].mxu0
    %v1805 = vpop.f32.mrb[0].mxu0
    %v1806 = vadd.f32 %v1618, %v1805
    %v1807 = vpop.f32.mrb[0].mxu0
    %1808 = vmatprep.mubr.bf16.mxu0 %v1600
    %1809 = vmatmul.mubr.bf16.gmra.mrb[0].mxu0 %v1536
    %v1810 = vpop.f32.mrb[0].mxu0
    %v1811 = vadd.f32 %v1618, %v1810
    %v1812 = vpop.f32.mrb[0].mxu0
    %v1813 = vpop.f32.mrb[0].mxu0
    %v1814 = vadd.f32 %v1618, %v1813
    %v1815 = vpop.f32.mrb[0].mxu0
    %1816 = vmatprep.mubr.bf16.mxu0 %v1603
    %1817 = vmatmul.mubr.bf16.gmra.mrb[0].mxu0 %v1539
    %v1818 = vpop.f32.mrb[0].mxu0
    %v1819 = vadd.f32 %v1618, %v1818
    %v1820 = vpop.f32.mrb[0].mxu0
    %v1821 = vpop.f32.mrb[0].mxu0
    %v1822 = vadd.f32 %v1618, %v1821
    %v1823 = vpop.f32.mrb[0].mxu0
    %1824 = vmatprep.mubr.bf16.mxu0 %v1606
    %1825 = vmatmul.mubr.bf16.gmra.mrb[0].mxu0 %v1542
    %v1826 = vpop.f32.mrb[0].mxu0
    %v1827 = vadd.f32 %v1618, %v1826
    %v1828 = vpop.f32.mrb[0].mxu0
    %v1829 = vpop.f32.mrb[0].mxu0
    %v1830 = vadd.f32 %v1618, %v1829
    %v1831 = vpop.f32.mrb[0].mxu0
    %1832 = vmatprep.mubr.bf16.mxu0 %v1609
    %1833 = vmatmul.mubr.bf16.gmra.mrb[0].mxu0 %v1545
    %v1834 = vpop.f32.mrb[0].mxu0
    %v1835 = vadd.f32 %v1618, %v1834
    %v1836 = vpop.f32.mrb[0].mxu0
    %v1837 = vpop.f32.mrb[0].mxu0
    %v1838 = vadd.f32 %v1618, %v1837
    %v1839 = vpop.f32.mrb[0].mxu0
    %1840 = vmatprep.mubr.bf16.mxu0 %v1612
    %1841 = vmatmul.mubr.bf16.gmra.mrb[0].mxu0 %v1548
    %v1842 = vpop.f32.mrb[0].mxu0
    %v1843 = vadd.f32 %v1618, %v1842
    %v1844 = vpop.f32.mrb[0].mxu0
    %v1845 = vpop.f32.mrb[0].mxu0
    %v1846 = vadd.f32 %v1618, %v1845
    %v1847 = vpop.f32.mrb[0].mxu0
    %1848 = vdwg.mxu0
    %1849 = vmatprep.subr.bf16.mxu0 0
    %1850 = vmatpush1.bf16.msra.mxu0 %v1708
    %1851 = vmatprep.subr.bf16.mxu0 0
    %1852 = vmatpush1.bf16.msra.mxu0 %v1709
    %1853 = vmatprep.subr.bf16.mxu0 0
    %1854 = vmatpush1.bf16.msra.mxu0 0
    %1855 = vmatprep.subr.bf16.mxu0 0
    %1856 = vmatpush1.bf16.msra.mxu0 0
    %1857 = vmatprep.subr.bf16.mxu0 0
    %1858 = vmatpush1.bf16.msra.mxu0 0
    %1859 = vmatprep.subr.bf16.mxu0 0
    %1860 = vmatpush1.bf16.msra.mxu0 0
    %1861 = vmatprep.subr.bf16.mxu0 0
    %1862 = vmatpush1.bf16.msra.mxu0 0
    %1863 = vmatprep.subr.bf16.mxu0 0
    %1864 = vmatpush1.bf16.msra.mxu0 0
    %1865 = vmatprep.subr.bf16.mxu0 0
    %1866 = vmatpush1.bf16.msra.mxu0 0
    %1867 = vmatprep.subr.bf16.mxu0 0
    %1868 = vmatpush1.bf16.msra.mxu0 0
    %1869 = vmatprep.subr.bf16.mxu0 0
    %1870 = vmatpush1.bf16.msra.mxu0 0
    %1871 = vmatprep.subr.bf16.mxu0 0
    %1872 = vmatpush1.bf16.msra.mxu0 0
    %1873 = vmatprep.subr.bf16.mxu0 0
    %1874 = vmatpush1.bf16.msra.mxu0 0
    %1875 = vmatprep.subr.bf16.mxu0 0
    %1876 = vmatpush1.bf16.msra.mxu0 0
    %1877 = vmatprep.subr.bf16.mxu0 0
    %1878 = vmatpush1.bf16.msra.mxu0 0
    %1879 = vmatprep.subr.bf16.mxu0 0
    %1880 = vmatpush1.bf16.msra.mxu0 0
    %1881 = vmatprep.mubr.bf16.mxu0 0
    %1882 = vmatmul.mubr.bf16.gmra.mrb[0].mxu0 %v1729
    %v1883 = vpop.f32.mrb[0].mxu0
    %v1884 = vadd.f32 %v1787, %v1883
    %v1885 = vpop.f32.mrb[0].mxu0
    %v1886 = vpop.f32.mrb[0].mxu0
    %v1887 = vadd.f32 %v1790, %v1886
    %v1888 = vpop.f32.mrb[0].mxu0
    %1889 = vmatprep.mubr.bf16.mxu0 0
    %1890 = vmatmul.mubr.bf16.gmra.mrb[0].mxu0 %v1732
    %v1891 = vpop.f32.mrb[0].mxu0
    %v1892 = vadd.f32 %v1795, %v1891
    %v1893 = vpop.f32.mrb[0].mxu0
    %v1894 = vpop.f32.mrb[0].mxu0
    %v1895 = vadd.f32 %v1798, %v1894
    %v1896 = vpop.f32.mrb[0].mxu0
    %1897 = vmatprep.mubr.bf16.mxu0 0
    %1898 = vmatmul.mubr.bf16.gmra.mrb[0].mxu0 %v1735
    %v1899 = vpop.f32.mrb[0].mxu0
    %v1900 = vadd.f32 %v1803, %v1899
    %v1901 = vpop.f32.mrb[0].mxu0
    %v1902 = vpop.f32.mrb[0].mxu0
    %v1903 = vadd.f32 %v1806, %v1902
    %v1904 = vpop.f32.mrb[0].mxu0
    %1905 = vmatprep.mubr.bf16.mxu0 0
    %1906 = vmatmul.mubr.bf16.gmra.mrb[0].mxu0 %v1738
    %v1907 = vpop.f32.mrb[0].mxu0
    %v1908 = vadd.f32 %v1811, %v1907
    %v1909 = vpop.f32.mrb[0].mxu0
    %v1910 = vpop.f32.mrb[0].mxu0
    %v1911 = vadd.f32 %v1814, %v1910
    %v1912 = vpop.f32.mrb[0].mxu0
    %1913 = vmatprep.mubr.bf16.mxu0 0
    %1914 = vmatmul.mubr.bf16.gmra.mrb[0].mxu0 %v1741
    %v1915 = vpop.f32.mrb[0].mxu0
    %v1916 = vadd.f32 %v1819, %v1915
    %v1917 = vpop.f32.mrb[0].mxu0
    %v1918 = vpop.f32.mrb[0].mxu0
    %v1919 = vadd.f32 %v1822, %v1918
    %v1920 = vpop.f32.mrb[0].mxu0
    %1921 = vmatprep.mubr.bf16.mxu0 0
    %1922 = vmatmul.mubr.bf16.gmra.mrb[0].mxu0 %v1744
    %v1923 = vpop.f32.mrb[0].mxu0
    %v1924 = vadd.f32 %v1827, %v1923
    %v1925 = vpop.f32.mrb[0].mxu0
    %v1926 = vpop.f32.mrb[0].mxu0
    %v1927 = vadd.f32 %v1830, %v1926
    %v1928 = vpop.f32.mrb[0].mxu0
    %1929 = vmatprep.mubr.bf16.mxu0 0
    %1930 = vmatmul.mubr.bf16.gmra.mrb[0].mxu0 %v1747
    %v1931 = vpop.f32.mrb[0].mxu0
    %v1932 = vadd.f32 %v1835, %v1931
    %v1933 = vpop.f32.mrb[0].mxu0
    %v1934 = vpop.f32.mrb[0].mxu0
    %v1935 = vadd.f32 %v1838, %v1934
    %v1936 = vpop.f32.mrb[0].mxu0
    %1937 = vmatprep.mubr.bf16.mxu0 0
    %1938 = vmatmul.mubr.bf16.gmra.mrb[0].mxu0 %v1750
    %v1939 = vpop.f32.mrb[0].mxu0
    %v1940 = vadd.f32 %v1843, %v1939
    %v1941 = vpop.f32.mrb[0].mxu0
    %v1942 = vpop.f32.mrb[0].mxu0
    %v1943 = vadd.f32 %v1846, %v1942
    %v1944 = vpop.f32.mrb[0].mxu0
    %1945 = vdwg.mxu0
    %v1946 = vld [vmem:[%s9] sm:$0xf]
    %v1947 = vld [vmem:[%s9 + $0x4] sm:$0xf]
    %v1948 = vld [vmem:[%s9 + $0x8] sm:$0xf]
    %v1949 = vld [vmem:[%s9 + $0xc] sm:$0xf]
    %v1950 = vld [vmem:[%s9 + $0x10] sm:$0xf]
    %v1951 = vld [vmem:[%s9 + $0x14] sm:$0xf]
    %v1952 = vld [vmem:[%s9 + $0x18] sm:$0xf]
    %v1953 = vld [vmem:[%s9 + $0x1c] sm:$0xf]
    %v1954 = vld [vmem:[%s9 + $0x20] sm:$0xf]
    %v1955 = vld [vmem:[%s9 + $0x24] sm:$0xf]
    %v1956 = vld [vmem:[%s9 + $0x28] sm:$0xf]
    %v1957 = vld [vmem:[%s9 + $0x2c] sm:$0xf]
    %v1958 = vld [vmem:[%s9 + $0x30] sm:$0xf]
    %v1959 = vld [vmem:[%s9 + $0x34] sm:$0xf]
    %v1960 = vld [vmem:[%s9 + $0x38] sm:$0xf]
    %v1961 = vld [vmem:[%s9 + $0x3c] sm:$0xf]
    %v1962 = vld [vmem:[%s9 + $0x40] sm:$0xf]
    %v1963 = vld [vmem:[%s9 + $0x44] sm:$0xf]
    %v1964 = vld [vmem:[%s9 + $0x48] sm:$0xf]
    %v1965 = vld [vmem:[%s9 + $0x4c] sm:$0xf]
    %v1966 = vld [vmem:[%s9 + $0x50] sm:$0xf]
    %v1967 = vld [vmem:[%s9 + $0x54] sm:$0xf]
    %v1968 = vld [vmem:[%s9 + $0x58] sm:$0xf]
    %v1969 = vld [vmem:[%s9 + $0x5c] sm:$0xf]
    %v1970 = vld [vmem:[%s9 + $0x60] sm:$0xf]
    %v1971 = vld [vmem:[%s9 + $0x64] sm:$0xf]
    %v1972 = vld [vmem:[%s9 + $0x68] sm:$0xf]
    %v1973 = vld [vmem:[%s9 + $0x6c] sm:$0xf]
    %v1974 = vld [vmem:[%s9 + $0x70] sm:$0xf]
    %v1975 = vld [vmem:[%s9 + $0x74] sm:$0xf]
    %v1976 = vld [vmem:[%s9 + $0x78] sm:$0xf]
    %v1977 = vld [vmem:[%s9 + $0x7c] sm:$0xf]
    %v1978 = vld [vmem:[%s9 + $0x80] sm:$0xf]
    %v1979 = vld [vmem:[%s9 + $0x84] sm:$0xf]
    %v1980 = vld [vmem:[%s9 + $0x88] sm:$0xf]
    %v1981 = vld [vmem:[%s9 + $0x8c] sm:$0xf]
    %v1982 = vld [vmem:[%s10] sm:$0x1]
    %v1985 = vrot.slane %v1940, 7
    %v1986 = vrot.slane %v1943, 7
    %v1987 = vsel %vm419, %v1985, %v1986
    %v2004 = vrot.slane %v1884, 7
    %v2005 = vrot.slane %v1887, 7
    %v2006 = vsel %vm419, %v2004, %v2005
    %v2007 = vrot.slane %v1892, 7
    %v2008 = vsel %vm419, %v2005, %v2007
    %v2009 = vrot.slane %v1895, 7
    %v2010 = vsel %vm419, %v2007, %v2009
    %v2011 = vrot.slane %v1900, 7
    %v2012 = vsel %vm419, %v2009, %v2011
    %v2013 = vrot.slane %v1903, 7
    %v2014 = vsel %vm419, %v2011, %v2013
    %v2015 = vrot.slane %v1908, 7
    %v2016 = vsel %vm419, %v2013, %v2015
    %v2017 = vrot.slane %v1911, 7
    %v2018 = vsel %vm419, %v2015, %v2017
    %v2019 = vrot.slane %v1916, 7
    %v2020 = vsel %vm419, %v2017, %v2019
    %v2021 = vrot.slane %v1919, 7
    %v2022 = vsel %vm419, %v2019, %v2021
    %v2023 = vrot.slane %v1924, 7
    %v2024 = vsel %vm419, %v2021, %v2023
    %v2025 = vrot.slane %v1927, 7
    %v2026 = vsel %vm419, %v2023, %v2025
    %v2027 = vrot.slane %v1932, 7
    %v2028 = vsel %vm419, %v2025, %v2027
    %v2029 = vrot.slane %v1935, 7
    %v2030 = vsel %vm419, %v2027, %v2029
    %v2031 = vsel %vm419, %v2029, %v1985
    %v2047 = vsel %vm419, %v1986, %v2004
    %v2048 = vmul.f32 %v1987, %v486
    %v2049 = vmul.f32 %v2047, %v491
    %v2050 = vmul.f32 %v2006, %v496
    %v2051 = vmul.f32 %v2008, %v501
    %v2052 = vmul.f32 %v2010, %v506
    %v2053 = vmul.f32 %v2012, %v511
    %v2054 = vmul.f32 %v2014, %v516
    %v2055 = vmul.f32 %v2016, %v521
    %v2056 = vmul.f32 %v2018, %v526
    %v2057 = vmul.f32 %v2020, %v531
    %v2058 = vmul.f32 %v2022, %v536
    %v2059 = vmul.f32 %v2024, %v541
    %v2060 = vmul.f32 %v2026, %v546
    %v2061 = vmul.f32 %v2028, %v551
    %v2062 = vmul.f32 %v2030, %v556
    %v2063 = vmul.f32 %v2031, %v561
    %v2064 = vpack.c.bf16 %v2049, %v2048
    %v2065 = vpack.c.bf16 %v2051, %v2050
    %v2066 = vpack.c.bf16 %v2053, %v2052
    %v2067 = vpack.c.bf16 %v2055, %v2054
    %v2068 = vpack.c.bf16 %v2057, %v2056
    %v2069 = vpack.c.bf16 %v2059, %v2058
    %v2070 = vpack.c.bf16 %v2061, %v2060
    %v2071 = vpack.c.bf16 %v2063, %v2062
    %v2072 = vmul.f32 %v1943, %v589
    %v2073 = vmul.f32 %v1884, %v593
    %v2074 = vmul.f32 %v1887, %v597
    %v2075 = vmul.f32 %v1892, %v601
    %v2076 = vmul.f32 %v1895, %v605
    %v2077 = vmul.f32 %v1900, %v609
    %v2078 = vmul.f32 %v1903, %v613
    %v2079 = vmul.f32 %v1908, %v617
    %v2080 = vmul.f32 %v1911, %v621
    %v2081 = vmul.f32 %v1916, %v625
    %v2082 = vmul.f32 %v1919, %v629
    %v2083 = vmul.f32 %v1924, %v633
    %v2084 = vmul.f32 %v1927, %v637
    %v2085 = vmul.f32 %v1932, %v641
    %v2086 = vmul.f32 %v1935, %v645
    %v2087 = vmul.f32 %v1940, %v649
    %v2088 = vpack.c.bf16 %v2073, %v2072
    %v2089 = vpack.c.bf16 %v2075, %v2074
    %v2090 = vpack.c.bf16 %v2077, %v2076
    %v2091 = vpack.c.bf16 %v2079, %v2078
    %v2092 = vpack.c.bf16 %v2081, %v2080
    %v2093 = vpack.c.bf16 %v2083, %v2082
    %v2094 = vpack.c.bf16 %v2085, %v2084
    %v2095 = vpack.c.bf16 %v2087, %v2086
    %v2096 = vrot.slane %v1943, 1
    %v2098 = vrot.slane %v1884, 1
    %v2099 = vrot.slane %v1887, 1
    %v2100 = vsel %vm677, %v2098, %v2099
    %v2101 = vrot.slane %v1892, 1
    %v2102 = vsel %vm677, %v2099, %v2101
    %v2103 = vrot.slane %v1895, 1
    %v2104 = vsel %vm677, %v2101, %v2103
    %v2105 = vrot.slane %v1900, 1
    %v2106 = vsel %vm677, %v2103, %v2105
    %v2107 = vrot.slane %v1903, 1
    %v2108 = vsel %vm677, %v2105, %v2107
    %v2109 = vrot.slane %v1908, 1
    %v2110 = vsel %vm677, %v2107, %v2109
    %v2111 = vrot.slane %v1911, 1
    %v2112 = vsel %vm677, %v2109, %v2111
    %v2113 = vrot.slane %v1916, 1
    %v2114 = vsel %vm677, %v2111, %v2113
    %v2115 = vrot.slane %v1919, 1
    %v2116 = vsel %vm677, %v2113, %v2115
    %v2117 = vrot.slane %v1924, 1
    %v2118 = vsel %vm677, %v2115, %v2117
    %v2119 = vrot.slane %v1927, 1
    %v2120 = vsel %vm677, %v2117, %v2119
    %v2121 = vrot.slane %v1932, 1
    %v2122 = vsel %vm677, %v2119, %v2121
    %v2123 = vrot.slane %v1935, 1
    %v2124 = vsel %vm677, %v2121, %v2123
    %v2125 = vrot.slane %v1940, 1
    %v2126 = vsel %vm677, %v2123, %v2125
    %v2127 = vsel %vm677, %v2125, %v2096
    %v2144 = vsel %vm677, %v2096, %v2098
    %v2145 = vmul.f32 %v2144, %v727
    %v2146 = vmul.f32 %v2100, %v731
    %v2147 = vmul.f32 %v2102, %v735
    %v2148 = vmul.f32 %v2104, %v739
    %v2149 = vmul.f32 %v2106, %v743
    %v2150 = vmul.f32 %v2108, %v747
    %v2151 = vmul.f32 %v2110, %v751
    %v2152 = vmul.f32 %v2112, %v755
    %v2153 = vmul.f32 %v2114, %v759
    %v2154 = vmul.f32 %v2116, %v763
    %v2155 = vmul.f32 %v2118, %v767
    %v2156 = vmul.f32 %v2120, %v771
    %v2157 = vmul.f32 %v2122, %v775
    %v2158 = vmul.f32 %v2124, %v779
    %v2159 = vmul.f32 %v2126, %v783
    %v2160 = vmul.f32 %v2127, %v787
    %v2161 = vpack.c.bf16 %v2146, %v2145
    %v2162 = vpack.c.bf16 %v2148, %v2147
    %v2163 = vpack.c.bf16 %v2150, %v2149
    %v2164 = vpack.c.bf16 %v2152, %v2151
    %v2165 = vpack.c.bf16 %v2154, %v2153
    %v2166 = vpack.c.bf16 %v2156, %v2155
    %v2167 = vpack.c.bf16 %v2158, %v2157
    %v2168 = vpack.c.bf16 %v2160, %v2159
    %v2169 = vmul.f32 %v2047, %v815
    %v2170 = vmul.f32 %v2006, %v819
    %v2171 = vmul.f32 %v2008, %v823
    %v2172 = vmul.f32 %v2010, %v827
    %v2173 = vmul.f32 %v2012, %v831
    %v2174 = vmul.f32 %v2014, %v835
    %v2175 = vmul.f32 %v2016, %v839
    %v2176 = vmul.f32 %v2018, %v843
    %v2177 = vmul.f32 %v2020, %v847
    %v2178 = vmul.f32 %v2022, %v851
    %v2179 = vmul.f32 %v2024, %v855
    %v2180 = vmul.f32 %v2026, %v859
    %v2181 = vmul.f32 %v2028, %v863
    %v2182 = vmul.f32 %v2030, %v867
    %v2183 = vmul.f32 %v2031, %v871
    %v2184 = vmul.f32 %v1987, %v875
    %v2185 = vpack.c.bf16 %v2170, %v2169
    %v2186 = vpack.c.bf16 %v2172, %v2171
    %v2187 = vpack.c.bf16 %v2174, %v2173
    %v2188 = vpack.c.bf16 %v2176, %v2175
    %v2189 = vpack.c.bf16 %v2178, %v2177
    %v2190 = vpack.c.bf16 %v2180, %v2179
    %v2191 = vpack.c.bf16 %v2182, %v2181
    %v2192 = vpack.c.bf16 %v2184, %v2183
    %v2193 = vmul.f32 %v1884, %v903
    %v2194 = vmul.f32 %v1887, %v907
    %v2195 = vmul.f32 %v1892, %v911
    %v2196 = vmul.f32 %v1895, %v915
    %v2197 = vmul.f32 %v1900, %v919
    %v2198 = vmul.f32 %v1903, %v923
    %v2199 = vmul.f32 %v1908, %v927
    %v2200 = vmul.f32 %v1911, %v931
    %v2201 = vmul.f32 %v1916, %v935
    %v2202 = vmul.f32 %v1919, %v939
    %v2203 = vmul.f32 %v1924, %v943
    %v2204 = vmul.f32 %v1927, %v947
    %v2205 = vmul.f32 %v1932, %v951
    %v2206 = vmul.f32 %v1935, %v955
    %v2207 = vmul.f32 %v1940, %v959
    %v2208 = vmul.f32 %v1943, %v963
    %v2209 = vpack.c.bf16 %v2194, %v2193
    %v2210 = vpack.c.bf16 %v2196, %v2195
    %v2211 = vpack.c.bf16 %v2198, %v2197
    %v2212 = vpack.c.bf16 %v2200, %v2199
    %v2213 = vpack.c.bf16 %v2202, %v2201
    %v2214 = vpack.c.bf16 %v2204, %v2203
    %v2215 = vpack.c.bf16 %v2206, %v2205
    %v2216 = vpack.c.bf16 %v2208, %v2207
    %v2217 = vmul.f32 %v2100, %v991
    %v2218 = vmul.f32 %v2102, %v995
    %v2219 = vmul.f32 %v2104, %v999
    %v2220 = vmul.f32 %v2106, %v1003
    %v2221 = vmul.f32 %v2108, %v1007
    %v2222 = vmul.f32 %v2110, %v1011
    %v2223 = vmul.f32 %v2112, %v1015
    %v2224 = vmul.f32 %v2114, %v1019
    %v2225 = vmul.f32 %v2116, %v1023
    %v2226 = vmul.f32 %v2118, %v1027
    %v2227 = vmul.f32 %v2120, %v1031
    %v2228 = vmul.f32 %v2122, %v1035
    %v2229 = vmul.f32 %v2124, %v1039
    %v2230 = vmul.f32 %v2126, %v1043
    %v2231 = vmul.f32 %v2127, %v1047
    %v2232 = vmul.f32 %v2144, %v1051
    %v2233 = vpack.c.bf16 %v2218, %v2217
    %v2234 = vpack.c.bf16 %v2220, %v2219
    %v2235 = vpack.c.bf16 %v2222, %v2221
    %v2236 = vpack.c.bf16 %v2224, %v2223
    %v2237 = vpack.c.bf16 %v2226, %v2225
    %v2238 = vpack.c.bf16 %v2228, %v2227
    %v2239 = vpack.c.bf16 %v2230, %v2229
    %v2240 = vpack.c.bf16 %v2232, %v2231
    %v2241 = vmul.f32 %v2006, %v1079
    %v2242 = vmul.f32 %v2008, %v1083
    %v2243 = vmul.f32 %v2010, %v1087
    %v2244 = vmul.f32 %v2012, %v1091
    %v2245 = vmul.f32 %v2014, %v1095
    %v2246 = vmul.f32 %v2016, %v1099
    %v2247 = vmul.f32 %v2018, %v1103
    %v2248 = vmul.f32 %v2020, %v1107
    %v2249 = vmul.f32 %v2022, %v1111
    %v2250 = vmul.f32 %v2024, %v1115
    %v2251 = vmul.f32 %v2026, %v1119
    %v2252 = vmul.f32 %v2028, %v1123
    %v2253 = vmul.f32 %v2030, %v1127
    %v2254 = vmul.f32 %v2031, %v1131
    %v2255 = vmul.f32 %v1987, %v1135
    %v2256 = vmul.f32 %v2047, %v1139
    %v2257 = vpack.c.bf16 %v2242, %v2241
    %v2258 = vpack.c.bf16 %v2244, %v2243
    %v2259 = vpack.c.bf16 %v2246, %v2245
    %v2260 = vpack.c.bf16 %v2248, %v2247
    %v2261 = vpack.c.bf16 %v2250, %v2249
    %v2262 = vpack.c.bf16 %v2252, %v2251
    %v2263 = vpack.c.bf16 %v2254, %v2253
    %v2264 = vpack.c.bf16 %v2256, %v2255
    %v2265 = vmul.f32 %v1887, %v1167
    %v2266 = vmul.f32 %v1892, %v1171
    %v2267 = vmul.f32 %v1895, %v1175
    %v2268 = vmul.f32 %v1900, %v1179
    %v2269 = vmul.f32 %v1903, %v1183
    %v2270 = vmul.f32 %v1908, %v1187
    %v2271 = vmul.f32 %v1911, %v1191
    %v2272 = vmul.f32 %v1916, %v1195
    %v2273 = vmul.f32 %v1919, %v1199
    %v2274 = vmul.f32 %v1924, %v1203
    %v2275 = vmul.f32 %v1927, %v1207
    %v2276 = vmul.f32 %v1932, %v1211
    %v2277 = vmul.f32 %v1935, %v1215
    %v2278 = vmul.f32 %v1940, %v1219
    %v2279 = vmul.f32 %v1943, %v1223
    %v2280 = vmul.f32 %v1884, %v1227
    %v2281 = vpack.c.bf16 %v2266, %v2265
    %v2282 = vpack.c.bf16 %v2268, %v2267
    %v2283 = vpack.c.bf16 %v2270, %v2269
    %v2284 = vpack.c.bf16 %v2272, %v2271
    %v2285 = vpack.c.bf16 %v2274, %v2273
    %v2286 = vpack.c.bf16 %v2276, %v2275
    %v2287 = vpack.c.bf16 %v2278, %v2277
    %v2288 = vpack.c.bf16 %v2280, %v2279
    %v2289 = vmul.f32 %v2102, %v1255
    %v2290 = vmul.f32 %v2104, %v1259
    %v2291 = vmul.f32 %v2106, %v1263
    %v2292 = vmul.f32 %v2108, %v1267
    %v2293 = vmul.f32 %v2110, %v1271
    %v2294 = vmul.f32 %v2112, %v1275
    %v2295 = vmul.f32 %v2114, %v1279
    %v2296 = vmul.f32 %v2116, %v1283
    %v2297 = vmul.f32 %v2118, %v1287
    %v2298 = vmul.f32 %v2120, %v1291
    %v2299 = vmul.f32 %v2122, %v1295
    %v2300 = vmul.f32 %v2124, %v1299
    %v2301 = vmul.f32 %v2126, %v1303
    %v2302 = vmul.f32 %v2127, %v1307
    %v2303 = vmul.f32 %v2144, %v1311
    %v2304 = vmul.f32 %v2100, %v1315
    %v2305 = vpack.c.bf16 %v2290, %v2289
    %v2306 = vpack.c.bf16 %v2292, %v2291
    %v2307 = vpack.c.bf16 %v2294, %v2293
    %v2308 = vpack.c.bf16 %v2296, %v2295
    %v2309 = vpack.c.bf16 %v2298, %v2297
    %v2310 = vpack.c.bf16 %v2300, %v2299
    %v2311 = vpack.c.bf16 %v2302, %v2301
    %v2312 = vpack.c.bf16 %v2304, %v2303
    %2321 = vrot.lane.b32.xlu0 %v2088, 32
    %v2322 = vpop.permute.xlu0 %2321
    %2323 = vrot.lane.b32.xlu0 %v2089, 32
    %v2324 = vpop.permute.xlu0 %2323
    %2325 = vrot.lane.b32.xlu0 %v2090, 32
    %v2326 = vpop.permute.xlu0 %2325
    %2327 = vrot.lane.b32.xlu0 %v2091, 32
    %v2328 = vpop.permute.xlu0 %2327
    %2329 = vrot.lane.b32.xlu0 %v2092, 32
    %v2330 = vpop.permute.xlu0 %2329
    %2331 = vrot.lane.b32.xlu0 %v2093, 32
    %v2332 = vpop.permute.xlu0 %2331
    %2333 = vrot.lane.b32.xlu0 %v2094, 32
    %v2334 = vpop.permute.xlu0 %2333
    %2335 = vrot.lane.b32.xlu0 %v2095, 32
    %v2336 = vpop.permute.xlu0 %2335
    %2345 = vrot.lane.b32.xlu0 %v2161, 64
    %v2346 = vpop.permute.xlu0 %2345
    %2347 = vrot.lane.b32.xlu0 %v2162, 64
    %v2348 = vpop.permute.xlu0 %2347
    %2349 = vrot.lane.b32.xlu0 %v2163, 64
    %v2350 = vpop.permute.xlu0 %2349
    %2351 = vrot.lane.b32.xlu0 %v2164, 64
    %v2352 = vpop.permute.xlu0 %2351
    %2353 = vrot.lane.b32.xlu0 %v2165, 64
    %v2354 = vpop.permute.xlu0 %2353
    %2355 = vrot.lane.b32.xlu0 %v2166, 64
    %v2356 = vpop.permute.xlu0 %2355
    %2357 = vrot.lane.b32.xlu0 %v2167, 64
    %v2358 = vpop.permute.xlu0 %2357
    %2359 = vrot.lane.b32.xlu0 %v2168, 64
    %v2360 = vpop.permute.xlu0 %2359
    %2369 = vrot.lane.b32.xlu0 %v2185, 96
    %v2370 = vpop.permute.xlu0 %2369
    %2371 = vrot.lane.b32.xlu0 %v2186, 96
    %v2372 = vpop.permute.xlu0 %2371
    %2373 = vrot.lane.b32.xlu0 %v2187, 96
    %v2374 = vpop.permute.xlu0 %2373
    %2375 = vrot.lane.b32.xlu0 %v2188, 96
    %v2376 = vpop.permute.xlu0 %2375
    %2377 = vrot.lane.b32.xlu0 %v2189, 96
    %v2378 = vpop.permute.xlu0 %2377
    %2379 = vrot.lane.b32.xlu0 %v2190, 96
    %v2380 = vpop.permute.xlu0 %2379
    %2381 = vrot.lane.b32.xlu0 %v2191, 96
    %v2382 = vpop.permute.xlu0 %2381
    %2383 = vrot.lane.b32.xlu0 %v2192, 96
    %v2384 = vpop.permute.xlu0 %2383
    %2393 = vrot.lane.b32.xlu0 %v2233, 32
    %v2394 = vpop.permute.xlu0 %2393
    %2395 = vrot.lane.b32.xlu0 %v2234, 32
    %v2396 = vpop.permute.xlu0 %2395
    %2397 = vrot.lane.b32.xlu0 %v2235, 32
    %v2398 = vpop.permute.xlu0 %2397
    %2399 = vrot.lane.b32.xlu0 %v2236, 32
    %v2400 = vpop.permute.xlu0 %2399
    %2401 = vrot.lane.b32.xlu0 %v2237, 32
    %v2402 = vpop.permute.xlu0 %2401
    %2403 = vrot.lane.b32.xlu0 %v2238, 32
    %v2404 = vpop.permute.xlu0 %2403
    %2405 = vrot.lane.b32.xlu0 %v2239, 32
    %v2406 = vpop.permute.xlu0 %2405
    %2407 = vrot.lane.b32.xlu0 %v2240, 32
    %v2408 = vpop.permute.xlu0 %2407
    %2417 = vrot.lane.b32.xlu0 %v2257, 64
    %v2418 = vpop.permute.xlu0 %2417
    %2419 = vrot.lane.b32.xlu0 %v2258, 64
    %v2420 = vpop.permute.xlu0 %2419
    %2421 = vrot.lane.b32.xlu0 %v2259, 64
    %v2422 = vpop.permute.xlu0 %2421
    %2423 = vrot.lane.b32.xlu0 %v2260, 64
    %v2424 = vpop.permute.xlu0 %2423
    %2425 = vrot.lane.b32.xlu0 %v2261, 64
    %v2426 = vpop.permute.xlu0 %2425
    %2427 = vrot.lane.b32.xlu0 %v2262, 64
    %v2428 = vpop.permute.xlu0 %2427
    %2429 = vrot.lane.b32.xlu0 %v2263, 64
    %v2430 = vpop.permute.xlu0 %2429
    %2431 = vrot.lane.b32.xlu0 %v2264, 64
    %v2432 = vpop.permute.xlu0 %2431
    %2441 = vrot.lane.b32.xlu0 %v2281, 96
    %v2442 = vpop.permute.xlu0 %2441
    %2443 = vrot.lane.b32.xlu0 %v2282, 96
    %v2444 = vpop.permute.xlu0 %2443
    %2445 = vrot.lane.b32.xlu0 %v2283, 96
    %v2446 = vpop.permute.xlu0 %2445
    %2447 = vrot.lane.b32.xlu0 %v2284, 96
    %v2448 = vpop.permute.xlu0 %2447
    %2449 = vrot.lane.b32.xlu0 %v2285, 96
    %v2450 = vpop.permute.xlu0 %2449
    %2451 = vrot.lane.b32.xlu0 %v2286, 96
    %v2452 = vpop.permute.xlu0 %2451
    %2453 = vrot.lane.b32.xlu0 %v2287, 96
    %v2454 = vpop.permute.xlu0 %2453
    %2455 = vrot.lane.b32.xlu0 %v2288, 96
    %v2456 = vpop.permute.xlu0 %2455
    %v2459 = vsel %vm194, %v2064, %v2322
    %v2462 = vsel %vm194, %v2065, %v2324
    %v2465 = vsel %vm194, %v2066, %v2326
    %v2468 = vsel %vm194, %v2067, %v2328
    %v2471 = vsel %vm194, %v2068, %v2330
    %v2474 = vsel %vm194, %v2069, %v2332
    %v2477 = vsel %vm194, %v2070, %v2334
    %v2480 = vsel %vm194, %v2071, %v2336
    %v2482 = vsel %vm258, %v2459, %v2346
    %v2484 = vsel %vm258, %v2462, %v2348
    %v2486 = vsel %vm258, %v2465, %v2350
    %v2488 = vsel %vm258, %v2468, %v2352
    %v2490 = vsel %vm258, %v2471, %v2354
    %v2492 = vsel %vm258, %v2474, %v2356
    %v2494 = vsel %vm258, %v2477, %v2358
    %v2496 = vsel %vm258, %v2480, %v2360
    %v2498 = vsel %vm1525, %v2482, %v2370
    %v2501 = vsel %vm1525, %v2484, %v2372
    %v2504 = vsel %vm1525, %v2486, %v2374
    %v2507 = vsel %vm1525, %v2488, %v2376
    %v2510 = vsel %vm1525, %v2490, %v2378
    %v2513 = vsel %vm1525, %v2492, %v2380
    %v2516 = vsel %vm1525, %v2494, %v2382
    %v2519 = vsel %vm1525, %v2496, %v2384
    %v2523 = vsel %vm194, %v2209, %v2394
    %v2526 = vsel %vm194, %v2210, %v2396
    %v2529 = vsel %vm194, %v2211, %v2398
    %v2532 = vsel %vm194, %v2212, %v2400
    %v2535 = vsel %vm194, %v2213, %v2402
    %v2538 = vsel %vm194, %v2214, %v2404
    %v2541 = vsel %vm194, %v2215, %v2406
    %v2544 = vsel %vm194, %v2216, %v2408
    %v2546 = vsel %vm258, %v2523, %v2418
    %v2548 = vsel %vm258, %v2526, %v2420
    %v2550 = vsel %vm258, %v2529, %v2422
    %v2552 = vsel %vm258, %v2532, %v2424
    %v2554 = vsel %vm258, %v2535, %v2426
    %v2556 = vsel %vm258, %v2538, %v2428
    %v2558 = vsel %vm258, %v2541, %v2430
    %v2560 = vsel %vm258, %v2544, %v2432
    %v2562 = vsel %vm1525, %v2546, %v2442
    %v2565 = vsel %vm1525, %v2548, %v2444
    %v2568 = vsel %vm1525, %v2550, %v2446
    %v2571 = vsel %vm1525, %v2552, %v2448
    %v2574 = vsel %vm1525, %v2554, %v2450
    %v2577 = vsel %vm1525, %v2556, %v2452
    %v2580 = vsel %vm1525, %v2558, %v2454
    %v2583 = vsel %vm1525, %v2560, %v2456
    %v2586 = vlaneseq
    %v2587 = vshrl.u32 %v2586, 7
    %v2588 = vsub.s32 0, %v2587
    %v2589 = vrot.slane %v1982, %v2588
    %v2627 = vunpack.c.l.b16 %v1946
    %v2628 = vunpack.c.l.b16 %v1947
    %v2629 = vunpack.c.l.b16 %v1948
    %v2630 = vunpack.c.l.b16 %v1949
    %v2631 = vunpack.c.l.b16 %v1950
    %v2632 = vunpack.c.l.b16 %v1951
    %v2633 = vunpack.c.l.b16 %v1952
    %v2634 = vunpack.c.l.b16 %v1953
    %v2635 = vunpack.c.l.b16 %v1954
    %v2636 = vunpack.c.l.b16 %v1955
    %v2637 = vunpack.c.l.b16 %v1956
    %v2638 = vunpack.c.l.b16 %v1957
    %v2639 = vunpack.c.l.b16 %v1958
    %v2640 = vunpack.c.l.b16 %v1959
    %v2641 = vunpack.c.l.b16 %v1960
    %v2642 = vunpack.c.l.b16 %v1961
    %v2643 = vunpack.c.l.b16 %v1962
    %v2644 = vunpack.c.l.b16 %v1963
    %v2645 = vunpack.c.l.b16 %v1964
    %v2646 = vunpack.c.l.b16 %v1965
    %v2647 = vunpack.c.l.b16 %v1966
    %v2648 = vunpack.c.l.b16 %v1967
    %v2649 = vunpack.c.l.b16 %v1968
    %v2650 = vunpack.c.l.b16 %v1969
    %v2651 = vunpack.c.l.b16 %v1970
    %v2652 = vunpack.c.l.b16 %v1971
    %v2653 = vunpack.c.l.b16 %v1972
    %v2654 = vunpack.c.l.b16 %v1973
    %v2655 = vunpack.c.l.b16 %v1974
    %v2656 = vunpack.c.l.b16 %v1975
    %v2657 = vunpack.c.l.b16 %v1976
    %v2658 = vunpack.c.l.b16 %v1977
    %v2659 = vunpack.c.l.b16 %v1978
    %v2660 = vunpack.c.l.b16 %v1979
    %v2661 = vunpack.c.l.b16 %v1980
    %v2662 = vunpack.c.l.b16 %v1981
    %v2663 = vpack.c.b16 %v2628, %v2627
    %v2664 = vpack.c.b16 %v2630, %v2629
    %v2665 = vpack.c.b16 %v2632, %v2631
    %v2666 = vpack.c.b16 %v2634, %v2633
    %v2667 = vpack.c.b16 %v2636, %v2635
    %v2668 = vpack.c.b16 %v2638, %v2637
    %v2669 = vpack.c.b16 %v2640, %v2639
    %v2670 = vpack.c.b16 %v2642, %v2641
    %v2671 = vpack.c.b16 %v2644, %v2643
    %v2672 = vpack.c.b16 %v2646, %v2645
    %v2673 = vpack.c.b16 %v2648, %v2647
    %v2674 = vpack.c.b16 %v2650, %v2649
    %v2675 = vpack.c.b16 %v2652, %v2651
    %v2676 = vpack.c.b16 %v2654, %v2653
    %v2677 = vpack.c.b16 %v2656, %v2655
    %v2678 = vpack.c.b16 %v2658, %v2657
    %v2679 = vpack.c.b16 %v2660, %v2659
    %v2680 = vpack.c.b16 %v2662, %v2661
    %v2700 = vsel %vm194, %v2305, 0
    %v2703 = vsel %vm194, %v2306, 0
    %v2706 = vsel %vm194, %v2307, 0
    %v2709 = vsel %vm194, %v2308, 0
    %v2712 = vsel %vm194, %v2309, 0
    %v2715 = vsel %vm194, %v2310, 0
    %v2718 = vsel %vm194, %v2311, 0
    %v2721 = vsel %vm194, %v2312, 0
    %2723 = vmatprep.subr.bf16.mxu0 0
    %2724 = vmatpush1.bf16.msra.mxu0 %v2663
    %2725 = vmatprep.subr.bf16.mxu0 0
    %2726 = vmatpush1.bf16.msra.mxu0 %v2664
    %2727 = vmatprep.subr.bf16.mxu0 0
    %2728 = vmatpush1.bf16.msra.mxu0 %v2665
    %2729 = vmatprep.subr.bf16.mxu0 0
    %2730 = vmatpush1.bf16.msra.mxu0 %v2666
    %2731 = vmatprep.subr.bf16.mxu0 0
    %2732 = vmatpush1.bf16.msra.mxu0 %v2667
    %2733 = vmatprep.subr.bf16.mxu0 0
    %2734 = vmatpush1.bf16.msra.mxu0 %v2668
    %2735 = vmatprep.subr.bf16.mxu0 0
    %2736 = vmatpush1.bf16.msra.mxu0 %v2669
    %2737 = vmatprep.subr.bf16.mxu0 0
    %2738 = vmatpush1.bf16.msra.mxu0 %v2670
    %2739 = vmatprep.subr.bf16.mxu0 0
    %2740 = vmatpush1.bf16.msra.mxu0 %v2671
    %2741 = vmatprep.subr.bf16.mxu0 0
    %2742 = vmatpush1.bf16.msra.mxu0 %v2672
    %2743 = vmatprep.subr.bf16.mxu0 0
    %2744 = vmatpush1.bf16.msra.mxu0 %v2673
    %2745 = vmatprep.subr.bf16.mxu0 0
    %2746 = vmatpush1.bf16.msra.mxu0 %v2674
    %2747 = vmatprep.subr.bf16.mxu0 0
    %2748 = vmatpush1.bf16.msra.mxu0 %v2675
    %2749 = vmatprep.subr.bf16.mxu0 0
    %2750 = vmatpush1.bf16.msra.mxu0 %v2676
    %2751 = vmatprep.subr.bf16.mxu0 0
    %2752 = vmatpush1.bf16.msra.mxu0 %v2677
    %2753 = vmatprep.subr.bf16.mxu0 0
    %2754 = vmatpush1.bf16.msra.mxu0 %v2678
    %2755 = vmatprep.mubr.bf16.mxu0 %v2562
    %2756 = vmatmul.mubr.bf16.gmra.mrb[0].mxu0 %v2498
    %v2757 = vpop.f32.mrb[0].mxu0
    %v2758 = vadd.f32 %v2589, %v2757
    %v2759 = vpop.f32.mrb[0].mxu0
    %v2760 = vpop.f32.mrb[0].mxu0
    %v2761 = vadd.f32 %v2589, %v2760
    %v2762 = vpop.f32.mrb[0].mxu0
    %2763 = vmatprep.mubr.bf16.mxu0 %v2565
    %2764 = vmatmul.mubr.bf16.gmra.mrb[0].mxu0 %v2501
    %v2765 = vpop.f32.mrb[0].mxu0
    %v2766 = vadd.f32 %v2589, %v2765
    %v2767 = vpop.f32.mrb[0].mxu0
    %v2768 = vpop.f32.mrb[0].mxu0
    %v2769 = vadd.f32 %v2589, %v2768
    %v2770 = vpop.f32.mrb[0].mxu0
    %2771 = vmatprep.mubr.bf16.mxu0 %v2568
    %2772 = vmatmul.mubr.bf16.gmra.mrb[0].mxu0 %v2504
    %v2773 = vpop.f32.mrb[0].mxu0
    %v2774 = vadd.f32 %v2589, %v2773
    %v2775 = vpop.f32.mrb[0].mxu0
    %v2776 = vpop.f32.mrb[0].mxu0
    %v2777 = vadd.f32 %v2589, %v2776
    %v2778 = vpop.f32.mrb[0].mxu0
    %2779 = vmatprep.mubr.bf16.mxu0 %v2571
    %2780 = vmatmul.mubr.bf16.gmra.mrb[0].mxu0 %v2507
    %v2781 = vpop.f32.mrb[0].mxu0
    %v2782 = vadd.f32 %v2589, %v2781
    %v2783 = vpop.f32.mrb[0].mxu0
    %v2784 = vpop.f32.mrb[0].mxu0
    %v2785 = vadd.f32 %v2589, %v2784
    %v2786 = vpop.f32.mrb[0].mxu0
    %2787 = vmatprep.mubr.bf16.mxu0 %v2574
    %2788 = vmatmul.mubr.bf16.gmra.mrb[0].mxu0 %v2510
    %v2789 = vpop.f32.mrb[0].mxu0
    %v2790 = vadd.f32 %v2589, %v2789
    %v2791 = vpop.f32.mrb[0].mxu0
    %v2792 = vpop.f32.mrb[0].mxu0
    %v2793 = vadd.f32 %v2589, %v2792
    %v2794 = vpop.f32.mrb[0].mxu0
    %2795 = vmatprep.mubr.bf16.mxu0 %v2577
    %2796 = vmatmul.mubr.bf16.gmra.mrb[0].mxu0 %v2513
    %v2797 = vpop.f32.mrb[0].mxu0
    %v2798 = vadd.f32 %v2589, %v2797
    %v2799 = vpop.f32.mrb[0].mxu0
    %v2800 = vpop.f32.mrb[0].mxu0
    %v2801 = vadd.f32 %v2589, %v2800
    %v2802 = vpop.f32.mrb[0].mxu0
    %2803 = vmatprep.mubr.bf16.mxu0 %v2580
    %2804 = vmatmul.mubr.bf16.gmra.mrb[0].mxu0 %v2516
    %v2805 = vpop.f32.mrb[0].mxu0
    %v2806 = vadd.f32 %v2589, %v2805
    %v2807 = vpop.f32.mrb[0].mxu0
    %v2808 = vpop.f32.mrb[0].mxu0
    %v2809 = vadd.f32 %v2589, %v2808
    %v2810 = vpop.f32.mrb[0].mxu0
    %2811 = vmatprep.mubr.bf16.mxu0 %v2583
    %2812 = vmatmul.mubr.bf16.gmra.mrb[0].mxu0 %v2519
    %v2813 = vpop.f32.mrb[0].mxu0
    %v2814 = vadd.f32 %v2589, %v2813
    %v2815 = vpop.f32.mrb[0].mxu0
    %v2816 = vpop.f32.mrb[0].mxu0
    %v2817 = vadd.f32 %v2589, %v2816
    %v2818 = vpop.f32.mrb[0].mxu0
    %2819 = vdwg.mxu0
    %2820 = vmatprep.subr.bf16.mxu0 0
    %2821 = vmatpush1.bf16.msra.mxu0 %v2679
    %2822 = vmatprep.subr.bf16.mxu0 0
    %2823 = vmatpush1.bf16.msra.mxu0 %v2680
    %2824 = vmatprep.subr.bf16.mxu0 0
    %2825 = vmatpush1.bf16.msra.mxu0 0
    %2826 = vmatprep.subr.bf16.mxu0 0
    %2827 = vmatpush1.bf16.msra.mxu0 0
    %2828 = vmatprep.subr.bf16.mxu0 0
    %2829 = vmatpush1.bf16.msra.mxu0 0
    %2830 = vmatprep.subr.bf16.mxu0 0
    %2831 = vmatpush1.bf16.msra.mxu0 0
    %2832 = vmatprep.subr.bf16.mxu0 0
    %2833 = vmatpush1.bf16.msra.mxu0 0
    %2834 = vmatprep.subr.bf16.mxu0 0
    %2835 = vmatpush1.bf16.msra.mxu0 0
    %2836 = vmatprep.subr.bf16.mxu0 0
    %2837 = vmatpush1.bf16.msra.mxu0 0
    %2838 = vmatprep.subr.bf16.mxu0 0
    %2839 = vmatpush1.bf16.msra.mxu0 0
    %2840 = vmatprep.subr.bf16.mxu0 0
    %2841 = vmatpush1.bf16.msra.mxu0 0
    %2842 = vmatprep.subr.bf16.mxu0 0
    %2843 = vmatpush1.bf16.msra.mxu0 0
    %2844 = vmatprep.subr.bf16.mxu0 0
    %2845 = vmatpush1.bf16.msra.mxu0 0
    %2846 = vmatprep.subr.bf16.mxu0 0
    %2847 = vmatpush1.bf16.msra.mxu0 0
    %2848 = vmatprep.subr.bf16.mxu0 0
    %2849 = vmatpush1.bf16.msra.mxu0 0
    %2850 = vmatprep.subr.bf16.mxu0 0
    %2851 = vmatpush1.bf16.msra.mxu0 0
    %2852 = vmatprep.mubr.bf16.mxu0 0
    %2853 = vmatmul.mubr.bf16.gmra.mrb[0].mxu0 %v2700
    %v2854 = vpop.f32.mrb[0].mxu0
    %v2855 = vadd.f32 %v2758, %v2854
    %v2856 = vpop.f32.mrb[0].mxu0
    %v2857 = vpop.f32.mrb[0].mxu0
    %v2858 = vadd.f32 %v2761, %v2857
    %v2859 = vpop.f32.mrb[0].mxu0
    %2860 = vmatprep.mubr.bf16.mxu0 0
    %2861 = vmatmul.mubr.bf16.gmra.mrb[0].mxu0 %v2703
    %v2862 = vpop.f32.mrb[0].mxu0
    %v2863 = vadd.f32 %v2766, %v2862
    %v2864 = vpop.f32.mrb[0].mxu0
    %v2865 = vpop.f32.mrb[0].mxu0
    %v2866 = vadd.f32 %v2769, %v2865
    %v2867 = vpop.f32.mrb[0].mxu0
    %2868 = vmatprep.mubr.bf16.mxu0 0
    %2869 = vmatmul.mubr.bf16.gmra.mrb[0].mxu0 %v2706
    %v2870 = vpop.f32.mrb[0].mxu0
    %v2871 = vadd.f32 %v2774, %v2870
    %v2872 = vpop.f32.mrb[0].mxu0
    %v2873 = vpop.f32.mrb[0].mxu0
    %v2874 = vadd.f32 %v2777, %v2873
    %v2875 = vpop.f32.mrb[0].mxu0
    %2876 = vmatprep.mubr.bf16.mxu0 0
    %2877 = vmatmul.mubr.bf16.gmra.mrb[0].mxu0 %v2709
    %v2878 = vpop.f32.mrb[0].mxu0
    %v2879 = vadd.f32 %v2782, %v2878
    %v2880 = vpop.f32.mrb[0].mxu0
    %v2881 = vpop.f32.mrb[0].mxu0
    %v2882 = vadd.f32 %v2785, %v2881
    %v2883 = vpop.f32.mrb[0].mxu0
    %2884 = vmatprep.mubr.bf16.mxu0 0
    %2885 = vmatmul.mubr.bf16.gmra.mrb[0].mxu0 %v2712
    %v2886 = vpop.f32.mrb[0].mxu0
    %v2887 = vadd.f32 %v2790, %v2886
    %v2888 = vpop.f32.mrb[0].mxu0
    %v2889 = vpop.f32.mrb[0].mxu0
    %v2890 = vadd.f32 %v2793, %v2889
    %v2891 = vpop.f32.mrb[0].mxu0
    %2892 = vmatprep.mubr.bf16.mxu0 0
    %2893 = vmatmul.mubr.bf16.gmra.mrb[0].mxu0 %v2715
    %v2894 = vpop.f32.mrb[0].mxu0
    %v2895 = vadd.f32 %v2798, %v2894
    %v2896 = vpop.f32.mrb[0].mxu0
    %v2897 = vpop.f32.mrb[0].mxu0
    %v2898 = vadd.f32 %v2801, %v2897
    %v2899 = vpop.f32.mrb[0].mxu0
    %2900 = vmatprep.mubr.bf16.mxu0 0
    %2901 = vmatmul.mubr.bf16.gmra.mrb[0].mxu0 %v2718
    %v2902 = vpop.f32.mrb[0].mxu0
    %v2903 = vadd.f32 %v2806, %v2902
    %v2904 = vpop.f32.mrb[0].mxu0
    %v2905 = vpop.f32.mrb[0].mxu0
    %v2906 = vadd.f32 %v2809, %v2905
    %v2907 = vpop.f32.mrb[0].mxu0
    %2908 = vmatprep.mubr.bf16.mxu0 0
    %2909 = vmatmul.mubr.bf16.gmra.mrb[0].mxu0 %v2721
    %v2910 = vpop.f32.mrb[0].mxu0
    %v2911 = vadd.f32 %v2814, %v2910
    %v2912 = vpop.f32.mrb[0].mxu0
    %v2913 = vpop.f32.mrb[0].mxu0
    %v2914 = vadd.f32 %v2817, %v2913
    %v2915 = vpop.f32.mrb[0].mxu0
    %2916 = vdwg.mxu0
    %v2917 = vmax.f32 %v2855, 0.0
    %v2918 = vmax.f32 %v2858, 0.0
    %v2919 = vmax.f32 %v2863, 0.0
    %v2920 = vmax.f32 %v2866, 0.0
    %v2921 = vmax.f32 %v2871, 0.0
    %v2922 = vmax.f32 %v2874, 0.0
    %v2923 = vmax.f32 %v2879, 0.0
    %v2924 = vmax.f32 %v2882, 0.0
    %v2925 = vmax.f32 %v2887, 0.0
    %v2926 = vmax.f32 %v2890, 0.0
    %v2927 = vmax.f32 %v2895, 0.0
    %v2928 = vmax.f32 %v2898, 0.0
    %v2929 = vmax.f32 %v2903, 0.0
    %v2930 = vmax.f32 %v2906, 0.0
    %v2931 = vmax.f32 %v2911, 0.0
    %v2932 = vmax.f32 %v2914, 0.0
    %v2933 = vld [vmem:[%s11] sm:$0xf]
    %v2934 = vld [vmem:[%s11 + $0x4] sm:$0xf]
    %v2935 = vld [vmem:[%s11 + $0x8] sm:$0xf]
    %v2936 = vld [vmem:[%s11 + $0xc] sm:$0xf]
    %v2937 = vpack.c.bf16 %v2918, %v2917
    %v2938 = vpack.c.bf16 %v2920, %v2919
    %v2939 = vpack.c.bf16 %v2922, %v2921
    %v2940 = vpack.c.bf16 %v2924, %v2923
    %v2941 = vpack.c.bf16 %v2926, %v2925
    %v2942 = vpack.c.bf16 %v2928, %v2927
    %v2943 = vpack.c.bf16 %v2930, %v2929
    %v2944 = vpack.c.bf16 %v2932, %v2931
    %v2945 = vld [vmem:[%s12] sm:$0x1]
    %v2947 = vlaneseq
    %v2948 = vshrl.u32 %v2947, 7
    %v2949 = vsub.s32 0, %v2948
    %v2950 = vrot.slane %v2945, %v2949
    %v2956 = vunpack.c.l.b16 %v2933
    %v2957 = vunpack.c.l.b16 %v2934
    %v2958 = vunpack.c.l.b16 %v2935
    %v2959 = vunpack.c.l.b16 %v2936
    %v2960 = vpack.c.b16 %v2957, %v2956
    %v2961 = vpack.c.b16 %v2959, %v2958
    %v2965 = vsel %vm194, %v2937, 0
    %v2968 = vsel %vm194, %v2938, 0
    %v2971 = vsel %vm194, %v2939, 0
    %v2974 = vsel %vm194, %v2940, 0
    %v2977 = vsel %vm194, %v2941, 0
    %v2980 = vsel %vm194, %v2942, 0
    %v2983 = vsel %vm194, %v2943, 0
    %v2986 = vsel %vm194, %v2944, 0
    %2988 = vmatprep.subr.bf16.mxu0 0
    %2989 = vmatpush1.bf16.msra.mxu0 %v2960
    %2990 = vmatprep.subr.bf16.mxu0 0
    %2991 = vmatpush1.bf16.msra.mxu0 %v2961
    %2992 = vmatprep.subr.bf16.mxu0 0
    %2993 = vmatpush1.bf16.msra.mxu0 0
    %2994 = vmatprep.subr.bf16.mxu0 0
    %2995 = vmatpush1.bf16.msra.mxu0 0
    %2996 = vmatprep.subr.bf16.mxu0 0
    %2997 = vmatpush1.bf16.msra.mxu0 0
    %2998 = vmatprep.subr.bf16.mxu0 0
    %2999 = vmatpush1.bf16.msra.mxu0 0
    %3000 = vmatprep.subr.bf16.mxu0 0
    %3001 = vmatpush1.bf16.msra.mxu0 0
    %3002 = vmatprep.subr.bf16.mxu0 0
    %3003 = vmatpush1.bf16.msra.mxu0 0
    %3004 = vmatprep.subr.bf16.mxu0 0
    %3005 = vmatpush1.bf16.msra.mxu0 0
    %3006 = vmatprep.subr.bf16.mxu0 0
    %3007 = vmatpush1.bf16.msra.mxu0 0
    %3008 = vmatprep.subr.bf16.mxu0 0
    %3009 = vmatpush1.bf16.msra.mxu0 0
    %3010 = vmatprep.subr.bf16.mxu0 0
    %3011 = vmatpush1.bf16.msra.mxu0 0
    %3012 = vmatprep.subr.bf16.mxu0 0
    %3013 = vmatpush1.bf16.msra.mxu0 0
    %3014 = vmatprep.subr.bf16.mxu0 0
    %3015 = vmatpush1.bf16.msra.mxu0 0
    %3016 = vmatprep.subr.bf16.mxu0 0
    %3017 = vmatpush1.bf16.msra.mxu0 0
    %3018 = vmatprep.subr.bf16.mxu0 0
    %3019 = vmatpush1.bf16.msra.mxu0 0
    %3020 = vmatprep.mubr.bf16.mxu0 0
    %3021 = vmatmul.mubr.bf16.gmra.mrb[0].mxu0 %v2965
    %v3022 = vpop.f32.mrb[0].mxu0
    %v3023 = vadd.f32 %v2950, %v3022
    %v3024 = vpop.f32.mrb[0].mxu0
    %v3025 = vpop.f32.mrb[0].mxu0
    %v3026 = vadd.f32 %v2950, %v3025
    %v3027 = vpop.f32.mrb[0].mxu0
    %3028 = vmatprep.mubr.bf16.mxu0 0
    %3029 = vmatmul.mubr.bf16.gmra.mrb[0].mxu0 %v2968
    %v3030 = vpop.f32.mrb[0].mxu0
    %v3031 = vadd.f32 %v2950, %v3030
    %v3032 = vpop.f32.mrb[0].mxu0
    %v3033 = vpop.f32.mrb[0].mxu0
    %v3034 = vadd.f32 %v2950, %v3033
    %v3035 = vpop.f32.mrb[0].mxu0
    %3036 = vmatprep.mubr.bf16.mxu0 0
    %3037 = vmatmul.mubr.bf16.gmra.mrb[0].mxu0 %v2971
    %v3038 = vpop.f32.mrb[0].mxu0
    %v3039 = vadd.f32 %v2950, %v3038
    %v3040 = vpop.f32.mrb[0].mxu0
    %v3041 = vpop.f32.mrb[0].mxu0
    %v3042 = vadd.f32 %v2950, %v3041
    %v3043 = vpop.f32.mrb[0].mxu0
    %3044 = vmatprep.mubr.bf16.mxu0 0
    %3045 = vmatmul.mubr.bf16.gmra.mrb[0].mxu0 %v2974
    %v3046 = vpop.f32.mrb[0].mxu0
    %v3047 = vadd.f32 %v2950, %v3046
    %v3048 = vpop.f32.mrb[0].mxu0
    %v3049 = vpop.f32.mrb[0].mxu0
    %v3050 = vadd.f32 %v2950, %v3049
    %v3051 = vpop.f32.mrb[0].mxu0
    %3052 = vmatprep.mubr.bf16.mxu0 0
    %3053 = vmatmul.mubr.bf16.gmra.mrb[0].mxu0 %v2977
    %v3054 = vpop.f32.mrb[0].mxu0
    %v3055 = vadd.f32 %v2950, %v3054
    %v3056 = vpop.f32.mrb[0].mxu0
    %v3057 = vpop.f32.mrb[0].mxu0
    %v3058 = vadd.f32 %v2950, %v3057
    %v3059 = vpop.f32.mrb[0].mxu0
    %3060 = vmatprep.mubr.bf16.mxu0 0
    %3061 = vmatmul.mubr.bf16.gmra.mrb[0].mxu0 %v2980
    %v3062 = vpop.f32.mrb[0].mxu0
    %v3063 = vadd.f32 %v2950, %v3062
    %v3064 = vpop.f32.mrb[0].mxu0
    %v3065 = vpop.f32.mrb[0].mxu0
    %v3066 = vadd.f32 %v2950, %v3065
    %v3067 = vpop.f32.mrb[0].mxu0
    %3068 = vmatprep.mubr.bf16.mxu0 0
    %3069 = vmatmul.mubr.bf16.gmra.mrb[0].mxu0 %v2983
    %v3070 = vpop.f32.mrb[0].mxu0
    %v3071 = vadd.f32 %v2950, %v3070
    %v3072 = vpop.f32.mrb[0].mxu0
    %v3073 = vpop.f32.mrb[0].mxu0
    %v3074 = vadd.f32 %v2950, %v3073
    %v3075 = vpop.f32.mrb[0].mxu0
    %3076 = vmatprep.mubr.bf16.mxu0 0
    %3077 = vmatmul.mubr.bf16.gmra.mrb[0].mxu0 %v2986
    %v3078 = vpop.f32.mrb[0].mxu0
    %v3079 = vadd.f32 %v2950, %v3078
    %v3080 = vpop.f32.mrb[0].mxu0
    %v3081 = vpop.f32.mrb[0].mxu0
    %v3082 = vadd.f32 %v2950, %v3081
    %v3083 = vpop.f32.mrb[0].mxu0
    %3084 = vdwg.mxu0
    %v3085 = vld [vmem:[%s13] sm:$0xf]
    %v3086 = vld [vmem:[%s13 + $0x4] sm:$0xf]
    %v3087 = vld [vmem:[%s13 + $0x8] sm:$0xf]
    %v3088 = vld [vmem:[%s13 + $0xc] sm:$0xf]
    %v3089 = vld [vmem:[%s13 + $0x10] sm:$0xf]
    %v3090 = vld [vmem:[%s13 + $0x14] sm:$0xf]
    %v3091 = vld [vmem:[%s13 + $0x18] sm:$0xf]
    %v3092 = vld [vmem:[%s13 + $0x1c] sm:$0xf]
    %v3093 = vld [vmem:[%s13 + $0x20] sm:$0xf]
    %v3094 = vld [vmem:[%s13 + $0x24] sm:$0xf]
    %v3095 = vld [vmem:[%s13 + $0x28] sm:$0xf]
    %v3096 = vld [vmem:[%s13 + $0x2c] sm:$0xf]
    %v3097 = vld [vmem:[%s13 + $0x30] sm:$0xf]
    %v3098 = vld [vmem:[%s13 + $0x34] sm:$0xf]
    %v3099 = vld [vmem:[%s13 + $0x38] sm:$0xf]
    %v3100 = vld [vmem:[%s13 + $0x3c] sm:$0xf]
    %v3101 = vld [vmem:[%s13 + $0x40] sm:$0xf]
    %v3102 = vld [vmem:[%s13 + $0x44] sm:$0xf]
    %v3103 = vld [vmem:[%s13 + $0x48] sm:$0xf]
    %v3104 = vld [vmem:[%s13 + $0x4c] sm:$0xf]
    %v3105 = vld [vmem:[%s13 + $0x50] sm:$0xf]
    %v3106 = vld [vmem:[%s13 + $0x54] sm:$0xf]
    %v3107 = vld [vmem:[%s13 + $0x58] sm:$0xf]
    %v3108 = vld [vmem:[%s13 + $0x5c] sm:$0xf]
    %v3109 = vld [vmem:[%s13 + $0x60] sm:$0xf]
    %v3110 = vld [vmem:[%s13 + $0x64] sm:$0xf]
    %v3111 = vld [vmem:[%s13 + $0x68] sm:$0xf]
    %v3112 = vld [vmem:[%s13 + $0x6c] sm:$0xf]
    %v3113 = vld [vmem:[%s13 + $0x70] sm:$0xf]
    %v3114 = vld [vmem:[%s13 + $0x74] sm:$0xf]
    %v3115 = vld [vmem:[%s13 + $0x78] sm:$0xf]
    %v3116 = vld [vmem:[%s13 + $0x7c] sm:$0xf]
    %v3117 = vld [vmem:[%s13 + $0x80] sm:$0xf]
    %v3118 = vld [vmem:[%s13 + $0x84] sm:$0xf]
    %v3119 = vld [vmem:[%s13 + $0x88] sm:$0xf]
    %v3120 = vld [vmem:[%s13 + $0x8c] sm:$0xf]
    %v3121 = vld [vmem:[%s14] sm:$0x1]
    %v3124 = vrot.slane %v3079, 7
    %v3125 = vrot.slane %v3082, 7
    %v3126 = vsel %vm419, %v3124, %v3125
    %v3143 = vrot.slane %v3023, 7
    %v3144 = vrot.slane %v3026, 7
    %v3145 = vsel %vm419, %v3143, %v3144
    %v3146 = vrot.slane %v3031, 7
    %v3147 = vsel %vm419, %v3144, %v3146
    %v3148 = vrot.slane %v3034, 7
    %v3149 = vsel %vm419, %v3146, %v3148
    %v3150 = vrot.slane %v3039, 7
    %v3151 = vsel %vm419, %v3148, %v3150
    %v3152 = vrot.slane %v3042, 7
    %v3153 = vsel %vm419, %v3150, %v3152
    %v3154 = vrot.slane %v3047, 7
    %v3155 = vsel %vm419, %v3152, %v3154
    %v3156 = vrot.slane %v3050, 7
    %v3157 = vsel %vm419, %v3154, %v3156
    %v3158 = vrot.slane %v3055, 7
    %v3159 = vsel %vm419, %v3156, %v3158
    %v3160 = vrot.slane %v3058, 7
    %v3161 = vsel %vm419, %v3158, %v3160
    %v3162 = vrot.slane %v3063, 7
    %v3163 = vsel %vm419, %v3160, %v3162
    %v3164 = vrot.slane %v3066, 7
    %v3165 = vsel %vm419, %v3162, %v3164
    %v3166 = vrot.slane %v3071, 7
    %v3167 = vsel %vm419, %v3164, %v3166
    %v3168 = vrot.slane %v3074, 7
    %v3169 = vsel %vm419, %v3166, %v3168
    %v3170 = vsel %vm419, %v3168, %v3124
    %v3186 = vsel %vm419, %v3125, %v3143
    %v3187 = vmul.f32 %v3126, %v486
    %v3188 = vmul.f32 %v3186, %v491
    %v3189 = vmul.f32 %v3145, %v496
    %v3190 = vmul.f32 %v3147, %v501
    %v3191 = vmul.f32 %v3149, %v506
    %v3192 = vmul.f32 %v3151, %v511
    %v3193 = vmul.f32 %v3153, %v516
    %v3194 = vmul.f32 %v3155, %v521
    %v3195 = vmul.f32 %v3157, %v526
    %v3196 = vmul.f32 %v3159, %v531
    %v3197 = vmul.f32 %v3161, %v536
    %v3198 = vmul.f32 %v3163, %v541
    %v3199 = vmul.f32 %v3165, %v546
    %v3200 = vmul.f32 %v3167, %v551
    %v3201 = vmul.f32 %v3169, %v556
    %v3202 = vmul.f32 %v3170, %v561
    %v3203 = vpack.c.bf16 %v3188, %v3187
    %v3204 = vpack.c.bf16 %v3190, %v3189
    %v3205 = vpack.c.bf16 %v3192, %v3191
    %v3206 = vpack.c.bf16 %v3194, %v3193
    %v3207 = vpack.c.bf16 %v3196, %v3195
    %v3208 = vpack.c.bf16 %v3198, %v3197
    %v3209 = vpack.c.bf16 %v3200, %v3199
    %v3210 = vpack.c.bf16 %v3202, %v3201
    %v3211 = vmul.f32 %v3082, %v589
    %v3212 = vmul.f32 %v3023, %v593
    %v3213 = vmul.f32 %v3026, %v597
    %v3214 = vmul.f32 %v3031, %v601
    %v3215 = vmul.f32 %v3034, %v605
    %v3216 = vmul.f32 %v3039, %v609
    %v3217 = vmul.f32 %v3042, %v613
    %v3218 = vmul.f32 %v3047, %v617
    %v3219 = vmul.f32 %v3050, %v621
    %v3220 = vmul.f32 %v3055, %v625
    %v3221 = vmul.f32 %v3058, %v629
    %v3222 = vmul.f32 %v3063, %v633
    %v3223 = vmul.f32 %v3066, %v637
    %v3224 = vmul.f32 %v3071, %v641
    %v3225 = vmul.f32 %v3074, %v645
    %v3226 = vmul.f32 %v3079, %v649
    %v3227 = vpack.c.bf16 %v3212, %v3211
    %v3228 = vpack.c.bf16 %v3214, %v3213
    %v3229 = vpack.c.bf16 %v3216, %v3215
    %v3230 = vpack.c.bf16 %v3218, %v3217
    %v3231 = vpack.c.bf16 %v3220, %v3219
    %v3232 = vpack.c.bf16 %v3222, %v3221
    %v3233 = vpack.c.bf16 %v3224, %v3223
    %v3234 = vpack.c.bf16 %v3226, %v3225
    %v3235 = vrot.slane %v3082, 1
    %v3237 = vrot.slane %v3023, 1
    %v3238 = vrot.slane %v3026, 1
    %v3239 = vsel %vm677, %v3237, %v3238
    %v3240 = vrot.slane %v3031, 1
    %v3241 = vsel %vm677, %v3238, %v3240
    %v3242 = vrot.slane %v3034, 1
    %v3243 = vsel %vm677, %v3240, %v3242
    %v3244 = vrot.slane %v3039, 1
    %v3245 = vsel %vm677, %v3242, %v3244
    %v3246 = vrot.slane %v3042, 1
    %v3247 = vsel %vm677, %v3244, %v3246
    %v3248 = vrot.slane %v3047, 1
    %v3249 = vsel %vm677, %v3246, %v3248
    %v3250 = vrot.slane %v3050, 1
    %v3251 = vsel %vm677, %v3248, %v3250
    %v3252 = vrot.slane %v3055, 1
    %v3253 = vsel %vm677, %v3250, %v3252
    %v3254 = vrot.slane %v3058, 1
    %v3255 = vsel %vm677, %v3252, %v3254
    %v3256 = vrot.slane %v3063, 1
    %v3257 = vsel %vm677, %v3254, %v3256
    %v3258 = vrot.slane %v3066, 1
    %v3259 = vsel %vm677, %v3256, %v3258
    %v3260 = vrot.slane %v3071, 1
    %v3261 = vsel %vm677, %v3258, %v3260
    %v3262 = vrot.slane %v3074, 1
    %v3263 = vsel %vm677, %v3260, %v3262
    %v3264 = vrot.slane %v3079, 1
    %v3265 = vsel %vm677, %v3262, %v3264
    %v3266 = vsel %vm677, %v3264, %v3235
    %v3283 = vsel %vm677, %v3235, %v3237
    %v3284 = vmul.f32 %v3283, %v727
    %v3285 = vmul.f32 %v3239, %v731
    %v3286 = vmul.f32 %v3241, %v735
    %v3287 = vmul.f32 %v3243, %v739
    %v3288 = vmul.f32 %v3245, %v743
    %v3289 = vmul.f32 %v3247, %v747
    %v3290 = vmul.f32 %v3249, %v751
    %v3291 = vmul.f32 %v3251, %v755
    %v3292 = vmul.f32 %v3253, %v759
    %v3293 = vmul.f32 %v3255, %v763
    %v3294 = vmul.f32 %v3257, %v767
    %v3295 = vmul.f32 %v3259, %v771
    %v3296 = vmul.f32 %v3261, %v775
    %v3297 = vmul.f32 %v3263, %v779
    %v3298 = vmul.f32 %v3265, %v783
    %v3299 = vmul.f32 %v3266, %v787
    %v3300 = vpack.c.bf16 %v3285, %v3284
    %v3301 = vpack.c.bf16 %v3287, %v3286
    %v3302 = vpack.c.bf16 %v3289, %v3288
    %v3303 = vpack.c.bf16 %v3291, %v3290
    %v3304 = vpack.c.bf16 %v3293, %v3292
    %v3305 = vpack.c.bf16 %v3295, %v3294
    %v3306 = vpack.c.bf16 %v3297, %v3296
    %v3307 = vpack.c.bf16 %v3299, %v3298
    %v3308 = vmul.f32 %v3186, %v815
    %v3309 = vmul.f32 %v3145, %v819
    %v3310 = vmul.f32 %v3147, %v823
    %v3311 = vmul.f32 %v3149, %v827
    %v3312 = vmul.f32 %v3151, %v831
    %v3313 = vmul.f32 %v3153, %v835
    %v3314 = vmul.f32 %v3155, %v839
    %v3315 = vmul.f32 %v3157, %v843
    %v3316 = vmul.f32 %v3159, %v847
    %v3317 = vmul.f32 %v3161, %v851
    %v3318 = vmul.f32 %v3163, %v855
    %v3319 = vmul.f32 %v3165, %v859
    %v3320 = vmul.f32 %v3167, %v863
    %v3321 = vmul.f32 %v3169, %v867
    %v3322 = vmul.f32 %v3170, %v871
    %v3323 = vmul.f32 %v3126, %v875
    %v3324 = vpack.c.bf16 %v3309, %v3308
    %v3325 = vpack.c.bf16 %v3311, %v3310
    %v3326 = vpack.c.bf16 %v3313, %v3312
    %v3327 = vpack.c.bf16 %v3315, %v3314
    %v3328 = vpack.c.bf16 %v3317, %v3316
    %v3329 = vpack.c.bf16 %v3319, %v3318
    %v3330 = vpack.c.bf16 %v3321, %v3320
    %v3331 = vpack.c.bf16 %v3323, %v3322
    %v3332 = vmul.f32 %v3023, %v903
    %v3333 = vmul.f32 %v3026, %v907
    %v3334 = vmul.f32 %v3031, %v911
    %v3335 = vmul.f32 %v3034, %v915
    %v3336 = vmul.f32 %v3039, %v919
    %v3337 = vmul.f32 %v3042, %v923
    %v3338 = vmul.f32 %v3047, %v927
    %v3339 = vmul.f32 %v3050, %v931
    %v3340 = vmul.f32 %v3055, %v935
    %v3341 = vmul.f32 %v3058, %v939
    %v3342 = vmul.f32 %v3063, %v943
    %v3343 = vmul.f32 %v3066, %v947
    %v3344 = vmul.f32 %v3071, %v951
    %v3345 = vmul.f32 %v3074, %v955
    %v3346 = vmul.f32 %v3079, %v959
    %v3347 = vmul.f32 %v3082, %v963
    %v3348 = vpack.c.bf16 %v3333, %v3332
    %v3349 = vpack.c.bf16 %v3335, %v3334
    %v3350 = vpack.c.bf16 %v3337, %v3336
    %v3351 = vpack.c.bf16 %v3339, %v3338
    %v3352 = vpack.c.bf16 %v3341, %v3340
    %v3353 = vpack.c.bf16 %v3343, %v3342
    %v3354 = vpack.c.bf16 %v3345, %v3344
    %v3355 = vpack.c.bf16 %v3347, %v3346
    %v3356 = vmul.f32 %v3239, %v991
    %v3357 = vmul.f32 %v3241, %v995
    %v3358 = vmul.f32 %v3243, %v999
    %v3359 = vmul.f32 %v3245, %v1003
    %v3360 = vmul.f32 %v3247, %v1007
    %v3361 = vmul.f32 %v3249, %v1011
    %v3362 = vmul.f32 %v3251, %v1015
    %v3363 = vmul.f32 %v3253, %v1019
    %v3364 = vmul.f32 %v3255, %v1023
    %v3365 = vmul.f32 %v3257, %v1027
    %v3366 = vmul.f32 %v3259, %v1031
    %v3367 = vmul.f32 %v3261, %v1035
    %v3368 = vmul.f32 %v3263, %v1039
    %v3369 = vmul.f32 %v3265, %v1043
    %v3370 = vmul.f32 %v3266, %v1047
    %v3371 = vmul.f32 %v3283, %v1051
    %v3372 = vpack.c.bf16 %v3357, %v3356
    %v3373 = vpack.c.bf16 %v3359, %v3358
    %v3374 = vpack.c.bf16 %v3361, %v3360
    %v3375 = vpack.c.bf16 %v3363, %v3362
    %v3376 = vpack.c.bf16 %v3365, %v3364
    %v3377 = vpack.c.bf16 %v3367, %v3366
    %v3378 = vpack.c.bf16 %v3369, %v3368
    %v3379 = vpack.c.bf16 %v3371, %v3370
    %v3380 = vmul.f32 %v3145, %v1079
    %v3381 = vmul.f32 %v3147, %v1083
    %v3382 = vmul.f32 %v3149, %v1087
    %v3383 = vmul.f32 %v3151, %v1091
    %v3384 = vmul.f32 %v3153, %v1095
    %v3385 = vmul.f32 %v3155, %v1099
    %v3386 = vmul.f32 %v3157, %v1103
    %v3387 = vmul.f32 %v3159, %v1107
    %v3388 = vmul.f32 %v3161, %v1111
    %v3389 = vmul.f32 %v3163, %v1115
    %v3390 = vmul.f32 %v3165, %v1119
    %v3391 = vmul.f32 %v3167, %v1123
    %v3392 = vmul.f32 %v3169, %v1127
    %v3393 = vmul.f32 %v3170, %v1131
    %v3394 = vmul.f32 %v3126, %v1135
    %v3395 = vmul.f32 %v3186, %v1139
    %v3396 = vpack.c.bf16 %v3381, %v3380
    %v3397 = vpack.c.bf16 %v3383, %v3382
    %v3398 = vpack.c.bf16 %v3385, %v3384
    %v3399 = vpack.c.bf16 %v3387, %v3386
    %v3400 = vpack.c.bf16 %v3389, %v3388
    %v3401 = vpack.c.bf16 %v3391, %v3390
    %v3402 = vpack.c.bf16 %v3393, %v3392
    %v3403 = vpack.c.bf16 %v3395, %v3394
    %v3404 = vmul.f32 %v3026, %v1167
    %v3405 = vmul.f32 %v3031, %v1171
    %v3406 = vmul.f32 %v3034, %v1175
    %v3407 = vmul.f32 %v3039, %v1179
    %v3408 = vmul.f32 %v3042, %v1183
    %v3409 = vmul.f32 %v3047, %v1187
    %v3410 = vmul.f32 %v3050, %v1191
    %v3411 = vmul.f32 %v3055, %v1195
    %v3412 = vmul.f32 %v3058, %v1199
    %v3413 = vmul.f32 %v3063, %v1203
    %v3414 = vmul.f32 %v3066, %v1207
    %v3415 = vmul.f32 %v3071, %v1211
    %v3416 = vmul.f32 %v3074, %v1215
    %v3417 = vmul.f32 %v3079, %v1219
    %v3418 = vmul.f32 %v3082, %v1223
    %v3419 = vmul.f32 %v3023, %v1227
    %v3420 = vpack.c.bf16 %v3405, %v3404
    %v3421 = vpack.c.bf16 %v3407, %v3406
    %v3422 = vpack.c.bf16 %v3409, %v3408
    %v3423 = vpack.c.bf16 %v3411, %v3410
    %v3424 = vpack.c.bf16 %v3413, %v3412
    %v3425 = vpack.c.bf16 %v3415, %v3414
    %v3426 = vpack.c.bf16 %v3417, %v3416
    %v3427 = vpack.c.bf16 %v3419, %v3418
    %v3428 = vmul.f32 %v3241, %v1255
    %v3429 = vmul.f32 %v3243, %v1259
    %v3430 = vmul.f32 %v3245, %v1263
    %v3431 = vmul.f32 %v3247, %v1267
    %v3432 = vmul.f32 %v3249, %v1271
    %v3433 = vmul.f32 %v3251, %v1275
    %v3434 = vmul.f32 %v3253, %v1279
    %v3435 = vmul.f32 %v3255, %v1283
    %v3436 = vmul.f32 %v3257, %v1287
    %v3437 = vmul.f32 %v3259, %v1291
    %v3438 = vmul.f32 %v3261, %v1295
    %v3439 = vmul.f32 %v3263, %v1299
    %v3440 = vmul.f32 %v3265, %v1303
    %v3441 = vmul.f32 %v3266, %v1307
    %v3442 = vmul.f32 %v3283, %v1311
    %v3443 = vmul.f32 %v3239, %v1315
    %v3444 = vpack.c.bf16 %v3429, %v3428
    %v3445 = vpack.c.bf16 %v3431, %v3430
    %v3446 = vpack.c.bf16 %v3433, %v3432
    %v3447 = vpack.c.bf16 %v3435, %v3434
    %v3448 = vpack.c.bf16 %v3437, %v3436
    %v3449 = vpack.c.bf16 %v3439, %v3438
    %v3450 = vpack.c.bf16 %v3441, %v3440
    %v3451 = vpack.c.bf16 %v3443, %v3442
    %3460 = vrot.lane.b32.xlu0 %v3227, 32
    %v3461 = vpop.permute.xlu0 %3460
    %3462 = vrot.lane.b32.xlu0 %v3228, 32
    %v3463 = vpop.permute.xlu0 %3462
    %3464 = vrot.lane.b32.xlu0 %v3229, 32
    %v3465 = vpop.permute.xlu0 %3464
    %3466 = vrot.lane.b32.xlu0 %v3230, 32
    %v3467 = vpop.permute.xlu0 %3466
    %3468 = vrot.lane.b32.xlu0 %v3231, 32
    %v3469 = vpop.permute.xlu0 %3468
    %3470 = vrot.lane.b32.xlu0 %v3232, 32
    %v3471 = vpop.permute.xlu0 %3470
    %3472 = vrot.lane.b32.xlu0 %v3233, 32
    %v3473 = vpop.permute.xlu0 %3472
    %3474 = vrot.lane.b32.xlu0 %v3234, 32
    %v3475 = vpop.permute.xlu0 %3474
    %3484 = vrot.lane.b32.xlu0 %v3300, 64
    %v3485 = vpop.permute.xlu0 %3484
    %3486 = vrot.lane.b32.xlu0 %v3301, 64
    %v3487 = vpop.permute.xlu0 %3486
    %3488 = vrot.lane.b32.xlu0 %v3302, 64
    %v3489 = vpop.permute.xlu0 %3488
    %3490 = vrot.lane.b32.xlu0 %v3303, 64
    %v3491 = vpop.permute.xlu0 %3490
    %3492 = vrot.lane.b32.xlu0 %v3304, 64
    %v3493 = vpop.permute.xlu0 %3492
    %3494 = vrot.lane.b32.xlu0 %v3305, 64
    %v3495 = vpop.permute.xlu0 %3494
    %3496 = vrot.lane.b32.xlu0 %v3306, 64
    %v3497 = vpop.permute.xlu0 %3496
    %3498 = vrot.lane.b32.xlu0 %v3307, 64
    %v3499 = vpop.permute.xlu0 %3498
    %3508 = vrot.lane.b32.xlu0 %v3324, 96
    %v3509 = vpop.permute.xlu0 %3508
    %3510 = vrot.lane.b32.xlu0 %v3325, 96
    %v3511 = vpop.permute.xlu0 %3510
    %3512 = vrot.lane.b32.xlu0 %v3326, 96
    %v3513 = vpop.permute.xlu0 %3512
    %3514 = vrot.lane.b32.xlu0 %v3327, 96
    %v3515 = vpop.permute.xlu0 %3514
    %3516 = vrot.lane.b32.xlu0 %v3328, 96
    %v3517 = vpop.permute.xlu0 %3516
    %3518 = vrot.lane.b32.xlu0 %v3329, 96
    %v3519 = vpop.permute.xlu0 %3518
    %3520 = vrot.lane.b32.xlu0 %v3330, 96
    %v3521 = vpop.permute.xlu0 %3520
    %3522 = vrot.lane.b32.xlu0 %v3331, 96
    %v3523 = vpop.permute.xlu0 %3522
    %3532 = vrot.lane.b32.xlu0 %v3372, 32
    %v3533 = vpop.permute.xlu0 %3532
    %3534 = vrot.lane.b32.xlu0 %v3373, 32
    %v3535 = vpop.permute.xlu0 %3534
    %3536 = vrot.lane.b32.xlu0 %v3374, 32
    %v3537 = vpop.permute.xlu0 %3536
    %3538 = vrot.lane.b32.xlu0 %v3375, 32
    %v3539 = vpop.permute.xlu0 %3538
    %3540 = vrot.lane.b32.xlu0 %v3376, 32
    %v3541 = vpop.permute.xlu0 %3540
    %3542 = vrot.lane.b32.xlu0 %v3377, 32
    %v3543 = vpop.permute.xlu0 %3542
    %3544 = vrot.lane.b32.xlu0 %v3378, 32
    %v3545 = vpop.permute.xlu0 %3544
    %3546 = vrot.lane.b32.xlu0 %v3379, 32
    %v3547 = vpop.permute.xlu0 %3546
    %3556 = vrot.lane.b32.xlu0 %v3396, 64
    %v3557 = vpop.permute.xlu0 %3556
    %3558 = vrot.lane.b32.xlu0 %v3397, 64
    %v3559 = vpop.permute.xlu0 %3558
    %3560 = vrot.lane.b32.xlu0 %v3398, 64
    %v3561 = vpop.permute.xlu0 %3560
    %3562 = vrot.lane.b32.xlu0 %v3399, 64
    %v3563 = vpop.permute.xlu0 %3562
    %3564 = vrot.lane.b32.xlu0 %v3400, 64
    %v3565 = vpop.permute.xlu0 %3564
    %3566 = vrot.lane.b32.xlu0 %v3401, 64
    %v3567 = vpop.permute.xlu0 %3566
    %3568 = vrot.lane.b32.xlu0 %v3402, 64
    %v3569 = vpop.permute.xlu0 %3568
    %3570 = vrot.lane.b32.xlu0 %v3403, 64
    %v3571 = vpop.permute.xlu0 %3570
    %3580 = vrot.lane.b32.xlu0 %v3420, 96
    %v3581 = vpop.permute.xlu0 %3580
    %3582 = vrot.lane.b32.xlu0 %v3421, 96
    %v3583 = vpop.permute.xlu0 %3582
    %3584 = vrot.lane.b32.xlu0 %v3422, 96
    %v3585 = vpop.permute.xlu0 %3584
    %3586 = vrot.lane.b32.xlu0 %v3423, 96
    %v3587 = vpop.permute.xlu0 %3586
    %3588 = vrot.lane.b32.xlu0 %v3424, 96
    %v3589 = vpop.permute.xlu0 %3588
    %3590 = vrot.lane.b32.xlu0 %v3425, 96
    %v3591 = vpop.permute.xlu0 %3590
    %3592 = vrot.lane.b32.xlu0 %v3426, 96
    %v3593 = vpop.permute.xlu0 %3592
    %3594 = vrot.lane.b32.xlu0 %v3427, 96
    %v3595 = vpop.permute.xlu0 %3594
    %v3598 = vsel %vm194, %v3203, %v3461
    %v3601 = vsel %vm194, %v3204, %v3463
    %v3604 = vsel %vm194, %v3205, %v3465
    %v3607 = vsel %vm194, %v3206, %v3467
    %v3610 = vsel %vm194, %v3207, %v3469
    %v3613 = vsel %vm194, %v3208, %v3471
    %v3616 = vsel %vm194, %v3209, %v3473
    %v3619 = vsel %vm194, %v3210, %v3475
    %v3621 = vsel %vm258, %v3598, %v3485
    %v3623 = vsel %vm258, %v3601, %v3487
    %v3625 = vsel %vm258, %v3604, %v3489
    %v3627 = vsel %vm258, %v3607, %v3491
    %v3629 = vsel %vm258, %v3610, %v3493
    %v3631 = vsel %vm258, %v3613, %v3495
    %v3633 = vsel %vm258, %v3616, %v3497
    %v3635 = vsel %vm258, %v3619, %v3499
    %v3637 = vsel %vm1525, %v3621, %v3509
    %v3640 = vsel %vm1525, %v3623, %v3511
    %v3643 = vsel %vm1525, %v3625, %v3513
    %v3646 = vsel %vm1525, %v3627, %v3515
    %v3649 = vsel %vm1525, %v3629, %v3517
    %v3652 = vsel %vm1525, %v3631, %v3519
    %v3655 = vsel %vm1525, %v3633, %v3521
    %v3658 = vsel %vm1525, %v3635, %v3523
    %v3662 = vsel %vm194, %v3348, %v3533
    %v3665 = vsel %vm194, %v3349, %v3535
    %v3668 = vsel %vm194, %v3350, %v3537
    %v3671 = vsel %vm194, %v3351, %v3539
    %v3674 = vsel %vm194, %v3352, %v3541
    %v3677 = vsel %vm194, %v3353, %v3543
    %v3680 = vsel %vm194, %v3354, %v3545
    %v3683 = vsel %vm194, %v3355, %v3547
    %v3685 = vsel %vm258, %v3662, %v3557
    %v3687 = vsel %vm258, %v3665, %v3559
    %v3689 = vsel %vm258, %v3668, %v3561
    %v3691 = vsel %vm258, %v3671, %v3563
    %v3693 = vsel %vm258, %v3674, %v3565
    %v3695 = vsel %vm258, %v3677, %v3567
    %v3697 = vsel %vm258, %v3680, %v3569
    %v3699 = vsel %vm258, %v3683, %v3571
    %v3701 = vsel %vm1525, %v3685, %v3581
    %v3704 = vsel %vm1525, %v3687, %v3583
    %v3707 = vsel %vm1525, %v3689, %v3585
    %v3710 = vsel %vm1525, %v3691, %v3587
    %v3713 = vsel %vm1525, %v3693, %v3589
    %v3716 = vsel %vm1525, %v3695, %v3591
    %v3719 = vsel %vm1525, %v3697, %v3593
    %v3722 = vsel %vm1525, %v3699, %v3595
    %v3725 = vlaneseq
    %v3726 = vshrl.u32 %v3725, 7
    %v3727 = vsub.s32 0, %v3726
    %v3728 = vrot.slane %v3121, %v3727
    %v3766 = vunpack.c.l.b16 %v3085
    %v3767 = vunpack.c.l.b16 %v3086
    %v3768 = vunpack.c.l.b16 %v3087
    %v3769 = vunpack.c.l.b16 %v3088
    %v3770 = vunpack.c.l.b16 %v3089
    %v3771 = vunpack.c.l.b16 %v3090
    %v3772 = vunpack.c.l.b16 %v3091
    %v3773 = vunpack.c.l.b16 %v3092
    %v3774 = vunpack.c.l.b16 %v3093
    %v3775 = vunpack.c.l.b16 %v3094
    %v3776 = vunpack.c.l.b16 %v3095
    %v3777 = vunpack.c.l.b16 %v3096
    %v3778 = vunpack.c.l.b16 %v3097
    %v3779 = vunpack.c.l.b16 %v3098
    %v3780 = vunpack.c.l.b16 %v3099
    %v3781 = vunpack.c.l.b16 %v3100
    %v3782 = vunpack.c.l.b16 %v3101
    %v3783 = vunpack.c.l.b16 %v3102
    %v3784 = vunpack.c.l.b16 %v3103
    %v3785 = vunpack.c.l.b16 %v3104
    %v3786 = vunpack.c.l.b16 %v3105
    %v3787 = vunpack.c.l.b16 %v3106
    %v3788 = vunpack.c.l.b16 %v3107
    %v3789 = vunpack.c.l.b16 %v3108
    %v3790 = vunpack.c.l.b16 %v3109
    %v3791 = vunpack.c.l.b16 %v3110
    %v3792 = vunpack.c.l.b16 %v3111
    %v3793 = vunpack.c.l.b16 %v3112
    %v3794 = vunpack.c.l.b16 %v3113
    %v3795 = vunpack.c.l.b16 %v3114
    %v3796 = vunpack.c.l.b16 %v3115
    %v3797 = vunpack.c.l.b16 %v3116
    %v3798 = vunpack.c.l.b16 %v3117
    %v3799 = vunpack.c.l.b16 %v3118
    %v3800 = vunpack.c.l.b16 %v3119
    %v3801 = vunpack.c.l.b16 %v3120
    %v3802 = vpack.c.b16 %v3767, %v3766
    %v3803 = vpack.c.b16 %v3769, %v3768
    %v3804 = vpack.c.b16 %v3771, %v3770
    %v3805 = vpack.c.b16 %v3773, %v3772
    %v3806 = vpack.c.b16 %v3775, %v3774
    %v3807 = vpack.c.b16 %v3777, %v3776
    %v3808 = vpack.c.b16 %v3779, %v3778
    %v3809 = vpack.c.b16 %v3781, %v3780
    %v3810 = vpack.c.b16 %v3783, %v3782
    %v3811 = vpack.c.b16 %v3785, %v3784
    %v3812 = vpack.c.b16 %v3787, %v3786
    %v3813 = vpack.c.b16 %v3789, %v3788
    %v3814 = vpack.c.b16 %v3791, %v3790
    %v3815 = vpack.c.b16 %v3793, %v3792
    %v3816 = vpack.c.b16 %v3795, %v3794
    %v3817 = vpack.c.b16 %v3797, %v3796
    %v3818 = vpack.c.b16 %v3799, %v3798
    %v3819 = vpack.c.b16 %v3801, %v3800
    %v3839 = vsel %vm194, %v3444, 0
    %v3842 = vsel %vm194, %v3445, 0
    %v3845 = vsel %vm194, %v3446, 0
    %v3848 = vsel %vm194, %v3447, 0
    %v3851 = vsel %vm194, %v3448, 0
    %v3854 = vsel %vm194, %v3449, 0
    %v3857 = vsel %vm194, %v3450, 0
    %v3860 = vsel %vm194, %v3451, 0
    %3862 = vmatprep.subr.bf16.mxu0 0
    %3863 = vmatpush1.bf16.msra.mxu0 %v3802
    %3864 = vmatprep.subr.bf16.mxu0 0
    %3865 = vmatpush1.bf16.msra.mxu0 %v3803
    %3866 = vmatprep.subr.bf16.mxu0 0
    %3867 = vmatpush1.bf16.msra.mxu0 %v3804
    %3868 = vmatprep.subr.bf16.mxu0 0
    %3869 = vmatpush1.bf16.msra.mxu0 %v3805
    %3870 = vmatprep.subr.bf16.mxu0 0
    %3871 = vmatpush1.bf16.msra.mxu0 %v3806
    %3872 = vmatprep.subr.bf16.mxu0 0
    %3873 = vmatpush1.bf16.msra.mxu0 %v3807
    %3874 = vmatprep.subr.bf16.mxu0 0
    %3875 = vmatpush1.bf16.msra.mxu0 %v3808
    %3876 = vmatprep.subr.bf16.mxu0 0
    %3877 = vmatpush1.bf16.msra.mxu0 %v3809
    %3878 = vmatprep.subr.bf16.mxu0 0
    %3879 = vmatpush1.bf16.msra.mxu0 %v3810
    %3880 = vmatprep.subr.bf16.mxu0 0
    %3881 = vmatpush1.bf16.msra.mxu0 %v3811
    %3882 = vmatprep.subr.bf16.mxu0 0
    %3883 = vmatpush1.bf16.msra.mxu0 %v3812
    %3884 = vmatprep.subr.bf16.mxu0 0
    %3885 = vmatpush1.bf16.msra.mxu0 %v3813
    %3886 = vmatprep.subr.bf16.mxu0 0
    %3887 = vmatpush1.bf16.msra.mxu0 %v3814
    %3888 = vmatprep.subr.bf16.mxu0 0
    %3889 = vmatpush1.bf16.msra.mxu0 %v3815
    %3890 = vmatprep.subr.bf16.mxu0 0
    %3891 = vmatpush1.bf16.msra.mxu0 %v3816
    %3892 = vmatprep.subr.bf16.mxu0 0
    %3893 = vmatpush1.bf16.msra.mxu0 %v3817
    %3894 = vmatprep.mubr.bf16.mxu0 %v3701
    %3895 = vmatmul.mubr.bf16.gmra.mrb[0].mxu0 %v3637
    %v3896 = vpop.f32.mrb[0].mxu0
    %v3897 = vadd.f32 %v3728, %v3896
    %v3898 = vpop.f32.mrb[0].mxu0
    %v3899 = vpop.f32.mrb[0].mxu0
    %v3900 = vadd.f32 %v3728, %v3899
    %v3901 = vpop.f32.mrb[0].mxu0
    %3902 = vmatprep.mubr.bf16.mxu0 %v3704
    %3903 = vmatmul.mubr.bf16.gmra.mrb[0].mxu0 %v3640
    %v3904 = vpop.f32.mrb[0].mxu0
    %v3905 = vadd.f32 %v3728, %v3904
    %v3906 = vpop.f32.mrb[0].mxu0
    %v3907 = vpop.f32.mrb[0].mxu0
    %v3908 = vadd.f32 %v3728, %v3907
    %v3909 = vpop.f32.mrb[0].mxu0
    %3910 = vmatprep.mubr.bf16.mxu0 %v3707
    %3911 = vmatmul.mubr.bf16.gmra.mrb[0].mxu0 %v3643
    %v3912 = vpop.f32.mrb[0].mxu0
    %v3913 = vadd.f32 %v3728, %v3912
    %v3914 = vpop.f32.mrb[0].mxu0
    %v3915 = vpop.f32.mrb[0].mxu0
    %v3916 = vadd.f32 %v3728, %v3915
    %v3917 = vpop.f32.mrb[0].mxu0
    %3918 = vmatprep.mubr.bf16.mxu0 %v3710
    %3919 = vmatmul.mubr.bf16.gmra.mrb[0].mxu0 %v3646
    %v3920 = vpop.f32.mrb[0].mxu0
    %v3921 = vadd.f32 %v3728, %v3920
    %v3922 = vpop.f32.mrb[0].mxu0
    %v3923 = vpop.f32.mrb[0].mxu0
    %v3924 = vadd.f32 %v3728, %v3923
    %v3925 = vpop.f32.mrb[0].mxu0
    %3926 = vmatprep.mubr.bf16.mxu0 %v3713
    %3927 = vmatmul.mubr.bf16.gmra.mrb[0].mxu0 %v3649
    %v3928 = vpop.f32.mrb[0].mxu0
    %v3929 = vadd.f32 %v3728, %v3928
    %v3930 = vpop.f32.mrb[0].mxu0
    %v3931 = vpop.f32.mrb[0].mxu0
    %v3932 = vadd.f32 %v3728, %v3931
    %v3933 = vpop.f32.mrb[0].mxu0
    %3934 = vmatprep.mubr.bf16.mxu0 %v3716
    %3935 = vmatmul.mubr.bf16.gmra.mrb[0].mxu0 %v3652
    %v3936 = vpop.f32.mrb[0].mxu0
    %v3937 = vadd.f32 %v3728, %v3936
    %v3938 = vpop.f32.mrb[0].mxu0
    %v3939 = vpop.f32.mrb[0].mxu0
    %v3940 = vadd.f32 %v3728, %v3939
    %v3941 = vpop.f32.mrb[0].mxu0
    %3942 = vmatprep.mubr.bf16.mxu0 %v3719
    %3943 = vmatmul.mubr.bf16.gmra.mrb[0].mxu0 %v3655
    %v3944 = vpop.f32.mrb[0].mxu0
    %v3945 = vadd.f32 %v3728, %v3944
    %v3946 = vpop.f32.mrb[0].mxu0
    %v3947 = vpop.f32.mrb[0].mxu0
    %v3948 = vadd.f32 %v3728, %v3947
    %v3949 = vpop.f32.mrb[0].mxu0
    %3950 = vmatprep.mubr.bf16.mxu0 %v3722
    %3951 = vmatmul.mubr.bf16.gmra.mrb[0].mxu0 %v3658
    %v3952 = vpop.f32.mrb[0].mxu0
    %v3953 = vadd.f32 %v3728, %v3952
    %v3954 = vpop.f32.mrb[0].mxu0
    %v3955 = vpop.f32.mrb[0].mxu0
    %v3956 = vadd.f32 %v3728, %v3955
    %v3957 = vpop.f32.mrb[0].mxu0
    %3958 = vdwg.mxu0
    %3959 = vmatprep.subr.bf16.mxu0 0
    %3960 = vmatpush1.bf16.msra.mxu0 %v3818
    %3961 = vmatprep.subr.bf16.mxu0 0
    %3962 = vmatpush1.bf16.msra.mxu0 %v3819
    %3963 = vmatprep.subr.bf16.mxu0 0
    %3964 = vmatpush1.bf16.msra.mxu0 0
    %3965 = vmatprep.subr.bf16.mxu0 0
    %3966 = vmatpush1.bf16.msra.mxu0 0
    %3967 = vmatprep.subr.bf16.mxu0 0
    %3968 = vmatpush1.bf16.msra.mxu0 0
    %3969 = vmatprep.subr.bf16.mxu0 0
    %3970 = vmatpush1.bf16.msra.mxu0 0
    %3971 = vmatprep.subr.bf16.mxu0 0
    %3972 = vmatpush1.bf16.msra.mxu0 0
    %3973 = vmatprep.subr.bf16.mxu0 0
    %3974 = vmatpush1.bf16.msra.mxu0 0
    %3975 = vmatprep.subr.bf16.mxu0 0
    %3976 = vmatpush1.bf16.msra.mxu0 0
    %3977 = vmatprep.subr.bf16.mxu0 0
    %3978 = vmatpush1.bf16.msra.mxu0 0
    %3979 = vmatprep.subr.bf16.mxu0 0
    %3980 = vmatpush1.bf16.msra.mxu0 0
    %3981 = vmatprep.subr.bf16.mxu0 0
    %3982 = vmatpush1.bf16.msra.mxu0 0
    %3983 = vmatprep.subr.bf16.mxu0 0
    %3984 = vmatpush1.bf16.msra.mxu0 0
    %3985 = vmatprep.subr.bf16.mxu0 0
    %3986 = vmatpush1.bf16.msra.mxu0 0
    %3987 = vmatprep.subr.bf16.mxu0 0
    %3988 = vmatpush1.bf16.msra.mxu0 0
    %3989 = vmatprep.subr.bf16.mxu0 0
    %3990 = vmatpush1.bf16.msra.mxu0 0
    %3991 = vmatprep.mubr.bf16.mxu0 0
    %3992 = vmatmul.mubr.bf16.gmra.mrb[0].mxu0 %v3839
    %v3993 = vpop.f32.mrb[0].mxu0
    %v3994 = vadd.f32 %v3897, %v3993
    %v3995 = vpop.f32.mrb[0].mxu0
    %v3996 = vpop.f32.mrb[0].mxu0
    %v3997 = vadd.f32 %v3900, %v3996
    %v3998 = vpop.f32.mrb[0].mxu0
    %3999 = vmatprep.mubr.bf16.mxu0 0
    %4000 = vmatmul.mubr.bf16.gmra.mrb[0].mxu0 %v3842
    %v4001 = vpop.f32.mrb[0].mxu0
    %v4002 = vadd.f32 %v3905, %v4001
    %v4003 = vpop.f32.mrb[0].mxu0
    %v4004 = vpop.f32.mrb[0].mxu0
    %v4005 = vadd.f32 %v3908, %v4004
    %v4006 = vpop.f32.mrb[0].mxu0
    %4007 = vmatprep.mubr.bf16.mxu0 0
    %4008 = vmatmul.mubr.bf16.gmra.mrb[0].mxu0 %v3845
    %v4009 = vpop.f32.mrb[0].mxu0
    %v4010 = vadd.f32 %v3913, %v4009
    %v4011 = vpop.f32.mrb[0].mxu0
    %v4012 = vpop.f32.mrb[0].mxu0
    %v4013 = vadd.f32 %v3916, %v4012
    %v4014 = vpop.f32.mrb[0].mxu0
    %4015 = vmatprep.mubr.bf16.mxu0 0
    %4016 = vmatmul.mubr.bf16.gmra.mrb[0].mxu0 %v3848
    %v4017 = vpop.f32.mrb[0].mxu0
    %v4018 = vadd.f32 %v3921, %v4017
    %v4019 = vpop.f32.mrb[0].mxu0
    %v4020 = vpop.f32.mrb[0].mxu0
    %v4021 = vadd.f32 %v3924, %v4020
    %v4022 = vpop.f32.mrb[0].mxu0
    %4023 = vmatprep.mubr.bf16.mxu0 0
    %4024 = vmatmul.mubr.bf16.gmra.mrb[0].mxu0 %v3851
    %v4025 = vpop.f32.mrb[0].mxu0
    %v4026 = vadd.f32 %v3929, %v4025
    %v4027 = vpop.f32.mrb[0].mxu0
    %v4028 = vpop.f32.mrb[0].mxu0
    %v4029 = vadd.f32 %v3932, %v4028
    %v4030 = vpop.f32.mrb[0].mxu0
    %4031 = vmatprep.mubr.bf16.mxu0 0
    %4032 = vmatmul.mubr.bf16.gmra.mrb[0].mxu0 %v3854
    %v4033 = vpop.f32.mrb[0].mxu0
    %v4034 = vadd.f32 %v3937, %v4033
    %v4035 = vpop.f32.mrb[0].mxu0
    %v4036 = vpop.f32.mrb[0].mxu0
    %v4037 = vadd.f32 %v3940, %v4036
    %v4038 = vpop.f32.mrb[0].mxu0
    %4039 = vmatprep.mubr.bf16.mxu0 0
    %4040 = vmatmul.mubr.bf16.gmra.mrb[0].mxu0 %v3857
    %v4041 = vpop.f32.mrb[0].mxu0
    %v4042 = vadd.f32 %v3945, %v4041
    %v4043 = vpop.f32.mrb[0].mxu0
    %v4044 = vpop.f32.mrb[0].mxu0
    %v4045 = vadd.f32 %v3948, %v4044
    %v4046 = vpop.f32.mrb[0].mxu0
    %4047 = vmatprep.mubr.bf16.mxu0 0
    %4048 = vmatmul.mubr.bf16.gmra.mrb[0].mxu0 %v3860
    %v4049 = vpop.f32.mrb[0].mxu0
    %v4050 = vadd.f32 %v3953, %v4049
    %v4051 = vpop.f32.mrb[0].mxu0
    %v4052 = vpop.f32.mrb[0].mxu0
    %v4053 = vadd.f32 %v3956, %v4052
    %v4054 = vpop.f32.mrb[0].mxu0
    %4055 = vdwg.mxu0
    %v4056 = vld [vmem:[%s15] sm:$0xf]
    %v4057 = vld [vmem:[%s15 + $0x4] sm:$0xf]
    %v4058 = vld [vmem:[%s15 + $0x8] sm:$0xf]
    %v4059 = vld [vmem:[%s15 + $0xc] sm:$0xf]
    %v4060 = vld [vmem:[%s15 + $0x10] sm:$0xf]
    %v4061 = vld [vmem:[%s15 + $0x14] sm:$0xf]
    %v4062 = vld [vmem:[%s15 + $0x18] sm:$0xf]
    %v4063 = vld [vmem:[%s15 + $0x1c] sm:$0xf]
    %v4064 = vld [vmem:[%s15 + $0x20] sm:$0xf]
    %v4065 = vld [vmem:[%s15 + $0x24] sm:$0xf]
    %v4066 = vld [vmem:[%s15 + $0x28] sm:$0xf]
    %v4067 = vld [vmem:[%s15 + $0x2c] sm:$0xf]
    %v4068 = vld [vmem:[%s15 + $0x30] sm:$0xf]
    %v4069 = vld [vmem:[%s15 + $0x34] sm:$0xf]
    %v4070 = vld [vmem:[%s15 + $0x38] sm:$0xf]
    %v4071 = vld [vmem:[%s15 + $0x3c] sm:$0xf]
    %v4072 = vld [vmem:[%s15 + $0x40] sm:$0xf]
    %v4073 = vld [vmem:[%s15 + $0x44] sm:$0xf]
    %v4074 = vld [vmem:[%s15 + $0x48] sm:$0xf]
    %v4075 = vld [vmem:[%s15 + $0x4c] sm:$0xf]
    %v4076 = vld [vmem:[%s15 + $0x50] sm:$0xf]
    %v4077 = vld [vmem:[%s15 + $0x54] sm:$0xf]
    %v4078 = vld [vmem:[%s15 + $0x58] sm:$0xf]
    %v4079 = vld [vmem:[%s15 + $0x5c] sm:$0xf]
    %v4080 = vld [vmem:[%s15 + $0x60] sm:$0xf]
    %v4081 = vld [vmem:[%s15 + $0x64] sm:$0xf]
    %v4082 = vld [vmem:[%s15 + $0x68] sm:$0xf]
    %v4083 = vld [vmem:[%s15 + $0x6c] sm:$0xf]
    %v4084 = vld [vmem:[%s15 + $0x70] sm:$0xf]
    %v4085 = vld [vmem:[%s15 + $0x74] sm:$0xf]
    %v4086 = vld [vmem:[%s15 + $0x78] sm:$0xf]
    %v4087 = vld [vmem:[%s15 + $0x7c] sm:$0xf]
    %v4088 = vld [vmem:[%s15 + $0x80] sm:$0xf]
    %v4089 = vld [vmem:[%s15 + $0x84] sm:$0xf]
    %v4090 = vld [vmem:[%s15 + $0x88] sm:$0xf]
    %v4091 = vld [vmem:[%s15 + $0x8c] sm:$0xf]
    %v4092 = vld [vmem:[%s16] sm:$0x1]
    %v4095 = vrot.slane %v4050, 7
    %v4096 = vrot.slane %v4053, 7
    %v4097 = vsel %vm419, %v4095, %v4096
    %v4114 = vrot.slane %v3994, 7
    %v4115 = vrot.slane %v3997, 7
    %v4116 = vsel %vm419, %v4114, %v4115
    %v4117 = vrot.slane %v4002, 7
    %v4118 = vsel %vm419, %v4115, %v4117
    %v4119 = vrot.slane %v4005, 7
    %v4120 = vsel %vm419, %v4117, %v4119
    %v4121 = vrot.slane %v4010, 7
    %v4122 = vsel %vm419, %v4119, %v4121
    %v4123 = vrot.slane %v4013, 7
    %v4124 = vsel %vm419, %v4121, %v4123
    %v4125 = vrot.slane %v4018, 7
    %v4126 = vsel %vm419, %v4123, %v4125
    %v4127 = vrot.slane %v4021, 7
    %v4128 = vsel %vm419, %v4125, %v4127
    %v4129 = vrot.slane %v4026, 7
    %v4130 = vsel %vm419, %v4127, %v4129
    %v4131 = vrot.slane %v4029, 7
    %v4132 = vsel %vm419, %v4129, %v4131
    %v4133 = vrot.slane %v4034, 7
    %v4134 = vsel %vm419, %v4131, %v4133
    %v4135 = vrot.slane %v4037, 7
    %v4136 = vsel %vm419, %v4133, %v4135
    %v4137 = vrot.slane %v4042, 7
    %v4138 = vsel %vm419, %v4135, %v4137
    %v4139 = vrot.slane %v4045, 7
    %v4140 = vsel %vm419, %v4137, %v4139
    %v4141 = vsel %vm419, %v4139, %v4095
    %v4157 = vsel %vm419, %v4096, %v4114
    %v4158 = vmul.f32 %v4097, %v486
    %v4159 = vmul.f32 %v4157, %v491
    %v4160 = vmul.f32 %v4116, %v496
    %v4161 = vmul.f32 %v4118, %v501
    %v4162 = vmul.f32 %v4120, %v506
    %v4163 = vmul.f32 %v4122, %v511
    %v4164 = vmul.f32 %v4124, %v516
    %v4165 = vmul.f32 %v4126, %v521
    %v4166 = vmul.f32 %v4128, %v526
    %v4167 = vmul.f32 %v4130, %v531
    %v4168 = vmul.f32 %v4132, %v536
    %v4169 = vmul.f32 %v4134, %v541
    %v4170 = vmul.f32 %v4136, %v546
    %v4171 = vmul.f32 %v4138, %v551
    %v4172 = vmul.f32 %v4140, %v556
    %v4173 = vmul.f32 %v4141, %v561
    %v4174 = vpack.c.bf16 %v4159, %v4158
    %v4175 = vpack.c.bf16 %v4161, %v4160
    %v4176 = vpack.c.bf16 %v4163, %v4162
    %v4177 = vpack.c.bf16 %v4165, %v4164
    %v4178 = vpack.c.bf16 %v4167, %v4166
    %v4179 = vpack.c.bf16 %v4169, %v4168
    %v4180 = vpack.c.bf16 %v4171, %v4170
    %v4181 = vpack.c.bf16 %v4173, %v4172
    %v4182 = vmul.f32 %v4053, %v589
    %v4183 = vmul.f32 %v3994, %v593
    %v4184 = vmul.f32 %v3997, %v597
    %v4185 = vmul.f32 %v4002, %v601
    %v4186 = vmul.f32 %v4005, %v605
    %v4187 = vmul.f32 %v4010, %v609
    %v4188 = vmul.f32 %v4013, %v613
    %v4189 = vmul.f32 %v4018, %v617
    %v4190 = vmul.f32 %v4021, %v621
    %v4191 = vmul.f32 %v4026, %v625
    %v4192 = vmul.f32 %v4029, %v629
    %v4193 = vmul.f32 %v4034, %v633
    %v4194 = vmul.f32 %v4037, %v637
    %v4195 = vmul.f32 %v4042, %v641
    %v4196 = vmul.f32 %v4045, %v645
    %v4197 = vmul.f32 %v4050, %v649
    %v4198 = vpack.c.bf16 %v4183, %v4182
    %v4199 = vpack.c.bf16 %v4185, %v4184
    %v4200 = vpack.c.bf16 %v4187, %v4186
    %v4201 = vpack.c.bf16 %v4189, %v4188
    %v4202 = vpack.c.bf16 %v4191, %v4190
    %v4203 = vpack.c.bf16 %v4193, %v4192
    %v4204 = vpack.c.bf16 %v4195, %v4194
    %v4205 = vpack.c.bf16 %v4197, %v4196
    %v4206 = vrot.slane %v4053, 1
    %v4208 = vrot.slane %v3994, 1
    %v4209 = vrot.slane %v3997, 1
    %v4210 = vsel %vm677, %v4208, %v4209
    %v4211 = vrot.slane %v4002, 1
    %v4212 = vsel %vm677, %v4209, %v4211
    %v4213 = vrot.slane %v4005, 1
    %v4214 = vsel %vm677, %v4211, %v4213
    %v4215 = vrot.slane %v4010, 1
    %v4216 = vsel %vm677, %v4213, %v4215
    %v4217 = vrot.slane %v4013, 1
    %v4218 = vsel %vm677, %v4215, %v4217
    %v4219 = vrot.slane %v4018, 1
    %v4220 = vsel %vm677, %v4217, %v4219
    %v4221 = vrot.slane %v4021, 1
    %v4222 = vsel %vm677, %v4219, %v4221
    %v4223 = vrot.slane %v4026, 1
    %v4224 = vsel %vm677, %v4221, %v4223
    %v4225 = vrot.slane %v4029, 1
    %v4226 = vsel %vm677, %v4223, %v4225
    %v4227 = vrot.slane %v4034, 1
    %v4228 = vsel %vm677, %v4225, %v4227
    %v4229 = vrot.slane %v4037, 1
    %v4230 = vsel %vm677, %v4227, %v4229
    %v4231 = vrot.slane %v4042, 1
    %v4232 = vsel %vm677, %v4229, %v4231
    %v4233 = vrot.slane %v4045, 1
    %v4234 = vsel %vm677, %v4231, %v4233
    %v4235 = vrot.slane %v4050, 1
    %v4236 = vsel %vm677, %v4233, %v4235
    %v4237 = vsel %vm677, %v4235, %v4206
    %v4254 = vsel %vm677, %v4206, %v4208
    %v4255 = vmul.f32 %v4254, %v727
    %v4256 = vmul.f32 %v4210, %v731
    %v4257 = vmul.f32 %v4212, %v735
    %v4258 = vmul.f32 %v4214, %v739
    %v4259 = vmul.f32 %v4216, %v743
    %v4260 = vmul.f32 %v4218, %v747
    %v4261 = vmul.f32 %v4220, %v751
    %v4262 = vmul.f32 %v4222, %v755
    %v4263 = vmul.f32 %v4224, %v759
    %v4264 = vmul.f32 %v4226, %v763
    %v4265 = vmul.f32 %v4228, %v767
    %v4266 = vmul.f32 %v4230, %v771
    %v4267 = vmul.f32 %v4232, %v775
    %v4268 = vmul.f32 %v4234, %v779
    %v4269 = vmul.f32 %v4236, %v783
    %v4270 = vmul.f32 %v4237, %v787
    %v4271 = vpack.c.bf16 %v4256, %v4255
    %v4272 = vpack.c.bf16 %v4258, %v4257
    %v4273 = vpack.c.bf16 %v4260, %v4259
    %v4274 = vpack.c.bf16 %v4262, %v4261
    %v4275 = vpack.c.bf16 %v4264, %v4263
    %v4276 = vpack.c.bf16 %v4266, %v4265
    %v4277 = vpack.c.bf16 %v4268, %v4267
    %v4278 = vpack.c.bf16 %v4270, %v4269
    %v4279 = vmul.f32 %v4157, %v815
    %v4280 = vmul.f32 %v4116, %v819
    %v4281 = vmul.f32 %v4118, %v823
    %v4282 = vmul.f32 %v4120, %v827
    %v4283 = vmul.f32 %v4122, %v831
    %v4284 = vmul.f32 %v4124, %v835
    %v4285 = vmul.f32 %v4126, %v839
    %v4286 = vmul.f32 %v4128, %v843
    %v4287 = vmul.f32 %v4130, %v847
    %v4288 = vmul.f32 %v4132, %v851
    %v4289 = vmul.f32 %v4134, %v855
    %v4290 = vmul.f32 %v4136, %v859
    %v4291 = vmul.f32 %v4138, %v863
    %v4292 = vmul.f32 %v4140, %v867
    %v4293 = vmul.f32 %v4141, %v871
    %v4294 = vmul.f32 %v4097, %v875
    %v4295 = vpack.c.bf16 %v4280, %v4279
    %v4296 = vpack.c.bf16 %v4282, %v4281
    %v4297 = vpack.c.bf16 %v4284, %v4283
    %v4298 = vpack.c.bf16 %v4286, %v4285
    %v4299 = vpack.c.bf16 %v4288, %v4287
    %v4300 = vpack.c.bf16 %v4290, %v4289
    %v4301 = vpack.c.bf16 %v4292, %v4291
    %v4302 = vpack.c.bf16 %v4294, %v4293
    %v4303 = vmul.f32 %v3994, %v903
    %v4304 = vmul.f32 %v3997, %v907
    %v4305 = vmul.f32 %v4002, %v911
    %v4306 = vmul.f32 %v4005, %v915
    %v4307 = vmul.f32 %v4010, %v919
    %v4308 = vmul.f32 %v4013, %v923
    %v4309 = vmul.f32 %v4018, %v927
    %v4310 = vmul.f32 %v4021, %v931
    %v4311 = vmul.f32 %v4026, %v935
    %v4312 = vmul.f32 %v4029, %v939
    %v4313 = vmul.f32 %v4034, %v943
    %v4314 = vmul.f32 %v4037, %v947
    %v4315 = vmul.f32 %v4042, %v951
    %v4316 = vmul.f32 %v4045, %v955
    %v4317 = vmul.f32 %v4050, %v959
    %v4318 = vmul.f32 %v4053, %v963
    %v4319 = vpack.c.bf16 %v4304, %v4303
    %v4320 = vpack.c.bf16 %v4306, %v4305
    %v4321 = vpack.c.bf16 %v4308, %v4307
    %v4322 = vpack.c.bf16 %v4310, %v4309
    %v4323 = vpack.c.bf16 %v4312, %v4311
    %v4324 = vpack.c.bf16 %v4314, %v4313
    %v4325 = vpack.c.bf16 %v4316, %v4315
    %v4326 = vpack.c.bf16 %v4318, %v4317
    %v4327 = vmul.f32 %v4210, %v991
    %v4328 = vmul.f32 %v4212, %v995
    %v4329 = vmul.f32 %v4214, %v999
    %v4330 = vmul.f32 %v4216, %v1003
    %v4331 = vmul.f32 %v4218, %v1007
    %v4332 = vmul.f32 %v4220, %v1011
    %v4333 = vmul.f32 %v4222, %v1015
    %v4334 = vmul.f32 %v4224, %v1019
    %v4335 = vmul.f32 %v4226, %v1023
    %v4336 = vmul.f32 %v4228, %v1027
    %v4337 = vmul.f32 %v4230, %v1031
    %v4338 = vmul.f32 %v4232, %v1035
    %v4339 = vmul.f32 %v4234, %v1039
    %v4340 = vmul.f32 %v4236, %v1043
    %v4341 = vmul.f32 %v4237, %v1047
    %v4342 = vmul.f32 %v4254, %v1051
    %v4343 = vpack.c.bf16 %v4328, %v4327
    %v4344 = vpack.c.bf16 %v4330, %v4329
    %v4345 = vpack.c.bf16 %v4332, %v4331
    %v4346 = vpack.c.bf16 %v4334, %v4333
    %v4347 = vpack.c.bf16 %v4336, %v4335
    %v4348 = vpack.c.bf16 %v4338, %v4337
    %v4349 = vpack.c.bf16 %v4340, %v4339
    %v4350 = vpack.c.bf16 %v4342, %v4341
    %v4351 = vmul.f32 %v4116, %v1079
    %v4352 = vmul.f32 %v4118, %v1083
    %v4353 = vmul.f32 %v4120, %v1087
    %v4354 = vmul.f32 %v4122, %v1091
    %v4355 = vmul.f32 %v4124, %v1095
    %v4356 = vmul.f32 %v4126, %v1099
    %v4357 = vmul.f32 %v4128, %v1103
    %v4358 = vmul.f32 %v4130, %v1107
    %v4359 = vmul.f32 %v4132, %v1111
    %v4360 = vmul.f32 %v4134, %v1115
    %v4361 = vmul.f32 %v4136, %v1119
    %v4362 = vmul.f32 %v4138, %v1123
    %v4363 = vmul.f32 %v4140, %v1127
    %v4364 = vmul.f32 %v4141, %v1131
    %v4365 = vmul.f32 %v4097, %v1135
    %v4366 = vmul.f32 %v4157, %v1139
    %v4367 = vpack.c.bf16 %v4352, %v4351
    %v4368 = vpack.c.bf16 %v4354, %v4353
    %v4369 = vpack.c.bf16 %v4356, %v4355
    %v4370 = vpack.c.bf16 %v4358, %v4357
    %v4371 = vpack.c.bf16 %v4360, %v4359
    %v4372 = vpack.c.bf16 %v4362, %v4361
    %v4373 = vpack.c.bf16 %v4364, %v4363
    %v4374 = vpack.c.bf16 %v4366, %v4365
    %v4375 = vmul.f32 %v3997, %v1167
    %v4376 = vmul.f32 %v4002, %v1171
    %v4377 = vmul.f32 %v4005, %v1175
    %v4378 = vmul.f32 %v4010, %v1179
    %v4379 = vmul.f32 %v4013, %v1183
    %v4380 = vmul.f32 %v4018, %v1187
    %v4381 = vmul.f32 %v4021, %v1191
    %v4382 = vmul.f32 %v4026, %v1195
    %v4383 = vmul.f32 %v4029, %v1199
    %v4384 = vmul.f32 %v4034, %v1203
    %v4385 = vmul.f32 %v4037, %v1207
    %v4386 = vmul.f32 %v4042, %v1211
    %v4387 = vmul.f32 %v4045, %v1215
    %v4388 = vmul.f32 %v4050, %v1219
    %v4389 = vmul.f32 %v4053, %v1223
    %v4390 = vmul.f32 %v3994, %v1227
    %v4391 = vpack.c.bf16 %v4376, %v4375
    %v4392 = vpack.c.bf16 %v4378, %v4377
    %v4393 = vpack.c.bf16 %v4380, %v4379
    %v4394 = vpack.c.bf16 %v4382, %v4381
    %v4395 = vpack.c.bf16 %v4384, %v4383
    %v4396 = vpack.c.bf16 %v4386, %v4385
    %v4397 = vpack.c.bf16 %v4388, %v4387
    %v4398 = vpack.c.bf16 %v4390, %v4389
    %v4399 = vmul.f32 %v4212, %v1255
    %v4400 = vmul.f32 %v4214, %v1259
    %v4401 = vmul.f32 %v4216, %v1263
    %v4402 = vmul.f32 %v4218, %v1267
    %v4403 = vmul.f32 %v4220, %v1271
    %v4404 = vmul.f32 %v4222, %v1275
    %v4405 = vmul.f32 %v4224, %v1279
    %v4406 = vmul.f32 %v4226, %v1283
    %v4407 = vmul.f32 %v4228, %v1287
    %v4408 = vmul.f32 %v4230, %v1291
    %v4409 = vmul.f32 %v4232, %v1295
    %v4410 = vmul.f32 %v4234, %v1299
    %v4411 = vmul.f32 %v4236, %v1303
    %v4412 = vmul.f32 %v4237, %v1307
    %v4413 = vmul.f32 %v4254, %v1311
    %v4414 = vmul.f32 %v4210, %v1315
    %v4415 = vpack.c.bf16 %v4400, %v4399
    %v4416 = vpack.c.bf16 %v4402, %v4401
    %v4417 = vpack.c.bf16 %v4404, %v4403
    %v4418 = vpack.c.bf16 %v4406, %v4405
    %v4419 = vpack.c.bf16 %v4408, %v4407
    %v4420 = vpack.c.bf16 %v4410, %v4409
    %v4421 = vpack.c.bf16 %v4412, %v4411
    %v4422 = vpack.c.bf16 %v4414, %v4413
    %4431 = vrot.lane.b32.xlu0 %v4198, 32
    %v4432 = vpop.permute.xlu0 %4431
    %4433 = vrot.lane.b32.xlu0 %v4199, 32
    %v4434 = vpop.permute.xlu0 %4433
    %4435 = vrot.lane.b32.xlu0 %v4200, 32
    %v4436 = vpop.permute.xlu0 %4435
    %4437 = vrot.lane.b32.xlu0 %v4201, 32
    %v4438 = vpop.permute.xlu0 %4437
    %4439 = vrot.lane.b32.xlu0 %v4202, 32
    %v4440 = vpop.permute.xlu0 %4439
    %4441 = vrot.lane.b32.xlu0 %v4203, 32
    %v4442 = vpop.permute.xlu0 %4441
    %4443 = vrot.lane.b32.xlu0 %v4204, 32
    %v4444 = vpop.permute.xlu0 %4443
    %4445 = vrot.lane.b32.xlu0 %v4205, 32
    %v4446 = vpop.permute.xlu0 %4445
    %4455 = vrot.lane.b32.xlu0 %v4271, 64
    %v4456 = vpop.permute.xlu0 %4455
    %4457 = vrot.lane.b32.xlu0 %v4272, 64
    %v4458 = vpop.permute.xlu0 %4457
    %4459 = vrot.lane.b32.xlu0 %v4273, 64
    %v4460 = vpop.permute.xlu0 %4459
    %4461 = vrot.lane.b32.xlu0 %v4274, 64
    %v4462 = vpop.permute.xlu0 %4461
    %4463 = vrot.lane.b32.xlu0 %v4275, 64
    %v4464 = vpop.permute.xlu0 %4463
    %4465 = vrot.lane.b32.xlu0 %v4276, 64
    %v4466 = vpop.permute.xlu0 %4465
    %4467 = vrot.lane.b32.xlu0 %v4277, 64
    %v4468 = vpop.permute.xlu0 %4467
    %4469 = vrot.lane.b32.xlu0 %v4278, 64
    %v4470 = vpop.permute.xlu0 %4469
    %4479 = vrot.lane.b32.xlu0 %v4295, 96
    %v4480 = vpop.permute.xlu0 %4479
    %4481 = vrot.lane.b32.xlu0 %v4296, 96
    %v4482 = vpop.permute.xlu0 %4481
    %4483 = vrot.lane.b32.xlu0 %v4297, 96
    %v4484 = vpop.permute.xlu0 %4483
    %4485 = vrot.lane.b32.xlu0 %v4298, 96
    %v4486 = vpop.permute.xlu0 %4485
    %4487 = vrot.lane.b32.xlu0 %v4299, 96
    %v4488 = vpop.permute.xlu0 %4487
    %4489 = vrot.lane.b32.xlu0 %v4300, 96
    %v4490 = vpop.permute.xlu0 %4489
    %4491 = vrot.lane.b32.xlu0 %v4301, 96
    %v4492 = vpop.permute.xlu0 %4491
    %4493 = vrot.lane.b32.xlu0 %v4302, 96
    %v4494 = vpop.permute.xlu0 %4493
    %4503 = vrot.lane.b32.xlu0 %v4343, 32
    %v4504 = vpop.permute.xlu0 %4503
    %4505 = vrot.lane.b32.xlu0 %v4344, 32
    %v4506 = vpop.permute.xlu0 %4505
    %4507 = vrot.lane.b32.xlu0 %v4345, 32
    %v4508 = vpop.permute.xlu0 %4507
    %4509 = vrot.lane.b32.xlu0 %v4346, 32
    %v4510 = vpop.permute.xlu0 %4509
    %4511 = vrot.lane.b32.xlu0 %v4347, 32
    %v4512 = vpop.permute.xlu0 %4511
    %4513 = vrot.lane.b32.xlu0 %v4348, 32
    %v4514 = vpop.permute.xlu0 %4513
    %4515 = vrot.lane.b32.xlu0 %v4349, 32
    %v4516 = vpop.permute.xlu0 %4515
    %4517 = vrot.lane.b32.xlu0 %v4350, 32
    %v4518 = vpop.permute.xlu0 %4517
    %4527 = vrot.lane.b32.xlu0 %v4367, 64
    %v4528 = vpop.permute.xlu0 %4527
    %4529 = vrot.lane.b32.xlu0 %v4368, 64
    %v4530 = vpop.permute.xlu0 %4529
    %4531 = vrot.lane.b32.xlu0 %v4369, 64
    %v4532 = vpop.permute.xlu0 %4531
    %4533 = vrot.lane.b32.xlu0 %v4370, 64
    %v4534 = vpop.permute.xlu0 %4533
    %4535 = vrot.lane.b32.xlu0 %v4371, 64
    %v4536 = vpop.permute.xlu0 %4535
    %4537 = vrot.lane.b32.xlu0 %v4372, 64
    %v4538 = vpop.permute.xlu0 %4537
    %4539 = vrot.lane.b32.xlu0 %v4373, 64
    %v4540 = vpop.permute.xlu0 %4539
    %4541 = vrot.lane.b32.xlu0 %v4374, 64
    %v4542 = vpop.permute.xlu0 %4541
    %4551 = vrot.lane.b32.xlu0 %v4391, 96
    %v4552 = vpop.permute.xlu0 %4551
    %4553 = vrot.lane.b32.xlu0 %v4392, 96
    %v4554 = vpop.permute.xlu0 %4553
    %4555 = vrot.lane.b32.xlu0 %v4393, 96
    %v4556 = vpop.permute.xlu0 %4555
    %4557 = vrot.lane.b32.xlu0 %v4394, 96
    %v4558 = vpop.permute.xlu0 %4557
    %4559 = vrot.lane.b32.xlu0 %v4395, 96
    %v4560 = vpop.permute.xlu0 %4559
    %4561 = vrot.lane.b32.xlu0 %v4396, 96
    %v4562 = vpop.permute.xlu0 %4561
    %4563 = vrot.lane.b32.xlu0 %v4397, 96
    %v4564 = vpop.permute.xlu0 %4563
    %4565 = vrot.lane.b32.xlu0 %v4398, 96
    %v4566 = vpop.permute.xlu0 %4565
    %v4569 = vsel %vm194, %v4174, %v4432
    %v4572 = vsel %vm194, %v4175, %v4434
    %v4575 = vsel %vm194, %v4176, %v4436
    %v4578 = vsel %vm194, %v4177, %v4438
    %v4581 = vsel %vm194, %v4178, %v4440
    %v4584 = vsel %vm194, %v4179, %v4442
    %v4587 = vsel %vm194, %v4180, %v4444
    %v4590 = vsel %vm194, %v4181, %v4446
    %v4592 = vsel %vm258, %v4569, %v4456
    %v4594 = vsel %vm258, %v4572, %v4458
    %v4596 = vsel %vm258, %v4575, %v4460
    %v4598 = vsel %vm258, %v4578, %v4462
    %v4600 = vsel %vm258, %v4581, %v4464
    %v4602 = vsel %vm258, %v4584, %v4466
    %v4604 = vsel %vm258, %v4587, %v4468
    %v4606 = vsel %vm258, %v4590, %v4470
    %v4608 = vsel %vm1525, %v4592, %v4480
    %v4611 = vsel %vm1525, %v4594, %v4482
    %v4614 = vsel %vm1525, %v4596, %v4484
    %v4617 = vsel %vm1525, %v4598, %v4486
    %v4620 = vsel %vm1525, %v4600, %v4488
    %v4623 = vsel %vm1525, %v4602, %v4490
    %v4626 = vsel %vm1525, %v4604, %v4492
    %v4629 = vsel %vm1525, %v4606, %v4494
    %v4633 = vsel %vm194, %v4319, %v4504
    %v4636 = vsel %vm194, %v4320, %v4506
    %v4639 = vsel %vm194, %v4321, %v4508
    %v4642 = vsel %vm194, %v4322, %v4510
    %v4645 = vsel %vm194, %v4323, %v4512
    %v4648 = vsel %vm194, %v4324, %v4514
    %v4651 = vsel %vm194, %v4325, %v4516
    %v4654 = vsel %vm194, %v4326, %v4518
    %v4656 = vsel %vm258, %v4633, %v4528
    %v4658 = vsel %vm258, %v4636, %v4530
    %v4660 = vsel %vm258, %v4639, %v4532
    %v4662 = vsel %vm258, %v4642, %v4534
    %v4664 = vsel %vm258, %v4645, %v4536
    %v4666 = vsel %vm258, %v4648, %v4538
    %v4668 = vsel %vm258, %v4651, %v4540
    %v4670 = vsel %vm258, %v4654, %v4542
    %v4672 = vsel %vm1525, %v4656, %v4552
    %v4675 = vsel %vm1525, %v4658, %v4554
    %v4678 = vsel %vm1525, %v4660, %v4556
    %v4681 = vsel %vm1525, %v4662, %v4558
    %v4684 = vsel %vm1525, %v4664, %v4560
    %v4687 = vsel %vm1525, %v4666, %v4562
    %v4690 = vsel %vm1525, %v4668, %v4564
    %v4693 = vsel %vm1525, %v4670, %v4566
    %v4696 = vlaneseq
    %v4697 = vshrl.u32 %v4696, 7
    %v4698 = vsub.s32 0, %v4697
    %v4699 = vrot.slane %v4092, %v4698
    %v4737 = vunpack.c.l.b16 %v4056
    %v4738 = vunpack.c.l.b16 %v4057
    %v4739 = vunpack.c.l.b16 %v4058
    %v4740 = vunpack.c.l.b16 %v4059
    %v4741 = vunpack.c.l.b16 %v4060
    %v4742 = vunpack.c.l.b16 %v4061
    %v4743 = vunpack.c.l.b16 %v4062
    %v4744 = vunpack.c.l.b16 %v4063
    %v4745 = vunpack.c.l.b16 %v4064
    %v4746 = vunpack.c.l.b16 %v4065
    %v4747 = vunpack.c.l.b16 %v4066
    %v4748 = vunpack.c.l.b16 %v4067
    %v4749 = vunpack.c.l.b16 %v4068
    %v4750 = vunpack.c.l.b16 %v4069
    %v4751 = vunpack.c.l.b16 %v4070
    %v4752 = vunpack.c.l.b16 %v4071
    %v4753 = vunpack.c.l.b16 %v4072
    %v4754 = vunpack.c.l.b16 %v4073
    %v4755 = vunpack.c.l.b16 %v4074
    %v4756 = vunpack.c.l.b16 %v4075
    %v4757 = vunpack.c.l.b16 %v4076
    %v4758 = vunpack.c.l.b16 %v4077
    %v4759 = vunpack.c.l.b16 %v4078
    %v4760 = vunpack.c.l.b16 %v4079
    %v4761 = vunpack.c.l.b16 %v4080
    %v4762 = vunpack.c.l.b16 %v4081
    %v4763 = vunpack.c.l.b16 %v4082
    %v4764 = vunpack.c.l.b16 %v4083
    %v4765 = vunpack.c.l.b16 %v4084
    %v4766 = vunpack.c.l.b16 %v4085
    %v4767 = vunpack.c.l.b16 %v4086
    %v4768 = vunpack.c.l.b16 %v4087
    %v4769 = vunpack.c.l.b16 %v4088
    %v4770 = vunpack.c.l.b16 %v4089
    %v4771 = vunpack.c.l.b16 %v4090
    %v4772 = vunpack.c.l.b16 %v4091
    %v4773 = vpack.c.b16 %v4738, %v4737
    %v4774 = vpack.c.b16 %v4740, %v4739
    %v4775 = vpack.c.b16 %v4742, %v4741
    %v4776 = vpack.c.b16 %v4744, %v4743
    %v4777 = vpack.c.b16 %v4746, %v4745
    %v4778 = vpack.c.b16 %v4748, %v4747
    %v4779 = vpack.c.b16 %v4750, %v4749
    %v4780 = vpack.c.b16 %v4752, %v4751
    %v4781 = vpack.c.b16 %v4754, %v4753
    %v4782 = vpack.c.b16 %v4756, %v4755
    %v4783 = vpack.c.b16 %v4758, %v4757
    %v4784 = vpack.c.b16 %v4760, %v4759
    %v4785 = vpack.c.b16 %v4762, %v4761
    %v4786 = vpack.c.b16 %v4764, %v4763
    %v4787 = vpack.c.b16 %v4766, %v4765
    %v4788 = vpack.c.b16 %v4768, %v4767
    %v4789 = vpack.c.b16 %v4770, %v4769
    %v4790 = vpack.c.b16 %v4772, %v4771
    %v4810 = vsel %vm194, %v4415, 0
    %v4813 = vsel %vm194, %v4416, 0
    %v4816 = vsel %vm194, %v4417, 0
    %v4819 = vsel %vm194, %v4418, 0
    %v4822 = vsel %vm194, %v4419, 0
    %v4825 = vsel %vm194, %v4420, 0
    %v4828 = vsel %vm194, %v4421, 0
    %v4831 = vsel %vm194, %v4422, 0
    %4833 = vmatprep.subr.bf16.mxu0 0
    %4834 = vmatpush1.bf16.msra.mxu0 %v4773
    %4835 = vmatprep.subr.bf16.mxu0 0
    %4836 = vmatpush1.bf16.msra.mxu0 %v4774
    %4837 = vmatprep.subr.bf16.mxu0 0
    %4838 = vmatpush1.bf16.msra.mxu0 %v4775
    %4839 = vmatprep.subr.bf16.mxu0 0
    %4840 = vmatpush1.bf16.msra.mxu0 %v4776
    %4841 = vmatprep.subr.bf16.mxu0 0
    %4842 = vmatpush1.bf16.msra.mxu0 %v4777
    %4843 = vmatprep.subr.bf16.mxu0 0
    %4844 = vmatpush1.bf16.msra.mxu0 %v4778
    %4845 = vmatprep.subr.bf16.mxu0 0
    %4846 = vmatpush1.bf16.msra.mxu0 %v4779
    %4847 = vmatprep.subr.bf16.mxu0 0
    %4848 = vmatpush1.bf16.msra.mxu0 %v4780
    %4849 = vmatprep.subr.bf16.mxu0 0
    %4850 = vmatpush1.bf16.msra.mxu0 %v4781
    %4851 = vmatprep.subr.bf16.mxu0 0
    %4852 = vmatpush1.bf16.msra.mxu0 %v4782
    %4853 = vmatprep.subr.bf16.mxu0 0
    %4854 = vmatpush1.bf16.msra.mxu0 %v4783
    %4855 = vmatprep.subr.bf16.mxu0 0
    %4856 = vmatpush1.bf16.msra.mxu0 %v4784
    %4857 = vmatprep.subr.bf16.mxu0 0
    %4858 = vmatpush1.bf16.msra.mxu0 %v4785
    %4859 = vmatprep.subr.bf16.mxu0 0
    %4860 = vmatpush1.bf16.msra.mxu0 %v4786
    %4861 = vmatprep.subr.bf16.mxu0 0
    %4862 = vmatpush1.bf16.msra.mxu0 %v4787
    %4863 = vmatprep.subr.bf16.mxu0 0
    %4864 = vmatpush1.bf16.msra.mxu0 %v4788
    %4865 = vmatprep.mubr.bf16.mxu0 %v4672
    %4866 = vmatmul.mubr.bf16.gmra.mrb[0].mxu0 %v4608
    %v4867 = vpop.f32.mrb[0].mxu0
    %v4868 = vadd.f32 %v4699, %v4867
    %v4869 = vpop.f32.mrb[0].mxu0
    %v4870 = vpop.f32.mrb[0].mxu0
    %v4871 = vadd.f32 %v4699, %v4870
    %v4872 = vpop.f32.mrb[0].mxu0
    %4873 = vmatprep.mubr.bf16.mxu0 %v4675
    %4874 = vmatmul.mubr.bf16.gmra.mrb[0].mxu0 %v4611
    %v4875 = vpop.f32.mrb[0].mxu0
    %v4876 = vadd.f32 %v4699, %v4875
    %v4877 = vpop.f32.mrb[0].mxu0
    %v4878 = vpop.f32.mrb[0].mxu0
    %v4879 = vadd.f32 %v4699, %v4878
    %v4880 = vpop.f32.mrb[0].mxu0
    %4881 = vmatprep.mubr.bf16.mxu0 %v4678
    %4882 = vmatmul.mubr.bf16.gmra.mrb[0].mxu0 %v4614
    %v4883 = vpop.f32.mrb[0].mxu0
    %v4884 = vadd.f32 %v4699, %v4883
    %v4885 = vpop.f32.mrb[0].mxu0
    %v4886 = vpop.f32.mrb[0].mxu0
    %v4887 = vadd.f32 %v4699, %v4886
    %v4888 = vpop.f32.mrb[0].mxu0
    %4889 = vmatprep.mubr.bf16.mxu0 %v4681
    %4890 = vmatmul.mubr.bf16.gmra.mrb[0].mxu0 %v4617
    %v4891 = vpop.f32.mrb[0].mxu0
    %v4892 = vadd.f32 %v4699, %v4891
    %v4893 = vpop.f32.mrb[0].mxu0
    %v4894 = vpop.f32.mrb[0].mxu0
    %v4895 = vadd.f32 %v4699, %v4894
    %v4896 = vpop.f32.mrb[0].mxu0
    %4897 = vmatprep.mubr.bf16.mxu0 %v4684
    %4898 = vmatmul.mubr.bf16.gmra.mrb[0].mxu0 %v4620
    %v4899 = vpop.f32.mrb[0].mxu0
    %v4900 = vadd.f32 %v4699, %v4899
    %v4901 = vpop.f32.mrb[0].mxu0
    %v4902 = vpop.f32.mrb[0].mxu0
    %v4903 = vadd.f32 %v4699, %v4902
    %v4904 = vpop.f32.mrb[0].mxu0
    %4905 = vmatprep.mubr.bf16.mxu0 %v4687
    %4906 = vmatmul.mubr.bf16.gmra.mrb[0].mxu0 %v4623
    %v4907 = vpop.f32.mrb[0].mxu0
    %v4908 = vadd.f32 %v4699, %v4907
    %v4909 = vpop.f32.mrb[0].mxu0
    %v4910 = vpop.f32.mrb[0].mxu0
    %v4911 = vadd.f32 %v4699, %v4910
    %v4912 = vpop.f32.mrb[0].mxu0
    %4913 = vmatprep.mubr.bf16.mxu0 %v4690
    %4914 = vmatmul.mubr.bf16.gmra.mrb[0].mxu0 %v4626
    %v4915 = vpop.f32.mrb[0].mxu0
    %v4916 = vadd.f32 %v4699, %v4915
    %v4917 = vpop.f32.mrb[0].mxu0
    %v4918 = vpop.f32.mrb[0].mxu0
    %v4919 = vadd.f32 %v4699, %v4918
    %v4920 = vpop.f32.mrb[0].mxu0
    %4921 = vmatprep.mubr.bf16.mxu0 %v4693
    %4922 = vmatmul.mubr.bf16.gmra.mrb[0].mxu0 %v4629
    %v4923 = vpop.f32.mrb[0].mxu0
    %v4924 = vadd.f32 %v4699, %v4923
    %v4925 = vpop.f32.mrb[0].mxu0
    %v4926 = vpop.f32.mrb[0].mxu0
    %v4927 = vadd.f32 %v4699, %v4926
    %v4928 = vpop.f32.mrb[0].mxu0
    %4929 = vdwg.mxu0
    %4930 = vmatprep.subr.bf16.mxu0 0
    %4931 = vmatpush1.bf16.msra.mxu0 %v4789
    %4932 = vmatprep.subr.bf16.mxu0 0
    %4933 = vmatpush1.bf16.msra.mxu0 %v4790
    %4934 = vmatprep.subr.bf16.mxu0 0
    %4935 = vmatpush1.bf16.msra.mxu0 0
    %4936 = vmatprep.subr.bf16.mxu0 0
    %4937 = vmatpush1.bf16.msra.mxu0 0
    %4938 = vmatprep.subr.bf16.mxu0 0
    %4939 = vmatpush1.bf16.msra.mxu0 0
    %4940 = vmatprep.subr.bf16.mxu0 0
    %4941 = vmatpush1.bf16.msra.mxu0 0
    %4942 = vmatprep.subr.bf16.mxu0 0
    %4943 = vmatpush1.bf16.msra.mxu0 0
    %4944 = vmatprep.subr.bf16.mxu0 0
    %4945 = vmatpush1.bf16.msra.mxu0 0
    %4946 = vmatprep.subr.bf16.mxu0 0
    %4947 = vmatpush1.bf16.msra.mxu0 0
    %4948 = vmatprep.subr.bf16.mxu0 0
    %4949 = vmatpush1.bf16.msra.mxu0 0
    %4950 = vmatprep.subr.bf16.mxu0 0
    %4951 = vmatpush1.bf16.msra.mxu0 0
    %4952 = vmatprep.subr.bf16.mxu0 0
    %4953 = vmatpush1.bf16.msra.mxu0 0
    %4954 = vmatprep.subr.bf16.mxu0 0
    %4955 = vmatpush1.bf16.msra.mxu0 0
    %4956 = vmatprep.subr.bf16.mxu0 0
    %4957 = vmatpush1.bf16.msra.mxu0 0
    %4958 = vmatprep.subr.bf16.mxu0 0
    %4959 = vmatpush1.bf16.msra.mxu0 0
    %4960 = vmatprep.subr.bf16.mxu0 0
    %4961 = vmatpush1.bf16.msra.mxu0 0
    %4962 = vmatprep.mubr.bf16.mxu0 0
    %4963 = vmatmul.mubr.bf16.gmra.mrb[0].mxu0 %v4810
    %v4964 = vpop.f32.mrb[0].mxu0
    %v4965 = vadd.f32 %v4868, %v4964
    %v4966 = vpop.f32.mrb[0].mxu0
    %v4967 = vpop.f32.mrb[0].mxu0
    %v4968 = vadd.f32 %v4871, %v4967
    %v4969 = vpop.f32.mrb[0].mxu0
    %4970 = vmatprep.mubr.bf16.mxu0 0
    %4971 = vmatmul.mubr.bf16.gmra.mrb[0].mxu0 %v4813
    %v4972 = vpop.f32.mrb[0].mxu0
    %v4973 = vadd.f32 %v4876, %v4972
    %v4974 = vpop.f32.mrb[0].mxu0
    %v4975 = vpop.f32.mrb[0].mxu0
    %v4976 = vadd.f32 %v4879, %v4975
    %v4977 = vpop.f32.mrb[0].mxu0
    %4978 = vmatprep.mubr.bf16.mxu0 0
    %4979 = vmatmul.mubr.bf16.gmra.mrb[0].mxu0 %v4816
    %v4980 = vpop.f32.mrb[0].mxu0
    %v4981 = vadd.f32 %v4884, %v4980
    %v4982 = vpop.f32.mrb[0].mxu0
    %v4983 = vpop.f32.mrb[0].mxu0
    %v4984 = vadd.f32 %v4887, %v4983
    %v4985 = vpop.f32.mrb[0].mxu0
    %4986 = vmatprep.mubr.bf16.mxu0 0
    %4987 = vmatmul.mubr.bf16.gmra.mrb[0].mxu0 %v4819
    %v4988 = vpop.f32.mrb[0].mxu0
    %v4989 = vadd.f32 %v4892, %v4988
    %v4990 = vpop.f32.mrb[0].mxu0
    %v4991 = vpop.f32.mrb[0].mxu0
    %v4992 = vadd.f32 %v4895, %v4991
    %v4993 = vpop.f32.mrb[0].mxu0
    %4994 = vmatprep.mubr.bf16.mxu0 0
    %4995 = vmatmul.mubr.bf16.gmra.mrb[0].mxu0 %v4822
    %v4996 = vpop.f32.mrb[0].mxu0
    %v4997 = vadd.f32 %v4900, %v4996
    %v4998 = vpop.f32.mrb[0].mxu0
    %v4999 = vpop.f32.mrb[0].mxu0
    %v5000 = vadd.f32 %v4903, %v4999
    %v5001 = vpop.f32.mrb[0].mxu0
    %5002 = vmatprep.mubr.bf16.mxu0 0
    %5003 = vmatmul.mubr.bf16.gmra.mrb[0].mxu0 %v4825
    %v5004 = vpop.f32.mrb[0].mxu0
    %v5005 = vadd.f32 %v4908, %v5004
    %v5006 = vpop.f32.mrb[0].mxu0
    %v5007 = vpop.f32.mrb[0].mxu0
    %v5008 = vadd.f32 %v4911, %v5007
    %v5009 = vpop.f32.mrb[0].mxu0
    %5010 = vmatprep.mubr.bf16.mxu0 0
    %5011 = vmatmul.mubr.bf16.gmra.mrb[0].mxu0 %v4828
    %v5012 = vpop.f32.mrb[0].mxu0
    %v5013 = vadd.f32 %v4916, %v5012
    %v5014 = vpop.f32.mrb[0].mxu0
    %v5015 = vpop.f32.mrb[0].mxu0
    %v5016 = vadd.f32 %v4919, %v5015
    %v5017 = vpop.f32.mrb[0].mxu0
    %5018 = vmatprep.mubr.bf16.mxu0 0
    %5019 = vmatmul.mubr.bf16.gmra.mrb[0].mxu0 %v4831
    %v5020 = vpop.f32.mrb[0].mxu0
    %v5021 = vadd.f32 %v4924, %v5020
    %v5022 = vpop.f32.mrb[0].mxu0
    %v5023 = vpop.f32.mrb[0].mxu0
    %v5024 = vadd.f32 %v4927, %v5023
    %v5025 = vpop.f32.mrb[0].mxu0
    %5026 = vdwg.mxu0
    %v5027 = vmax.f32 %v4965, 0.0
    %v5028 = vmax.f32 %v4968, 0.0
    %v5029 = vmax.f32 %v4973, 0.0
    %v5030 = vmax.f32 %v4976, 0.0
    %v5031 = vmax.f32 %v4981, 0.0
    %v5032 = vmax.f32 %v4984, 0.0
    %v5033 = vmax.f32 %v4989, 0.0
    %v5034 = vmax.f32 %v4992, 0.0
    %v5035 = vmax.f32 %v4997, 0.0
    %v5036 = vmax.f32 %v5000, 0.0
    %v5037 = vmax.f32 %v5005, 0.0
    %v5038 = vmax.f32 %v5008, 0.0
    %v5039 = vmax.f32 %v5013, 0.0
    %v5040 = vmax.f32 %v5016, 0.0
    %v5041 = vmax.f32 %v5021, 0.0
    %v5042 = vmax.f32 %v5024, 0.0
    %v5043 = vld [vmem:[%s3] sm:$0xf]
    %v5044 = vld [vmem:[%s3 + $0x4] sm:$0xf]
    %v5045 = vld [vmem:[%s3 + $0x8] sm:$0xf]
    %v5046 = vld [vmem:[%s3 + $0xc] sm:$0xf]
    %v5047 = vld [vmem:[%s3 + $0x10] sm:$0xf]
    %v5048 = vld [vmem:[%s3 + $0x14] sm:$0xf]
    %v5049 = vld [vmem:[%s3 + $0x18] sm:$0xf]
    %v5050 = vld [vmem:[%s3 + $0x1c] sm:$0xf]
    %v5051 = vld [vmem:[%s3 + $0x20] sm:$0xf]
    %v5052 = vld [vmem:[%s3 + $0x24] sm:$0xf]
    %v5053 = vld [vmem:[%s3 + $0x28] sm:$0xf]
    %v5054 = vld [vmem:[%s3 + $0x2c] sm:$0xf]
    %v5055 = vld [vmem:[%s3 + $0x30] sm:$0xf]
    %v5056 = vld [vmem:[%s3 + $0x34] sm:$0xf]
    %v5057 = vld [vmem:[%s3 + $0x38] sm:$0xf]
    %v5058 = vld [vmem:[%s3 + $0x3c] sm:$0xf]
    %v5059 = vld [vmem:[%s3 + $0x40] sm:$0xf]
    %v5060 = vld [vmem:[%s3 + $0x44] sm:$0xf]
    %v5061 = vld [vmem:[%s3 + $0x48] sm:$0xf]
    %v5062 = vld [vmem:[%s3 + $0x4c] sm:$0xf]
    %v5063 = vld [vmem:[%s3 + $0x50] sm:$0xf]
    %v5064 = vld [vmem:[%s3 + $0x54] sm:$0xf]
    %v5065 = vld [vmem:[%s3 + $0x58] sm:$0xf]
    %v5066 = vld [vmem:[%s3 + $0x5c] sm:$0xf]
    %v5067 = vld [vmem:[%s3 + $0x60] sm:$0xf]
    %v5068 = vld [vmem:[%s3 + $0x64] sm:$0xf]
    %v5069 = vld [vmem:[%s3 + $0x68] sm:$0xf]
    %v5070 = vld [vmem:[%s3 + $0x6c] sm:$0xf]
    %v5071 = vld [vmem:[%s3 + $0x70] sm:$0xf]
    %v5072 = vld [vmem:[%s3 + $0x74] sm:$0xf]
    %v5073 = vld [vmem:[%s3 + $0x78] sm:$0xf]
    %v5074 = vld [vmem:[%s3 + $0x7c] sm:$0xf]
    %v5107 = vunpack.c.l.b16 %v5043
    %v5108 = vunpack.c.l.b16 %v5044
    %v5109 = vunpack.c.l.b16 %v5045
    %v5110 = vunpack.c.l.b16 %v5046
    %v5111 = vunpack.c.l.b16 %v5047
    %v5112 = vunpack.c.l.b16 %v5048
    %v5113 = vunpack.c.l.b16 %v5049
    %v5114 = vunpack.c.l.b16 %v5050
    %v5115 = vunpack.c.l.b16 %v5051
    %v5116 = vunpack.c.l.b16 %v5052
    %v5117 = vunpack.c.l.b16 %v5053
    %v5118 = vunpack.c.l.b16 %v5054
    %v5119 = vunpack.c.l.b16 %v5055
    %v5120 = vunpack.c.l.b16 %v5056
    %v5121 = vunpack.c.l.b16 %v5057
    %v5122 = vunpack.c.l.b16 %v5058
    %v5123 = vunpack.c.l.b16 %v5059
    %v5124 = vunpack.c.l.b16 %v5060
    %v5125 = vunpack.c.l.b16 %v5061
    %v5126 = vunpack.c.l.b16 %v5062
    %v5127 = vunpack.c.l.b16 %v5063
    %v5128 = vunpack.c.l.b16 %v5064
    %v5129 = vunpack.c.l.b16 %v5065
    %v5130 = vunpack.c.l.b16 %v5066
    %v5131 = vunpack.c.l.b16 %v5067
    %v5132 = vunpack.c.l.b16 %v5068
    %v5133 = vunpack.c.l.b16 %v5069
    %v5134 = vunpack.c.l.b16 %v5070
    %v5135 = vunpack.c.l.b16 %v5071
    %v5136 = vunpack.c.l.b16 %v5072
    %v5137 = vunpack.c.l.b16 %v5073
    %v5138 = vunpack.c.l.b16 %v5074
    %v5139 = vpack.c.b16 %v5108, %v5107
    %v5140 = vpack.c.b16 %v5110, %v5109
    %v5141 = vpack.c.b16 %v5112, %v5111
    %v5142 = vpack.c.b16 %v5114, %v5113
    %v5143 = vpack.c.b16 %v5116, %v5115
    %v5144 = vpack.c.b16 %v5118, %v5117
    %v5145 = vpack.c.b16 %v5120, %v5119
    %v5146 = vpack.c.b16 %v5122, %v5121
    %v5147 = vpack.c.b16 %v5124, %v5123
    %v5148 = vpack.c.b16 %v5126, %v5125
    %v5149 = vpack.c.b16 %v5128, %v5127
    %v5150 = vpack.c.b16 %v5130, %v5129
    %v5151 = vpack.c.b16 %v5132, %v5131
    %v5152 = vpack.c.b16 %v5134, %v5133
    %v5153 = vpack.c.b16 %v5136, %v5135
    %v5154 = vpack.c.b16 %v5138, %v5137
    %5171 = vmatprep.subr.bf16.mxu0 0
    %5172 = vmatpush1.bf16.msra.mxu0 %v2937
    %5173 = vmatprep.subr.bf16.mxu0 0
    %5174 = vmatpush1.bf16.msra.mxu0 %v2938
    %5175 = vmatprep.subr.bf16.mxu0 0
    %5176 = vmatpush1.bf16.msra.mxu0 %v2939
    %5177 = vmatprep.subr.bf16.mxu0 0
    %5178 = vmatpush1.bf16.msra.mxu0 %v2940
    %5179 = vmatprep.subr.bf16.mxu0 0
    %5180 = vmatpush1.bf16.msra.mxu0 %v2941
    %5181 = vmatprep.subr.bf16.mxu0 0
    %5182 = vmatpush1.bf16.msra.mxu0 %v2942
    %5183 = vmatprep.subr.bf16.mxu0 0
    %5184 = vmatpush1.bf16.msra.mxu0 %v2943
    %5185 = vmatprep.subr.bf16.mxu0 0
    %5186 = vmatpush1.bf16.msra.mxu0 %v2944
    %5187 = vmatprep.subr.bf16.mxu0 0
    %5188 = vmatpush1.bf16.msra.mxu0 0
    %5189 = vmatprep.subr.bf16.mxu0 0
    %5190 = vmatpush1.bf16.msra.mxu0 0
    %5191 = vmatprep.subr.bf16.mxu0 0
    %5192 = vmatpush1.bf16.msra.mxu0 0
    %5193 = vmatprep.subr.bf16.mxu0 0
    %5194 = vmatpush1.bf16.msra.mxu0 0
    %5195 = vmatprep.subr.bf16.mxu0 0
    %5196 = vmatpush1.bf16.msra.mxu0 0
    %5197 = vmatprep.subr.bf16.mxu0 0
    %5198 = vmatpush1.bf16.msra.mxu0 0
    %5199 = vmatprep.subr.bf16.mxu0 0
    %5200 = vmatpush1.bf16.msra.mxu0 0
    %5201 = vmatprep.subr.bf16.mxu0 0
    %5202 = vmatpush1.bf16.msra.mxu0 0
    %5203 = vmatprep.mubr.bf16.mxu0 0
    %5204 = vmatmul.mubr.bf16.gmra.mrb[0].mxu0 %v5139
    %v5205 = vpop.f32.mrb[0].mxu0
    %v5206 = vadd.f32 0.0, %v5205
    %v5207 = vpop.f32.mrb[0].mxu0
    %v5208 = vpop.f32.mrb[0].mxu0
    %v5209 = vadd.f32 0.0, %v5208
    %v5210 = vpop.f32.mrb[0].mxu0
    %5211 = vmatprep.mubr.bf16.mxu0 0
    %5212 = vmatmul.mubr.bf16.gmra.mrb[0].mxu0 %v5140
    %v5213 = vpop.f32.mrb[0].mxu0
    %v5214 = vadd.f32 0.0, %v5213
    %v5215 = vpop.f32.mrb[0].mxu0
    %v5216 = vpop.f32.mrb[0].mxu0
    %v5217 = vadd.f32 0.0, %v5216
    %v5218 = vpop.f32.mrb[0].mxu0
    %5219 = vmatprep.mubr.bf16.mxu0 0
    %5220 = vmatmul.mubr.bf16.gmra.mrb[0].mxu0 %v5141
    %v5221 = vpop.f32.mrb[0].mxu0
    %v5222 = vadd.f32 0.0, %v5221
    %v5223 = vpop.f32.mrb[0].mxu0
    %v5224 = vpop.f32.mrb[0].mxu0
    %v5225 = vadd.f32 0.0, %v5224
    %v5226 = vpop.f32.mrb[0].mxu0
    %5227 = vmatprep.mubr.bf16.mxu0 0
    %5228 = vmatmul.mubr.bf16.gmra.mrb[0].mxu0 %v5142
    %v5229 = vpop.f32.mrb[0].mxu0
    %v5230 = vadd.f32 0.0, %v5229
    %v5231 = vpop.f32.mrb[0].mxu0
    %v5232 = vpop.f32.mrb[0].mxu0
    %v5233 = vadd.f32 0.0, %v5232
    %v5234 = vpop.f32.mrb[0].mxu0
    %5235 = vmatprep.mubr.bf16.mxu0 0
    %5236 = vmatmul.mubr.bf16.gmra.mrb[0].mxu0 %v5143
    %v5237 = vpop.f32.mrb[0].mxu0
    %v5238 = vadd.f32 0.0, %v5237
    %v5239 = vpop.f32.mrb[0].mxu0
    %v5240 = vpop.f32.mrb[0].mxu0
    %v5241 = vadd.f32 0.0, %v5240
    %v5242 = vpop.f32.mrb[0].mxu0
    %5243 = vmatprep.mubr.bf16.mxu0 0
    %5244 = vmatmul.mubr.bf16.gmra.mrb[0].mxu0 %v5144
    %v5245 = vpop.f32.mrb[0].mxu0
    %v5246 = vadd.f32 0.0, %v5245
    %v5247 = vpop.f32.mrb[0].mxu0
    %v5248 = vpop.f32.mrb[0].mxu0
    %v5249 = vadd.f32 0.0, %v5248
    %v5250 = vpop.f32.mrb[0].mxu0
    %5251 = vmatprep.mubr.bf16.mxu0 0
    %5252 = vmatmul.mubr.bf16.gmra.mrb[0].mxu0 %v5145
    %v5253 = vpop.f32.mrb[0].mxu0
    %v5254 = vadd.f32 0.0, %v5253
    %v5255 = vpop.f32.mrb[0].mxu0
    %v5256 = vpop.f32.mrb[0].mxu0
    %v5257 = vadd.f32 0.0, %v5256
    %v5258 = vpop.f32.mrb[0].mxu0
    %5259 = vmatprep.mubr.bf16.mxu0 0
    %5260 = vmatmul.mubr.bf16.gmra.mrb[0].mxu0 %v5146
    %v5261 = vpop.f32.mrb[0].mxu0
    %v5262 = vadd.f32 0.0, %v5261
    %v5263 = vpop.f32.mrb[0].mxu0
    %v5264 = vpop.f32.mrb[0].mxu0
    %v5265 = vadd.f32 0.0, %v5264
    %v5266 = vpop.f32.mrb[0].mxu0
    %5267 = vmatprep.mubr.bf16.mxu0 0
    %5268 = vmatmul.mubr.bf16.gmra.mrb[0].mxu0 %v5147
    %v5269 = vpop.f32.mrb[0].mxu0
    %v5270 = vadd.f32 0.0, %v5269
    %v5271 = vpop.f32.mrb[0].mxu0
    %v5272 = vpop.f32.mrb[0].mxu0
    %v5273 = vadd.f32 0.0, %v5272
    %v5274 = vpop.f32.mrb[0].mxu0
    %5275 = vmatprep.mubr.bf16.mxu0 0
    %5276 = vmatmul.mubr.bf16.gmra.mrb[0].mxu0 %v5148
    %v5277 = vpop.f32.mrb[0].mxu0
    %v5278 = vadd.f32 0.0, %v5277
    %v5279 = vpop.f32.mrb[0].mxu0
    %v5280 = vpop.f32.mrb[0].mxu0
    %v5281 = vadd.f32 0.0, %v5280
    %v5282 = vpop.f32.mrb[0].mxu0
    %5283 = vmatprep.mubr.bf16.mxu0 0
    %5284 = vmatmul.mubr.bf16.gmra.mrb[0].mxu0 %v5149
    %v5285 = vpop.f32.mrb[0].mxu0
    %v5286 = vadd.f32 0.0, %v5285
    %v5287 = vpop.f32.mrb[0].mxu0
    %v5288 = vpop.f32.mrb[0].mxu0
    %v5289 = vadd.f32 0.0, %v5288
    %v5290 = vpop.f32.mrb[0].mxu0
    %5291 = vmatprep.mubr.bf16.mxu0 0
    %5292 = vmatmul.mubr.bf16.gmra.mrb[0].mxu0 %v5150
    %v5293 = vpop.f32.mrb[0].mxu0
    %v5294 = vadd.f32 0.0, %v5293
    %v5295 = vpop.f32.mrb[0].mxu0
    %v5296 = vpop.f32.mrb[0].mxu0
    %v5297 = vadd.f32 0.0, %v5296
    %v5298 = vpop.f32.mrb[0].mxu0
    %5299 = vmatprep.mubr.bf16.mxu0 0
    %5300 = vmatmul.mubr.bf16.gmra.mrb[0].mxu0 %v5151
    %v5301 = vpop.f32.mrb[0].mxu0
    %v5302 = vadd.f32 0.0, %v5301
    %v5303 = vpop.f32.mrb[0].mxu0
    %v5304 = vpop.f32.mrb[0].mxu0
    %v5305 = vadd.f32 0.0, %v5304
    %v5306 = vpop.f32.mrb[0].mxu0
    %5307 = vmatprep.mubr.bf16.mxu0 0
    %5308 = vmatmul.mubr.bf16.gmra.mrb[0].mxu0 %v5152
    %v5309 = vpop.f32.mrb[0].mxu0
    %v5310 = vadd.f32 0.0, %v5309
    %v5311 = vpop.f32.mrb[0].mxu0
    %v5312 = vpop.f32.mrb[0].mxu0
    %v5313 = vadd.f32 0.0, %v5312
    %v5314 = vpop.f32.mrb[0].mxu0
    %5315 = vmatprep.mubr.bf16.mxu0 0
    %5316 = vmatmul.mubr.bf16.gmra.mrb[0].mxu0 %v5153
    %v5317 = vpop.f32.mrb[0].mxu0
    %v5318 = vadd.f32 0.0, %v5317
    %v5319 = vpop.f32.mrb[0].mxu0
    %v5320 = vpop.f32.mrb[0].mxu0
    %v5321 = vadd.f32 0.0, %v5320
    %v5322 = vpop.f32.mrb[0].mxu0
    %5323 = vmatprep.mubr.bf16.mxu0 0
    %5324 = vmatmul.mubr.bf16.gmra.mrb[0].mxu0 %v5154
    %v5325 = vpop.f32.mrb[0].mxu0
    %v5326 = vadd.f32 0.0, %v5325
    %v5327 = vpop.f32.mrb[0].mxu0
    %v5328 = vpop.f32.mrb[0].mxu0
    %v5329 = vadd.f32 0.0, %v5328
    %v5330 = vpop.f32.mrb[0].mxu0
    %5331 = vdwg.mxu0
    %v5332 = vld [vmem:[%s17] sm:$0xf]
    %v5333 = vld [vmem:[%s17 + $0x4] sm:$0xf]
    %v5334 = vld [vmem:[%s17 + $0x8] sm:$0xf]
    %v5335 = vld [vmem:[%s17 + $0xc] sm:$0xf]
    %v5336 = vpack.c.bf16 %v5209, %v5206
    %v5337 = vpack.c.bf16 %v5217, %v5214
    %v5338 = vpack.c.bf16 %v5225, %v5222
    %v5339 = vpack.c.bf16 %v5233, %v5230
    %v5340 = vpack.c.bf16 %v5241, %v5238
    %v5341 = vpack.c.bf16 %v5249, %v5246
    %v5342 = vpack.c.bf16 %v5257, %v5254
    %v5343 = vpack.c.bf16 %v5265, %v5262
    %v5344 = vld [vmem:[%s18] sm:$0x1]
    %v5346 = vlaneseq
    %v5347 = vshrl.u32 %v5346, 7
    %v5348 = vsub.s32 0, %v5347
    %v5349 = vrot.slane %v5344, %v5348
    %v5355 = vunpack.c.l.b16 %v5332
    %v5356 = vunpack.c.l.b16 %v5333
    %v5357 = vunpack.c.l.b16 %v5334
    %v5358 = vunpack.c.l.b16 %v5335
    %v5359 = vpack.c.b16 %v5356, %v5355
    %v5360 = vpack.c.b16 %v5358, %v5357
    %v5364 = vsel %vm194, %v5336, 0
    %v5367 = vsel %vm194, %v5337, 0
    %v5370 = vsel %vm194, %v5338, 0
    %v5373 = vsel %vm194, %v5339, 0
    %v5376 = vsel %vm194, %v5340, 0
    %v5379 = vsel %vm194, %v5341, 0
    %v5382 = vsel %vm194, %v5342, 0
    %v5385 = vsel %vm194, %v5343, 0
    %5387 = vmatprep.subr.bf16.mxu0 0
    %5388 = vmatpush1.bf16.msra.mxu0 %v5359
    %5389 = vmatprep.subr.bf16.mxu0 0
    %5390 = vmatpush1.bf16.msra.mxu0 %v5360
    %5391 = vmatprep.subr.bf16.mxu0 0
    %5392 = vmatpush1.bf16.msra.mxu0 0
    %5393 = vmatprep.subr.bf16.mxu0 0
    %5394 = vmatpush1.bf16.msra.mxu0 0
    %5395 = vmatprep.subr.bf16.mxu0 0
    %5396 = vmatpush1.bf16.msra.mxu0 0
    %5397 = vmatprep.subr.bf16.mxu0 0
    %5398 = vmatpush1.bf16.msra.mxu0 0
    %5399 = vmatprep.subr.bf16.mxu0 0
    %5400 = vmatpush1.bf16.msra.mxu0 0
    %5401 = vmatprep.subr.bf16.mxu0 0
    %5402 = vmatpush1.bf16.msra.mxu0 0
    %5403 = vmatprep.subr.bf16.mxu0 0
    %5404 = vmatpush1.bf16.msra.mxu0 0
    %5405 = vmatprep.subr.bf16.mxu0 0
    %5406 = vmatpush1.bf16.msra.mxu0 0
    %5407 = vmatprep.subr.bf16.mxu0 0
    %5408 = vmatpush1.bf16.msra.mxu0 0
    %5409 = vmatprep.subr.bf16.mxu0 0
    %5410 = vmatpush1.bf16.msra.mxu0 0
    %5411 = vmatprep.subr.bf16.mxu0 0
    %5412 = vmatpush1.bf16.msra.mxu0 0
    %5413 = vmatprep.subr.bf16.mxu0 0
    %5414 = vmatpush1.bf16.msra.mxu0 0
    %5415 = vmatprep.subr.bf16.mxu0 0
    %5416 = vmatpush1.bf16.msra.mxu0 0
    %5417 = vmatprep.subr.bf16.mxu0 0
    %5418 = vmatpush1.bf16.msra.mxu0 0
    %5419 = vmatprep.mubr.bf16.mxu0 0
    %5420 = vmatmul.mubr.bf16.gmra.mrb[0].mxu0 %v5364
    %v5421 = vpop.f32.mrb[0].mxu0
    %v5422 = vadd.f32 %v5349, %v5421
    %v5423 = vpop.f32.mrb[0].mxu0
    %v5424 = vpop.f32.mrb[0].mxu0
    %v5425 = vadd.f32 %v5349, %v5424
    %v5426 = vpop.f32.mrb[0].mxu0
    %5427 = vmatprep.mubr.bf16.mxu0 0
    %5428 = vmatmul.mubr.bf16.gmra.mrb[0].mxu0 %v5367
    %v5429 = vpop.f32.mrb[0].mxu0
    %v5430 = vadd.f32 %v5349, %v5429
    %v5431 = vpop.f32.mrb[0].mxu0
    %v5432 = vpop.f32.mrb[0].mxu0
    %v5433 = vadd.f32 %v5349, %v5432
    %v5434 = vpop.f32.mrb[0].mxu0
    %5435 = vmatprep.mubr.bf16.mxu0 0
    %5436 = vmatmul.mubr.bf16.gmra.mrb[0].mxu0 %v5370
    %v5437 = vpop.f32.mrb[0].mxu0
    %v5438 = vadd.f32 %v5349, %v5437
    %v5439 = vpop.f32.mrb[0].mxu0
    %v5440 = vpop.f32.mrb[0].mxu0
    %v5441 = vadd.f32 %v5349, %v5440
    %v5442 = vpop.f32.mrb[0].mxu0
    %5443 = vmatprep.mubr.bf16.mxu0 0
    %5444 = vmatmul.mubr.bf16.gmra.mrb[0].mxu0 %v5373
    %v5445 = vpop.f32.mrb[0].mxu0
    %v5446 = vadd.f32 %v5349, %v5445
    %v5447 = vpop.f32.mrb[0].mxu0
    %v5448 = vpop.f32.mrb[0].mxu0
    %v5449 = vadd.f32 %v5349, %v5448
    %v5450 = vpop.f32.mrb[0].mxu0
    %5451 = vmatprep.mubr.bf16.mxu0 0
    %5452 = vmatmul.mubr.bf16.gmra.mrb[0].mxu0 %v5376
    %v5453 = vpop.f32.mrb[0].mxu0
    %v5454 = vadd.f32 %v5349, %v5453
    %v5455 = vpop.f32.mrb[0].mxu0
    %v5456 = vpop.f32.mrb[0].mxu0
    %v5457 = vadd.f32 %v5349, %v5456
    %v5458 = vpop.f32.mrb[0].mxu0
    %5459 = vmatprep.mubr.bf16.mxu0 0
    %5460 = vmatmul.mubr.bf16.gmra.mrb[0].mxu0 %v5379
    %v5461 = vpop.f32.mrb[0].mxu0
    %v5462 = vadd.f32 %v5349, %v5461
    %v5463 = vpop.f32.mrb[0].mxu0
    %v5464 = vpop.f32.mrb[0].mxu0
    %v5465 = vadd.f32 %v5349, %v5464
    %v5466 = vpop.f32.mrb[0].mxu0
    %5467 = vmatprep.mubr.bf16.mxu0 0
    %5468 = vmatmul.mubr.bf16.gmra.mrb[0].mxu0 %v5382
    %v5469 = vpop.f32.mrb[0].mxu0
    %v5470 = vadd.f32 %v5349, %v5469
    %v5471 = vpop.f32.mrb[0].mxu0
    %v5472 = vpop.f32.mrb[0].mxu0
    %v5473 = vadd.f32 %v5349, %v5472
    %v5474 = vpop.f32.mrb[0].mxu0
    %5475 = vmatprep.mubr.bf16.mxu0 0
    %5476 = vmatmul.mubr.bf16.gmra.mrb[0].mxu0 %v5385
    %v5477 = vpop.f32.mrb[0].mxu0
    %v5478 = vadd.f32 %v5349, %v5477
    %v5479 = vpop.f32.mrb[0].mxu0
    %v5480 = vpop.f32.mrb[0].mxu0
    %v5481 = vadd.f32 %v5349, %v5480
    %v5482 = vpop.f32.mrb[0].mxu0
    %5483 = vdwg.mxu0
    %v5484 = vmax.f32 %v5422, 0.0
    %v5485 = vmax.f32 %v5425, 0.0
    %v5486 = vmax.f32 %v5430, 0.0
    %v5487 = vmax.f32 %v5433, 0.0
    %v5488 = vmax.f32 %v5438, 0.0
    %v5489 = vmax.f32 %v5441, 0.0
    %v5490 = vmax.f32 %v5446, 0.0
    %v5491 = vmax.f32 %v5449, 0.0
    %v5492 = vmax.f32 %v5454, 0.0
    %v5493 = vmax.f32 %v5457, 0.0
    %v5494 = vmax.f32 %v5462, 0.0
    %v5495 = vmax.f32 %v5465, 0.0
    %v5496 = vmax.f32 %v5470, 0.0
    %v5497 = vmax.f32 %v5473, 0.0
    %v5498 = vmax.f32 %v5478, 0.0
    %v5499 = vmax.f32 %v5481, 0.0
    %v5500 = vld [vmem:[%s19] sm:$0x1]
    %v5501 = vpack.c.bf16 %v5485, %v5484
    %v5502 = vpack.c.bf16 %v5487, %v5486
    %v5503 = vpack.c.bf16 %v5489, %v5488
    %v5504 = vpack.c.bf16 %v5491, %v5490
    %v5505 = vpack.c.bf16 %v5493, %v5492
    %v5506 = vpack.c.bf16 %v5495, %v5494
    %v5507 = vpack.c.bf16 %v5497, %v5496
    %v5508 = vpack.c.bf16 %v5499, %v5498
    %v5509 = vld [vmem:[%s20] sm:$0x1]
    %v5511 = vlaneseq
    %v5512 = vshrl.u32 %v5511, 7
    %v5513 = vsub.s32 0, %v5512
    %v5514 = vrot.slane %v5509, %v5513
    %vm5516 = vcmask 15360
    %v5518 = vsel %vm5516, %v5501, 0
    %v5521 = vsel %vm5516, %v5502, 0
    %v5524 = vsel %vm5516, %v5503, 0
    %v5527 = vsel %vm5516, %v5504, 0
    %v5530 = vsel %vm5516, %v5505, 0
    %v5533 = vsel %vm5516, %v5506, 0
    %v5536 = vsel %vm5516, %v5507, 0
    %v5539 = vsel %vm5516, %v5508, 0
    %v5542 = vsel %vm419, %v5500, 0
    %5544 = vmatprep.subr.bf16.mxu0 0
    %5545 = vmatpush1.bf16.msra.mxu0 %v5542
    %5546 = vmatprep.subr.bf16.mxu0 0
    %5547 = vmatpush1.bf16.msra.mxu0 0
    %5548 = vmatprep.subr.bf16.mxu0 0
    %5549 = vmatpush1.bf16.msra.mxu0 0
    %5550 = vmatprep.subr.bf16.mxu0 0
    %5551 = vmatpush1.bf16.msra.mxu0 0
    %5552 = vmatprep.subr.bf16.mxu0 0
    %5553 = vmatpush1.bf16.msra.mxu0 0
    %5554 = vmatprep.subr.bf16.mxu0 0
    %5555 = vmatpush1.bf16.msra.mxu0 0
    %5556 = vmatprep.subr.bf16.mxu0 0
    %5557 = vmatpush1.bf16.msra.mxu0 0
    %5558 = vmatprep.subr.bf16.mxu0 0
    %5559 = vmatpush1.bf16.msra.mxu0 0
    %5560 = vmatprep.subr.bf16.mxu0 0
    %5561 = vmatpush1.bf16.msra.mxu0 0
    %5562 = vmatprep.subr.bf16.mxu0 0
    %5563 = vmatpush1.bf16.msra.mxu0 0
    %5564 = vmatprep.subr.bf16.mxu0 0
    %5565 = vmatpush1.bf16.msra.mxu0 0
    %5566 = vmatprep.subr.bf16.mxu0 0
    %5567 = vmatpush1.bf16.msra.mxu0 0
    %5568 = vmatprep.subr.bf16.mxu0 0
    %5569 = vmatpush1.bf16.msra.mxu0 0
    %5570 = vmatprep.subr.bf16.mxu0 0
    %5571 = vmatpush1.bf16.msra.mxu0 0
    %5572 = vmatprep.subr.bf16.mxu0 0
    %5573 = vmatpush1.bf16.msra.mxu0 0
    %5574 = vmatprep.subr.bf16.mxu0 0
    %5575 = vmatpush1.bf16.msra.mxu0 0
    %5576 = vmatprep.mubr.bf16.mxu0 0
    %5577 = vmatmul.mubr.bf16.gmra.mrb[0].mxu0 %v5518
    %v5578 = vpop.f32.mrb[0].mxu0
    %v5579 = vadd.f32 %v5514, %v5578
    %v5580 = vpop.f32.mrb[0].mxu0
    %v5581 = vpop.f32.mrb[0].mxu0
    %v5582 = vadd.f32 %v5514, %v5581
    %v5583 = vpop.f32.mrb[0].mxu0
    %5584 = vmatprep.mubr.bf16.mxu0 0
    %5585 = vmatmul.mubr.bf16.gmra.mrb[0].mxu0 %v5521
    %v5586 = vpop.f32.mrb[0].mxu0
    %v5587 = vadd.f32 %v5514, %v5586
    %v5588 = vpop.f32.mrb[0].mxu0
    %v5589 = vpop.f32.mrb[0].mxu0
    %v5590 = vadd.f32 %v5514, %v5589
    %v5591 = vpop.f32.mrb[0].mxu0
    %5592 = vmatprep.mubr.bf16.mxu0 0
    %5593 = vmatmul.mubr.bf16.gmra.mrb[0].mxu0 %v5524
    %v5594 = vpop.f32.mrb[0].mxu0
    %v5595 = vadd.f32 %v5514, %v5594
    %v5596 = vpop.f32.mrb[0].mxu0
    %v5597 = vpop.f32.mrb[0].mxu0
    %v5598 = vadd.f32 %v5514, %v5597
    %v5599 = vpop.f32.mrb[0].mxu0
    %5600 = vmatprep.mubr.bf16.mxu0 0
    %5601 = vmatmul.mubr.bf16.gmra.mrb[0].mxu0 %v5527
    %v5602 = vpop.f32.mrb[0].mxu0
    %v5603 = vadd.f32 %v5514, %v5602
    %v5604 = vpop.f32.mrb[0].mxu0
    %v5605 = vpop.f32.mrb[0].mxu0
    %v5606 = vadd.f32 %v5514, %v5605
    %v5607 = vpop.f32.mrb[0].mxu0
    %5608 = vmatprep.mubr.bf16.mxu0 0
    %5609 = vmatmul.mubr.bf16.gmra.mrb[0].mxu0 %v5530
    %v5610 = vpop.f32.mrb[0].mxu0
    %v5611 = vadd.f32 %v5514, %v5610
    %v5612 = vpop.f32.mrb[0].mxu0
    %v5613 = vpop.f32.mrb[0].mxu0
    %v5614 = vadd.f32 %v5514, %v5613
    %v5615 = vpop.f32.mrb[0].mxu0
    %5616 = vmatprep.mubr.bf16.mxu0 0
    %5617 = vmatmul.mubr.bf16.gmra.mrb[0].mxu0 %v5533
    %v5618 = vpop.f32.mrb[0].mxu0
    %v5619 = vadd.f32 %v5514, %v5618
    %v5620 = vpop.f32.mrb[0].mxu0
    %v5621 = vpop.f32.mrb[0].mxu0
    %v5622 = vadd.f32 %v5514, %v5621
    %v5623 = vpop.f32.mrb[0].mxu0
    %5624 = vmatprep.mubr.bf16.mxu0 0
    %5625 = vmatmul.mubr.bf16.gmra.mrb[0].mxu0 %v5536
    %v5626 = vpop.f32.mrb[0].mxu0
    %v5627 = vadd.f32 %v5514, %v5626
    %v5628 = vpop.f32.mrb[0].mxu0
    %v5629 = vpop.f32.mrb[0].mxu0
    %v5630 = vadd.f32 %v5514, %v5629
    %v5631 = vpop.f32.mrb[0].mxu0
    %5632 = vmatprep.mubr.bf16.mxu0 0
    %5633 = vmatmul.mubr.bf16.gmra.mrb[0].mxu0 %v5539
    %v5634 = vpop.f32.mrb[0].mxu0
    %v5635 = vadd.f32 %v5514, %v5634
    %v5636 = vpop.f32.mrb[0].mxu0
    %v5637 = vpop.f32.mrb[0].mxu0
    %v5638 = vadd.f32 %v5514, %v5637
    %v5639 = vpop.f32.mrb[0].mxu0
    %5640 = vdwg.mxu0
    %v5641 = vxor.u32 %v5579, 2147483648
    %v5642 = vxor.u32 %v5582, 2147483648
    %v5643 = vxor.u32 %v5587, 2147483648
    %v5644 = vxor.u32 %v5590, 2147483648
    %v5645 = vxor.u32 %v5595, 2147483648
    %v5646 = vxor.u32 %v5598, 2147483648
    %v5647 = vxor.u32 %v5603, 2147483648
    %v5648 = vxor.u32 %v5606, 2147483648
    %v5649 = vxor.u32 %v5611, 2147483648
    %v5650 = vxor.u32 %v5614, 2147483648
    %v5651 = vxor.u32 %v5619, 2147483648
    %v5652 = vxor.u32 %v5622, 2147483648
    %v5653 = vxor.u32 %v5627, 2147483648
    %v5654 = vxor.u32 %v5630, 2147483648
    %v5655 = vxor.u32 %v5635, 2147483648
    %v5656 = vxor.u32 %v5638, 2147483648
    %v5657 = vmul.f32 %v5641, 1.442695
    %v5658 = vpow.pop %v5657
    %v5659 = vmul.f32 %v5642, 1.442695
    %v5660 = vpow.pop %v5659
    %v5661 = vmul.f32 %v5643, 1.442695
    %v5662 = vpow.pop %v5661
    %v5663 = vmul.f32 %v5644, 1.442695
    %v5664 = vpow.pop %v5663
    %v5665 = vmul.f32 %v5645, 1.442695
    %v5666 = vpow.pop %v5665
    %v5667 = vmul.f32 %v5646, 1.442695
    %v5668 = vpow.pop %v5667
    %v5669 = vmul.f32 %v5647, 1.442695
    %v5670 = vpow.pop %v5669
    %v5671 = vmul.f32 %v5648, 1.442695
    %v5672 = vpow.pop %v5671
    %v5673 = vmul.f32 %v5649, 1.442695
    %v5674 = vpow.pop %v5673
    %v5675 = vmul.f32 %v5650, 1.442695
    %v5676 = vpow.pop %v5675
    %v5677 = vmul.f32 %v5651, 1.442695
    %v5678 = vpow.pop %v5677
    %v5679 = vmul.f32 %v5652, 1.442695
    %v5680 = vpow.pop %v5679
    %v5681 = vmul.f32 %v5653, 1.442695
    %v5682 = vpow.pop %v5681
    %v5683 = vmul.f32 %v5654, 1.442695
    %v5684 = vpow.pop %v5683
    %v5685 = vmul.f32 %v5655, 1.442695
    %v5686 = vpow.pop %v5685
    %v5687 = vmul.f32 %v5656, 1.442695
    %v5688 = vpow.pop %v5687
    %v5689 = vadd.f32 %v5658, 1.0
    %v5690 = vadd.f32 %v5660, 1.0
    %v5691 = vadd.f32 %v5662, 1.0
    %v5692 = vadd.f32 %v5664, 1.0
    %v5693 = vadd.f32 %v5666, 1.0
    %v5694 = vadd.f32 %v5668, 1.0
    %v5695 = vadd.f32 %v5670, 1.0
    %v5696 = vadd.f32 %v5672, 1.0
    %v5697 = vadd.f32 %v5674, 1.0
    %v5698 = vadd.f32 %v5676, 1.0
    %v5699 = vadd.f32 %v5678, 1.0
    %v5700 = vadd.f32 %v5680, 1.0
    %v5701 = vadd.f32 %v5682, 1.0
    %v5702 = vadd.f32 %v5684, 1.0
    %v5703 = vadd.f32 %v5686, 1.0
    %v5704 = vadd.f32 %v5688, 1.0
    %v5705 = vrcp.pop %v5689
    %v5706 = vmul.f32 1.0, %v5705
    %v5707 = vrcp.pop %v5690
    %v5708 = vmul.f32 1.0, %v5707
    %v5709 = vrcp.pop %v5691
    %v5710 = vmul.f32 1.0, %v5709
    %v5711 = vrcp.pop %v5692
    %v5712 = vmul.f32 1.0, %v5711
    %v5713 = vrcp.pop %v5693
    %v5714 = vmul.f32 1.0, %v5713
    %v5715 = vrcp.pop %v5694
    %v5716 = vmul.f32 1.0, %v5715
    %v5717 = vrcp.pop %v5695
    %v5718 = vmul.f32 1.0, %v5717
    %v5719 = vrcp.pop %v5696
    %v5720 = vmul.f32 1.0, %v5719
    %v5721 = vrcp.pop %v5697
    %v5722 = vmul.f32 1.0, %v5721
    %v5723 = vrcp.pop %v5698
    %v5724 = vmul.f32 1.0, %v5723
    %v5725 = vrcp.pop %v5699
    %v5726 = vmul.f32 1.0, %v5725
    %v5727 = vrcp.pop %v5700
    %v5728 = vmul.f32 1.0, %v5727
    %v5729 = vrcp.pop %v5701
    %v5730 = vmul.f32 1.0, %v5729
    %v5731 = vrcp.pop %v5702
    %v5732 = vmul.f32 1.0, %v5731
    %v5733 = vrcp.pop %v5703
    %v5734 = vmul.f32 1.0, %v5733
    %v5735 = vrcp.pop %v5704
    %v5736 = vmul.f32 1.0, %v5735
    %v5737 = vmul.f32 %v5206, %v5706
    %v5738 = vmul.f32 %v5209, %v5708
    %v5739 = vmul.f32 %v5214, %v5710
    %v5740 = vmul.f32 %v5217, %v5712
    %v5741 = vmul.f32 %v5222, %v5714
    %v5742 = vmul.f32 %v5225, %v5716
    %v5743 = vmul.f32 %v5230, %v5718
    %v5744 = vmul.f32 %v5233, %v5720
    %v5745 = vmul.f32 %v5238, %v5722
    %v5746 = vmul.f32 %v5241, %v5724
    %v5747 = vmul.f32 %v5246, %v5726
    %v5748 = vmul.f32 %v5249, %v5728
    %v5749 = vmul.f32 %v5254, %v5730
    %v5750 = vmul.f32 %v5257, %v5732
    %v5751 = vmul.f32 %v5262, %v5734
    %v5752 = vmul.f32 %v5265, %v5736
    %v5753 = vmul.f32 %v5270, %v5706
    %v5754 = vmul.f32 %v5273, %v5708
    %v5755 = vmul.f32 %v5278, %v5710
    %v5756 = vmul.f32 %v5281, %v5712
    %v5757 = vmul.f32 %v5286, %v5714
    %v5758 = vmul.f32 %v5289, %v5716
    %v5759 = vmul.f32 %v5294, %v5718
    %v5760 = vmul.f32 %v5297, %v5720
    %v5761 = vmul.f32 %v5302, %v5722
    %v5762 = vmul.f32 %v5305, %v5724
    %v5763 = vmul.f32 %v5310, %v5726
    %v5764 = vmul.f32 %v5313, %v5728
    %v5765 = vmul.f32 %v5318, %v5730
    %v5766 = vmul.f32 %v5321, %v5732
    %v5767 = vmul.f32 %v5326, %v5734
    %v5768 = vmul.f32 %v5329, %v5736
    %v5769 = vld [vmem:[%s4] sm:$0xff]
    %v5770 = vld [vmem:[%s4 + $0x8] sm:$0xff]
    %v5771 = vld [vmem:[%s4 + $0x10] sm:$0xff]
    %v5772 = vld [vmem:[%s4 + $0x18] sm:$0xff]
    %v5773 = vld [vmem:[%s4 + $0x20] sm:$0xff]
    %v5774 = vld [vmem:[%s4 + $0x28] sm:$0xff]
    %v5775 = vld [vmem:[%s4 + $0x30] sm:$0xff]
    %v5776 = vld [vmem:[%s4 + $0x38] sm:$0xff]
    %v5777 = vld [vmem:[%s4 + $0x40] sm:$0xff]
    %v5778 = vld [vmem:[%s4 + $0x48] sm:$0xff]
    %v5779 = vld [vmem:[%s4 + $0x50] sm:$0xff]
    %v5780 = vld [vmem:[%s4 + $0x58] sm:$0xff]
    %v5781 = vld [vmem:[%s4 + $0x60] sm:$0xff]
    %v5782 = vld [vmem:[%s4 + $0x68] sm:$0xff]
    %v5783 = vld [vmem:[%s4 + $0x70] sm:$0xff]
    %v5784 = vld [vmem:[%s4 + $0x78] sm:$0xff]
    %v5785 = vld [vmem:[%s4 + $0x80] sm:$0xff]
    %v5786 = vld [vmem:[%s4 + $0x88] sm:$0xff]
    %v5787 = vld [vmem:[%s4 + $0x90] sm:$0xff]
    %v5788 = vld [vmem:[%s4 + $0x98] sm:$0xff]
    %v5789 = vld [vmem:[%s4 + $0xa0] sm:$0xff]
    %v5790 = vld [vmem:[%s4 + $0xa8] sm:$0xff]
    %v5791 = vld [vmem:[%s4 + $0xb0] sm:$0xff]
    %v5792 = vld [vmem:[%s4 + $0xb8] sm:$0xff]
    %v5793 = vld [vmem:[%s4 + $0xc0] sm:$0xff]
    %v5794 = vld [vmem:[%s4 + $0xc8] sm:$0xff]
    %v5795 = vld [vmem:[%s4 + $0xd0] sm:$0xff]
    %v5796 = vld [vmem:[%s4 + $0xd8] sm:$0xff]
    %v5797 = vld [vmem:[%s4 + $0xe0] sm:$0xff]
    %v5798 = vld [vmem:[%s4 + $0xe8] sm:$0xff]
    %v5799 = vld [vmem:[%s4 + $0xf0] sm:$0xff]
    %v5800 = vld [vmem:[%s4 + $0xf8] sm:$0xff]
    %v5801 = vpack.c.bf16 %v5738, %v5737
    %v5802 = vpack.c.bf16 %v5740, %v5739
    %v5803 = vpack.c.bf16 %v5742, %v5741
    %v5804 = vpack.c.bf16 %v5744, %v5743
    %v5805 = vpack.c.bf16 %v5746, %v5745
    %v5806 = vpack.c.bf16 %v5748, %v5747
    %v5807 = vpack.c.bf16 %v5750, %v5749
    %v5808 = vpack.c.bf16 %v5752, %v5751
    %v5809 = vpack.c.bf16 %v5754, %v5753
    %v5810 = vpack.c.bf16 %v5756, %v5755
    %v5811 = vpack.c.bf16 %v5758, %v5757
    %v5812 = vpack.c.bf16 %v5760, %v5759
    %v5813 = vpack.c.bf16 %v5762, %v5761
    %v5814 = vpack.c.bf16 %v5764, %v5763
    %v5815 = vpack.c.bf16 %v5766, %v5765
    %v5816 = vpack.c.bf16 %v5768, %v5767
    %v5849 = vunpack.c.l.b16 %v5769
    %v5850 = vunpack.c.h.b16 %v5769
    %v5851 = vunpack.c.l.b16 %v5770
    %v5852 = vunpack.c.h.b16 %v5770
    %v5853 = vunpack.c.l.b16 %v5771
    %v5854 = vunpack.c.h.b16 %v5771
    %v5855 = vunpack.c.l.b16 %v5772
    %v5856 = vunpack.c.h.b16 %v5772
    %v5857 = vunpack.c.l.b16 %v5773
    %v5858 = vunpack.c.h.b16 %v5773
    %v5859 = vunpack.c.l.b16 %v5774
    %v5860 = vunpack.c.h.b16 %v5774
    %v5861 = vunpack.c.l.b16 %v5775
    %v5862 = vunpack.c.h.b16 %v5775
    %v5863 = vunpack.c.l.b16 %v5776
    %v5864 = vunpack.c.h.b16 %v5776
    %v5865 = vunpack.c.l.b16 %v5777
    %v5866 = vunpack.c.h.b16 %v5777
    %v5867 = vunpack.c.l.b16 %v5778
    %v5868 = vunpack.c.h.b16 %v5778
    %v5869 = vunpack.c.l.b16 %v5779
    %v5870 = vunpack.c.h.b16 %v5779
    %v5871 = vunpack.c.l.b16 %v5780
    %v5872 = vunpack.c.h.b16 %v5780
    %v5873 = vunpack.c.l.b16 %v5781
    %v5874 = vunpack.c.h.b16 %v5781
    %v5875 = vunpack.c.l.b16 %v5782
    %v5876 = vunpack.c.h.b16 %v5782
    %v5877 = vunpack.c.l.b16 %v5783
    %v5878 = vunpack.c.h.b16 %v5783
    %v5879 = vunpack.c.l.b16 %v5784
    %v5880 = vunpack.c.h.b16 %v5784
    %v5881 = vunpack.c.l.b16 %v5785
    %v5882 = vunpack.c.h.b16 %v5785
    %v5883 = vunpack.c.l.b16 %v5786
    %v5884 = vunpack.c.h.b16 %v5786
    %v5885 = vunpack.c.l.b16 %v5787
    %v5886 = vunpack.c.h.b16 %v5787
    %v5887 = vunpack.c.l.b16 %v5788
    %v5888 = vunpack.c.h.b16 %v5788
    %v5889 = vunpack.c.l.b16 %v5789
    %v5890 = vunpack.c.h.b16 %v5789
    %v5891 = vunpack.c.l.b16 %v5790
    %v5892 = vunpack.c.h.b16 %v5790
    %v5893 = vunpack.c.l.b16 %v5791
    %v5894 = vunpack.c.h.b16 %v5791
    %v5895 = vunpack.c.l.b16 %v5792
    %v5896 = vunpack.c.h.b16 %v5792
    %v5897 = vunpack.c.l.b16 %v5793
    %v5898 = vunpack.c.h.b16 %v5793
    %v5899 = vunpack.c.l.b16 %v5794
    %v5900 = vunpack.c.h.b16 %v5794
    %v5901 = vunpack.c.l.b16 %v5795
    %v5902 = vunpack.c.h.b16 %v5795
    %v5903 = vunpack.c.l.b16 %v5796
    %v5904 = vunpack.c.h.b16 %v5796
    %v5905 = vunpack.c.l.b16 %v5797
    %v5906 = vunpack.c.h.b16 %v5797
    %v5907 = vunpack.c.l.b16 %v5798
    %v5908 = vunpack.c.h.b16 %v5798
    %v5909 = vunpack.c.l.b16 %v5799
    %v5910 = vunpack.c.h.b16 %v5799
    %v5911 = vunpack.c.l.b16 %v5800
    %v5912 = vunpack.c.h.b16 %v5800
    %v5913 = vpack.c.b16 %v5851, %v5849
    %v5914 = vpack.c.b16 %v5852, %v5850
    %v5915 = vpack.c.b16 %v5855, %v5853
    %v5916 = vpack.c.b16 %v5856, %v5854
    %v5917 = vpack.c.b16 %v5859, %v5857
    %v5918 = vpack.c.b16 %v5860, %v5858
    %v5919 = vpack.c.b16 %v5863, %v5861
    %v5920 = vpack.c.b16 %v5864, %v5862
    %v5921 = vpack.c.b16 %v5867, %v5865
    %v5922 = vpack.c.b16 %v5868, %v5866
    %v5923 = vpack.c.b16 %v5871, %v5869
    %v5924 = vpack.c.b16 %v5872, %v5870
    %v5925 = vpack.c.b16 %v5875, %v5873
    %v5926 = vpack.c.b16 %v5876, %v5874
    %v5927 = vpack.c.b16 %v5879, %v5877
    %v5928 = vpack.c.b16 %v5880, %v5878
    %v5929 = vpack.c.b16 %v5883, %v5881
    %v5930 = vpack.c.b16 %v5884, %v5882
    %v5931 = vpack.c.b16 %v5887, %v5885
    %v5932 = vpack.c.b16 %v5888, %v5886
    %v5933 = vpack.c.b16 %v5891, %v5889
    %v5934 = vpack.c.b16 %v5892, %v5890
    %v5935 = vpack.c.b16 %v5895, %v5893
    %v5936 = vpack.c.b16 %v5896, %v5894
    %v5937 = vpack.c.b16 %v5899, %v5897
    %v5938 = vpack.c.b16 %v5900, %v5898
    %v5939 = vpack.c.b16 %v5903, %v5901
    %v5940 = vpack.c.b16 %v5904, %v5902
    %v5941 = vpack.c.b16 %v5907, %v5905
    %v5942 = vpack.c.b16 %v5908, %v5906
    %v5943 = vpack.c.b16 %v5911, %v5909
    %v5944 = vpack.c.b16 %v5912, %v5910
    %5977 = vmatprep.subr.bf16.mxu0 0
    %5978 = vmatpush1.bf16.msra.mxu0 %v5801
    %5979 = vmatprep.subr.bf16.mxu0 0
    %5980 = vmatpush1.bf16.msra.mxu0 %v5802
    %5981 = vmatprep.subr.bf16.mxu0 0
    %5982 = vmatpush1.bf16.msra.mxu0 %v5803
    %5983 = vmatprep.subr.bf16.mxu0 0
    %5984 = vmatpush1.bf16.msra.mxu0 %v5804
    %5985 = vmatprep.subr.bf16.mxu0 0
    %5986 = vmatpush1.bf16.msra.mxu0 %v5805
    %5987 = vmatprep.subr.bf16.mxu0 0
    %5988 = vmatpush1.bf16.msra.mxu0 %v5806
    %5989 = vmatprep.subr.bf16.mxu0 0
    %5990 = vmatpush1.bf16.msra.mxu0 %v5807
    %5991 = vmatprep.subr.bf16.mxu0 0
    %5992 = vmatpush1.bf16.msra.mxu0 %v5808
    %5993 = vmatprep.subr.bf16.mxu0 0
    %5994 = vmatpush1.bf16.msra.mxu0 %v5809
    %5995 = vmatprep.subr.bf16.mxu0 0
    %5996 = vmatpush1.bf16.msra.mxu0 %v5810
    %5997 = vmatprep.subr.bf16.mxu0 0
    %5998 = vmatpush1.bf16.msra.mxu0 %v5811
    %5999 = vmatprep.subr.bf16.mxu0 0
    %6000 = vmatpush1.bf16.msra.mxu0 %v5812
    %6001 = vmatprep.subr.bf16.mxu0 0
    %6002 = vmatpush1.bf16.msra.mxu0 %v5813
    %6003 = vmatprep.subr.bf16.mxu0 0
    %6004 = vmatpush1.bf16.msra.mxu0 %v5814
    %6005 = vmatprep.subr.bf16.mxu0 0
    %6006 = vmatpush1.bf16.msra.mxu0 %v5815
    %6007 = vmatprep.subr.bf16.mxu0 0
    %6008 = vmatpush1.bf16.msra.mxu0 %v5816
    %6009 = vmatprep.mubr.bf16.mxu0 %v5914
    %6010 = vmatmul.mubr.bf16.gmra.mrb[0].mxu0 %v5913
    %v6011 = vpop.f32.mrb[0].mxu0
    %v6012 = vadd.f32 0.0, %v6011
    %v6013 = vpop.f32.mrb[0].mxu0
    %v6014 = vpop.f32.mrb[0].mxu0
    %v6015 = vadd.f32 0.0, %v6014
    %v6016 = vpop.f32.mrb[0].mxu0
    %6017 = vmatprep.mubr.bf16.mxu0 %v5916
    %6018 = vmatmul.mubr.bf16.gmra.mrb[0].mxu0 %v5915
    %v6019 = vpop.f32.mrb[0].mxu0
    %v6020 = vadd.f32 0.0, %v6019
    %v6021 = vpop.f32.mrb[0].mxu0
    %v6022 = vpop.f32.mrb[0].mxu0
    %v6023 = vadd.f32 0.0, %v6022
    %v6024 = vpop.f32.mrb[0].mxu0
    %6025 = vmatprep.mubr.bf16.mxu0 %v5918
    %6026 = vmatmul.mubr.bf16.gmra.mrb[0].mxu0 %v5917
    %v6027 = vpop.f32.mrb[0].mxu0
    %v6028 = vadd.f32 0.0, %v6027
    %v6029 = vpop.f32.mrb[0].mxu0
    %v6030 = vpop.f32.mrb[0].mxu0
    %v6031 = vadd.f32 0.0, %v6030
    %v6032 = vpop.f32.mrb[0].mxu0
    %6033 = vmatprep.mubr.bf16.mxu0 %v5920
    %6034 = vmatmul.mubr.bf16.gmra.mrb[0].mxu0 %v5919
    %v6035 = vpop.f32.mrb[0].mxu0
    %v6036 = vadd.f32 0.0, %v6035
    %v6037 = vpop.f32.mrb[0].mxu0
    %v6038 = vpop.f32.mrb[0].mxu0
    %v6039 = vadd.f32 0.0, %v6038
    %v6040 = vpop.f32.mrb[0].mxu0
    %6041 = vmatprep.mubr.bf16.mxu0 %v5922
    %6042 = vmatmul.mubr.bf16.gmra.mrb[0].mxu0 %v5921
    %v6043 = vpop.f32.mrb[0].mxu0
    %v6044 = vadd.f32 0.0, %v6043
    %v6045 = vpop.f32.mrb[0].mxu0
    %v6046 = vpop.f32.mrb[0].mxu0
    %v6047 = vadd.f32 0.0, %v6046
    %v6048 = vpop.f32.mrb[0].mxu0
    %6049 = vmatprep.mubr.bf16.mxu0 %v5924
    %6050 = vmatmul.mubr.bf16.gmra.mrb[0].mxu0 %v5923
    %v6051 = vpop.f32.mrb[0].mxu0
    %v6052 = vadd.f32 0.0, %v6051
    %v6053 = vpop.f32.mrb[0].mxu0
    %v6054 = vpop.f32.mrb[0].mxu0
    %v6055 = vadd.f32 0.0, %v6054
    %v6056 = vpop.f32.mrb[0].mxu0
    %6057 = vmatprep.mubr.bf16.mxu0 %v5926
    %6058 = vmatmul.mubr.bf16.gmra.mrb[0].mxu0 %v5925
    %v6059 = vpop.f32.mrb[0].mxu0
    %v6060 = vadd.f32 0.0, %v6059
    %v6061 = vpop.f32.mrb[0].mxu0
    %v6062 = vpop.f32.mrb[0].mxu0
    %v6063 = vadd.f32 0.0, %v6062
    %v6064 = vpop.f32.mrb[0].mxu0
    %6065 = vmatprep.mubr.bf16.mxu0 %v5928
    %6066 = vmatmul.mubr.bf16.gmra.mrb[0].mxu0 %v5927
    %v6067 = vpop.f32.mrb[0].mxu0
    %v6068 = vadd.f32 0.0, %v6067
    %v6069 = vpop.f32.mrb[0].mxu0
    %v6070 = vpop.f32.mrb[0].mxu0
    %v6071 = vadd.f32 0.0, %v6070
    %v6072 = vpop.f32.mrb[0].mxu0
    %6073 = vmatprep.mubr.bf16.mxu0 %v5930
    %6074 = vmatmul.mubr.bf16.gmra.mrb[0].mxu0 %v5929
    %v6075 = vpop.f32.mrb[0].mxu0
    %v6076 = vadd.f32 0.0, %v6075
    %v6077 = vpop.f32.mrb[0].mxu0
    %v6078 = vpop.f32.mrb[0].mxu0
    %v6079 = vadd.f32 0.0, %v6078
    %v6080 = vpop.f32.mrb[0].mxu0
    %6081 = vmatprep.mubr.bf16.mxu0 %v5932
    %6082 = vmatmul.mubr.bf16.gmra.mrb[0].mxu0 %v5931
    %v6083 = vpop.f32.mrb[0].mxu0
    %v6084 = vadd.f32 0.0, %v6083
    %v6085 = vpop.f32.mrb[0].mxu0
    %v6086 = vpop.f32.mrb[0].mxu0
    %v6087 = vadd.f32 0.0, %v6086
    %v6088 = vpop.f32.mrb[0].mxu0
    %6089 = vmatprep.mubr.bf16.mxu0 %v5934
    %6090 = vmatmul.mubr.bf16.gmra.mrb[0].mxu0 %v5933
    %v6091 = vpop.f32.mrb[0].mxu0
    %v6092 = vadd.f32 0.0, %v6091
    %v6093 = vpop.f32.mrb[0].mxu0
    %v6094 = vpop.f32.mrb[0].mxu0
    %v6095 = vadd.f32 0.0, %v6094
    %v6096 = vpop.f32.mrb[0].mxu0
    %6097 = vmatprep.mubr.bf16.mxu0 %v5936
    %6098 = vmatmul.mubr.bf16.gmra.mrb[0].mxu0 %v5935
    %v6099 = vpop.f32.mrb[0].mxu0
    %v6100 = vadd.f32 0.0, %v6099
    %v6101 = vpop.f32.mrb[0].mxu0
    %v6102 = vpop.f32.mrb[0].mxu0
    %v6103 = vadd.f32 0.0, %v6102
    %v6104 = vpop.f32.mrb[0].mxu0
    %6105 = vmatprep.mubr.bf16.mxu0 %v5938
    %6106 = vmatmul.mubr.bf16.gmra.mrb[0].mxu0 %v5937
    %v6107 = vpop.f32.mrb[0].mxu0
    %v6108 = vadd.f32 0.0, %v6107
    %v6109 = vpop.f32.mrb[0].mxu0
    %v6110 = vpop.f32.mrb[0].mxu0
    %v6111 = vadd.f32 0.0, %v6110
    %v6112 = vpop.f32.mrb[0].mxu0
    %6113 = vmatprep.mubr.bf16.mxu0 %v5940
    %6114 = vmatmul.mubr.bf16.gmra.mrb[0].mxu0 %v5939
    %v6115 = vpop.f32.mrb[0].mxu0
    %v6116 = vadd.f32 0.0, %v6115
    %v6117 = vpop.f32.mrb[0].mxu0
    %v6118 = vpop.f32.mrb[0].mxu0
    %v6119 = vadd.f32 0.0, %v6118
    %v6120 = vpop.f32.mrb[0].mxu0
    %6121 = vmatprep.mubr.bf16.mxu0 %v5942
    %6122 = vmatmul.mubr.bf16.gmra.mrb[0].mxu0 %v5941
    %v6123 = vpop.f32.mrb[0].mxu0
    %v6124 = vadd.f32 0.0, %v6123
    %v6125 = vpop.f32.mrb[0].mxu0
    %v6126 = vpop.f32.mrb[0].mxu0
    %v6127 = vadd.f32 0.0, %v6126
    %v6128 = vpop.f32.mrb[0].mxu0
    %6129 = vmatprep.mubr.bf16.mxu0 %v5944
    %6130 = vmatmul.mubr.bf16.gmra.mrb[0].mxu0 %v5943
    %v6131 = vpop.f32.mrb[0].mxu0
    %v6132 = vadd.f32 0.0, %v6131
    %v6133 = vpop.f32.mrb[0].mxu0
    %v6134 = vpop.f32.mrb[0].mxu0
    %v6135 = vadd.f32 0.0, %v6134
    %v6136 = vpop.f32.mrb[0].mxu0
    %6137 = vdwg.mxu0
    %v6138 = vmul.f32 %v6012, %v6012
    %v6139 = vmul.f32 %v6015, %v6015
    %v6140 = vmul.f32 %v6020, %v6020
    %v6141 = vmul.f32 %v6023, %v6023
    %v6142 = vmul.f32 %v6028, %v6028
    %v6143 = vmul.f32 %v6031, %v6031
    %v6144 = vmul.f32 %v6036, %v6036
    %v6145 = vmul.f32 %v6039, %v6039
    %v6146 = vmul.f32 %v6044, %v6044
    %v6147 = vmul.f32 %v6047, %v6047
    %v6148 = vmul.f32 %v6052, %v6052
    %v6149 = vmul.f32 %v6055, %v6055
    %v6150 = vmul.f32 %v6060, %v6060
    %v6151 = vmul.f32 %v6063, %v6063
    %v6152 = vmul.f32 %v6068, %v6068
    %v6153 = vmul.f32 %v6071, %v6071
    %v6154 = vmul.f32 %v6076, %v6076
    %v6155 = vmul.f32 %v6079, %v6079
    %v6156 = vmul.f32 %v6084, %v6084
    %v6157 = vmul.f32 %v6087, %v6087
    %v6158 = vmul.f32 %v6092, %v6092
    %v6159 = vmul.f32 %v6095, %v6095
    %v6160 = vmul.f32 %v6100, %v6100
    %v6161 = vmul.f32 %v6103, %v6103
    %v6162 = vmul.f32 %v6108, %v6108
    %v6163 = vmul.f32 %v6111, %v6111
    %v6164 = vmul.f32 %v6116, %v6116
    %v6165 = vmul.f32 %v6119, %v6119
    %v6166 = vmul.f32 %v6124, %v6124
    %v6167 = vmul.f32 %v6127, %v6127
    %v6168 = vmul.f32 %v6132, %v6132
    %v6169 = vmul.f32 %v6135, %v6135
    %v6170 = vadd.f32 %v6138, %v6154
    %v6171 = vadd.f32 %v6139, %v6155
    %v6172 = vadd.f32 %v6140, %v6156
    %v6173 = vadd.f32 %v6141, %v6157
    %v6174 = vadd.f32 %v6142, %v6158
    %v6175 = vadd.f32 %v6143, %v6159
    %v6176 = vadd.f32 %v6144, %v6160
    %v6177 = vadd.f32 %v6145, %v6161
    %v6178 = vadd.f32 %v6146, %v6162
    %v6179 = vadd.f32 %v6147, %v6163
    %v6180 = vadd.f32 %v6148, %v6164
    %v6181 = vadd.f32 %v6149, %v6165
    %v6182 = vadd.f32 %v6150, %v6166
    %v6183 = vadd.f32 %v6151, %v6167
    %v6184 = vadd.f32 %v6152, %v6168
    %v6185 = vadd.f32 %v6153, %v6169
    %v6186 = vrsqrt.pop %v6170
    %v6187 = vmul.f32 %v6170, %v6186
    %vm6188 = vcmp.eq.f32.partialorder %v6170, inf
    %v6189 = vsel %vm6188, %v6170, %v6187
    %vm6190 = vcmp.eq.f32.partialorder %v6170, 0.0
    %v6191 = vand.u32 %v6170, 2147483648
    %v6192 = vsel %vm6190, %v6191, %v6189
    %v6193 = vrsqrt.pop %v6171
    %v6194 = vmul.f32 %v6171, %v6193
    %vm6195 = vcmp.eq.f32.partialorder %v6171, inf
    %v6196 = vsel %vm6195, %v6171, %v6194
    %vm6197 = vcmp.eq.f32.partialorder %v6171, 0.0
    %v6198 = vand.u32 %v6171, 2147483648
    %v6199 = vsel %vm6197, %v6198, %v6196
    %v6200 = vrsqrt.pop %v6172
    %v6201 = vmul.f32 %v6172, %v6200
    %vm6202 = vcmp.eq.f32.partialorder %v6172, inf
    %v6203 = vsel %vm6202, %v6172, %v6201
    %vm6204 = vcmp.eq.f32.partialorder %v6172, 0.0
    %v6205 = vand.u32 %v6172, 2147483648
    %v6206 = vsel %vm6204, %v6205, %v6203
    %v6207 = vrsqrt.pop %v6173
    %v6208 = vmul.f32 %v6173, %v6207
    %vm6209 = vcmp.eq.f32.partialorder %v6173, inf
    %v6210 = vsel %vm6209, %v6173, %v6208
    %vm6211 = vcmp.eq.f32.partialorder %v6173, 0.0
    %v6212 = vand.u32 %v6173, 2147483648
    %v6213 = vsel %vm6211, %v6212, %v6210
    %v6214 = vrsqrt.pop %v6174
    %v6215 = vmul.f32 %v6174, %v6214
    %vm6216 = vcmp.eq.f32.partialorder %v6174, inf
    %v6217 = vsel %vm6216, %v6174, %v6215
    %vm6218 = vcmp.eq.f32.partialorder %v6174, 0.0
    %v6219 = vand.u32 %v6174, 2147483648
    %v6220 = vsel %vm6218, %v6219, %v6217
    %v6221 = vrsqrt.pop %v6175
    %v6222 = vmul.f32 %v6175, %v6221
    %vm6223 = vcmp.eq.f32.partialorder %v6175, inf
    %v6224 = vsel %vm6223, %v6175, %v6222
    %vm6225 = vcmp.eq.f32.partialorder %v6175, 0.0
    %v6226 = vand.u32 %v6175, 2147483648
    %v6227 = vsel %vm6225, %v6226, %v6224
    %v6228 = vrsqrt.pop %v6176
    %v6229 = vmul.f32 %v6176, %v6228
    %vm6230 = vcmp.eq.f32.partialorder %v6176, inf
    %v6231 = vsel %vm6230, %v6176, %v6229
    %vm6232 = vcmp.eq.f32.partialorder %v6176, 0.0
    %v6233 = vand.u32 %v6176, 2147483648
    %v6234 = vsel %vm6232, %v6233, %v6231
    %v6235 = vrsqrt.pop %v6177
    %v6236 = vmul.f32 %v6177, %v6235
    %vm6237 = vcmp.eq.f32.partialorder %v6177, inf
    %v6238 = vsel %vm6237, %v6177, %v6236
    %vm6239 = vcmp.eq.f32.partialorder %v6177, 0.0
    %v6240 = vand.u32 %v6177, 2147483648
    %v6241 = vsel %vm6239, %v6240, %v6238
    %v6242 = vrsqrt.pop %v6178
    %v6243 = vmul.f32 %v6178, %v6242
    %vm6244 = vcmp.eq.f32.partialorder %v6178, inf
    %v6245 = vsel %vm6244, %v6178, %v6243
    %vm6246 = vcmp.eq.f32.partialorder %v6178, 0.0
    %v6247 = vand.u32 %v6178, 2147483648
    %v6248 = vsel %vm6246, %v6247, %v6245
    %v6249 = vrsqrt.pop %v6179
    %v6250 = vmul.f32 %v6179, %v6249
    %vm6251 = vcmp.eq.f32.partialorder %v6179, inf
    %v6252 = vsel %vm6251, %v6179, %v6250
    %vm6253 = vcmp.eq.f32.partialorder %v6179, 0.0
    %v6254 = vand.u32 %v6179, 2147483648
    %v6255 = vsel %vm6253, %v6254, %v6252
    %v6256 = vrsqrt.pop %v6180
    %v6257 = vmul.f32 %v6180, %v6256
    %vm6258 = vcmp.eq.f32.partialorder %v6180, inf
    %v6259 = vsel %vm6258, %v6180, %v6257
    %vm6260 = vcmp.eq.f32.partialorder %v6180, 0.0
    %v6261 = vand.u32 %v6180, 2147483648
    %v6262 = vsel %vm6260, %v6261, %v6259
    %v6263 = vrsqrt.pop %v6181
    %v6264 = vmul.f32 %v6181, %v6263
    %vm6265 = vcmp.eq.f32.partialorder %v6181, inf
    %v6266 = vsel %vm6265, %v6181, %v6264
    %vm6267 = vcmp.eq.f32.partialorder %v6181, 0.0
    %v6268 = vand.u32 %v6181, 2147483648
    %v6269 = vsel %vm6267, %v6268, %v6266
    %v6270 = vrsqrt.pop %v6182
    %v6271 = vmul.f32 %v6182, %v6270
    %vm6272 = vcmp.eq.f32.partialorder %v6182, inf
    %v6273 = vsel %vm6272, %v6182, %v6271
    %vm6274 = vcmp.eq.f32.partialorder %v6182, 0.0
    %v6275 = vand.u32 %v6182, 2147483648
    %v6276 = vsel %vm6274, %v6275, %v6273
    %v6277 = vrsqrt.pop %v6183
    %v6278 = vmul.f32 %v6183, %v6277
    %vm6279 = vcmp.eq.f32.partialorder %v6183, inf
    %v6280 = vsel %vm6279, %v6183, %v6278
    %vm6281 = vcmp.eq.f32.partialorder %v6183, 0.0
    %v6282 = vand.u32 %v6183, 2147483648
    %v6283 = vsel %vm6281, %v6282, %v6280
    %v6284 = vrsqrt.pop %v6184
    %v6285 = vmul.f32 %v6184, %v6284
    %vm6286 = vcmp.eq.f32.partialorder %v6184, inf
    %v6287 = vsel %vm6286, %v6184, %v6285
    %vm6288 = vcmp.eq.f32.partialorder %v6184, 0.0
    %v6289 = vand.u32 %v6184, 2147483648
    %v6290 = vsel %vm6288, %v6289, %v6287
    %v6291 = vrsqrt.pop %v6185
    %v6292 = vmul.f32 %v6185, %v6291
    %vm6293 = vcmp.eq.f32.partialorder %v6185, inf
    %v6294 = vsel %vm6293, %v6185, %v6292
    %vm6295 = vcmp.eq.f32.partialorder %v6185, 0.0
    %v6296 = vand.u32 %v6185, 2147483648
    %v6297 = vsel %vm6295, %v6296, %v6294
    %v6298 = vld [vmem:[%s21] sm:$0x1]
    %v6300 = vlaneseq
    %v6301 = vshrl.u32 %v6300, 7
    %v6302 = vsub.s32 0, %v6301
    %v6303 = vrot.slane %v6298, %v6302
    %v6305 = vmul.f32 %v6192, %v6303
    %v6306 = vmul.f32 %v6199, %v6303
    %v6307 = vmul.f32 %v6206, %v6303
    %v6308 = vmul.f32 %v6213, %v6303
    %v6309 = vmul.f32 %v6220, %v6303
    %v6310 = vmul.f32 %v6227, %v6303
    %v6311 = vmul.f32 %v6234, %v6303
    %v6312 = vmul.f32 %v6241, %v6303
    %v6313 = vmul.f32 %v6248, %v6303
    %v6314 = vmul.f32 %v6255, %v6303
    %v6315 = vmul.f32 %v6262, %v6303
    %v6316 = vmul.f32 %v6269, %v6303
    %v6317 = vmul.f32 %v6276, %v6303
    %v6318 = vmul.f32 %v6283, %v6303
    %v6319 = vmul.f32 %v6290, %v6303
    %v6320 = vmul.f32 %v6297, %v6303
    %v6321 = vld [vmem:[%s22] sm:$0x1]
    %v6323 = vlaneseq
    %v6324 = vshrl.u32 %v6323, 7
    %v6325 = vsub.s32 0, %v6324
    %v6326 = vrot.slane %v6321, %v6325
    %v6328 = vadd.f32 %v6305, %v6326
    %v6329 = vadd.f32 %v6306, %v6326
    %v6330 = vadd.f32 %v6307, %v6326
    %v6331 = vadd.f32 %v6308, %v6326
    %v6332 = vadd.f32 %v6309, %v6326
    %v6333 = vadd.f32 %v6310, %v6326
    %v6334 = vadd.f32 %v6311, %v6326
    %v6335 = vadd.f32 %v6312, %v6326
    %v6336 = vadd.f32 %v6313, %v6326
    %v6337 = vadd.f32 %v6314, %v6326
    %v6338 = vadd.f32 %v6315, %v6326
    %v6339 = vadd.f32 %v6316, %v6326
    %v6340 = vadd.f32 %v6317, %v6326
    %v6341 = vadd.f32 %v6318, %v6326
    %v6342 = vadd.f32 %v6319, %v6326
    %v6343 = vadd.f32 %v6320, %v6326
    %v6344 = vmax.f32 %v6328, 0.0
    %v6345 = vmax.f32 %v6329, 0.0
    %v6346 = vmax.f32 %v6330, 0.0
    %v6347 = vmax.f32 %v6331, 0.0
    %v6348 = vmax.f32 %v6332, 0.0
    %v6349 = vmax.f32 %v6333, 0.0
    %v6350 = vmax.f32 %v6334, 0.0
    %v6351 = vmax.f32 %v6335, 0.0
    %v6352 = vmax.f32 %v6336, 0.0
    %v6353 = vmax.f32 %v6337, 0.0
    %v6354 = vmax.f32 %v6338, 0.0
    %v6355 = vmax.f32 %v6339, 0.0
    %v6356 = vmax.f32 %v6340, 0.0
    %v6357 = vmax.f32 %v6341, 0.0
    %v6358 = vmax.f32 %v6342, 0.0
    %v6359 = vmax.f32 %v6343, 0.0
    %v6360 = vxor.u32 %v5027, 2147483648
    %v6361 = vxor.u32 %v5028, 2147483648
    %v6362 = vxor.u32 %v5029, 2147483648
    %v6363 = vxor.u32 %v5030, 2147483648
    %v6364 = vxor.u32 %v5031, 2147483648
    %v6365 = vxor.u32 %v5032, 2147483648
    %v6366 = vxor.u32 %v5033, 2147483648
    %v6367 = vxor.u32 %v5034, 2147483648
    %v6368 = vxor.u32 %v5035, 2147483648
    %v6369 = vxor.u32 %v5036, 2147483648
    %v6370 = vxor.u32 %v5037, 2147483648
    %v6371 = vxor.u32 %v5038, 2147483648
    %v6372 = vxor.u32 %v5039, 2147483648
    %v6373 = vxor.u32 %v5040, 2147483648
    %v6374 = vxor.u32 %v5041, 2147483648
    %v6375 = vxor.u32 %v5042, 2147483648
    %v6376 = vmul.f32 %v6360, 1.442695
    %v6377 = vpow.pop %v6376
    %v6378 = vmul.f32 %v6361, 1.442695
    %v6379 = vpow.pop %v6378
    %v6380 = vmul.f32 %v6362, 1.442695
    %v6381 = vpow.pop %v6380
    %v6382 = vmul.f32 %v6363, 1.442695
    %v6383 = vpow.pop %v6382
    %v6384 = vmul.f32 %v6364, 1.442695
    %v6385 = vpow.pop %v6384
    %v6386 = vmul.f32 %v6365, 1.442695
    %v6387 = vpow.pop %v6386
    %v6388 = vmul.f32 %v6366, 1.442695
    %v6389 = vpow.pop %v6388
    %v6390 = vmul.f32 %v6367, 1.442695
    %v6391 = vpow.pop %v6390
    %v6392 = vmul.f32 %v6368, 1.442695
    %v6393 = vpow.pop %v6392
    %v6394 = vmul.f32 %v6369, 1.442695
    %v6395 = vpow.pop %v6394
    %v6396 = vmul.f32 %v6370, 1.442695
    %v6397 = vpow.pop %v6396
    %v6398 = vmul.f32 %v6371, 1.442695
    %v6399 = vpow.pop %v6398
    %v6400 = vmul.f32 %v6372, 1.442695
    %v6401 = vpow.pop %v6400
    %v6402 = vmul.f32 %v6373, 1.442695
    %v6403 = vpow.pop %v6402
    %v6404 = vmul.f32 %v6374, 1.442695
    %v6405 = vpow.pop %v6404
    %v6406 = vmul.f32 %v6375, 1.442695
    %v6407 = vpow.pop %v6406
    %v6408 = vadd.f32 %v6377, 1.0
    %v6409 = vadd.f32 %v6379, 1.0
    %v6410 = vadd.f32 %v6381, 1.0
    %v6411 = vadd.f32 %v6383, 1.0
    %v6412 = vadd.f32 %v6385, 1.0
    %v6413 = vadd.f32 %v6387, 1.0
    %v6414 = vadd.f32 %v6389, 1.0
    %v6415 = vadd.f32 %v6391, 1.0
    %v6416 = vadd.f32 %v6393, 1.0
    %v6417 = vadd.f32 %v6395, 1.0
    %v6418 = vadd.f32 %v6397, 1.0
    %v6419 = vadd.f32 %v6399, 1.0
    %v6420 = vadd.f32 %v6401, 1.0
    %v6421 = vadd.f32 %v6403, 1.0
    %v6422 = vadd.f32 %v6405, 1.0
    %v6423 = vadd.f32 %v6407, 1.0
    %v6424 = vrcp.pop %v6408
    %v6425 = vmul.f32 1.0, %v6424
    %v6426 = vrcp.pop %v6409
    %v6427 = vmul.f32 1.0, %v6426
    %v6428 = vrcp.pop %v6410
    %v6429 = vmul.f32 1.0, %v6428
    %v6430 = vrcp.pop %v6411
    %v6431 = vmul.f32 1.0, %v6430
    %v6432 = vrcp.pop %v6412
    %v6433 = vmul.f32 1.0, %v6432
    %v6434 = vrcp.pop %v6413
    %v6435 = vmul.f32 1.0, %v6434
    %v6436 = vrcp.pop %v6414
    %v6437 = vmul.f32 1.0, %v6436
    %v6438 = vrcp.pop %v6415
    %v6439 = vmul.f32 1.0, %v6438
    %v6440 = vrcp.pop %v6416
    %v6441 = vmul.f32 1.0, %v6440
    %v6442 = vrcp.pop %v6417
    %v6443 = vmul.f32 1.0, %v6442
    %v6444 = vrcp.pop %v6418
    %v6445 = vmul.f32 1.0, %v6444
    %v6446 = vrcp.pop %v6419
    %v6447 = vmul.f32 1.0, %v6446
    %v6448 = vrcp.pop %v6420
    %v6449 = vmul.f32 1.0, %v6448
    %v6450 = vrcp.pop %v6421
    %v6451 = vmul.f32 1.0, %v6450
    %v6452 = vrcp.pop %v6422
    %v6453 = vmul.f32 1.0, %v6452
    %v6454 = vrcp.pop %v6423
    %v6455 = vmul.f32 1.0, %v6454
    %v6456 = vxor.u32 %v6344, 2147483648
    %v6457 = vxor.u32 %v6345, 2147483648
    %v6458 = vxor.u32 %v6346, 2147483648
    %v6459 = vxor.u32 %v6347, 2147483648
    %v6460 = vxor.u32 %v6348, 2147483648
    %v6461 = vxor.u32 %v6349, 2147483648
    %v6462 = vxor.u32 %v6350, 2147483648
    %v6463 = vxor.u32 %v6351, 2147483648
    %v6464 = vxor.u32 %v6352, 2147483648
    %v6465 = vxor.u32 %v6353, 2147483648
    %v6466 = vxor.u32 %v6354, 2147483648
    %v6467 = vxor.u32 %v6355, 2147483648
    %v6468 = vxor.u32 %v6356, 2147483648
    %v6469 = vxor.u32 %v6357, 2147483648
    %v6470 = vxor.u32 %v6358, 2147483648
    %v6471 = vxor.u32 %v6359, 2147483648
    %v6472 = vmul.f32 %v6456, 1.442695
    %v6473 = vpow.pop %v6472
    %v6474 = vmul.f32 %v6457, 1.442695
    %v6475 = vpow.pop %v6474
    %v6476 = vmul.f32 %v6458, 1.442695
    %v6477 = vpow.pop %v6476
    %v6478 = vmul.f32 %v6459, 1.442695
    %v6479 = vpow.pop %v6478
    %v6480 = vmul.f32 %v6460, 1.442695
    %v6481 = vpow.pop %v6480
    %v6482 = vmul.f32 %v6461, 1.442695
    %v6483 = vpow.pop %v6482
    %v6484 = vmul.f32 %v6462, 1.442695
    %v6485 = vpow.pop %v6484
    %v6486 = vmul.f32 %v6463, 1.442695
    %v6487 = vpow.pop %v6486
    %v6488 = vmul.f32 %v6464, 1.442695
    %v6489 = vpow.pop %v6488
    %v6490 = vmul.f32 %v6465, 1.442695
    %v6491 = vpow.pop %v6490
    %v6492 = vmul.f32 %v6466, 1.442695
    %v6493 = vpow.pop %v6492
    %v6494 = vmul.f32 %v6467, 1.442695
    %v6495 = vpow.pop %v6494
    %v6496 = vmul.f32 %v6468, 1.442695
    %v6497 = vpow.pop %v6496
    %v6498 = vmul.f32 %v6469, 1.442695
    %v6499 = vpow.pop %v6498
    %v6500 = vmul.f32 %v6470, 1.442695
    %v6501 = vpow.pop %v6500
    %v6502 = vmul.f32 %v6471, 1.442695
    %v6503 = vpow.pop %v6502
    %v6504 = vadd.f32 %v6473, 1.0
    %v6505 = vadd.f32 %v6475, 1.0
    %v6506 = vadd.f32 %v6477, 1.0
    %v6507 = vadd.f32 %v6479, 1.0
    %v6508 = vadd.f32 %v6481, 1.0
    %v6509 = vadd.f32 %v6483, 1.0
    %v6510 = vadd.f32 %v6485, 1.0
    %v6511 = vadd.f32 %v6487, 1.0
    %v6512 = vadd.f32 %v6489, 1.0
    %v6513 = vadd.f32 %v6491, 1.0
    %v6514 = vadd.f32 %v6493, 1.0
    %v6515 = vadd.f32 %v6495, 1.0
    %v6516 = vadd.f32 %v6497, 1.0
    %v6517 = vadd.f32 %v6499, 1.0
    %v6518 = vadd.f32 %v6501, 1.0
    %v6519 = vadd.f32 %v6503, 1.0
    %v6520 = vrcp.pop %v6504
    %v6521 = vmul.f32 1.0, %v6520
    %v6522 = vrcp.pop %v6505
    %v6523 = vmul.f32 1.0, %v6522
    %v6524 = vrcp.pop %v6506
    %v6525 = vmul.f32 1.0, %v6524
    %v6526 = vrcp.pop %v6507
    %v6527 = vmul.f32 1.0, %v6526
    %v6528 = vrcp.pop %v6508
    %v6529 = vmul.f32 1.0, %v6528
    %v6530 = vrcp.pop %v6509
    %v6531 = vmul.f32 1.0, %v6530
    %v6532 = vrcp.pop %v6510
    %v6533 = vmul.f32 1.0, %v6532
    %v6534 = vrcp.pop %v6511
    %v6535 = vmul.f32 1.0, %v6534
    %v6536 = vrcp.pop %v6512
    %v6537 = vmul.f32 1.0, %v6536
    %v6538 = vrcp.pop %v6513
    %v6539 = vmul.f32 1.0, %v6538
    %v6540 = vrcp.pop %v6514
    %v6541 = vmul.f32 1.0, %v6540
    %v6542 = vrcp.pop %v6515
    %v6543 = vmul.f32 1.0, %v6542
    %v6544 = vrcp.pop %v6516
    %v6545 = vmul.f32 1.0, %v6544
    %v6546 = vrcp.pop %v6517
    %v6547 = vmul.f32 1.0, %v6546
    %v6548 = vrcp.pop %v6518
    %v6549 = vmul.f32 1.0, %v6548
    %v6550 = vrcp.pop %v6519
    %v6551 = vmul.f32 1.0, %v6550
    %v6552 = vmul.f32 %v114, %v6425
    %v6553 = vmul.f32 %v115, %v6427
    %v6554 = vmul.f32 %v116, %v6429
    %v6555 = vmul.f32 %v117, %v6431
    %v6556 = vmul.f32 %v118, %v6433
    %v6557 = vmul.f32 %v119, %v6435
    %v6558 = vmul.f32 %v120, %v6437
    %v6559 = vmul.f32 %v121, %v6439
    %v6560 = vmul.f32 %v122, %v6441
    %v6561 = vmul.f32 %v123, %v6443
    %v6562 = vmul.f32 %v124, %v6445
    %v6563 = vmul.f32 %v125, %v6447
    %v6564 = vmul.f32 %v126, %v6449
    %v6565 = vmul.f32 %v127, %v6451
    %v6566 = vmul.f32 %v128, %v6453
    %v6567 = vmul.f32 %v129, %v6455
    %v6568 = vadd.f32 %v114, %v6552
    %v6569 = vadd.f32 %v115, %v6553
    %v6570 = vadd.f32 %v116, %v6554
    %v6571 = vadd.f32 %v117, %v6555
    %v6572 = vadd.f32 %v118, %v6556
    %v6573 = vadd.f32 %v119, %v6557
    %v6574 = vadd.f32 %v120, %v6558
    %v6575 = vadd.f32 %v121, %v6559
    %v6576 = vadd.f32 %v122, %v6560
    %v6577 = vadd.f32 %v123, %v6561
    %v6578 = vadd.f32 %v124, %v6562
    %v6579 = vadd.f32 %v125, %v6563
    %v6580 = vadd.f32 %v126, %v6564
    %v6581 = vadd.f32 %v127, %v6565
    %v6582 = vadd.f32 %v128, %v6566
    %v6583 = vadd.f32 %v129, %v6567
    %v6584 = vsub.f32 1.0, %v6425
    %v6585 = vsub.f32 1.0, %v6427
    %v6586 = vsub.f32 1.0, %v6429
    %v6587 = vsub.f32 1.0, %v6431
    %v6588 = vsub.f32 1.0, %v6433
    %v6589 = vsub.f32 1.0, %v6435
    %v6590 = vsub.f32 1.0, %v6437
    %v6591 = vsub.f32 1.0, %v6439
    %v6592 = vsub.f32 1.0, %v6441
    %v6593 = vsub.f32 1.0, %v6443
    %v6594 = vsub.f32 1.0, %v6445
    %v6595 = vsub.f32 1.0, %v6447
    %v6596 = vsub.f32 1.0, %v6449
    %v6597 = vsub.f32 1.0, %v6451
    %v6598 = vsub.f32 1.0, %v6453
    %v6599 = vsub.f32 1.0, %v6455
    %v6600 = vmul.f32 %v6584, %v6521
    %v6601 = vmul.f32 %v6585, %v6523
    %v6602 = vmul.f32 %v6586, %v6525
    %v6603 = vmul.f32 %v6587, %v6527
    %v6604 = vmul.f32 %v6588, %v6529
    %v6605 = vmul.f32 %v6589, %v6531
    %v6606 = vmul.f32 %v6590, %v6533
    %v6607 = vmul.f32 %v6591, %v6535
    %v6608 = vmul.f32 %v6592, %v6537
    %v6609 = vmul.f32 %v6593, %v6539
    %v6610 = vmul.f32 %v6594, %v6541
    %v6611 = vmul.f32 %v6595, %v6543
    %v6612 = vmul.f32 %v6596, %v6545
    %v6613 = vmul.f32 %v6597, %v6547
    %v6614 = vmul.f32 %v6598, %v6549
    %v6615 = vmul.f32 %v6599, %v6551
    %v6616 = vmul.f32 %v6600, %v6344
    %v6617 = vmul.f32 %v6601, %v6345
    %v6618 = vmul.f32 %v6602, %v6346
    %v6619 = vmul.f32 %v6603, %v6347
    %v6620 = vmul.f32 %v6604, %v6348
    %v6621 = vmul.f32 %v6605, %v6349
    %v6622 = vmul.f32 %v6606, %v6350
    %v6623 = vmul.f32 %v6607, %v6351
    %v6624 = vmul.f32 %v6608, %v6352
    %v6625 = vmul.f32 %v6609, %v6353
    %v6626 = vmul.f32 %v6610, %v6354
    %v6627 = vmul.f32 %v6611, %v6355
    %v6628 = vmul.f32 %v6612, %v6356
    %v6629 = vmul.f32 %v6613, %v6357
    %v6630 = vmul.f32 %v6614, %v6358
    %v6631 = vmul.f32 %v6615, %v6359
    %v6632 = vadd.f32 %v6568, %v6616
    %v6633 = vadd.f32 %v6569, %v6617
    %v6634 = vadd.f32 %v6570, %v6618
    %v6635 = vadd.f32 %v6571, %v6619
    %v6636 = vadd.f32 %v6572, %v6620
    %v6637 = vadd.f32 %v6573, %v6621
    %v6638 = vadd.f32 %v6574, %v6622
    %v6639 = vadd.f32 %v6575, %v6623
    %v6640 = vadd.f32 %v6576, %v6624
    %v6641 = vadd.f32 %v6577, %v6625
    %v6642 = vadd.f32 %v6578, %v6626
    %v6643 = vadd.f32 %v6579, %v6627
    %v6644 = vadd.f32 %v6580, %v6628
    %v6645 = vadd.f32 %v6581, %v6629
    %v6646 = vadd.f32 %v6582, %v6630
    %v6647 = vadd.f32 %v6583, %v6631
    %v6648 = vmul.f32 %v98, %v6521
    %v6649 = vmul.f32 %v99, %v6523
    %v6650 = vmul.f32 %v100, %v6525
    %v6651 = vmul.f32 %v101, %v6527
    %v6652 = vmul.f32 %v102, %v6529
    %v6653 = vmul.f32 %v103, %v6531
    %v6654 = vmul.f32 %v104, %v6533
    %v6655 = vmul.f32 %v105, %v6535
    %v6656 = vmul.f32 %v106, %v6537
    %v6657 = vmul.f32 %v107, %v6539
    %v6658 = vmul.f32 %v108, %v6541
    %v6659 = vmul.f32 %v109, %v6543
    %v6660 = vmul.f32 %v110, %v6545
    %v6661 = vmul.f32 %v111, %v6547
    %v6662 = vmul.f32 %v112, %v6549
    %v6663 = vmul.f32 %v113, %v6551
    %v6664 = vadd.f32 %v98, %v6648
    %v6665 = vadd.f32 %v99, %v6649
    %v6666 = vadd.f32 %v100, %v6650
    %v6667 = vadd.f32 %v101, %v6651
    %v6668 = vadd.f32 %v102, %v6652
    %v6669 = vadd.f32 %v103, %v6653
    %v6670 = vadd.f32 %v104, %v6654
    %v6671 = vadd.f32 %v105, %v6655
    %v6672 = vadd.f32 %v106, %v6656
    %v6673 = vadd.f32 %v107, %v6657
    %v6674 = vadd.f32 %v108, %v6658
    %v6675 = vadd.f32 %v109, %v6659
    %v6676 = vadd.f32 %v110, %v6660
    %v6677 = vadd.f32 %v111, %v6661
    %v6678 = vadd.f32 %v112, %v6662
    %v6679 = vadd.f32 %v113, %v6663
    %v6680 = vsub.f32 1.0, %v6521
    %v6681 = vsub.f32 1.0, %v6523
    %v6682 = vsub.f32 1.0, %v6525
    %v6683 = vsub.f32 1.0, %v6527
    %v6684 = vsub.f32 1.0, %v6529
    %v6685 = vsub.f32 1.0, %v6531
    %v6686 = vsub.f32 1.0, %v6533
    %v6687 = vsub.f32 1.0, %v6535
    %v6688 = vsub.f32 1.0, %v6537
    %v6689 = vsub.f32 1.0, %v6539
    %v6690 = vsub.f32 1.0, %v6541
    %v6691 = vsub.f32 1.0, %v6543
    %v6692 = vsub.f32 1.0, %v6545
    %v6693 = vsub.f32 1.0, %v6547
    %v6694 = vsub.f32 1.0, %v6549
    %v6695 = vsub.f32 1.0, %v6551
    %v6696 = vmul.f32 %v6680, %v6425
    %v6697 = vmul.f32 %v6681, %v6427
    %v6698 = vmul.f32 %v6682, %v6429
    %v6699 = vmul.f32 %v6683, %v6431
    %v6700 = vmul.f32 %v6684, %v6433
    %v6701 = vmul.f32 %v6685, %v6435
    %v6702 = vmul.f32 %v6686, %v6437
    %v6703 = vmul.f32 %v6687, %v6439
    %v6704 = vmul.f32 %v6688, %v6441
    %v6705 = vmul.f32 %v6689, %v6443
    %v6706 = vmul.f32 %v6690, %v6445
    %v6707 = vmul.f32 %v6691, %v6447
    %v6708 = vmul.f32 %v6692, %v6449
    %v6709 = vmul.f32 %v6693, %v6451
    %v6710 = vmul.f32 %v6694, %v6453
    %v6711 = vmul.f32 %v6695, %v6455
    %v6712 = vmul.f32 %v6696, %v6632
    %v6713 = vmul.f32 %v6697, %v6633
    %v6714 = vmul.f32 %v6698, %v6634
    %v6715 = vmul.f32 %v6699, %v6635
    %v6716 = vmul.f32 %v6700, %v6636
    %v6717 = vmul.f32 %v6701, %v6637
    %v6718 = vmul.f32 %v6702, %v6638
    %v6719 = vmul.f32 %v6703, %v6639
    %v6720 = vmul.f32 %v6704, %v6640
    %v6721 = vmul.f32 %v6705, %v6641
    %v6722 = vmul.f32 %v6706, %v6642
    %v6723 = vmul.f32 %v6707, %v6643
    %v6724 = vmul.f32 %v6708, %v6644
    %v6725 = vmul.f32 %v6709, %v6645
    %v6726 = vmul.f32 %v6710, %v6646
    %v6727 = vmul.f32 %v6711, %v6647
    %v6728 = vadd.f32 %v6664, %v6712
    %v6729 = vadd.f32 %v6665, %v6713
    %v6730 = vadd.f32 %v6666, %v6714
    %v6731 = vadd.f32 %v6667, %v6715
    %v6732 = vadd.f32 %v6668, %v6716
    %v6733 = vadd.f32 %v6669, %v6717
    %v6734 = vadd.f32 %v6670, %v6718
    %v6735 = vadd.f32 %v6671, %v6719
    %v6736 = vadd.f32 %v6672, %v6720
    %v6737 = vadd.f32 %v6673, %v6721
    %v6738 = vadd.f32 %v6674, %v6722
    %v6739 = vadd.f32 %v6675, %v6723
    %v6740 = vadd.f32 %v6676, %v6724
    %v6741 = vadd.f32 %v6677, %v6725
    %v6742 = vadd.f32 %v6678, %v6726
    %v6743 = vadd.f32 %v6679, %v6727
    %6760 = vrot.lane.b32.xlu0 %v6632, 32
    %v6761 = vpop.permute.xlu0 %6760
    %6762 = vrot.lane.b32.xlu0 %v6633, 32
    %v6763 = vpop.permute.xlu0 %6762
    %6764 = vrot.lane.b32.xlu0 %v6634, 32
    %v6765 = vpop.permute.xlu0 %6764
    %6766 = vrot.lane.b32.xlu0 %v6635, 32
    %v6767 = vpop.permute.xlu0 %6766
    %6768 = vrot.lane.b32.xlu0 %v6636, 32
    %v6769 = vpop.permute.xlu0 %6768
    %6770 = vrot.lane.b32.xlu0 %v6637, 32
    %v6771 = vpop.permute.xlu0 %6770
    %6772 = vrot.lane.b32.xlu0 %v6638, 32
    %v6773 = vpop.permute.xlu0 %6772
    %6774 = vrot.lane.b32.xlu0 %v6639, 32
    %v6775 = vpop.permute.xlu0 %6774
    %6776 = vrot.lane.b32.xlu0 %v6640, 32
    %v6777 = vpop.permute.xlu0 %6776
    %6778 = vrot.lane.b32.xlu0 %v6641, 32
    %v6779 = vpop.permute.xlu0 %6778
    %6780 = vrot.lane.b32.xlu0 %v6642, 32
    %v6781 = vpop.permute.xlu0 %6780
    %6782 = vrot.lane.b32.xlu0 %v6643, 32
    %v6783 = vpop.permute.xlu0 %6782
    %6784 = vrot.lane.b32.xlu0 %v6644, 32
    %v6785 = vpop.permute.xlu0 %6784
    %6786 = vrot.lane.b32.xlu0 %v6645, 32
    %v6787 = vpop.permute.xlu0 %6786
    %6788 = vrot.lane.b32.xlu0 %v6646, 32
    %v6789 = vpop.permute.xlu0 %6788
    %6790 = vrot.lane.b32.xlu0 %v6647, 32
    %v6791 = vpop.permute.xlu0 %6790
    %v6808 = vsel %vm194, %v6728, %v6761
    %v6809 = vsel %vm194, %v6729, %v6763
    %v6810 = vsel %vm194, %v6730, %v6765
    %v6811 = vsel %vm194, %v6731, %v6767
    %v6812 = vsel %vm194, %v6732, %v6769
    %v6813 = vsel %vm194, %v6733, %v6771
    %v6814 = vsel %vm194, %v6734, %v6773
    %v6815 = vsel %vm194, %v6735, %v6775
    %v6816 = vsel %vm194, %v6736, %v6777
    %v6817 = vsel %vm194, %v6737, %v6779
    %v6818 = vsel %vm194, %v6738, %v6781
    %v6819 = vsel %vm194, %v6739, %v6783
    %v6820 = vsel %vm194, %v6740, %v6785
    %v6821 = vsel %vm194, %v6741, %v6787
    %v6822 = vsel %vm194, %v6742, %v6789
    %v6823 = vsel %vm194, %v6743, %v6791
    %v6824 = vld [vmem:[%s23] sm:$0xf]
    %v6825 = vld [vmem:[%s23 + $0x4] sm:$0xf]
    %v6826 = vld [vmem:[%s23 + $0x8] sm:$0xf]
    %v6827 = vld [vmem:[%s23 + $0xc] sm:$0xf]
    %v6828 = vld [vmem:[%s23 + $0x10] sm:$0xf]
    %v6829 = vld [vmem:[%s23 + $0x14] sm:$0xf]
    %v6830 = vld [vmem:[%s23 + $0x18] sm:$0xf]
    %v6831 = vld [vmem:[%s23 + $0x1c] sm:$0xf]
    %v6832 = vld [vmem:[%s23 + $0x20] sm:$0xf]
    %v6833 = vld [vmem:[%s23 + $0x24] sm:$0xf]
    %v6834 = vld [vmem:[%s23 + $0x28] sm:$0xf]
    %v6835 = vld [vmem:[%s23 + $0x2c] sm:$0xf]
    %v6836 = vld [vmem:[%s23 + $0x30] sm:$0xf]
    %v6837 = vld [vmem:[%s23 + $0x34] sm:$0xf]
    %v6838 = vld [vmem:[%s23 + $0x38] sm:$0xf]
    %v6839 = vld [vmem:[%s23 + $0x3c] sm:$0xf]
    %v6840 = vld [vmem:[%s23 + $0x40] sm:$0xf]
    %v6841 = vld [vmem:[%s23 + $0x44] sm:$0xf]
    %v6842 = vld [vmem:[%s23 + $0x48] sm:$0xf]
    %v6843 = vld [vmem:[%s23 + $0x4c] sm:$0xf]
    %v6844 = vld [vmem:[%s23 + $0x50] sm:$0xf]
    %v6845 = vld [vmem:[%s23 + $0x54] sm:$0xf]
    %v6846 = vld [vmem:[%s23 + $0x58] sm:$0xf]
    %v6847 = vld [vmem:[%s23 + $0x5c] sm:$0xf]
    %v6848 = vld [vmem:[%s23 + $0x60] sm:$0xf]
    %v6849 = vld [vmem:[%s23 + $0x64] sm:$0xf]
    %v6850 = vld [vmem:[%s23 + $0x68] sm:$0xf]
    %v6851 = vld [vmem:[%s23 + $0x6c] sm:$0xf]
    %v6852 = vld [vmem:[%s23 + $0x70] sm:$0xf]
    %v6853 = vld [vmem:[%s23 + $0x74] sm:$0xf]
    %v6854 = vld [vmem:[%s23 + $0x78] sm:$0xf]
    %v6855 = vld [vmem:[%s23 + $0x7c] sm:$0xf]
    %v6856 = vld [vmem:[%s23 + $0x80] sm:$0xf]
    %v6857 = vld [vmem:[%s23 + $0x84] sm:$0xf]
    %v6858 = vld [vmem:[%s23 + $0x88] sm:$0xf]
    %v6859 = vld [vmem:[%s23 + $0x8c] sm:$0xf]
    %v6860 = vld [vmem:[%s23 + $0x90] sm:$0xf]
    %v6861 = vld [vmem:[%s23 + $0x94] sm:$0xf]
    %v6862 = vld [vmem:[%s23 + $0x98] sm:$0xf]
    %v6863 = vld [vmem:[%s23 + $0x9c] sm:$0xf]
    %v6864 = vld [vmem:[%s23 + $0xa0] sm:$0xf]
    %v6865 = vld [vmem:[%s23 + $0xa4] sm:$0xf]
    %v6866 = vld [vmem:[%s23 + $0xa8] sm:$0xf]
    %v6867 = vld [vmem:[%s23 + $0xac] sm:$0xf]
    %v6868 = vld [vmem:[%s23 + $0xb0] sm:$0xf]
    %v6869 = vld [vmem:[%s23 + $0xb4] sm:$0xf]
    %v6870 = vld [vmem:[%s23 + $0xb8] sm:$0xf]
    %v6871 = vld [vmem:[%s23 + $0xbc] sm:$0xf]
    %v6872 = vld [vmem:[%s23 + $0xc0] sm:$0xf]
    %v6873 = vld [vmem:[%s23 + $0xc4] sm:$0xf]
    %v6874 = vld [vmem:[%s23 + $0xc8] sm:$0xf]
    %v6875 = vld [vmem:[%s23 + $0xcc] sm:$0xf]
    %v6876 = vld [vmem:[%s23 + $0xd0] sm:$0xf]
    %v6877 = vld [vmem:[%s23 + $0xd4] sm:$0xf]
    %v6878 = vld [vmem:[%s23 + $0xd8] sm:$0xf]
    %v6879 = vld [vmem:[%s23 + $0xdc] sm:$0xf]
    %v6880 = vld [vmem:[%s23 + $0xe0] sm:$0xf]
    %v6881 = vld [vmem:[%s23 + $0xe4] sm:$0xf]
    %v6882 = vld [vmem:[%s23 + $0xe8] sm:$0xf]
    %v6883 = vld [vmem:[%s23 + $0xec] sm:$0xf]
    %v6884 = vld [vmem:[%s23 + $0xf0] sm:$0xf]
    %v6885 = vld [vmem:[%s23 + $0xf4] sm:$0xf]
    %v6886 = vld [vmem:[%s23 + $0xf8] sm:$0xf]
    %v6887 = vld [vmem:[%s23 + $0xfc] sm:$0xf]
    %v6888 = vld [vmem:[%s23 + $0x100] sm:$0xf]
    %v6889 = vld [vmem:[%s23 + $0x104] sm:$0xf]
    %v6890 = vld [vmem:[%s23 + $0x108] sm:$0xf]
    %v6891 = vld [vmem:[%s23 + $0x10c] sm:$0xf]
    %v6892 = vld [vmem:[%s23 + $0x110] sm:$0xf]
    %v6893 = vld [vmem:[%s23 + $0x114] sm:$0xf]
    %v6894 = vld [vmem:[%s23 + $0x118] sm:$0xf]
    %v6895 = vld [vmem:[%s23 + $0x11c] sm:$0xf]
    %v6896 = vld [vmem:[%s24] sm:$0x1]
    %v6899 = vrot.slane %v6822, 7
    %v6900 = vrot.slane %v6823, 7
    %v6901 = vsel %vm419, %v6899, %v6900
    %v6918 = vrot.slane %v6808, 7
    %v6919 = vrot.slane %v6809, 7
    %v6920 = vsel %vm419, %v6918, %v6919
    %v6921 = vrot.slane %v6810, 7
    %v6922 = vsel %vm419, %v6919, %v6921
    %v6923 = vrot.slane %v6811, 7
    %v6924 = vsel %vm419, %v6921, %v6923
    %v6925 = vrot.slane %v6812, 7
    %v6926 = vsel %vm419, %v6923, %v6925
    %v6927 = vrot.slane %v6813, 7
    %v6928 = vsel %vm419, %v6925, %v6927
    %v6929 = vrot.slane %v6814, 7
    %v6930 = vsel %vm419, %v6927, %v6929
    %v6931 = vrot.slane %v6815, 7
    %v6932 = vsel %vm419, %v6929, %v6931
    %v6933 = vrot.slane %v6816, 7
    %v6934 = vsel %vm419, %v6931, %v6933
    %v6935 = vrot.slane %v6817, 7
    %v6936 = vsel %vm419, %v6933, %v6935
    %v6937 = vrot.slane %v6818, 7
    %v6938 = vsel %vm419, %v6935, %v6937
    %v6939 = vrot.slane %v6819, 7
    %v6940 = vsel %vm419, %v6937, %v6939
    %v6941 = vrot.slane %v6820, 7
    %v6942 = vsel %vm419, %v6939, %v6941
    %v6943 = vrot.slane %v6821, 7
    %v6944 = vsel %vm419, %v6941, %v6943
    %v6945 = vsel %vm419, %v6943, %v6899
    %v6961 = vsel %vm419, %v6900, %v6918
    %v6962 = vmul.f32 %v6901, %v486
    %v6963 = vmul.f32 %v6961, %v491
    %v6964 = vmul.f32 %v6920, %v496
    %v6965 = vmul.f32 %v6922, %v501
    %v6966 = vmul.f32 %v6924, %v506
    %v6967 = vmul.f32 %v6926, %v511
    %v6968 = vmul.f32 %v6928, %v516
    %v6969 = vmul.f32 %v6930, %v521
    %v6970 = vmul.f32 %v6932, %v526
    %v6971 = vmul.f32 %v6934, %v531
    %v6972 = vmul.f32 %v6936, %v536
    %v6973 = vmul.f32 %v6938, %v541
    %v6974 = vmul.f32 %v6940, %v546
    %v6975 = vmul.f32 %v6942, %v551
    %v6976 = vmul.f32 %v6944, %v556
    %v6977 = vmul.f32 %v6945, %v561
    %v6978 = vpack.c.bf16 %v6963, %v6962
    %v6979 = vpack.c.bf16 %v6965, %v6964
    %v6980 = vpack.c.bf16 %v6967, %v6966
    %v6981 = vpack.c.bf16 %v6969, %v6968
    %v6982 = vpack.c.bf16 %v6971, %v6970
    %v6983 = vpack.c.bf16 %v6973, %v6972
    %v6984 = vpack.c.bf16 %v6975, %v6974
    %v6985 = vpack.c.bf16 %v6977, %v6976
    %v6986 = vmul.f32 %v6823, %v589
    %v6987 = vmul.f32 %v6808, %v593
    %v6988 = vmul.f32 %v6809, %v597
    %v6989 = vmul.f32 %v6810, %v601
    %v6990 = vmul.f32 %v6811, %v605
    %v6991 = vmul.f32 %v6812, %v609
    %v6992 = vmul.f32 %v6813, %v613
    %v6993 = vmul.f32 %v6814, %v617
    %v6994 = vmul.f32 %v6815, %v621
    %v6995 = vmul.f32 %v6816, %v625
    %v6996 = vmul.f32 %v6817, %v629
    %v6997 = vmul.f32 %v6818, %v633
    %v6998 = vmul.f32 %v6819, %v637
    %v6999 = vmul.f32 %v6820, %v641
    %v7000 = vmul.f32 %v6821, %v645
    %v7001 = vmul.f32 %v6822, %v649
    %v7002 = vpack.c.bf16 %v6987, %v6986
    %v7003 = vpack.c.bf16 %v6989, %v6988
    %v7004 = vpack.c.bf16 %v6991, %v6990
    %v7005 = vpack.c.bf16 %v6993, %v6992
    %v7006 = vpack.c.bf16 %v6995, %v6994
    %v7007 = vpack.c.bf16 %v6997, %v6996
    %v7008 = vpack.c.bf16 %v6999, %v6998
    %v7009 = vpack.c.bf16 %v7001, %v7000
    %v7010 = vrot.slane %v6823, 1
    %v7012 = vrot.slane %v6808, 1
    %v7013 = vrot.slane %v6809, 1
    %v7014 = vsel %vm677, %v7012, %v7013
    %v7015 = vrot.slane %v6810, 1
    %v7016 = vsel %vm677, %v7013, %v7015
    %v7017 = vrot.slane %v6811, 1
    %v7018 = vsel %vm677, %v7015, %v7017
    %v7019 = vrot.slane %v6812, 1
    %v7020 = vsel %vm677, %v7017, %v7019
    %v7021 = vrot.slane %v6813, 1
    %v7022 = vsel %vm677, %v7019, %v7021
    %v7023 = vrot.slane %v6814, 1
    %v7024 = vsel %vm677, %v7021, %v7023
    %v7025 = vrot.slane %v6815, 1
    %v7026 = vsel %vm677, %v7023, %v7025
    %v7027 = vrot.slane %v6816, 1
    %v7028 = vsel %vm677, %v7025, %v7027
    %v7029 = vrot.slane %v6817, 1
    %v7030 = vsel %vm677, %v7027, %v7029
    %v7031 = vrot.slane %v6818, 1
    %v7032 = vsel %vm677, %v7029, %v7031
    %v7033 = vrot.slane %v6819, 1
    %v7034 = vsel %vm677, %v7031, %v7033
    %v7035 = vrot.slane %v6820, 1
    %v7036 = vsel %vm677, %v7033, %v7035
    %v7037 = vrot.slane %v6821, 1
    %v7038 = vsel %vm677, %v7035, %v7037
    %v7039 = vrot.slane %v6822, 1
    %v7040 = vsel %vm677, %v7037, %v7039
    %v7041 = vsel %vm677, %v7039, %v7010
    %v7058 = vsel %vm677, %v7010, %v7012
    %v7059 = vmul.f32 %v7058, %v727
    %v7060 = vmul.f32 %v7014, %v731
    %v7061 = vmul.f32 %v7016, %v735
    %v7062 = vmul.f32 %v7018, %v739
    %v7063 = vmul.f32 %v7020, %v743
    %v7064 = vmul.f32 %v7022, %v747
    %v7065 = vmul.f32 %v7024, %v751
    %v7066 = vmul.f32 %v7026, %v755
    %v7067 = vmul.f32 %v7028, %v759
    %v7068 = vmul.f32 %v7030, %v763
    %v7069 = vmul.f32 %v7032, %v767
    %v7070 = vmul.f32 %v7034, %v771
    %v7071 = vmul.f32 %v7036, %v775
    %v7072 = vmul.f32 %v7038, %v779
    %v7073 = vmul.f32 %v7040, %v783
    %v7074 = vmul.f32 %v7041, %v787
    %v7075 = vpack.c.bf16 %v7060, %v7059
    %v7076 = vpack.c.bf16 %v7062, %v7061
    %v7077 = vpack.c.bf16 %v7064, %v7063
    %v7078 = vpack.c.bf16 %v7066, %v7065
    %v7079 = vpack.c.bf16 %v7068, %v7067
    %v7080 = vpack.c.bf16 %v7070, %v7069
    %v7081 = vpack.c.bf16 %v7072, %v7071
    %v7082 = vpack.c.bf16 %v7074, %v7073
    %v7083 = vmul.f32 %v6961, %v815
    %v7084 = vmul.f32 %v6920, %v819
    %v7085 = vmul.f32 %v6922, %v823
    %v7086 = vmul.f32 %v6924, %v827
    %v7087 = vmul.f32 %v6926, %v831
    %v7088 = vmul.f32 %v6928, %v835
    %v7089 = vmul.f32 %v6930, %v839
    %v7090 = vmul.f32 %v6932, %v843
    %v7091 = vmul.f32 %v6934, %v847
    %v7092 = vmul.f32 %v6936, %v851
    %v7093 = vmul.f32 %v6938, %v855
    %v7094 = vmul.f32 %v6940, %v859
    %v7095 = vmul.f32 %v6942, %v863
    %v7096 = vmul.f32 %v6944, %v867
    %v7097 = vmul.f32 %v6945, %v871
    %v7098 = vmul.f32 %v6901, %v875
    %v7099 = vpack.c.bf16 %v7084, %v7083
    %v7100 = vpack.c.bf16 %v7086, %v7085
    %v7101 = vpack.c.bf16 %v7088, %v7087
    %v7102 = vpack.c.bf16 %v7090, %v7089
    %v7103 = vpack.c.bf16 %v7092, %v7091
    %v7104 = vpack.c.bf16 %v7094, %v7093
    %v7105 = vpack.c.bf16 %v7096, %v7095
    %v7106 = vpack.c.bf16 %v7098, %v7097
    %v7107 = vmul.f32 %v6808, %v903
    %v7108 = vmul.f32 %v6809, %v907
    %v7109 = vmul.f32 %v6810, %v911
    %v7110 = vmul.f32 %v6811, %v915
    %v7111 = vmul.f32 %v6812, %v919
    %v7112 = vmul.f32 %v6813, %v923
    %v7113 = vmul.f32 %v6814, %v927
    %v7114 = vmul.f32 %v6815, %v931
    %v7115 = vmul.f32 %v6816, %v935
    %v7116 = vmul.f32 %v6817, %v939
    %v7117 = vmul.f32 %v6818, %v943
    %v7118 = vmul.f32 %v6819, %v947
    %v7119 = vmul.f32 %v6820, %v951
    %v7120 = vmul.f32 %v6821, %v955
    %v7121 = vmul.f32 %v6822, %v959
    %v7122 = vmul.f32 %v6823, %v963
    %v7123 = vpack.c.bf16 %v7108, %v7107
    %v7124 = vpack.c.bf16 %v7110, %v7109
    %v7125 = vpack.c.bf16 %v7112, %v7111
    %v7126 = vpack.c.bf16 %v7114, %v7113
    %v7127 = vpack.c.bf16 %v7116, %v7115
    %v7128 = vpack.c.bf16 %v7118, %v7117
    %v7129 = vpack.c.bf16 %v7120, %v7119
    %v7130 = vpack.c.bf16 %v7122, %v7121
    %v7131 = vmul.f32 %v7014, %v991
    %v7132 = vmul.f32 %v7016, %v995
    %v7133 = vmul.f32 %v7018, %v999
    %v7134 = vmul.f32 %v7020, %v1003
    %v7135 = vmul.f32 %v7022, %v1007
    %v7136 = vmul.f32 %v7024, %v1011
    %v7137 = vmul.f32 %v7026, %v1015
    %v7138 = vmul.f32 %v7028, %v1019
    %v7139 = vmul.f32 %v7030, %v1023
    %v7140 = vmul.f32 %v7032, %v1027
    %v7141 = vmul.f32 %v7034, %v1031
    %v7142 = vmul.f32 %v7036, %v1035
    %v7143 = vmul.f32 %v7038, %v1039
    %v7144 = vmul.f32 %v7040, %v1043
    %v7145 = vmul.f32 %v7041, %v1047
    %v7146 = vmul.f32 %v7058, %v1051
    %v7147 = vpack.c.bf16 %v7132, %v7131
    %v7148 = vpack.c.bf16 %v7134, %v7133
    %v7149 = vpack.c.bf16 %v7136, %v7135
    %v7150 = vpack.c.bf16 %v7138, %v7137
    %v7151 = vpack.c.bf16 %v7140, %v7139
    %v7152 = vpack.c.bf16 %v7142, %v7141
    %v7153 = vpack.c.bf16 %v7144, %v7143
    %v7154 = vpack.c.bf16 %v7146, %v7145
    %v7155 = vmul.f32 %v6920, %v1079
    %v7156 = vmul.f32 %v6922, %v1083
    %v7157 = vmul.f32 %v6924, %v1087
    %v7158 = vmul.f32 %v6926, %v1091
    %v7159 = vmul.f32 %v6928, %v1095
    %v7160 = vmul.f32 %v6930, %v1099
    %v7161 = vmul.f32 %v6932, %v1103
    %v7162 = vmul.f32 %v6934, %v1107
    %v7163 = vmul.f32 %v6936, %v1111
    %v7164 = vmul.f32 %v6938, %v1115
    %v7165 = vmul.f32 %v6940, %v1119
    %v7166 = vmul.f32 %v6942, %v1123
    %v7167 = vmul.f32 %v6944, %v1127
    %v7168 = vmul.f32 %v6945, %v1131
    %v7169 = vmul.f32 %v6901, %v1135
    %v7170 = vmul.f32 %v6961, %v1139
    %v7171 = vpack.c.bf16 %v7156, %v7155
    %v7172 = vpack.c.bf16 %v7158, %v7157
    %v7173 = vpack.c.bf16 %v7160, %v7159
    %v7174 = vpack.c.bf16 %v7162, %v7161
    %v7175 = vpack.c.bf16 %v7164, %v7163
    %v7176 = vpack.c.bf16 %v7166, %v7165
    %v7177 = vpack.c.bf16 %v7168, %v7167
    %v7178 = vpack.c.bf16 %v7170, %v7169
    %v7179 = vmul.f32 %v6809, %v1167
    %v7180 = vmul.f32 %v6810, %v1171
    %v7181 = vmul.f32 %v6811, %v1175
    %v7182 = vmul.f32 %v6812, %v1179
    %v7183 = vmul.f32 %v6813, %v1183
    %v7184 = vmul.f32 %v6814, %v1187
    %v7185 = vmul.f32 %v6815, %v1191
    %v7186 = vmul.f32 %v6816, %v1195
    %v7187 = vmul.f32 %v6817, %v1199
    %v7188 = vmul.f32 %v6818, %v1203
    %v7189 = vmul.f32 %v6819, %v1207
    %v7190 = vmul.f32 %v6820, %v1211
    %v7191 = vmul.f32 %v6821, %v1215
    %v7192 = vmul.f32 %v6822, %v1219
    %v7193 = vmul.f32 %v6823, %v1223
    %v7194 = vmul.f32 %v6808, %v1227
    %v7195 = vpack.c.bf16 %v7180, %v7179
    %v7196 = vpack.c.bf16 %v7182, %v7181
    %v7197 = vpack.c.bf16 %v7184, %v7183
    %v7198 = vpack.c.bf16 %v7186, %v7185
    %v7199 = vpack.c.bf16 %v7188, %v7187
    %v7200 = vpack.c.bf16 %v7190, %v7189
    %v7201 = vpack.c.bf16 %v7192, %v7191
    %v7202 = vpack.c.bf16 %v7194, %v7193
    %v7203 = vmul.f32 %v7016, %v1255
    %v7204 = vmul.f32 %v7018, %v1259
    %v7205 = vmul.f32 %v7020, %v1263
    %v7206 = vmul.f32 %v7022, %v1267
    %v7207 = vmul.f32 %v7024, %v1271
    %v7208 = vmul.f32 %v7026, %v1275
    %v7209 = vmul.f32 %v7028, %v1279
    %v7210 = vmul.f32 %v7030, %v1283
    %v7211 = vmul.f32 %v7032, %v1287
    %v7212 = vmul.f32 %v7034, %v1291
    %v7213 = vmul.f32 %v7036, %v1295
    %v7214 = vmul.f32 %v7038, %v1299
    %v7215 = vmul.f32 %v7040, %v1303
    %v7216 = vmul.f32 %v7041, %v1307
    %v7217 = vmul.f32 %v7058, %v1311
    %v7218 = vmul.f32 %v7014, %v1315
    %v7219 = vpack.c.bf16 %v7204, %v7203
    %v7220 = vpack.c.bf16 %v7206, %v7205
    %v7221 = vpack.c.bf16 %v7208, %v7207
    %v7222 = vpack.c.bf16 %v7210, %v7209
    %v7223 = vpack.c.bf16 %v7212, %v7211
    %v7224 = vpack.c.bf16 %v7214, %v7213
    %v7225 = vpack.c.bf16 %v7216, %v7215
    %v7226 = vpack.c.bf16 %v7218, %v7217
    %7235 = vrot.lane.b32.xlu0 %v7002, 64
    %v7236 = vpop.permute.xlu0 %7235
    %7237 = vrot.lane.b32.xlu0 %v7003, 64
    %v7238 = vpop.permute.xlu0 %7237
    %7239 = vrot.lane.b32.xlu0 %v7004, 64
    %v7240 = vpop.permute.xlu0 %7239
    %7241 = vrot.lane.b32.xlu0 %v7005, 64
    %v7242 = vpop.permute.xlu0 %7241
    %7243 = vrot.lane.b32.xlu0 %v7006, 64
    %v7244 = vpop.permute.xlu0 %7243
    %7245 = vrot.lane.b32.xlu0 %v7007, 64
    %v7246 = vpop.permute.xlu0 %7245
    %7247 = vrot.lane.b32.xlu0 %v7008, 64
    %v7248 = vpop.permute.xlu0 %7247
    %7249 = vrot.lane.b32.xlu0 %v7009, 64
    %v7250 = vpop.permute.xlu0 %7249
    %7259 = vrot.lane.b32.xlu0 %v7099, 64
    %v7260 = vpop.permute.xlu0 %7259
    %7261 = vrot.lane.b32.xlu0 %v7100, 64
    %v7262 = vpop.permute.xlu0 %7261
    %7263 = vrot.lane.b32.xlu0 %v7101, 64
    %v7264 = vpop.permute.xlu0 %7263
    %7265 = vrot.lane.b32.xlu0 %v7102, 64
    %v7266 = vpop.permute.xlu0 %7265
    %7267 = vrot.lane.b32.xlu0 %v7103, 64
    %v7268 = vpop.permute.xlu0 %7267
    %7269 = vrot.lane.b32.xlu0 %v7104, 64
    %v7270 = vpop.permute.xlu0 %7269
    %7271 = vrot.lane.b32.xlu0 %v7105, 64
    %v7272 = vpop.permute.xlu0 %7271
    %7273 = vrot.lane.b32.xlu0 %v7106, 64
    %v7274 = vpop.permute.xlu0 %7273
    %7283 = vrot.lane.b32.xlu0 %v7147, 64
    %v7284 = vpop.permute.xlu0 %7283
    %7285 = vrot.lane.b32.xlu0 %v7148, 64
    %v7286 = vpop.permute.xlu0 %7285
    %7287 = vrot.lane.b32.xlu0 %v7149, 64
    %v7288 = vpop.permute.xlu0 %7287
    %7289 = vrot.lane.b32.xlu0 %v7150, 64
    %v7290 = vpop.permute.xlu0 %7289
    %7291 = vrot.lane.b32.xlu0 %v7151, 64
    %v7292 = vpop.permute.xlu0 %7291
    %7293 = vrot.lane.b32.xlu0 %v7152, 64
    %v7294 = vpop.permute.xlu0 %7293
    %7295 = vrot.lane.b32.xlu0 %v7153, 64
    %v7296 = vpop.permute.xlu0 %7295
    %7297 = vrot.lane.b32.xlu0 %v7154, 64
    %v7298 = vpop.permute.xlu0 %7297
    %7307 = vrot.lane.b32.xlu0 %v7195, 64
    %v7308 = vpop.permute.xlu0 %7307
    %7309 = vrot.lane.b32.xlu0 %v7196, 64
    %v7310 = vpop.permute.xlu0 %7309
    %7311 = vrot.lane.b32.xlu0 %v7197, 64
    %v7312 = vpop.permute.xlu0 %7311
    %7313 = vrot.lane.b32.xlu0 %v7198, 64
    %v7314 = vpop.permute.xlu0 %7313
    %7315 = vrot.lane.b32.xlu0 %v7199, 64
    %v7316 = vpop.permute.xlu0 %7315
    %7317 = vrot.lane.b32.xlu0 %v7200, 64
    %v7318 = vpop.permute.xlu0 %7317
    %7319 = vrot.lane.b32.xlu0 %v7201, 64
    %v7320 = vpop.permute.xlu0 %7319
    %7321 = vrot.lane.b32.xlu0 %v7202, 64
    %v7322 = vpop.permute.xlu0 %7321
    %v7325 = vsel %vm258, %v6978, %v7236
    %v7329 = vsel %vm258, %v6979, %v7238
    %v7333 = vsel %vm258, %v6980, %v7240
    %v7337 = vsel %vm258, %v6981, %v7242
    %v7341 = vsel %vm258, %v6982, %v7244
    %v7345 = vsel %vm258, %v6983, %v7246
    %v7349 = vsel %vm258, %v6984, %v7248
    %v7353 = vsel %vm258, %v6985, %v7250
    %v7357 = vsel %vm258, %v7075, %v7260
    %v7361 = vsel %vm258, %v7076, %v7262
    %v7365 = vsel %vm258, %v7077, %v7264
    %v7369 = vsel %vm258, %v7078, %v7266
    %v7373 = vsel %vm258, %v7079, %v7268
    %v7377 = vsel %vm258, %v7080, %v7270
    %v7381 = vsel %vm258, %v7081, %v7272
    %v7385 = vsel %vm258, %v7082, %v7274
    %v7389 = vsel %vm258, %v7123, %v7284
    %v7393 = vsel %vm258, %v7124, %v7286
    %v7397 = vsel %vm258, %v7125, %v7288
    %v7401 = vsel %vm258, %v7126, %v7290
    %v7405 = vsel %vm258, %v7127, %v7292
    %v7409 = vsel %vm258, %v7128, %v7294
    %v7413 = vsel %vm258, %v7129, %v7296
    %v7417 = vsel %vm258, %v7130, %v7298
    %v7421 = vsel %vm258, %v7171, %v7308
    %v7425 = vsel %vm258, %v7172, %v7310
    %v7429 = vsel %vm258, %v7173, %v7312
    %v7433 = vsel %vm258, %v7174, %v7314
    %v7437 = vsel %vm258, %v7175, %v7316
    %v7441 = vsel %vm258, %v7176, %v7318
    %v7445 = vsel %vm258, %v7177, %v7320
    %v7449 = vsel %vm258, %v7178, %v7322
    %v7452 = vlaneseq
    %v7453 = vshrl.u32 %v7452, 7
    %v7454 = vsub.s32 0, %v7453
    %v7455 = vrot.slane %v6896, %v7454
    %v7529 = vunpack.c.l.b16 %v6824
    %v7530 = vunpack.c.l.b16 %v6825
    %v7531 = vunpack.c.l.b16 %v6826
    %v7532 = vunpack.c.l.b16 %v6827
    %v7533 = vunpack.c.l.b16 %v6828
    %v7534 = vunpack.c.l.b16 %v6829
    %v7535 = vunpack.c.l.b16 %v6830
    %v7536 = vunpack.c.l.b16 %v6831
    %v7537 = vunpack.c.l.b16 %v6832
    %v7538 = vunpack.c.l.b16 %v6833
    %v7539 = vunpack.c.l.b16 %v6834
    %v7540 = vunpack.c.l.b16 %v6835
    %v7541 = vunpack.c.l.b16 %v6836
    %v7542 = vunpack.c.l.b16 %v6837
    %v7543 = vunpack.c.l.b16 %v6838
    %v7544 = vunpack.c.l.b16 %v6839
    %v7545 = vunpack.c.l.b16 %v6840
    %v7546 = vunpack.c.l.b16 %v6841
    %v7547 = vunpack.c.l.b16 %v6842
    %v7548 = vunpack.c.l.b16 %v6843
    %v7549 = vunpack.c.l.b16 %v6844
    %v7550 = vunpack.c.l.b16 %v6845
    %v7551 = vunpack.c.l.b16 %v6846
    %v7552 = vunpack.c.l.b16 %v6847
    %v7553 = vunpack.c.l.b16 %v6848
    %v7554 = vunpack.c.l.b16 %v6849
    %v7555 = vunpack.c.l.b16 %v6850
    %v7556 = vunpack.c.l.b16 %v6851
    %v7557 = vunpack.c.l.b16 %v6852
    %v7558 = vunpack.c.l.b16 %v6853
    %v7559 = vunpack.c.l.b16 %v6854
    %v7560 = vunpack.c.l.b16 %v6855
    %v7561 = vunpack.c.l.b16 %v6856
    %v7562 = vunpack.c.l.b16 %v6857
    %v7563 = vunpack.c.l.b16 %v6858
    %v7564 = vunpack.c.l.b16 %v6859
    %v7565 = vunpack.c.l.b16 %v6860
    %v7566 = vunpack.c.l.b16 %v6861
    %v7567 = vunpack.c.l.b16 %v6862
    %v7568 = vunpack.c.l.b16 %v6863
    %v7569 = vunpack.c.l.b16 %v6864
    %v7570 = vunpack.c.l.b16 %v6865
    %v7571 = vunpack.c.l.b16 %v6866
    %v7572 = vunpack.c.l.b16 %v6867
    %v7573 = vunpack.c.l.b16 %v6868
    %v7574 = vunpack.c.l.b16 %v6869
    %v7575 = vunpack.c.l.b16 %v6870
    %v7576 = vunpack.c.l.b16 %v6871
    %v7577 = vunpack.c.l.b16 %v6872
    %v7578 = vunpack.c.l.b16 %v6873
    %v7579 = vunpack.c.l.b16 %v6874
    %v7580 = vunpack.c.l.b16 %v6875
    %v7581 = vunpack.c.l.b16 %v6876
    %v7582 = vunpack.c.l.b16 %v6877
    %v7583 = vunpack.c.l.b16 %v6878
    %v7584 = vunpack.c.l.b16 %v6879
    %v7585 = vunpack.c.l.b16 %v6880
    %v7586 = vunpack.c.l.b16 %v6881
    %v7587 = vunpack.c.l.b16 %v6882
    %v7588 = vunpack.c.l.b16 %v6883
    %v7589 = vunpack.c.l.b16 %v6884
    %v7590 = vunpack.c.l.b16 %v6885
    %v7591 = vunpack.c.l.b16 %v6886
    %v7592 = vunpack.c.l.b16 %v6887
    %v7593 = vunpack.c.l.b16 %v6888
    %v7594 = vunpack.c.l.b16 %v6889
    %v7595 = vunpack.c.l.b16 %v6890
    %v7596 = vunpack.c.l.b16 %v6891
    %v7597 = vunpack.c.l.b16 %v6892
    %v7598 = vunpack.c.l.b16 %v6893
    %v7599 = vunpack.c.l.b16 %v6894
    %v7600 = vunpack.c.l.b16 %v6895
    %v7601 = vpack.c.b16 %v7530, %v7529
    %v7602 = vpack.c.b16 %v7532, %v7531
    %v7603 = vpack.c.b16 %v7534, %v7533
    %v7604 = vpack.c.b16 %v7536, %v7535
    %v7605 = vpack.c.b16 %v7538, %v7537
    %v7606 = vpack.c.b16 %v7540, %v7539
    %v7607 = vpack.c.b16 %v7542, %v7541
    %v7608 = vpack.c.b16 %v7544, %v7543
    %v7609 = vpack.c.b16 %v7546, %v7545
    %v7610 = vpack.c.b16 %v7548, %v7547
    %v7611 = vpack.c.b16 %v7550, %v7549
    %v7612 = vpack.c.b16 %v7552, %v7551
    %v7613 = vpack.c.b16 %v7554, %v7553
    %v7614 = vpack.c.b16 %v7556, %v7555
    %v7615 = vpack.c.b16 %v7558, %v7557
    %v7616 = vpack.c.b16 %v7560, %v7559
    %v7617 = vpack.c.b16 %v7562, %v7561
    %v7618 = vpack.c.b16 %v7564, %v7563
    %v7619 = vpack.c.b16 %v7566, %v7565
    %v7620 = vpack.c.b16 %v7568, %v7567
    %v7621 = vpack.c.b16 %v7570, %v7569
    %v7622 = vpack.c.b16 %v7572, %v7571
    %v7623 = vpack.c.b16 %v7574, %v7573
    %v7624 = vpack.c.b16 %v7576, %v7575
    %v7625 = vpack.c.b16 %v7578, %v7577
    %v7626 = vpack.c.b16 %v7580, %v7579
    %v7627 = vpack.c.b16 %v7582, %v7581
    %v7628 = vpack.c.b16 %v7584, %v7583
    %v7629 = vpack.c.b16 %v7586, %v7585
    %v7630 = vpack.c.b16 %v7588, %v7587
    %v7631 = vpack.c.b16 %v7590, %v7589
    %v7632 = vpack.c.b16 %v7592, %v7591
    %v7633 = vpack.c.b16 %v7594, %v7593
    %v7634 = vpack.c.b16 %v7596, %v7595
    %v7635 = vpack.c.b16 %v7598, %v7597
    %v7636 = vpack.c.b16 %v7600, %v7599
    %v7674 = vsel %vm258, %v7219, 0
    %v7677 = vsel %vm258, %v7220, 0
    %v7680 = vsel %vm258, %v7221, 0
    %v7683 = vsel %vm258, %v7222, 0
    %v7686 = vsel %vm258, %v7223, 0
    %v7689 = vsel %vm258, %v7224, 0
    %v7692 = vsel %vm258, %v7225, 0
    %v7695 = vsel %vm258, %v7226, 0
    %7697 = vmatprep.subr.bf16.mxu0 0
    %7698 = vmatpush1.bf16.msra.mxu0 %v7601
    %7699 = vmatprep.subr.bf16.mxu0 0
    %7700 = vmatpush1.bf16.msra.mxu0 %v7602
    %7701 = vmatprep.subr.bf16.mxu0 0
    %7702 = vmatpush1.bf16.msra.mxu0 %v7603
    %7703 = vmatprep.subr.bf16.mxu0 0
    %7704 = vmatpush1.bf16.msra.mxu0 %v7604
    %7705 = vmatprep.subr.bf16.mxu0 0
    %7706 = vmatpush1.bf16.msra.mxu0 %v7605
    %7707 = vmatprep.subr.bf16.mxu0 0
    %7708 = vmatpush1.bf16.msra.mxu0 %v7606
    %7709 = vmatprep.subr.bf16.mxu0 0
    %7710 = vmatpush1.bf16.msra.mxu0 %v7607
    %7711 = vmatprep.subr.bf16.mxu0 0
    %7712 = vmatpush1.bf16.msra.mxu0 %v7608
    %7713 = vmatprep.subr.bf16.mxu0 0
    %7714 = vmatpush1.bf16.msra.mxu0 %v7609
    %7715 = vmatprep.subr.bf16.mxu0 0
    %7716 = vmatpush1.bf16.msra.mxu0 %v7610
    %7717 = vmatprep.subr.bf16.mxu0 0
    %7718 = vmatpush1.bf16.msra.mxu0 %v7611
    %7719 = vmatprep.subr.bf16.mxu0 0
    %7720 = vmatpush1.bf16.msra.mxu0 %v7612
    %7721 = vmatprep.subr.bf16.mxu0 0
    %7722 = vmatpush1.bf16.msra.mxu0 %v7613
    %7723 = vmatprep.subr.bf16.mxu0 0
    %7724 = vmatpush1.bf16.msra.mxu0 %v7614
    %7725 = vmatprep.subr.bf16.mxu0 0
    %7726 = vmatpush1.bf16.msra.mxu0 %v7615
    %7727 = vmatprep.subr.bf16.mxu0 0
    %7728 = vmatpush1.bf16.msra.mxu0 %v7616
    %7729 = vmatprep.mubr.bf16.mxu0 %v7357
    %7730 = vmatmul.mubr.bf16.gmra.mrb[0].mxu0 %v7325
    %v7731 = vpop.f32.mrb[0].mxu0
    %v7732 = vadd.f32 %v7455, %v7731
    %v7733 = vpop.f32.mrb[0].mxu0
    %v7734 = vpop.f32.mrb[0].mxu0
    %v7735 = vadd.f32 %v7455, %v7734
    %v7736 = vpop.f32.mrb[0].mxu0
    %7737 = vmatprep.mubr.bf16.mxu0 %v7361
    %7738 = vmatmul.mubr.bf16.gmra.mrb[0].mxu0 %v7329
    %v7739 = vpop.f32.mrb[0].mxu0
    %v7740 = vadd.f32 %v7455, %v7739
    %v7741 = vpop.f32.mrb[0].mxu0
    %v7742 = vpop.f32.mrb[0].mxu0
    %v7743 = vadd.f32 %v7455, %v7742
    %v7744 = vpop.f32.mrb[0].mxu0
    %7745 = vmatprep.mubr.bf16.mxu0 %v7365
    %7746 = vmatmul.mubr.bf16.gmra.mrb[0].mxu0 %v7333
    %v7747 = vpop.f32.mrb[0].mxu0
    %v7748 = vadd.f32 %v7455, %v7747
    %v7749 = vpop.f32.mrb[0].mxu0
    %v7750 = vpop.f32.mrb[0].mxu0
    %v7751 = vadd.f32 %v7455, %v7750
    %v7752 = vpop.f32.mrb[0].mxu0
    %7753 = vmatprep.mubr.bf16.mxu0 %v7369
    %7754 = vmatmul.mubr.bf16.gmra.mrb[0].mxu0 %v7337
    %v7755 = vpop.f32.mrb[0].mxu0
    %v7756 = vadd.f32 %v7455, %v7755
    %v7757 = vpop.f32.mrb[0].mxu0
    %v7758 = vpop.f32.mrb[0].mxu0
    %v7759 = vadd.f32 %v7455, %v7758
    %v7760 = vpop.f32.mrb[0].mxu0
    %7761 = vmatprep.mubr.bf16.mxu0 %v7373
    %7762 = vmatmul.mubr.bf16.gmra.mrb[0].mxu0 %v7341
    %v7763 = vpop.f32.mrb[0].mxu0
    %v7764 = vadd.f32 %v7455, %v7763
    %v7765 = vpop.f32.mrb[0].mxu0
    %v7766 = vpop.f32.mrb[0].mxu0
    %v7767 = vadd.f32 %v7455, %v7766
    %v7768 = vpop.f32.mrb[0].mxu0
    %7769 = vmatprep.mubr.bf16.mxu0 %v7377
    %7770 = vmatmul.mubr.bf16.gmra.mrb[0].mxu0 %v7345
    %v7771 = vpop.f32.mrb[0].mxu0
    %v7772 = vadd.f32 %v7455, %v7771
    %v7773 = vpop.f32.mrb[0].mxu0
    %v7774 = vpop.f32.mrb[0].mxu0
    %v7775 = vadd.f32 %v7455, %v7774
    %v7776 = vpop.f32.mrb[0].mxu0
    %7777 = vmatprep.mubr.bf16.mxu0 %v7381
    %7778 = vmatmul.mubr.bf16.gmra.mrb[0].mxu0 %v7349
    %v7779 = vpop.f32.mrb[0].mxu0
    %v7780 = vadd.f32 %v7455, %v7779
    %v7781 = vpop.f32.mrb[0].mxu0
    %v7782 = vpop.f32.mrb[0].mxu0
    %v7783 = vadd.f32 %v7455, %v7782
    %v7784 = vpop.f32.mrb[0].mxu0
    %7785 = vmatprep.mubr.bf16.mxu0 %v7385
    %7786 = vmatmul.mubr.bf16.gmra.mrb[0].mxu0 %v7353
    %v7787 = vpop.f32.mrb[0].mxu0
    %v7788 = vadd.f32 %v7455, %v7787
    %v7789 = vpop.f32.mrb[0].mxu0
    %v7790 = vpop.f32.mrb[0].mxu0
    %v7791 = vadd.f32 %v7455, %v7790
    %v7792 = vpop.f32.mrb[0].mxu0
    %7793 = vdwg.mxu0
    %7794 = vmatprep.subr.bf16.mxu0 0
    %7795 = vmatpush1.bf16.msra.mxu0 %v7617
    %7796 = vmatprep.subr.bf16.mxu0 0
    %7797 = vmatpush1.bf16.msra.mxu0 %v7618
    %7798 = vmatprep.subr.bf16.mxu0 0
    %7799 = vmatpush1.bf16.msra.mxu0 %v7619
    %7800 = vmatprep.subr.bf16.mxu0 0
    %7801 = vmatpush1.bf16.msra.mxu0 %v7620
    %7802 = vmatprep.subr.bf16.mxu0 0
    %7803 = vmatpush1.bf16.msra.mxu0 %v7621
    %7804 = vmatprep.subr.bf16.mxu0 0
    %7805 = vmatpush1.bf16.msra.mxu0 %v7622
    %7806 = vmatprep.subr.bf16.mxu0 0
    %7807 = vmatpush1.bf16.msra.mxu0 %v7623
    %7808 = vmatprep.subr.bf16.mxu0 0
    %7809 = vmatpush1.bf16.msra.mxu0 %v7624
    %7810 = vmatprep.subr.bf16.mxu0 0
    %7811 = vmatpush1.bf16.msra.mxu0 %v7625
    %7812 = vmatprep.subr.bf16.mxu0 0
    %7813 = vmatpush1.bf16.msra.mxu0 %v7626
    %7814 = vmatprep.subr.bf16.mxu0 0
    %7815 = vmatpush1.bf16.msra.mxu0 %v7627
    %7816 = vmatprep.subr.bf16.mxu0 0
    %7817 = vmatpush1.bf16.msra.mxu0 %v7628
    %7818 = vmatprep.subr.bf16.mxu0 0
    %7819 = vmatpush1.bf16.msra.mxu0 %v7629
    %7820 = vmatprep.subr.bf16.mxu0 0
    %7821 = vmatpush1.bf16.msra.mxu0 %v7630
    %7822 = vmatprep.subr.bf16.mxu0 0
    %7823 = vmatpush1.bf16.msra.mxu0 %v7631
    %7824 = vmatprep.subr.bf16.mxu0 0
    %7825 = vmatpush1.bf16.msra.mxu0 %v7632
    %7826 = vmatprep.mubr.bf16.mxu0 %v7421
    %7827 = vmatmul.mubr.bf16.gmra.mrb[0].mxu0 %v7389
    %v7828 = vpop.f32.mrb[0].mxu0
    %v7829 = vadd.f32 %v7732, %v7828
    %v7830 = vpop.f32.mrb[0].mxu0
    %v7831 = vpop.f32.mrb[0].mxu0
    %v7832 = vadd.f32 %v7735, %v7831
    %v7833 = vpop.f32.mrb[0].mxu0
    %7834 = vmatprep.mubr.bf16.mxu0 %v7425
    %7835 = vmatmul.mubr.bf16.gmra.mrb[0].mxu0 %v7393
    %v7836 = vpop.f32.mrb[0].mxu0
    %v7837 = vadd.f32 %v7740, %v7836
    %v7838 = vpop.f32.mrb[0].mxu0
    %v7839 = vpop.f32.mrb[0].mxu0
    %v7840 = vadd.f32 %v7743, %v7839
    %v7841 = vpop.f32.mrb[0].mxu0
    %7842 = vmatprep.mubr.bf16.mxu0 %v7429
    %7843 = vmatmul.mubr.bf16.gmra.mrb[0].mxu0 %v7397
    %v7844 = vpop.f32.mrb[0].mxu0
    %v7845 = vadd.f32 %v7748, %v7844
    %v7846 = vpop.f32.mrb[0].mxu0
    %v7847 = vpop.f32.mrb[0].mxu0
    %v7848 = vadd.f32 %v7751, %v7847
    %v7849 = vpop.f32.mrb[0].mxu0
    %7850 = vmatprep.mubr.bf16.mxu0 %v7433
    %7851 = vmatmul.mubr.bf16.gmra.mrb[0].mxu0 %v7401
    %v7852 = vpop.f32.mrb[0].mxu0
    %v7853 = vadd.f32 %v7756, %v7852
    %v7854 = vpop.f32.mrb[0].mxu0
    %v7855 = vpop.f32.mrb[0].mxu0
    %v7856 = vadd.f32 %v7759, %v7855
    %v7857 = vpop.f32.mrb[0].mxu0
    %7858 = vmatprep.mubr.bf16.mxu0 %v7437
    %7859 = vmatmul.mubr.bf16.gmra.mrb[0].mxu0 %v7405
    %v7860 = vpop.f32.mrb[0].mxu0
    %v7861 = vadd.f32 %v7764, %v7860
    %v7862 = vpop.f32.mrb[0].mxu0
    %v7863 = vpop.f32.mrb[0].mxu0
    %v7864 = vadd.f32 %v7767, %v7863
    %v7865 = vpop.f32.mrb[0].mxu0
    %7866 = vmatprep.mubr.bf16.mxu0 %v7441
    %7867 = vmatmul.mubr.bf16.gmra.mrb[0].mxu0 %v7409
    %v7868 = vpop.f32.mrb[0].mxu0
    %v7869 = vadd.f32 %v7772, %v7868
    %v7870 = vpop.f32.mrb[0].mxu0
    %v7871 = vpop.f32.mrb[0].mxu0
    %v7872 = vadd.f32 %v7775, %v7871
    %v7873 = vpop.f32.mrb[0].mxu0
    %7874 = vmatprep.mubr.bf16.mxu0 %v7445
    %7875 = vmatmul.mubr.bf16.gmra.mrb[0].mxu0 %v7413
    %v7876 = vpop.f32.mrb[0].mxu0
    %v7877 = vadd.f32 %v7780, %v7876
    %v7878 = vpop.f32.mrb[0].mxu0
    %v7879 = vpop.f32.mrb[0].mxu0
    %v7880 = vadd.f32 %v7783, %v7879
    %v7881 = vpop.f32.mrb[0].mxu0
    %7882 = vmatprep.mubr.bf16.mxu0 %v7449
    %7883 = vmatmul.mubr.bf16.gmra.mrb[0].mxu0 %v7417
    %v7884 = vpop.f32.mrb[0].mxu0
    %v7885 = vadd.f32 %v7788, %v7884
    %v7886 = vpop.f32.mrb[0].mxu0
    %v7887 = vpop.f32.mrb[0].mxu0
    %v7888 = vadd.f32 %v7791, %v7887
    %v7889 = vpop.f32.mrb[0].mxu0
    %7890 = vdwg.mxu0
    %7891 = vmatprep.subr.bf16.mxu0 0
    %7892 = vmatpush1.bf16.msra.mxu0 %v7633
    %7893 = vmatprep.subr.bf16.mxu0 0
    %7894 = vmatpush1.bf16.msra.mxu0 %v7634
    %7895 = vmatprep.subr.bf16.mxu0 0
    %7896 = vmatpush1.bf16.msra.mxu0 %v7635
    %7897 = vmatprep.subr.bf16.mxu0 0
    %7898 = vmatpush1.bf16.msra.mxu0 %v7636
    %7899 = vmatprep.subr.bf16.mxu0 0
    %7900 = vmatpush1.bf16.msra.mxu0 0
    %7901 = vmatprep.subr.bf16.mxu0 0
    %7902 = vmatpush1.bf16.msra.mxu0 0
    %7903 = vmatprep.subr.bf16.mxu0 0
    %7904 = vmatpush1.bf16.msra.mxu0 0
    %7905 = vmatprep.subr.bf16.mxu0 0
    %7906 = vmatpush1.bf16.msra.mxu0 0
    %7907 = vmatprep.subr.bf16.mxu0 0
    %7908 = vmatpush1.bf16.msra.mxu0 0
    %7909 = vmatprep.subr.bf16.mxu0 0
    %7910 = vmatpush1.bf16.msra.mxu0 0
    %7911 = vmatprep.subr.bf16.mxu0 0
    %7912 = vmatpush1.bf16.msra.mxu0 0
    %7913 = vmatprep.subr.bf16.mxu0 0
    %7914 = vmatpush1.bf16.msra.mxu0 0
    %7915 = vmatprep.subr.bf16.mxu0 0
    %7916 = vmatpush1.bf16.msra.mxu0 0
    %7917 = vmatprep.subr.bf16.mxu0 0
    %7918 = vmatpush1.bf16.msra.mxu0 0
    %7919 = vmatprep.subr.bf16.mxu0 0
    %7920 = vmatpush1.bf16.msra.mxu0 0
    %7921 = vmatprep.subr.bf16.mxu0 0
    %7922 = vmatpush1.bf16.msra.mxu0 0
    %7923 = vmatprep.mubr.bf16.mxu0 0
    %7924 = vmatmul.mubr.bf16.gmra.mrb[0].mxu0 %v7674
    %v7925 = vpop.f32.mrb[0].mxu0
    %v7926 = vadd.f32 %v7829, %v7925
    %v7927 = vpop.f32.mrb[0].mxu0
    %v7928 = vpop.f32.mrb[0].mxu0
    %v7929 = vadd.f32 %v7832, %v7928
    %v7930 = vpop.f32.mrb[0].mxu0
    %7931 = vmatprep.mubr.bf16.mxu0 0
    %7932 = vmatmul.mubr.bf16.gmra.mrb[0].mxu0 %v7677
    %v7933 = vpop.f32.mrb[0].mxu0
    %v7934 = vadd.f32 %v7837, %v7933
    %v7935 = vpop.f32.mrb[0].mxu0
    %v7936 = vpop.f32.mrb[0].mxu0
    %v7937 = vadd.f32 %v7840, %v7936
    %v7938 = vpop.f32.mrb[0].mxu0
    %7939 = vmatprep.mubr.bf16.mxu0 0
    %7940 = vmatmul.mubr.bf16.gmra.mrb[0].mxu0 %v7680
    %v7941 = vpop.f32.mrb[0].mxu0
    %v7942 = vadd.f32 %v7845, %v7941
    %v7943 = vpop.f32.mrb[0].mxu0
    %v7944 = vpop.f32.mrb[0].mxu0
    %v7945 = vadd.f32 %v7848, %v7944
    %v7946 = vpop.f32.mrb[0].mxu0
    %7947 = vmatprep.mubr.bf16.mxu0 0
    %7948 = vmatmul.mubr.bf16.gmra.mrb[0].mxu0 %v7683
    %v7949 = vpop.f32.mrb[0].mxu0
    %v7950 = vadd.f32 %v7853, %v7949
    %v7951 = vpop.f32.mrb[0].mxu0
    %v7952 = vpop.f32.mrb[0].mxu0
    %v7953 = vadd.f32 %v7856, %v7952
    %v7954 = vpop.f32.mrb[0].mxu0
    %7955 = vmatprep.mubr.bf16.mxu0 0
    %7956 = vmatmul.mubr.bf16.gmra.mrb[0].mxu0 %v7686
    %v7957 = vpop.f32.mrb[0].mxu0
    %v7958 = vadd.f32 %v7861, %v7957
    %v7959 = vpop.f32.mrb[0].mxu0
    %v7960 = vpop.f32.mrb[0].mxu0
    %v7961 = vadd.f32 %v7864, %v7960
    %v7962 = vpop.f32.mrb[0].mxu0
    %7963 = vmatprep.mubr.bf16.mxu0 0
    %7964 = vmatmul.mubr.bf16.gmra.mrb[0].mxu0 %v7689
    %v7965 = vpop.f32.mrb[0].mxu0
    %v7966 = vadd.f32 %v7869, %v7965
    %v7967 = vpop.f32.mrb[0].mxu0
    %v7968 = vpop.f32.mrb[0].mxu0
    %v7969 = vadd.f32 %v7872, %v7968
    %v7970 = vpop.f32.mrb[0].mxu0
    %7971 = vmatprep.mubr.bf16.mxu0 0
    %7972 = vmatmul.mubr.bf16.gmra.mrb[0].mxu0 %v7692
    %v7973 = vpop.f32.mrb[0].mxu0
    %v7974 = vadd.f32 %v7877, %v7973
    %v7975 = vpop.f32.mrb[0].mxu0
    %v7976 = vpop.f32.mrb[0].mxu0
    %v7977 = vadd.f32 %v7880, %v7976
    %v7978 = vpop.f32.mrb[0].mxu0
    %7979 = vmatprep.mubr.bf16.mxu0 0
    %7980 = vmatmul.mubr.bf16.gmra.mrb[0].mxu0 %v7695
    %v7981 = vpop.f32.mrb[0].mxu0
    %v7982 = vadd.f32 %v7885, %v7981
    %v7983 = vpop.f32.mrb[0].mxu0
    %v7984 = vpop.f32.mrb[0].mxu0
    %v7985 = vadd.f32 %v7888, %v7984
    %v7986 = vpop.f32.mrb[0].mxu0
    %7987 = vdwg.mxu0
    %v7988 = vmax.f32 %v7926, 0.0
    %v7989 = vmax.f32 %v7929, 0.0
    %v7990 = vmax.f32 %v7934, 0.0
    %v7991 = vmax.f32 %v7937, 0.0
    %v7992 = vmax.f32 %v7942, 0.0
    %v7993 = vmax.f32 %v7945, 0.0
    %v7994 = vmax.f32 %v7950, 0.0
    %v7995 = vmax.f32 %v7953, 0.0
    %v7996 = vmax.f32 %v7958, 0.0
    %v7997 = vmax.f32 %v7961, 0.0
    %v7998 = vmax.f32 %v7966, 0.0
    %v7999 = vmax.f32 %v7969, 0.0
    %v8000 = vmax.f32 %v7974, 0.0
    %v8001 = vmax.f32 %v7977, 0.0
    %v8002 = vmax.f32 %v7982, 0.0
    %v8003 = vmax.f32 %v7985, 0.0
    %8004 = vst.msk [vmem:[#allocation2] sm:$0xff] %vm194, %v7988
    %8005 = vst.msk [vmem:[#allocation2 + $0x8] sm:$0xff] %vm194, %v7989
    %8006 = vst.msk [vmem:[#allocation2 + $0x10] sm:$0xff] %vm194, %v7990
    %8007 = vst.msk [vmem:[#allocation2 + $0x18] sm:$0xff] %vm194, %v7991
    %8008 = vst.msk [vmem:[#allocation2 + $0x20] sm:$0xff] %vm194, %v7992
    %8009 = vst.msk [vmem:[#allocation2 + $0x28] sm:$0xff] %vm194, %v7993
    %8010 = vst.msk [vmem:[#allocation2 + $0x30] sm:$0xff] %vm194, %v7994
    %8011 = vst.msk [vmem:[#allocation2 + $0x38] sm:$0xff] %vm194, %v7995
    %8012 = vst.msk [vmem:[#allocation2 + $0x40] sm:$0xff] %vm194, %v7996
    %8013 = vst.msk [vmem:[#allocation2 + $0x48] sm:$0xff] %vm194, %v7997
    %8014 = vst.msk [vmem:[#allocation2 + $0x50] sm:$0xff] %vm194, %v7998
    %8015 = vst.msk [vmem:[#allocation2 + $0x58] sm:$0xff] %vm194, %v7999
    %8016 = vst.msk [vmem:[#allocation2 + $0x60] sm:$0xff] %vm194, %v8000
    %8017 = vst.msk [vmem:[#allocation2 + $0x68] sm:$0xff] %vm194, %v8001
    %8018 = vst.msk [vmem:[#allocation2 + $0x70] sm:$0xff] %vm194, %v8002
    %8019 = vst.msk [vmem:[#allocation2 + $0x78] sm:$0xff] %vm194, %v8003
    // Predicated region
    $region102: #{module3_forward.1} parent=1 // pred_check
      _
    $region103: #{module3_forward.1} parent=1 // pred_check_branch
      %8021 = sbr.rel (0) target = $region105
    $region104: #{module3_forward.1} parent=1 // pred_region
      %s8023 = ssub.s32 2048, 2048
      %8024 = vsyncadd [#allocation3], %s8023
      %s8025 = sshll.u32 [#allocation2], 4
      %s8026 = int_to_ptr.vmem [resolvable:$true] %s8025
      %8031 = dma.vmem_to_hbm [thread:$0]  %s8026, 2048, %s25, [#allocation3], 128, 128, 8
    $region105: #{module3_forward.1} parent=1 // pred_fallthru
      _
    // Predicated region
    $region106: #{module3_forward.1} parent=1 // pred_check
      _
    $region107: #{module3_forward.1} parent=1 // pred_check_branch
      %8033 = sbr.rel (0) target = $region109
    $region108: #{module3_forward.1} parent=1 // pred_region
      %8034 = dma.done [#allocation3], 2048
    $region109: #{module3_forward.1} parent=1 // pred_fallthru
      _
    %8035 = vsyncpa [#allocation3], 1

</llo_original>
